<compile_context>
chip_gen: v5e
topology: v5e:2x2
jax: 0.10.0
libtpu: 0.0.40
codegen_flags: <defaults>
</compile_context>

<pallas_src>
import functools
import numpy as np
import jax
import jax.numpy as jnp
from jax.experimental import pallas as pl
from jax.experimental.pallas import tpu as pltpu

# ----------------------------- configuration --------------------------------
DIM = 4          # channels
WS = 8           # window size
H = 16           # ori_height
W = 16           # ori_width
B_ORI = 2        # batch of token sequences
N_ORI = H * W    # tokens per sequence (so internal image batch == B_ORI)
NWIN = (H // WS) * (W // WS)
S = WS * WS      # tokens per window


# ----------------------------- Pallas kernels --------------------------------
def _linear_kernel(x_ref, w_ref, b_ref, o_ref, *, act=None):
    y = (jnp.dot(x_ref[...], w_ref[...], preferred_element_type=jnp.float32)
         + b_ref[...])
    if act == "lrelu":
        y = jnp.where(y >= 0, y, 0.1 * y)
    o_ref[...] = y.astype(o_ref.dtype)


def pallas_linear(x, w, b, act=None, tile_m=1024):
    """(M, K) @ (K, N) + b.  Single grid step when M is small."""
    M, K = x.shape
    N = w.shape[1]
    kern = functools.partial(_linear_kernel, act=act)
    b2 = b.reshape(1, N)
    out_shape = jax.ShapeDtypeStruct((M, N), x.dtype)
    if M <= tile_m:
        return pl.pallas_call(kern, out_shape=out_shape)(x, w, b2)
    assert M % tile_m == 0
    return pl.pallas_call(
        kern, out_shape=out_shape, grid=(M // tile_m,),
        in_specs=[pl.BlockSpec((tile_m, K), lambda i: (i, 0)),
                  pl.BlockSpec((K, N), lambda i: (0, 0)),
                  pl.BlockSpec((1, N), lambda i: (0, 0))],
        out_specs=pl.BlockSpec((tile_m, N), lambda i: (i, 0)),
        compiler_params=pltpu.CompilerParams(dimension_semantics=("parallel",)),
    )(x, w, b2)


def _cond_feat_kernel(x_ref, cg_ref, cw_ref, wv_ref, bv_ref,
                      wiv_ref, wig_ref, wiw_ref, bi_ref, g_ref, be_ref,
                      v_ref, f_ref):
    """Fused project_v (1x1) + in_conv (1x1 + LayerNorm + LeakyReLU).

    The channel concat of [v, cond_global, cond_wind] is expressed as three
    small matmuls summed (no in-kernel concatenate)."""
    x = x_ref[...]
    v = (jnp.dot(x, wv_ref[...], preferred_element_type=jnp.float32)
         + bv_ref[...])
    v_ref[...] = v.astype(v_ref.dtype)
    h = (jnp.dot(v, wiv_ref[...], preferred_element_type=jnp.float32)
         + jnp.dot(cg_ref[...], wig_ref[...], preferred_element_type=jnp.float32)
         + jnp.dot(cw_ref[...], wiw_ref[...], preferred_element_type=jnp.float32)
         + bi_ref[...])
    # LayerNorm over the channel dim (channels_first semantics; here last dim)
    u = jnp.mean(h, axis=-1, keepdims=True)
    s = jnp.mean((h - u) ** 2, axis=-1, keepdims=True)
    h = (h - u) * jax.lax.rsqrt(s + 1e-6)
    h = g_ref[...] * h + be_ref[...]
    f_ref[...] = jnp.where(h >= 0, h, 0.1 * h).astype(f_ref.dtype)


def pallas_cond_feat(x, cg, cw, wv, bv, wiv, wig, wiw, bi, lnw, lnb):
    M, C = x.shape
    cf = wiv.shape[1]
    return pl.pallas_call(
        _cond_feat_kernel,
        out_shape=(jax.ShapeDtypeStruct((M, C), x.dtype),
                   jax.ShapeDtypeStruct((M, cf), x.dtype)),
    )(x, cg, cw, wv, bv.reshape(1, -1), wiv, wig, wiw,
      bi.reshape(1, -1), lnw.reshape(1, -1), lnb.reshape(1, -1))


def _offsets_kernel(f_ref, w1_ref, b1_ref, w2_ref, b2_ref, o_ref):
    """Fused out_offsets: 1x1 conv -> LeakyReLU -> 1x1 conv -> tanh * 8."""
    h = (jnp.dot(f_ref[...], w1_ref[...], preferred_element_type=jnp.float32)
         + b1_ref[...])
    h = jnp.where(h >= 0, h, 0.1 * h)
    o = (jnp.dot(h, w2_ref[...], preferred_element_type=jnp.float32)
         + b2_ref[...])
    o_ref[...] = (jnp.tanh(o) * 8.0).astype(o_ref.dtype)


def pallas_offsets(feat, w1, b1, w2, b2):
    M = feat.shape[0]
    return pl.pallas_call(
        _offsets_kernel,
        out_shape=jax.ShapeDtypeStruct((M, w2.shape[1]), feat.dtype),
    )(feat, w1, b1.reshape(1, -1), w2, b2.reshape(1, -1))


def _mask_score_kernel(x_ref, w1_ref, b1_ref, w2_ref, b2_ref, o_ref):
    """Fused out_mask: Linear -> LeakyReLU -> Linear -> Softmax."""
    h = (jnp.dot(x_ref[...], w1_ref[...], preferred_element_type=jnp.float32)
         + b1_ref[...])
    h = jnp.where(h >= 0, h, 0.1 * h)
    s = (jnp.dot(h, w2_ref[...], preferred_element_type=jnp.float32)
         + b2_ref[...])
    s = s - jnp.max(s, axis=-1, keepdims=True)
    e = jnp.exp(s)
    o_ref[...] = (e / jnp.sum(e, axis=-1, keepdims=True)).astype(o_ref.dtype)


def pallas_mask_score(xw, w1, b1, w2, b2):
    M = xw.shape[0]
    return pl.pallas_call(
        _mask_score_kernel,
        out_shape=jax.ShapeDtypeStruct((M, w2.shape[1]), xw.dtype),
    )(xw, w1, b1.reshape(1, -1), w2, b2.reshape(1, -1))


def _window_attn_kernel(q_ref, k_ref, v_ref, sa_ref, m_ref,
                        wq_ref, bq_ref, wk_ref, bk_ref, bias_ref, o_ref):
    """Fused masked window attention on channel-second tiles.

    Per grid step (one image): q/k/v/sa are (nwin, C, S) with S=ws*ws on the
    lane axis.  Does: v1=v*m, v2=v*sa*(1-m), q1=Wq(q*m)+bq, k1=Wk(k*m)+bk,
    softmax(q1^T k1 + rel_bias) @ v1 + v2.  Output stays (nwin, C, S)."""
    nw, cc, ss = q_ref.shape
    m = m_ref[...]                                  # (nw, 1, 1)
    q = q_ref[...] * m
    k = k_ref[...] * m
    v = v_ref[...]
    v1 = v * m
    v2 = (v * sa_ref[...]) * (1.0 - m)

    wq = jnp.broadcast_to(wq_ref[...][None, :, :], (nw, cc, cc))
    wk = jnp.broadcast_to(wk_ref[...][None, :, :], (nw, cc, cc))
    q1 = (jnp.einsum('boi,bis->bos', wq, q, preferred_element_type=jnp.float32)
          + bq_ref[...][None, :, :])
    k1 = (jnp.einsum('boi,bis->bos', wk, k, preferred_element_type=jnp.float32)
          + bk_ref[...][None, :, :])

    attn = jnp.einsum('bdq,bdk->bqk', q1, k1, preferred_element_type=jnp.float32)
    attn = attn + bias_ref[...][None, :, :]
    attn = attn - jnp.max(attn, axis=-1, keepdims=True)
    p = jnp.exp(attn)
    p = p * pl.reciprocal(jnp.sum(p, axis=-1, keepdims=True), approx=True)

    f = jnp.einsum('bck,bqk->bcq', v1, p, preferred_element_type=jnp.float32)
    o_ref[...] = (f + v2).astype(o_ref.dtype)


def pallas_window_attention(q_cs, k_cs, v_cs, sa_cs, m_cs,
                            wq_t, bq, wk_t, bk, bias, n_img):
    BW, C, Ssz = q_cs.shape
    nw = BW // n_img
    qkv_spec = pl.BlockSpec((nw, C, Ssz), lambda i: (i, 0, 0))
    return pl.pallas_call(
        _window_attn_kernel,
        out_shape=jax.ShapeDtypeStruct((BW, C, Ssz), q_cs.dtype),
        grid=(n_img,),
        in_specs=[qkv_spec, qkv_spec, qkv_spec,
                  pl.BlockSpec((nw, 1, Ssz), lambda i: (i, 0, 0)),
                  pl.BlockSpec((nw, 1, 1), lambda i: (i, 0, 0)),
                  pl.BlockSpec((C, C), lambda i: (0, 0)),
                  pl.BlockSpec((C, 1), lambda i: (0, 0)),
                  pl.BlockSpec((C, C), lambda i: (0, 0)),
                  pl.BlockSpec((C, 1), lambda i: (0, 0)),
                  pl.BlockSpec((Ssz, Ssz), lambda i: (0, 0))],
        out_specs=pl.BlockSpec((nw, C, Ssz), lambda i: (i, 0, 0)),
        compiler_params=pltpu.CompilerParams(dimension_semantics=("parallel",)),
    )(q_cs, k_cs, v_cs, sa_cs, m_cs, wq_t, bq, wk_t, bk, bias)


# ----------------------------- glue helpers ----------------------------------
def depthwise_conv3x3_nhwc(x, w, b, dilation):
    """x: NHWC, w: (3,3,1,C) HWIO depthwise.  (XLA glue, not the hot path.)"""
    pad = dilation
    y = jax.lax.conv_general_dilated(
        x, w, window_strides=(1, 1), padding=((pad, pad), (pad, pad)),
        rhs_dilation=(dilation, dilation), feature_group_count=x.shape[-1],
        dimension_numbers=("NHWC", "HWIO", "NHWC"))
    return y + b


def to_windows_cs(x, ws):
    """NHWC (N,H,W,C) -> channel-second windows (N*nWin, C, ws*ws)."""
    N, Hh, Ww, C = x.shape
    x = x.reshape(N, Hh // ws, ws, Ww // ws, ws, C)
    x = jnp.transpose(x, (0, 1, 3, 5, 2, 4))         # N, h, w, C, dh, dw
    return x.reshape(N * (Hh // ws) * (Ww // ws), C, ws * ws)


def from_windows_cs(xw, N, Hh, Ww, ws):
    """(N*nWin, C, ws*ws) -> NHWC (N,H,W,C)."""
    C = xw.shape[1]
    x = xw.reshape(N, Hh // ws, Ww // ws, C, ws, ws)
    x = jnp.transpose(x, (0, 1, 4, 2, 5, 3))         # N, h, dh, w, dw, C
    return x.reshape(N, Hh, Ww, C)


def flow_warp_nhwc(x, flow):
    """Bilinear grid_sample, padding='border', align_corners=True.
    x: (N,H,W,C), flow: (N,H,W,2) with [...,0]=dx (width), [...,1]=dy."""
    N, Hh, Ww, C = x.shape
    gy, gx = jnp.meshgrid(jnp.arange(Hh, dtype=x.dtype),
                          jnp.arange(Ww, dtype=x.dtype), indexing="ij")
    vx = jnp.clip(gx[None] + flow[..., 0], 0.0, Ww - 1)
    vy = jnp.clip(gy[None] + flow[..., 1], 0.0, Hh - 1)
    x0 = jnp.floor(vx)
    y0 = jnp.floor(vy)
    wx = (vx - x0)[..., None]
    wy = (vy - y0)[..., None]
    x0i = jnp.clip(x0.astype(jnp.int32), 0, Ww - 1)
    y0i = jnp.clip(y0.astype(jnp.int32), 0, Hh - 1)
    x1i = jnp.clip(x0i + 1, 0, Ww - 1)
    y1i = jnp.clip(y0i + 1, 0, Hh - 1)
    flat = x.reshape(N, Hh * Ww, C)

    def gather(yi, xi):
        idx = (yi * Ww + xi).reshape(N, Hh * Ww, 1)
        idx = jnp.broadcast_to(idx, (N, Hh * Ww, C))
        return jnp.take_along_axis(flat, idx, axis=1).reshape(N, Hh, Ww, C)

    v00 = gather(y0i, x0i)
    v01 = gather(y0i, x1i)
    v10 = gather(y1i, x0i)
    v11 = gather(y1i, x1i)
    return (v00 * (1 - wx) * (1 - wy) + v01 * wx * (1 - wy)
            + v10 * (1 - wx) * wy + v11 * wx * wy)


# -------------------- relative position index (buffer) -----------------------
def make_relative_position_index(ws):
    coords_h = np.arange(ws)
    coords_w = np.arange(ws)
    coords = np.stack(np.meshgrid(coords_h, coords_w, indexing="ij"))
    coords_flatten = coords.reshape(2, -1)
    rel = coords_flatten[:, :, None] - coords_flatten[:, None, :]
    rel = rel.transpose(1, 2, 0).copy()
    rel[:, :, 0] += ws - 1
    rel[:, :, 1] += ws - 1
    rel[:, :, 0] *= 2 * ws - 1
    return rel.sum(-1)  # (ws*ws, ws*ws)


RPI = jnp.asarray(make_relative_position_index(WS), dtype=jnp.int32)


# ----------------------------- parameters ------------------------------------
def init_params(key, dim=DIM, ws=WS):
    cdim = dim + 4
    keys = jax.random.split(key, 32)
    n = lambda i, shape, scale=0.1: (scale * jax.random.normal(keys[i], shape)).astype(jnp.float32)
    p = {
        # attention block
        "rpb_table": n(0, ((2 * ws - 1) * (2 * ws - 1), 1), 0.02),
        "project_v_w": n(1, (dim, dim)), "project_v_b": n(2, (dim,)),
        "project_q_w": n(3, (dim, dim)), "project_q_b": n(4, (dim,)),
        "project_k_w": n(5, (dim, dim)), "project_k_b": n(6, (dim,)),
        "proj_w": n(7, (dim, dim)), "proj_b": n(8, (dim,)),
        "project_out_w": n(9, (dim, dim)), "project_out_b": n(10, (dim,)),
        # conv_sptial (depthwise, HWIO layout for NHWC lax.conv)
        "csp1_w": n(11, (3, 3, 1, dim)), "csp1_b": n(12, (dim,)),
        "csp2_w": n(13, (3, 3, 1, dim)), "csp2_b": n(14, (dim,)),
        # PredictorLG (route)
        "in_conv_w": n(15, (cdim, cdim // 4)), "in_conv_b": n(16, (cdim // 4,)),
        "ln_w": jnp.ones((cdim // 4,), jnp.float32),
        "ln_b": jnp.zeros((cdim // 4,), jnp.float32),
        "off1_w": n(17, (cdim // 4, cdim // 8)), "off1_b": n(18, (cdim // 8,)),
        "off2_w": n(19, (cdim // 8, 2)), "off2_b": n(20, (2,)),
        "mask1_w": n(21, (ws * ws, ws)), "mask1_b": n(22, (ws,)),
        "mask2_w": n(23, (ws, 2)), "mask2_b": n(24, (2,)),
        "ca_w": n(25, (cdim // 4, dim)), "ca_b": n(26, (dim,)),
        "sa_w": n(27, (3, 3, cdim // 4, 1)), "sa_b": n(28, (1,)),
    }
    # static relative-position bias (num_heads == 1): gather once, not per call
    p["rpb_bias"] = p["rpb_table"][RPI.reshape(-1)].reshape(ws * ws, ws * ws)
    return p


# -------------------------- WindowAttention_mixer ----------------------------
# TODO(synk): inference path (train_mode=False: top-k window selection with
# batch_index_select / batch_index_fill) is not implemented; train-mode only.
@jax.jit
def window_attention_mixer_forward(p, x, condition_global, gumbel_key):
    """x: (B_ori, N_ori, C); condition_global: (N_img, 2, H, W) NCHW."""
    B_ori, N_ori, C_ori = x.shape
    # raw torch .view(-1, C, H, W) (NCHW) then go channel-last for everything
    xi_nchw = x.reshape(-1, C_ori, H, W)
    Nn, C = xi_nchw.shape[0], C_ori
    x_nhwc = jnp.transpose(xi_nchw, (0, 2, 3, 1))            # (Nn, H, W, C)
    cg_nhwc = jnp.transpose(condition_global, (0, 2, 3, 1))  # (Nn, H, W, 2)

    # deformable window condition (channels = [lin over dh, lin over dw])
    lin = jnp.linspace(-1.0, 1.0, WS, dtype=x.dtype)
    cy = jnp.tile(lin, H // WS)
    cx = jnp.tile(lin, W // WS)
    cw_nhwc = jnp.stack([jnp.broadcast_to(cy[:, None], (H, W)),
                         jnp.broadcast_to(cx[None, :], (H, W))], axis=-1)

    rows = Nn * H * W
    x_rows = x_nhwc.reshape(rows, C)
    cg_rows = cg_nhwc.reshape(rows, 2)
    cw_rows = jnp.broadcast_to(cw_nhwc[None], (Nn, H, W, 2)).reshape(rows, 2)

    # ---- fused: project_v (1x1) + in_conv (1x1 + LayerNorm + LeakyReLU) ----
    w_in = p["in_conv_w"]
    v_rows, feat_rows = pallas_cond_feat(
        x_rows, cg_rows, cw_rows,
        p["project_v_w"], p["project_v_b"],
        w_in[:C], w_in[C:C + 2], w_in[C + 2:], p["in_conv_b"],
        p["ln_w"], p["ln_b"])
    cf = w_in.shape[1]                                       # cdim // 4
    v_nhwc = v_rows.reshape(Nn, H, W, C)
    feat_nhwc = feat_rows.reshape(Nn, H, W, cf)

    # ---- offsets: 1x1 -> LeakyReLU -> 1x1 -> tanh*8 (fused kernel) ----
    offsets = pallas_offsets(feat_rows, p["off1_w"], p["off1_b"],
                             p["off2_w"], p["off2_b"]).reshape(Nn, H, W, 2)

    # ---- channel attention (global pool; 2x2@2x4 -> plain jnp glue) ----
    pooled = jnp.mean(feat_nhwc, axis=(1, 2))                # (Nn, cf)
    ca = jax.nn.sigmoid(pooled @ p["ca_w"] + p["ca_b"]).reshape(Nn, 1, 1, C)

    # ---- spatial attention: 3x3 conv (XLA) + sigmoid ----
    sa = jax.lax.conv_general_dilated(
        feat_nhwc, p["sa_w"], (1, 1), ((1, 1), (1, 1)),
        dimension_numbers=("NHWC", "HWIO", "NHWC")) + p["sa_b"]
    sa = jax.nn.sigmoid(sa)                                  # (Nn, H, W, 1)

    # ---- window importance score + gumbel hard mask ----
    xm = jnp.mean(feat_nhwc, axis=-1)                        # (Nn, H, W)
    xm = xm.reshape(Nn, H // WS, WS, W // WS, WS)
    xm = jnp.transpose(xm, (0, 1, 3, 2, 4)).reshape(Nn * NWIN, S)
    pred_score = pallas_mask_score(xm, p["mask1_w"], p["mask1_b"],
                                   p["mask2_w"], p["mask2_b"])
    pred_score = pred_score.reshape(Nn, NWIN, 2)
    g = jax.random.gumbel(gumbel_key, pred_score.shape, dtype=pred_score.dtype)
    y = jax.nn.softmax(pred_score + g, axis=-1)
    hard = jax.nn.one_hot(jnp.argmax(y, axis=-1), 2, dtype=y.dtype)
    mask_mixer = hard[:, :, 0:1]                             # (Nn, NWIN, 1)

    # ---- q / k (deformable) ----
    q_nhwc = x_nhwc
    k_nhwc = x_nhwc + flow_warp_nhwc(x_nhwc, offsets)

    # ---- windows in channel-second layout: (BW, C, S), S on lanes ----
    q_cs = to_windows_cs(q_nhwc, WS)
    k_cs = to_windows_cs(k_nhwc, WS)
    v_cs = to_windows_cs(v_nhwc, WS)
    sa_cs = to_windows_cs(sa, WS)                            # (BW, 1, S)
    m_cs = mask_mixer.reshape(Nn * NWIN, 1, 1)

    # ---- fused masking + q/k projection + attention (+ v2) ----
    out_cs = pallas_window_attention(
        q_cs, k_cs, v_cs, sa_cs, m_cs,
        p["project_q_w"].T, p["project_q_b"].reshape(C, 1),
        p["project_k_w"].T, p["project_k_b"].reshape(C, 1),
        p["rpb_bias"], n_img=Nn)
    attn_out = from_windows_cs(out_cs, Nn, H, W, WS)         # NHWC

    # ---- conv_sptial (depthwise, XLA) + GELU * ca + residual ----
    cs1 = depthwise_conv3x3_nhwc(attn_out, p["csp1_w"], p["csp1_b"], 1)
    cs2 = depthwise_conv3x3_nhwc(cs1, p["csp2_w"], p["csp2_b"], 2)
    out = jax.nn.gelu(cs2, approximate=False) * ca + attn_out

    # ---- project_out (1x1 conv) ----
    y_rows = pallas_linear(out.reshape(rows, C),
                           p["project_out_w"], p["project_out_b"])
    y_nchw = jnp.transpose(y_rows.reshape(Nn, H, W, C), (0, 3, 1, 2))

    # ---- raw torch .view(B_ori, N_ori, C) of NCHW, then proj Linear ----
    xo = pallas_linear(y_nchw.reshape(B_ori * N_ori, C_ori),
                       p["proj_w"], p["proj_b"])
    xo = xo.reshape(B_ori, N_ori, C_ori)
    # proj_drop has p=0.0 -> identity
    return xo, mask_mixer


# ----------------------------------- main ------------------------------------
if __name__ == "__main__":
    key = jax.random.PRNGKey(0)
    k_x, k_cond, k_gumbel, k_params = jax.random.split(key, 4)

    x = jax.random.normal(k_x, (B_ORI, N_ORI, DIM), dtype=jnp.float32)
    # condition_global has 2 channels so that cdim = dim + 2 + 2 = dim + k (k=4)
    condition_global = jax.random.normal(k_cond, (B_ORI, 2, H, W),
                                         dtype=jnp.float32)
    params = init_params(k_params)

    out, mask_mixer = window_attention_mixer_forward(
        params, x, condition_global, k_gumbel)
    out = jax.block_until_ready(out)
    mask_mixer = jax.block_until_ready(mask_mixer)

    assert out.shape == (B_ORI, N_ORI, DIM)
    assert mask_mixer.shape == (B_ORI, NWIN, 1)
    assert bool(jnp.all(jnp.isfinite(out)))
    print("KERNEL_OK")
</pallas_src>

<mosaic_0001>
module attributes {stable_mosaic.version = 11 : i64} {
  func.func @_cond_feat_kernel(%arg0: memref<512x4xf32, #tpu.memory_space<vmem>>, %arg1: memref<512x2xf32, #tpu.memory_space<vmem>>, %arg2: memref<512x2xf32, #tpu.memory_space<vmem>>, %arg3: memref<4x4xf32, #tpu.memory_space<vmem>>, %arg4: memref<1x4xf32, #tpu.memory_space<vmem>>, %arg5: memref<4x2xf32, #tpu.memory_space<vmem>>, %arg6: memref<2x2xf32, #tpu.memory_space<vmem>>, %arg7: memref<2x2xf32, #tpu.memory_space<vmem>>, %arg8: memref<1x2xf32, #tpu.memory_space<vmem>>, %arg9: memref<1x2xf32, #tpu.memory_space<vmem>>, %arg10: memref<1x2xf32, #tpu.memory_space<vmem>>, %arg11: memref<512x4xf32, #tpu.memory_space<vmem>>, %arg12: memref<512x2xf32, #tpu.memory_space<vmem>>) attributes {dimension_semantics = [], scalar_prefetch = 0 : i64, scratch_operands = 0 : i64, tpu.core_type = #tpu.core_type<tc>} {
    %c0 = arith.constant 0 : index
    %c0_0 = arith.constant 0 : index
    %0 = vector.load %arg0[%c0, %c0_0] : memref<512x4xf32, #tpu.memory_space<vmem>>, vector<512x4xf32>
    %c0_1 = arith.constant 0 : index
    %c0_2 = arith.constant 0 : index
    %1 = vector.load %arg3[%c0_1, %c0_2] : memref<4x4xf32, #tpu.memory_space<vmem>>, vector<4x4xf32>
    %cst = arith.constant dense<0.000000e+00> : vector<512x4xf32>
    %2 = tpu.matmul %0, %1, %cst {dimension_numbers = #tpu.dot_dimension_numbers<[1], [0], [0], [1], [0, 0, 1, 1], [], []>} : vector<512x4xf32>, vector<4x4xf32>, vector<512x4xf32> -> vector<512x4xf32>
    %c0_3 = arith.constant 0 : index
    %c0_4 = arith.constant 0 : index
    %3 = vector.load %arg4[%c0_3, %c0_4] : memref<1x4xf32, #tpu.memory_space<vmem>>, vector<1x4xf32>
    %4 = vector.broadcast %3 : vector<1x4xf32> to vector<512x4xf32>
    %5 = arith.addf %2, %4 : vector<512x4xf32>
    %c0_5 = arith.constant 0 : index
    %c0_6 = arith.constant 0 : index
    %6 = vector.load %arg11[%c0_5, %c0_6] : memref<512x4xf32, #tpu.memory_space<vmem>>, vector<512x4xf32>
    tpu.vector_store %arg11[%c0_5, %c0_6], %5 {strides = array<i32>} : memref<512x4xf32, #tpu.memory_space<vmem>>, vector<512x4xf32>,
    %c0_7 = arith.constant 0 : index
    %c0_8 = arith.constant 0 : index
    %7 = vector.load %arg5[%c0_7, %c0_8] : memref<4x2xf32, #tpu.memory_space<vmem>>, vector<4x2xf32>
    %cst_9 = arith.constant dense<0.000000e+00> : vector<512x2xf32>
    %8 = tpu.matmul %5, %7, %cst_9 {dimension_numbers = #tpu.dot_dimension_numbers<[1], [0], [0], [1], [0, 0, 1, 1], [], []>} : vector<512x4xf32>, vector<4x2xf32>, vector<512x2xf32> -> vector<512x2xf32>
    %c0_10 = arith.constant 0 : index
    %c0_11 = arith.constant 0 : index
    %9 = vector.load %arg1[%c0_10, %c0_11] : memref<512x2xf32, #tpu.memory_space<vmem>>, vector<512x2xf32>
    %c0_12 = arith.constant 0 : index
    %c0_13 = arith.constant 0 : index
    %10 = vector.load %arg6[%c0_12, %c0_13] : memref<2x2xf32, #tpu.memory_space<vmem>>, vector<2x2xf32>
    %cst_14 = arith.constant dense<0.000000e+00> : vector<512x2xf32>
    %11 = tpu.matmul %9, %10, %cst_14 {dimension_numbers = #tpu.dot_dimension_numbers<[1], [0], [0], [1], [0, 0, 1, 1], [], []>} : vector<512x2xf32>, vector<2x2xf32>, vector<512x2xf32> -> vector<512x2xf32>
    %12 = arith.addf %8, %11 : vector<512x2xf32>
    %c0_15 = arith.constant 0 : index
    %c0_16 = arith.constant 0 : index
    %13 = vector.load %arg2[%c0_15, %c0_16] : memref<512x2xf32, #tpu.memory_space<vmem>>, vector<512x2xf32>
    %c0_17 = arith.constant 0 : index
    %c0_18 = arith.constant 0 : index
    %14 = vector.load %arg7[%c0_17, %c0_18] : memref<2x2xf32, #tpu.memory_space<vmem>>, vector<2x2xf32>
    %cst_19 = arith.constant dense<0.000000e+00> : vector<512x2xf32>
    %15 = tpu.matmul %13, %14, %cst_19 {dimension_numbers = #tpu.dot_dimension_numbers<[1], [0], [0], [1], [0, 0, 1, 1], [], []>} : vector<512x2xf32>, vector<2x2xf32>, vector<512x2xf32> -> vector<512x2xf32>
    %16 = arith.addf %12, %15 : vector<512x2xf32>
    %c0_20 = arith.constant 0 : index
    %c0_21 = arith.constant 0 : index
    %17 = vector.load %arg8[%c0_20, %c0_21] : memref<1x2xf32, #tpu.memory_space<vmem>>, vector<1x2xf32>
    %18 = vector.broadcast %17 : vector<1x2xf32> to vector<512x2xf32>
    %19 = arith.addf %16, %18 : vector<512x2xf32>
    %cst_22 = arith.constant dense<0.000000e+00> : vector<512xf32>
    %20 = vector.multi_reduction <add>, %19, %cst_22 [1] : vector<512x2xf32> to vector<512xf32>
    %21 = vector.shape_cast %20 : vector<512xf32> to vector<512x1xf32>
    %cst_23 = arith.constant 2.000000e+00 : f32
    %22 = vector.broadcast %cst_23 : f32 to vector<512x1xf32>
    %23 = arith.divf %21, %22 : vector<512x1xf32>
    %24 = vector.broadcast %23 : vector<512x1xf32> to vector<512x2xf32>
    %25 = arith.subf %19, %24 : vector<512x2xf32>
    %26 = arith.mulf %25, %25 : vector<512x2xf32>
    %cst_24 = arith.constant dense<0.000000e+00> : vector<512xf32>
    %27 = vector.multi_reduction <add>, %26, %cst_24 [1] : vector<512x2xf32> to vector<512xf32>
    %28 = vector.shape_cast %27 : vector<512xf32> to vector<512x1xf32>
    %cst_25 = arith.constant 2.000000e+00 : f32
    %29 = vector.broadcast %cst_25 : f32 to vector<512x1xf32>
    %30 = arith.divf %28, %29 : vector<512x1xf32>
    %31 = vector.broadcast %23 : vector<512x1xf32> to vector<512x2xf32>
    %32 = arith.subf %19, %31 : vector<512x2xf32>
    %cst_26 = arith.constant 9.99999997E-7 : f32
    %33 = vector.broadcast %cst_26 : f32 to vector<512x1xf32>
    %34 = arith.addf %30, %33 : vector<512x1xf32>
    %35 = math.rsqrt %34 : vector<512x1xf32>
    %36 = vector.broadcast %35 : vector<512x1xf32> to vector<512x2xf32>
    %37 = arith.mulf %32, %36 : vector<512x2xf32>
    %c0_27 = arith.constant 0 : index
    %c0_28 = arith.constant 0 : index
    %38 = vector.load %arg9[%c0_27, %c0_28] : memref<1x2xf32, #tpu.memory_space<vmem>>, vector<1x2xf32>
    %39 = vector.broadcast %38 : vector<1x2xf32> to vector<512x2xf32>
    %40 = arith.mulf %39, %37 : vector<512x2xf32>
    %c0_29 = arith.constant 0 : index
    %c0_30 = arith.constant 0 : index
    %41 = vector.load %arg10[%c0_29, %c0_30] : memref<1x2xf32, #tpu.memory_space<vmem>>, vector<1x2xf32>
    %42 = vector.broadcast %41 : vector<1x2xf32> to vector<512x2xf32>
    %43 = arith.addf %40, %42 : vector<512x2xf32>
    %cst_31 = arith.constant 0.000000e+00 : f32
    %44 = vector.broadcast %cst_31 : f32 to vector<512x2xf32>
    %45 = arith.cmpf oge, %43, %44 : vector<512x2xf32>
    %cst_32 = arith.constant 1.000000e-01 : f32
    %46 = vector.broadcast %cst_32 : f32 to vector<512x2xf32>
    %47 = arith.mulf %46, %43 : vector<512x2xf32>
    %48 = arith.select %45, %43, %47 : vector<512x2xi1>, vector<512x2xf32>
    %c0_33 = arith.constant 0 : index
    %c0_34 = arith.constant 0 : index
    %49 = vector.load %arg12[%c0_33, %c0_34] : memref<512x2xf32, #tpu.memory_space<vmem>>, vector<512x2xf32>
    tpu.vector_store %arg12[%c0_33, %c0_34], %48 {strides = array<i32>} : memref<512x2xf32, #tpu.memory_space<vmem>>, vector<512x2xf32>,
    return
  }
}

module attributes {stable_mosaic.version = 11 : i64} {
  func.func @_mask_score_kernel(%arg0: memref<8x64xf32, #tpu.memory_space<vmem>>, %arg1: memref<64x8xf32, #tpu.memory_space<vmem>>, %arg2: memref<1x8xf32, #tpu.memory_space<vmem>>, %arg3: memref<8x2xf32, #tpu.memory_space<vmem>>, %arg4: memref<1x2xf32, #tpu.memory_space<vmem>>, %arg5: memref<8x2xf32, #tpu.memory_space<vmem>>) attributes {dimension_semantics = [], scalar_prefetch = 0 : i64, scratch_operands = 0 : i64, tpu.core_type = #tpu.core_type<tc>} {
    %c0 = arith.constant 0 : index
    %c0_0 = arith.constant 0 : index
    %0 = vector.load %arg0[%c0, %c0_0] : memref<8x64xf32, #tpu.memory_space<vmem>>, vector<8x64xf32>
    %c0_1 = arith.constant 0 : index
    %c0_2 = arith.constant 0 : index
    %1 = vector.load %arg1[%c0_1, %c0_2] : memref<64x8xf32, #tpu.memory_space<vmem>>, vector<64x8xf32>
    %cst = arith.constant dense<0.000000e+00> : vector<8x8xf32>
    %2 = tpu.matmul %0, %1, %cst {dimension_numbers = #tpu.dot_dimension_numbers<[1], [0], [0], [1], [0, 0, 1, 1], [], []>} : vector<8x64xf32>, vector<64x8xf32>, vector<8x8xf32> -> vector<8x8xf32>
    %c0_3 = arith.constant 0 : index
    %c0_4 = arith.constant 0 : index
    %3 = vector.load %arg2[%c0_3, %c0_4] : memref<1x8xf32, #tpu.memory_space<vmem>>, vector<1x8xf32>
    %4 = vector.broadcast %3 : vector<1x8xf32> to vector<8x8xf32>
    %5 = arith.addf %2, %4 : vector<8x8xf32>
    %cst_5 = arith.constant 0.000000e+00 : f32
    %6 = vector.broadcast %cst_5 : f32 to vector<8x8xf32>
    %7 = arith.cmpf oge, %5, %6 : vector<8x8xf32>
    %cst_6 = arith.constant 1.000000e-01 : f32
    %8 = vector.broadcast %cst_6 : f32 to vector<8x8xf32>
    %9 = arith.mulf %8, %5 : vector<8x8xf32>
    %10 = arith.select %7, %5, %9 : vector<8x8xi1>, vector<8x8xf32>
    %c0_7 = arith.constant 0 : index
    %c0_8 = arith.constant 0 : index
    %11 = vector.load %arg3[%c0_7, %c0_8] : memref<8x2xf32, #tpu.memory_space<vmem>>, vector<8x2xf32>
    %cst_9 = arith.constant dense<0.000000e+00> : vector<8x2xf32>
    %12 = tpu.matmul %10, %11, %cst_9 {dimension_numbers = #tpu.dot_dimension_numbers<[1], [0], [0], [1], [0, 0, 1, 1], [], []>} : vector<8x8xf32>, vector<8x2xf32>, vector<8x2xf32> -> vector<8x2xf32>
    %c0_10 = arith.constant 0 : index
    %c0_11 = arith.constant 0 : index
    %13 = vector.load %arg4[%c0_10, %c0_11] : memref<1x2xf32, #tpu.memory_space<vmem>>, vector<1x2xf32>
    %14 = vector.broadcast %13 : vector<1x2xf32> to vector<8x2xf32>
    %15 = arith.addf %12, %14 : vector<8x2xf32>
    %cst_12 = arith.constant dense<0xFF800000> : vector<8xf32>
    %16 = vector.multi_reduction <maximumf>, %15, %cst_12 [1] : vector<8x2xf32> to vector<8xf32>
    %17 = vector.shape_cast %16 : vector<8xf32> to vector<8x1xf32>
    %18 = vector.broadcast %17 : vector<8x1xf32> to vector<8x2xf32>
    %19 = arith.subf %15, %18 : vector<8x2xf32>
    %20 = math.exp %19 : vector<8x2xf32>
    %cst_13 = arith.constant dense<0.000000e+00> : vector<8xf32>
    %21 = vector.multi_reduction <add>, %20, %cst_13 [1] : vector<8x2xf32> to vector<8xf32>
    %22 = vector.shape_cast %21 : vector<8xf32> to vector<8x1xf32>
    %23 = vector.broadcast %22 : vector<8x1xf32> to vector<8x2xf32>
    %24 = arith.divf %20, %23 : vector<8x2xf32>
    %c0_14 = arith.constant 0 : index
    %c0_15 = arith.constant 0 : index
    %25 = vector.load %arg5[%c0_14, %c0_15] : memref<8x2xf32, #tpu.memory_space<vmem>>, vector<8x2xf32>
    tpu.vector_store %arg5[%c0_14, %c0_15], %24 {strides = array<i32>} : memref<8x2xf32, #tpu.memory_space<vmem>>, vector<8x2xf32>,
    return
  }
}

module attributes {stable_mosaic.version = 11 : i64} {
  func.func @_offsets_kernel(%arg0: memref<512x2xf32, #tpu.memory_space<vmem>>, %arg1: memref<2x1xf32, #tpu.memory_space<vmem>>, %arg2: memref<1x1xf32, #tpu.memory_space<vmem>>, %arg3: memref<1x2xf32, #tpu.memory_space<vmem>>, %arg4: memref<1x2xf32, #tpu.memory_space<vmem>>, %arg5: memref<512x2xf32, #tpu.memory_space<vmem>>) attributes {dimension_semantics = [], scalar_prefetch = 0 : i64, scratch_operands = 0 : i64, tpu.core_type = #tpu.core_type<tc>} {
    %c0 = arith.constant 0 : index
    %c0_0 = arith.constant 0 : index
    %0 = vector.load %arg0[%c0, %c0_0] : memref<512x2xf32, #tpu.memory_space<vmem>>, vector<512x2xf32>
    %c0_1 = arith.constant 0 : index
    %c0_2 = arith.constant 0 : index
    %1 = vector.load %arg1[%c0_1, %c0_2] : memref<2x1xf32, #tpu.memory_space<vmem>>, vector<2x1xf32>
    %cst = arith.constant dense<0.000000e+00> : vector<512x1xf32>
    %2 = tpu.matmul %0, %1, %cst {dimension_numbers = #tpu.dot_dimension_numbers<[1], [0], [0], [1], [0, 0, 1, 1], [], []>} : vector<512x2xf32>, vector<2x1xf32>, vector<512x1xf32> -> vector<512x1xf32>
    %c0_3 = arith.constant 0 : index
    %c0_4 = arith.constant 0 : index
    %3 = vector.load %arg2[%c0_3, %c0_4] : memref<1x1xf32, #tpu.memory_space<vmem>>, vector<1x1xf32>
    %4 = vector.broadcast %3 : vector<1x1xf32> to vector<512x1xf32>
    %5 = arith.addf %2, %4 : vector<512x1xf32>
    %cst_5 = arith.constant 0.000000e+00 : f32
    %6 = vector.broadcast %cst_5 : f32 to vector<512x1xf32>
    %7 = arith.cmpf oge, %5, %6 : vector<512x1xf32>
    %cst_6 = arith.constant 1.000000e-01 : f32
    %8 = vector.broadcast %cst_6 : f32 to vector<512x1xf32>
    %9 = arith.mulf %8, %5 : vector<512x1xf32>
    %10 = arith.select %7, %5, %9 : vector<512x1xi1>, vector<512x1xf32>
    %c0_7 = arith.constant 0 : index
    %c0_8 = arith.constant 0 : index
    %11 = vector.load %arg3[%c0_7, %c0_8] : memref<1x2xf32, #tpu.memory_space<vmem>>, vector<1x2xf32>
    %cst_9 = arith.constant dense<0.000000e+00> : vector<512x2xf32>
    %12 = tpu.matmul %10, %11, %cst_9 {dimension_numbers = #tpu.dot_dimension_numbers<[1], [0], [0], [1], [0, 0, 1, 1], [], []>} : vector<512x1xf32>, vector<1x2xf32>, vector<512x2xf32> -> vector<512x2xf32>
    %c0_10 = arith.constant 0 : index
    %c0_11 = arith.constant 0 : index
    %13 = vector.load %arg4[%c0_10, %c0_11] : memref<1x2xf32, #tpu.memory_space<vmem>>, vector<1x2xf32>
    %14 = vector.broadcast %13 : vector<1x2xf32> to vector<512x2xf32>
    %15 = arith.addf %12, %14 : vector<512x2xf32>
    %16 = math.tanh %15 : vector<512x2xf32>
    %cst_12 = arith.constant 8.000000e+00 : f32
    %17 = vector.broadcast %cst_12 : f32 to vector<512x2xf32>
    %18 = arith.mulf %16, %17 : vector<512x2xf32>
    %c0_13 = arith.constant 0 : index
    %c0_14 = arith.constant 0 : index
    %19 = vector.load %arg5[%c0_13, %c0_14] : memref<512x2xf32, #tpu.memory_space<vmem>>, vector<512x2xf32>
    tpu.vector_store %arg5[%c0_13, %c0_14], %18 {strides = array<i32>} : memref<512x2xf32, #tpu.memory_space<vmem>>, vector<512x2xf32>,
    return
  }
}

module attributes {stable_mosaic.version = 11 : i64} {
  func.func @_window_attn_kernel(%arg0: i32, %arg1: memref<4x4x64xf32, #tpu.memory_space<vmem>>, %arg2: memref<4x4x64xf32, #tpu.memory_space<vmem>>, %arg3: memref<4x4x64xf32, #tpu.memory_space<vmem>>, %arg4: memref<4x1x64xf32, #tpu.memory_space<vmem>>, %arg5: memref<4x1x1xf32, #tpu.memory_space<vmem>>, %arg6: memref<4x4xf32, #tpu.memory_space<vmem>>, %arg7: memref<4x1xf32, #tpu.memory_space<vmem>>, %arg8: memref<4x4xf32, #tpu.memory_space<vmem>>, %arg9: memref<4x1xf32, #tpu.memory_space<vmem>>, %arg10: memref<64x64xf32, #tpu.memory_space<vmem>>, %arg11: memref<4x4x64xf32, #tpu.memory_space<vmem>>) attributes {dimension_semantics = [#tpu.dimension_semantics<parallel>], iteration_bounds = array<i64: 2>, scalar_prefetch = 0 : i64, scratch_operands = 0 : i64, tpu.core_type = #tpu.core_type<tc>, window_params = [{transform_indices = @transform_0, window_bounds = array<i64: 4, 4, 64>}, {transform_indices = @transform_1, window_bounds = array<i64: 4, 4, 64>}, {transform_indices = @transform_2, window_bounds = array<i64: 4, 4, 64>}, {transform_indices = @transform_3, window_bounds = array<i64: 4, 1, 64>}, {transform_indices = @transform_4, window_bounds = array<i64: 4, 1, 1>}, {pipeline_mode = #tpu.pipeline_mode<synchronous>, transform_indices = @transform_5, window_bounds = array<i64: 4, 4>}, {pipeline_mode = #tpu.pipeline_mode<synchronous>, transform_indices = @transform_6, window_bounds = array<i64: 4, 1>}, {pipeline_mode = #tpu.pipeline_mode<synchronous>, transform_indices = @transform_7, window_bounds = array<i64: 4, 4>}, {pipeline_mode = #tpu.pipeline_mode<synchronous>, transform_indices = @transform_8, window_bounds = array<i64: 4, 1>}, {pipeline_mode = #tpu.pipeline_mode<synchronous>, transform_indices = @transform_9, window_bounds = array<i64: 64, 64>}, {transform_indices = @transform_10, window_bounds = array<i64: 4, 4, 64>}]} {
    %c0 = arith.constant 0 : index
    %c0_0 = arith.constant 0 : index
    %c0_1 = arith.constant 0 : index
    %0 = vector.load %arg5[%c0, %c0_0, %c0_1] : memref<4x1x1xf32, #tpu.memory_space<vmem>>, vector<4x1x1xf32>
    %c0_2 = arith.constant 0 : index
    %c0_3 = arith.constant 0 : index
    %c0_4 = arith.constant 0 : index
    %1 = vector.load %arg1[%c0_2, %c0_3, %c0_4] : memref<4x4x64xf32, #tpu.memory_space<vmem>>, vector<4x4x64xf32>
    %2 = vector.broadcast %0 : vector<4x1x1xf32> to vector<4x4x64xf32>
    %3 = arith.mulf %1, %2 : vector<4x4x64xf32>
    %c0_5 = arith.constant 0 : index
    %c0_6 = arith.constant 0 : index
    %c0_7 = arith.constant 0 : index
    %4 = vector.load %arg2[%c0_5, %c0_6, %c0_7] : memref<4x4x64xf32, #tpu.memory_space<vmem>>, vector<4x4x64xf32>
    %5 = vector.broadcast %0 : vector<4x1x1xf32> to vector<4x4x64xf32>
    %6 = arith.mulf %4, %5 : vector<4x4x64xf32>
    %c0_8 = arith.constant 0 : index
    %c0_9 = arith.constant 0 : index
    %c0_10 = arith.constant 0 : index
    %7 = vector.load %arg3[%c0_8, %c0_9, %c0_10] : memref<4x4x64xf32, #tpu.memory_space<vmem>>, vector<4x4x64xf32>
    %8 = vector.broadcast %0 : vector<4x1x1xf32> to vector<4x4x64xf32>
    %9 = arith.mulf %7, %8 : vector<4x4x64xf32>
    %c0_11 = arith.constant 0 : index
    %c0_12 = arith.constant 0 : index
    %c0_13 = arith.constant 0 : index
    %10 = vector.load %arg4[%c0_11, %c0_12, %c0_13] : memref<4x1x64xf32, #tpu.memory_space<vmem>>, vector<4x1x64xf32>
    %11 = vector.broadcast %10 : vector<4x1x64xf32> to vector<4x4x64xf32>
    %12 = arith.mulf %7, %11 : vector<4x4x64xf32>
    %cst = arith.constant 1.000000e+00 : f32
    %13 = vector.broadcast %cst : f32 to vector<4x1x1xf32>
    %14 = arith.subf %13, %0 : vector<4x1x1xf32>
    %15 = vector.broadcast %14 : vector<4x1x1xf32> to vector<4x4x64xf32>
    %16 = arith.mulf %12, %15 : vector<4x4x64xf32>
    %c0_14 = arith.constant 0 : index
    %c0_15 = arith.constant 0 : index
    %17 = vector.load %arg6[%c0_14, %c0_15] : memref<4x4xf32, #tpu.memory_space<vmem>>, vector<4x4xf32>
    %18 = vector.shape_cast %17 : vector<4x4xf32> to vector<1x4x4xf32>
    %19 = vector.shape_cast %18 : vector<1x4x4xf32> to vector<1x4x4xf32>
    %20 = vector.broadcast %19 : vector<1x4x4xf32> to vector<4x4x4xf32>
    %c0_16 = arith.constant 0 : index
    %c0_17 = arith.constant 0 : index
    %21 = vector.load %arg8[%c0_16, %c0_17] : memref<4x4xf32, #tpu.memory_space<vmem>>, vector<4x4xf32>
    %22 = vector.shape_cast %21 : vector<4x4xf32> to vector<1x4x4xf32>
    %23 = vector.shape_cast %22 : vector<1x4x4xf32> to vector<1x4x4xf32>
    %24 = vector.broadcast %23 : vector<1x4x4xf32> to vector<4x4x4xf32>
    "tpu.trace_start"() <{level = 10 : i32, message = "boi,bis->bos"}> : () -> ()
    %cst_18 = arith.constant dense<0.000000e+00> : vector<4x4x64xf32>
    %25 = tpu.matmul %20, %3, %cst_18 {dimension_numbers = #tpu.dot_dimension_numbers<[2], [1], [1], [2], [0, 0, 0, 1, 1, 2], [0], [0]>} : vector<4x4x4xf32>, vector<4x4x64xf32>, vector<4x4x64xf32> -> vector<4x4x64xf32>
    "tpu.trace_stop"() : () -> ()
    %c0_19 = arith.constant 0 : index
    %c0_20 = arith.constant 0 : index
    %26 = vector.load %arg7[%c0_19, %c0_20] : memref<4x1xf32, #tpu.memory_space<vmem>>, vector<4x1xf32>
    %27 = vector.shape_cast %26 : vector<4x1xf32> to vector<1x4x1xf32>
    %28 = vector.broadcast %27 : vector<1x4x1xf32> to vector<4x4x64xf32>
    %29 = arith.addf %25, %28 : vector<4x4x64xf32>
    "tpu.trace_start"() <{level = 10 : i32, message = "boi,bis->bos"}> : () -> ()
    %cst_21 = arith.constant dense<0.000000e+00> : vector<4x4x64xf32>
    %30 = tpu.matmul %24, %6, %cst_21 {dimension_numbers = #tpu.dot_dimension_numbers<[2], [1], [1], [2], [0, 0, 0, 1, 1, 2], [0], [0]>} : vector<4x4x4xf32>, vector<4x4x64xf32>, vector<4x4x64xf32> -> vector<4x4x64xf32>
    "tpu.trace_stop"() : () -> ()
    %c0_22 = arith.constant 0 : index
    %c0_23 = arith.constant 0 : index
    %31 = vector.load %arg9[%c0_22, %c0_23] : memref<4x1xf32, #tpu.memory_space<vmem>>, vector<4x1xf32>
    %32 = vector.shape_cast %31 : vector<4x1xf32> to vector<1x4x1xf32>
    %33 = vector.broadcast %32 : vector<1x4x1xf32> to vector<4x4x64xf32>
    %34 = arith.addf %30, %33 : vector<4x4x64xf32>
    "tpu.trace_start"() <{level = 10 : i32, message = "bdq,bdk->bqk"}> : () -> ()
    %cst_24 = arith.constant dense<0.000000e+00> : vector<4x64x64xf32>
    %35 = tpu.matmul %29, %34, %cst_24 {dimension_numbers = #tpu.dot_dimension_numbers<[1], [1], [2], [2], [0, 0, 0, 2, 1, 2], [0], [0]>} : vector<4x4x64xf32>, vector<4x4x64xf32>, vector<4x64x64xf32> -> vector<4x64x64xf32>
    "tpu.trace_stop"() : () -> ()
    %c0_25 = arith.constant 0 : index
    %c0_26 = arith.constant 0 : index
    %36 = vector.load %arg10[%c0_25, %c0_26] : memref<64x64xf32, #tpu.memory_space<vmem>>, vector<64x64xf32>
    %37 = vector.shape_cast %36 : vector<64x64xf32> to vector<1x64x64xf32>
    %38 = vector.broadcast %37 : vector<1x64x64xf32> to vector<4x64x64xf32>
    %39 = arith.addf %35, %38 : vector<4x64x64xf32>
    %cst_27 = arith.constant dense<0xFF800000> : vector<4x64xf32>
    %40 = vector.multi_reduction <maximumf>, %39, %cst_27 [2] : vector<4x64x64xf32> to vector<4x64xf32>
    %41 = vector.shape_cast %40 : vector<4x64xf32> to vector<4x64x1xf32>
    %42 = vector.broadcast %41 : vector<4x64x1xf32> to vector<4x64x64xf32>
    %43 = arith.subf %39, %42 : vector<4x64x64xf32>
    %44 = math.exp %43 : vector<4x64x64xf32>
    %cst_28 = arith.constant dense<0.000000e+00> : vector<4x64xf32>
    %45 = vector.multi_reduction <add>, %44, %cst_28 [2] : vector<4x64x64xf32> to vector<4x64xf32>
    %46 = vector.shape_cast %45 : vector<4x64xf32> to vector<4x64x1xf32>
    %47 = tpu.reciprocal %46 {approx = true} : vector<4x64x1xf32> -> vector<4x64x1xf32>
    %48 = vector.broadcast %47 : vector<4x64x1xf32> to vector<4x64x64xf32>
    %49 = arith.mulf %44, %48 : vector<4x64x64xf32>
    "tpu.trace_start"() <{level = 10 : i32, message = "bck,bqk->bcq"}> : () -> ()
    %cst_29 = arith.constant dense<0.000000e+00> : vector<4x4x64xf32>
    %50 = tpu.matmul %9, %49, %cst_29 {dimension_numbers = #tpu.dot_dimension_numbers<[2], [2], [1], [1], [0, 0, 0, 1, 1, 1], [0], [0]>} : vector<4x4x64xf32>, vector<4x64x64xf32>, vector<4x4x64xf32> -> vector<4x4x64xf32>
    "tpu.trace_stop"() : () -> ()
    %51 = arith.addf %50, %16 : vector<4x4x64xf32>
    %c0_30 = arith.constant 0 : index
    %c0_31 = arith.constant 0 : index
    %c0_32 = arith.constant 0 : index
    %52 = vector.load %arg11[%c0_30, %c0_31, %c0_32] : memref<4x4x64xf32, #tpu.memory_space<vmem>>, vector<4x4x64xf32>
    tpu.vector_store %arg11[%c0_30, %c0_31, %c0_32], %51 {strides = array<i32>} : memref<4x4x64xf32, #tpu.memory_space<vmem>>, vector<4x4x64xf32>,
    return
  }
  func.func @transform_0(%arg0: i32) -> (i32, i32, i32) {
    %c0_i32 = arith.constant 0 : i32
    %c0_i32_0 = arith.constant 0 : i32
    %c0_i32_1 = arith.constant 0 : i32
    return %arg0, %c0_i32, %c0_i32_0 : i32, i32, i32
  }
  func.func @transform_1(%arg0: i32) -> (i32, i32, i32) {
    %c0_i32 = arith.constant 0 : i32
    %c0_i32_0 = arith.constant 0 : i32
    %c0_i32_1 = arith.constant 0 : i32
    return %arg0, %c0_i32, %c0_i32_0 : i32, i32, i32
  }
  func.func @transform_2(%arg0: i32) -> (i32, i32, i32) {
    %c0_i32 = arith.constant 0 : i32
    %c0_i32_0 = arith.constant 0 : i32
    %c0_i32_1 = arith.constant 0 : i32
    return %arg0, %c0_i32, %c0_i32_0 : i32, i32, i32
  }
  func.func @transform_3(%arg0: i32) -> (i32, i32, i32) {
    %c0_i32 = arith.constant 0 : i32
    %c0_i32_0 = arith.constant 0 : i32
    %c0_i32_1 = arith.constant 0 : i32
    return %arg0, %c0_i32, %c0_i32_0 : i32, i32, i32
  }
  func.func @transform_4(%arg0: i32) -> (i32, i32, i32) {
    %c0_i32 = arith.constant 0 : i32
    %c0_i32_0 = arith.constant 0 : i32
    %c0_i32_1 = arith.constant 0 : i32
    return %arg0, %c0_i32, %c0_i32_0 : i32, i32, i32
  }
  func.func @transform_5(%arg0: i32) -> (i32, i32) {
    %c0_i32 = arith.constant 0 : i32
    %c0_i32_0 = arith.constant 0 : i32
    %c0_i32_1 = arith.constant 0 : i32
    return %c0_i32, %c0_i32_0 : i32, i32
  }
  func.func @transform_6(%arg0: i32) -> (i32, i32) {
    %c0_i32 = arith.constant 0 : i32
    %c0_i32_0 = arith.constant 0 : i32
    %c0_i32_1 = arith.constant 0 : i32
    return %c0_i32, %c0_i32_0 : i32, i32
  }
  func.func @transform_7(%arg0: i32) -> (i32, i32) {
    %c0_i32 = arith.constant 0 : i32
    %c0_i32_0 = arith.constant 0 : i32
    %c0_i32_1 = arith.constant 0 : i32
    return %c0_i32, %c0_i32_0 : i32, i32
  }
  func.func @transform_8(%arg0: i32) -> (i32, i32) {
    %c0_i32 = arith.constant 0 : i32
    %c0_i32_0 = arith.constant 0 : i32
    %c0_i32_1 = arith.constant 0 : i32
    return %c0_i32, %c0_i32_0 : i32, i32
  }
  func.func @transform_9(%arg0: i32) -> (i32, i32) {
    %c0_i32 = arith.constant 0 : i32
    %c0_i32_0 = arith.constant 0 : i32
    %c0_i32_1 = arith.constant 0 : i32
    return %c0_i32, %c0_i32_0 : i32, i32
  }
  func.func @transform_10(%arg0: i32) -> (i32, i32, i32) {
    %c0_i32 = arith.constant 0 : i32
    %c0_i32_0 = arith.constant 0 : i32
    %c0_i32_1 = arith.constant 0 : i32
    return %arg0, %c0_i32, %c0_i32_0 : i32, i32, i32
  }
}

module attributes {stable_mosaic.version = 11 : i64} {
  func.func @_linear_kernel(%arg0: memref<512x4xf32, #tpu.memory_space<vmem>>, %arg1: memref<4x4xf32, #tpu.memory_space<vmem>>, %arg2: memref<1x4xf32, #tpu.memory_space<vmem>>, %arg3: memref<512x4xf32, #tpu.memory_space<vmem>>) attributes {dimension_semantics = [], scalar_prefetch = 0 : i64, scratch_operands = 0 : i64, tpu.core_type = #tpu.core_type<tc>} {
    %c0 = arith.constant 0 : index
    %c0_0 = arith.constant 0 : index
    %0 = vector.load %arg0[%c0, %c0_0] : memref<512x4xf32, #tpu.memory_space<vmem>>, vector<512x4xf32>
    %c0_1 = arith.constant 0 : index
    %c0_2 = arith.constant 0 : index
    %1 = vector.load %arg1[%c0_1, %c0_2] : memref<4x4xf32, #tpu.memory_space<vmem>>, vector<4x4xf32>
    %cst = arith.constant dense<0.000000e+00> : vector<512x4xf32>
    %2 = tpu.matmul %0, %1, %cst {dimension_numbers = #tpu.dot_dimension_numbers<[1], [0], [0], [1], [0, 0, 1, 1], [], []>} : vector<512x4xf32>, vector<4x4xf32>, vector<512x4xf32> -> vector<512x4xf32>
    %c0_3 = arith.constant 0 : index
    %c0_4 = arith.constant 0 : index
    %3 = vector.load %arg2[%c0_3, %c0_4] : memref<1x4xf32, #tpu.memory_space<vmem>>, vector<1x4xf32>
    %4 = vector.broadcast %3 : vector<1x4xf32> to vector<512x4xf32>
    %5 = arith.addf %2, %4 : vector<512x4xf32>
    %c0_5 = arith.constant 0 : index
    %c0_6 = arith.constant 0 : index
    %6 = vector.load %arg3[%c0_5, %c0_6] : memref<512x4xf32, #tpu.memory_space<vmem>>, vector<512x4xf32>
    tpu.vector_store %arg3[%c0_5, %c0_6], %5 {strides = array<i32>} : memref<512x4xf32, #tpu.memory_space<vmem>>, vector<512x4xf32>,
    return
  }
}

</mosaic_0001>

<llo_original>
// kernel: tile.13
$region0: #{tile.13}
  #allocation0 [shape = 's32[1]{0}', space=sflag, size = 0x4, scoped, tag = 'scoped memory for tile.13']
  %s0 = inlined_call_operand.vmem [shape: f32[8], index: 0, kind: input, shape index: {}]
  %s1 = inlined_call_operand.vmem [shape: f32[2,8], index: 1, kind: output, shape index: {}]
  // Predicated region
  $region2: #{tile.13} parent=0 // pred_check
    _
  $region3: #{tile.13} parent=0 // pred_check_branch
    %3 = sbr.rel (0) target = $region5
  $region4: #{tile.13} parent=0 // pred_region
    _
  $region5: #{tile.13} parent=0 // pred_fallthru
    _
  %v4 = vld [vmem:[%s0] ss:$0 sm:$0xff]
  %5 = vst [vmem:[%s1] sm:$0x3] %v4

// kernel: sub.17
$region0: #{sub.17}
  %s0 = inlined_call_operand.vmem [shape: f32[8], index: 0, kind: input, shape index: {}]
  %s1 = inlined_call_operand.vmem [shape: f32[2,4], index: 1, kind: output, shape index: {}]
  $region1: #{sub.17} parent=0
    #allocation0 [shape = 'u8[4096]{0}', space=vmem, size = 0x1000, scoped, tag = 'scoped mem for output reshape']
    #allocation1 [shape = 'u8[4096]{0}', space=vmem, size = 0x1000, scoped, tag = 'scoped mem for input reshape']
    %s3 = ssub.s32 2, 1
    %v4 = vld [vmem:[%s0] sm:%s3]
    %5 = vst [vmem:[#allocation1] sm:%s3] %v4
    %v6 = vld [vmem:[#allocation1] sm:$0x1]
    %vm7 = vcmask 31744
    %8 = vst.msk [vmem:[#allocation0] sm:$0x1] %vm7, %v6
    %v9 = vld [vmem:[#allocation1] sm:$0x1]
    %10 = vrot.lane.b32.xlu0 %v9, 124
    %v11 = vpop.permute.xlu0 %10
    %vm12 = vcmask 31744
    %s13 = scalar_lea.vmem [#allocation0], 1
    %14 = vst.msk [vmem:[%s13] sm:$0x1] %vm12, %v11
    %s16 = ssub.s32 4, 1
    %v17 = vld [vmem:[#allocation0] sm:%s16]
    %s19 = ssub.s32 4, 1
    %20 = vst [vmem:[%s1] sm:%s19] %v17

// kernel: window_attention_mixer_forward.8
$region0: #{window_attention_mixer_forward.8}
  #allocation0 [shape = 'u32[]', space=smem, size = 0x4, offset = 0x4, fixed_abs, tag = 'smem constant byte address 0x4 - core index']
  #allocation1 [shape = 'u32[72,128]{1,0:T(1,128)}', space=vmem, size = 0x9000, scoped, tag = 'internal scratch']
  %s0 = inlined_call_operand.vmem [shape: f32[8,64], index: 0, kind: input, shape index: {}]
  %s1 = inlined_call_operand.vmem [shape: f32[64,8], index: 1, kind: input, shape index: {}]
  %s2 = inlined_call_operand.vmem [shape: f32[1,8], index: 2, kind: input, shape index: {}]
  %s3 = inlined_call_operand.vmem [shape: f32[8,2], index: 3, kind: input, shape index: {}]
  %s4 = inlined_call_operand.vmem [shape: f32[1,2], index: 4, kind: input, shape index: {}]
  %s5 = inlined_call_operand.vmem [shape: f32[8,2], index: 5, kind: output, shape index: {}]
  %s6 = sld [smem:[#allocation0]]
  $region30: #{window_attention_mixer_forward.8} parent=0
    _
  %s8 = ssub.s32 1, %s6
  %s9 = scalar_select 0, %s8, %s6
  // Predicated region
  $region2: #{window_attention_mixer_forward.8} parent=0 // pred_check
    _
  $region3: #{window_attention_mixer_forward.8} parent=0 // pred_check_branch
    %11 = sbr.rel (0) target = $region5
  $region4: #{window_attention_mixer_forward.8} parent=0 // pred_region
    _
  $region5: #{window_attention_mixer_forward.8} parent=0 // pred_fallthru
    _
  // Predicated region
  $region6: #{window_attention_mixer_forward.8} parent=0 // pred_check
    _
  $region7: #{window_attention_mixer_forward.8} parent=0 // pred_check_branch
    %13 = sbr.rel (0) target = $region9
  $region8: #{window_attention_mixer_forward.8} parent=0 // pred_region
    _
  $region9: #{window_attention_mixer_forward.8} parent=0 // pred_fallthru
    _
  // Predicated region
  $region10: #{window_attention_mixer_forward.8} parent=0 // pred_check
    _
  $region11: #{window_attention_mixer_forward.8} parent=0 // pred_check_branch
    %15 = sbr.rel (0) target = $region13
  $region12: #{window_attention_mixer_forward.8} parent=0 // pred_region
    _
  $region13: #{window_attention_mixer_forward.8} parent=0 // pred_fallthru
    _
  // Predicated region
  $region14: #{window_attention_mixer_forward.8} parent=0 // pred_check
    _
  $region15: #{window_attention_mixer_forward.8} parent=0 // pred_check_branch
    %17 = sbr.rel (0) target = $region17
  $region16: #{window_attention_mixer_forward.8} parent=0 // pred_region
    _
  $region17: #{window_attention_mixer_forward.8} parent=0 // pred_fallthru
    _
  // Predicated region
  $region18: #{window_attention_mixer_forward.8} parent=0 // pred_check
    _
  $region19: #{window_attention_mixer_forward.8} parent=0 // pred_check_branch
    %19 = sbr.rel (0) target = $region21
  $region20: #{window_attention_mixer_forward.8} parent=0 // pred_region
    _
  $region21: #{window_attention_mixer_forward.8} parent=0 // pred_fallthru
    _
  %v20 = vld [vmem:[%s0] sm:$0xff]
  %v21 = vld [vmem:[%s1] sm:$0xff]
  %v22 = vld [vmem:[%s1 + $0x8] sm:$0xff]
  %v23 = vld [vmem:[%s1 + $0x10] sm:$0xff]
  %v24 = vld [vmem:[%s1 + $0x18] sm:$0xff]
  %v25 = vld [vmem:[%s1 + $0x20] sm:$0xff]
  %v26 = vld [vmem:[%s1 + $0x28] sm:$0xff]
  %v27 = vld [vmem:[%s1 + $0x30] sm:$0xff]
  %v28 = vld [vmem:[%s1 + $0x38] sm:$0xff]
  %v29 = vld [vmem:[%s2] sm:$0x1]
  %v31 = vperm.slane %v29, 0
  %vm33 = vcmask 523264
  %v35 = vsel %vm33, %v20, 0
  %37 = vmatpush.msra.mxu0 0.0
  %38 = vmatpush.msra.mxu0 0.0
  %39 = vmatpush.msra.mxu0 0.0
  %40 = vmatpush.msra.mxu0 0.0
  %41 = vmatpush.msra.mxu0 0.0
  %42 = vmatpush.msra.mxu0 0.0
  %43 = vmatpush.msra.mxu0 0.0
  %44 = vmatpush.msra.mxu0 0.0
  %45 = vmatpush.msra.mxu0 %v28
  %46 = vmatpush.msra.mxu0 %v27
  %47 = vmatpush.msra.mxu0 %v26
  %48 = vmatpush.msra.mxu0 %v25
  %49 = vmatpush.msra.mxu0 %v24
  %50 = vmatpush.msra.mxu0 %v23
  %51 = vmatpush.msra.mxu0 %v22
  %52 = vmatpush.msra.mxu0 %v21
  %53 = vmatmul.f32.gmra.mxu0 %v35
  %v54 = vpop.f32.mrf.mxu0
  %v55 = vadd.f32 %v31, %v54
  %56 = vdwg.mxu0
  %vm57 = vcmp.ge.f32.partialorder %v55, 0.0
  %v58 = vmul.f32 %v55, 0.1
  %v59 = vsel %vm57, %v55, %v58
  %v60 = vld [vmem:[%s3] sm:$0xff]
  %v61 = vld [vmem:[%s4] sm:$0x1]
  %v63 = vperm.slane %v61, 0
  %vm65 = vcmask 64512
  %v67 = vsel %vm65, %v59, 0
  %69 = vmatpush.msra.mxu0 0.0
  %70 = vmatpush.msra.mxu0 0.0
  %71 = vmatpush.msra.mxu0 0.0
  %72 = vmatpush.msra.mxu0 0.0
  %73 = vmatpush.msra.mxu0 0.0
  %74 = vmatpush.msra.mxu0 0.0
  %75 = vmatpush.msra.mxu0 0.0
  %76 = vmatpush.msra.mxu0 0.0
  %77 = vmatpush.msra.mxu0 0.0
  %78 = vmatpush.msra.mxu0 0.0
  %79 = vmatpush.msra.mxu0 0.0
  %80 = vmatpush.msra.mxu0 0.0
  %81 = vmatpush.msra.mxu0 0.0
  %82 = vmatpush.msra.mxu0 0.0
  %83 = vmatpush.msra.mxu0 0.0
  %84 = vmatpush.msra.mxu0 %v60
  %85 = vmatmul.f32.gmra.mxu0 %v67
  %v86 = vpop.f32.mrf.mxu0
  %v87 = vadd.f32 %v63, %v86
  %88 = vdwg.mxu0
  %vm89 = vcmask 15360
  %v90 = vsel %vm89, %v87, -inf
  %91 = vmax.xlane.f32.xlu0 %v90
  %v92 = vpop.xlane.xlu0 %91
  %v93 = vsub.f32 %v87, %v92
  %v94 = vmul.f32 %v93, 1.442695
  %v95 = vpow.pop %v94
  %v96 = vsel %vm89, %v95, 0.0
  %97 = vadd.xlane.f32.xlu0 %v96
  %v98 = vpop.xlane.xlu0 %97
  %v99 = vrcp.pop %v98
  %v100 = vmul.f32 %v98, %v99
  %v101 = vsub.f32 1.0, %v100
  %v102 = vmul.f32 %v99, %v101
  %v103 = vadd.f32 %v99, %v102
  %vm104 = vweird.f32 %v98
  %vm105 = vweird.f32 %v99
  %vm106 = vmor %vm104, %vm105
  %v107 = vsel %vm106, %v99, %v103
  %v108 = vand.u32 2147483647, %v98
  %vm109 = vcmp.eq.f32.partialorder %v108, 8.507059e+37
  %v110 = vand.u32 %v98, 2147483648
  %v111 = vor.u32 1.1754944e-38, %v110
  %v112 = vsel %vm109, %v111, %v107
  %v113 = vmul.f32 %v95, %v112
  %114 = vst.msk [vmem:[%s5] sm:$0xff] %vm89, %v113
  // Predicated region
  $region22: #{window_attention_mixer_forward.8} parent=0 // pred_check
    _
  $region23: #{window_attention_mixer_forward.8} parent=0 // pred_check_branch
    %116 = sbr.rel (0) target = $region25
  $region24: #{window_attention_mixer_forward.8} parent=0 // pred_region
    _
  $region25: #{window_attention_mixer_forward.8} parent=0 // pred_fallthru
    _
  // Predicated region
  $region26: #{window_attention_mixer_forward.8} parent=0 // pred_check
    _
  $region27: #{window_attention_mixer_forward.8} parent=0 // pred_check_branch
    %118 = sbr.rel (0) target = $region29
  $region28: #{window_attention_mixer_forward.8} parent=0 // pred_region
    _
  $region29: #{window_attention_mixer_forward.8} parent=0 // pred_fallthru
    _

// kernel: window_attention_mixer_forward.6
$region0: #{window_attention_mixer_forward.6}
  #allocation0 [shape = 'u32[]', space=smem, size = 0x4, offset = 0x4, fixed_abs, tag = 'smem constant byte address 0x4 - core index']
  #allocation1 [shape = 'u32[72,128]{1,0:T(1,128)}', space=vmem, size = 0x9000, scoped, tag = 'internal scratch']
  %s0 = inlined_call_operand.vmem [shape: f32[512,4], index: 0, kind: input, shape index: {}]
  %s1 = inlined_call_operand.vmem [shape: f32[512,2], index: 1, kind: input, shape index: {}]
  %s2 = inlined_call_operand.vmem [shape: f32[512,2], index: 2, kind: input, shape index: {}]
  %s3 = inlined_call_operand.vmem [shape: f32[4,4], index: 3, kind: input, shape index: {}]
  %s4 = inlined_call_operand.vmem [shape: f32[1,4], index: 4, kind: input, shape index: {}]
  %s5 = inlined_call_operand.vmem [shape: f32[4,2], index: 5, kind: input, shape index: {}]
  %s6 = inlined_call_operand.vmem [shape: f32[2,2], index: 6, kind: input, shape index: {}]
  %s7 = inlined_call_operand.vmem [shape: f32[2,2], index: 7, kind: input, shape index: {}]
  %s8 = inlined_call_operand.vmem [shape: f32[1,2], index: 8, kind: input, shape index: {}]
  %s9 = inlined_call_operand.vmem [shape: f32[1,2], index: 9, kind: input, shape index: {}]
  %s10 = inlined_call_operand.vmem [shape: f32[1,2], index: 10, kind: input, shape index: {}]
  %s11 = inlined_call_operand.vmem [shape: f32[512,4], index: 11, kind: output, shape index: {0}]
  %s12 = inlined_call_operand.vmem [shape: f32[512,2], index: 12, kind: output, shape index: {1}]
  %13 = xla_tuple %s11, %s12
  %s14 = sld [smem:[#allocation0]]
  $region62: #{window_attention_mixer_forward.6} parent=0
    _
  %s16 = ssub.s32 1, %s14
  %s17 = scalar_select 0, %s16, %s14
  // Predicated region
  $region2: #{window_attention_mixer_forward.6} parent=0 // pred_check
    _
  $region3: #{window_attention_mixer_forward.6} parent=0 // pred_check_branch
    %19 = sbr.rel (0) target = $region5
  $region4: #{window_attention_mixer_forward.6} parent=0 // pred_region
    _
  $region5: #{window_attention_mixer_forward.6} parent=0 // pred_fallthru
    _
  // Predicated region
  $region6: #{window_attention_mixer_forward.6} parent=0 // pred_check
    _
  $region7: #{window_attention_mixer_forward.6} parent=0 // pred_check_branch
    %21 = sbr.rel (0) target = $region9
  $region8: #{window_attention_mixer_forward.6} parent=0 // pred_region
    _
  $region9: #{window_attention_mixer_forward.6} parent=0 // pred_fallthru
    _
  // Predicated region
  $region10: #{window_attention_mixer_forward.6} parent=0 // pred_check
    _
  $region11: #{window_attention_mixer_forward.6} parent=0 // pred_check_branch
    %23 = sbr.rel (0) target = $region13
  $region12: #{window_attention_mixer_forward.6} parent=0 // pred_region
    _
  $region13: #{window_attention_mixer_forward.6} parent=0 // pred_fallthru
    _
  // Predicated region
  $region14: #{window_attention_mixer_forward.6} parent=0 // pred_check
    _
  $region15: #{window_attention_mixer_forward.6} parent=0 // pred_check_branch
    %25 = sbr.rel (0) target = $region17
  $region16: #{window_attention_mixer_forward.6} parent=0 // pred_region
    _
  $region17: #{window_attention_mixer_forward.6} parent=0 // pred_fallthru
    _
  // Predicated region
  $region18: #{window_attention_mixer_forward.6} parent=0 // pred_check
    _
  $region19: #{window_attention_mixer_forward.6} parent=0 // pred_check_branch
    %27 = sbr.rel (0) target = $region21
  $region20: #{window_attention_mixer_forward.6} parent=0 // pred_region
    _
  $region21: #{window_attention_mixer_forward.6} parent=0 // pred_fallthru
    _
  // Predicated region
  $region22: #{window_attention_mixer_forward.6} parent=0 // pred_check
    _
  $region23: #{window_attention_mixer_forward.6} parent=0 // pred_check_branch
    %29 = sbr.rel (0) target = $region25
  $region24: #{window_attention_mixer_forward.6} parent=0 // pred_region
    _
  $region25: #{window_attention_mixer_forward.6} parent=0 // pred_fallthru
    _
  // Predicated region
  $region26: #{window_attention_mixer_forward.6} parent=0 // pred_check
    _
  $region27: #{window_attention_mixer_forward.6} parent=0 // pred_check_branch
    %31 = sbr.rel (0) target = $region29
  $region28: #{window_attention_mixer_forward.6} parent=0 // pred_region
    _
  $region29: #{window_attention_mixer_forward.6} parent=0 // pred_fallthru
    _
  // Predicated region
  $region30: #{window_attention_mixer_forward.6} parent=0 // pred_check
    _
  $region31: #{window_attention_mixer_forward.6} parent=0 // pred_check_branch
    %33 = sbr.rel (0) target = $region33
  $region32: #{window_attention_mixer_forward.6} parent=0 // pred_region
    _
  $region33: #{window_attention_mixer_forward.6} parent=0 // pred_fallthru
    _
  // Predicated region
  $region34: #{window_attention_mixer_forward.6} parent=0 // pred_check
    _
  $region35: #{window_attention_mixer_forward.6} parent=0 // pred_check_branch
    %35 = sbr.rel (0) target = $region37
  $region36: #{window_attention_mixer_forward.6} parent=0 // pred_region
    _
  $region37: #{window_attention_mixer_forward.6} parent=0 // pred_fallthru
    _
  // Predicated region
  $region38: #{window_attention_mixer_forward.6} parent=0 // pred_check
    _
  $region39: #{window_attention_mixer_forward.6} parent=0 // pred_check_branch
    %37 = sbr.rel (0) target = $region41
  $region40: #{window_attention_mixer_forward.6} parent=0 // pred_region
    _
  $region41: #{window_attention_mixer_forward.6} parent=0 // pred_fallthru
    _
  // Predicated region
  $region42: #{window_attention_mixer_forward.6} parent=0 // pred_check
    _
  $region43: #{window_attention_mixer_forward.6} parent=0 // pred_check_branch
    %39 = sbr.rel (0) target = $region45
  $region44: #{window_attention_mixer_forward.6} parent=0 // pred_region
    _
  $region45: #{window_attention_mixer_forward.6} parent=0 // pred_fallthru
    _
  %v40 = vld [vmem:[%s0] sm:$0xff]
  %v41 = vld [vmem:[%s0 + $0x8] sm:$0xff]
  %v42 = vld [vmem:[%s0 + $0x10] sm:$0xff]
  %v43 = vld [vmem:[%s0 + $0x18] sm:$0xff]
  %v44 = vld [vmem:[%s0 + $0x20] sm:$0xff]
  %v45 = vld [vmem:[%s0 + $0x28] sm:$0xff]
  %v46 = vld [vmem:[%s0 + $0x30] sm:$0xff]
  %v47 = vld [vmem:[%s0 + $0x38] sm:$0xff]
  %v48 = vld [vmem:[%s0 + $0x40] sm:$0xff]
  %v49 = vld [vmem:[%s0 + $0x48] sm:$0xff]
  %v50 = vld [vmem:[%s0 + $0x50] sm:$0xff]
  %v51 = vld [vmem:[%s0 + $0x58] sm:$0xff]
  %v52 = vld [vmem:[%s0 + $0x60] sm:$0xff]
  %v53 = vld [vmem:[%s0 + $0x68] sm:$0xff]
  %v54 = vld [vmem:[%s0 + $0x70] sm:$0xff]
  %v55 = vld [vmem:[%s0 + $0x78] sm:$0xff]
  %v56 = vld [vmem:[%s0 + $0x80] sm:$0xff]
  %v57 = vld [vmem:[%s0 + $0x88] sm:$0xff]
  %v58 = vld [vmem:[%s0 + $0x90] sm:$0xff]
  %v59 = vld [vmem:[%s0 + $0x98] sm:$0xff]
  %v60 = vld [vmem:[%s0 + $0xa0] sm:$0xff]
  %v61 = vld [vmem:[%s0 + $0xa8] sm:$0xff]
  %v62 = vld [vmem:[%s0 + $0xb0] sm:$0xff]
  %v63 = vld [vmem:[%s0 + $0xb8] sm:$0xff]
  %v64 = vld [vmem:[%s0 + $0xc0] sm:$0xff]
  %v65 = vld [vmem:[%s0 + $0xc8] sm:$0xff]
  %v66 = vld [vmem:[%s0 + $0xd0] sm:$0xff]
  %v67 = vld [vmem:[%s0 + $0xd8] sm:$0xff]
  %v68 = vld [vmem:[%s0 + $0xe0] sm:$0xff]
  %v69 = vld [vmem:[%s0 + $0xe8] sm:$0xff]
  %v70 = vld [vmem:[%s0 + $0xf0] sm:$0xff]
  %v71 = vld [vmem:[%s0 + $0xf8] sm:$0xff]
  %v72 = vld [vmem:[%s0 + $0x100] sm:$0xff]
  %v73 = vld [vmem:[%s0 + $0x108] sm:$0xff]
  %v74 = vld [vmem:[%s0 + $0x110] sm:$0xff]
  %v75 = vld [vmem:[%s0 + $0x118] sm:$0xff]
  %v76 = vld [vmem:[%s0 + $0x120] sm:$0xff]
  %v77 = vld [vmem:[%s0 + $0x128] sm:$0xff]
  %v78 = vld [vmem:[%s0 + $0x130] sm:$0xff]
  %v79 = vld [vmem:[%s0 + $0x138] sm:$0xff]
  %v80 = vld [vmem:[%s0 + $0x140] sm:$0xff]
  %v81 = vld [vmem:[%s0 + $0x148] sm:$0xff]
  %v82 = vld [vmem:[%s0 + $0x150] sm:$0xff]
  %v83 = vld [vmem:[%s0 + $0x158] sm:$0xff]
  %v84 = vld [vmem:[%s0 + $0x160] sm:$0xff]
  %v85 = vld [vmem:[%s0 + $0x168] sm:$0xff]
  %v86 = vld [vmem:[%s0 + $0x170] sm:$0xff]
  %v87 = vld [vmem:[%s0 + $0x178] sm:$0xff]
  %v88 = vld [vmem:[%s0 + $0x180] sm:$0xff]
  %v89 = vld [vmem:[%s0 + $0x188] sm:$0xff]
  %v90 = vld [vmem:[%s0 + $0x190] sm:$0xff]
  %v91 = vld [vmem:[%s0 + $0x198] sm:$0xff]
  %v92 = vld [vmem:[%s0 + $0x1a0] sm:$0xff]
  %v93 = vld [vmem:[%s0 + $0x1a8] sm:$0xff]
  %v94 = vld [vmem:[%s0 + $0x1b0] sm:$0xff]
  %v95 = vld [vmem:[%s0 + $0x1b8] sm:$0xff]
  %v96 = vld [vmem:[%s0 + $0x1c0] sm:$0xff]
  %v97 = vld [vmem:[%s0 + $0x1c8] sm:$0xff]
  %v98 = vld [vmem:[%s0 + $0x1d0] sm:$0xff]
  %v99 = vld [vmem:[%s0 + $0x1d8] sm:$0xff]
  %v100 = vld [vmem:[%s0 + $0x1e0] sm:$0xff]
  %v101 = vld [vmem:[%s0 + $0x1e8] sm:$0xff]
  %v102 = vld [vmem:[%s0 + $0x1f0] sm:$0xff]
  %v103 = vld [vmem:[%s0 + $0x1f8] sm:$0xff]
  %v104 = vld [vmem:[%s3] sm:$0xf]
  %v105 = vld [vmem:[%s4] sm:$0x1]
  %v107 = vperm.slane %v105, 0
  %vm109 = vcmask 31744
  %v111 = vsel %vm109, %v40, 0
  %v114 = vsel %vm109, %v41, 0
  %v117 = vsel %vm109, %v42, 0
  %v120 = vsel %vm109, %v43, 0
  %v123 = vsel %vm109, %v44, 0
  %v126 = vsel %vm109, %v45, 0
  %v129 = vsel %vm109, %v46, 0
  %v132 = vsel %vm109, %v47, 0
  %v135 = vsel %vm109, %v48, 0
  %v138 = vsel %vm109, %v49, 0
  %v141 = vsel %vm109, %v50, 0
  %v144 = vsel %vm109, %v51, 0
  %v147 = vsel %vm109, %v52, 0
  %v150 = vsel %vm109, %v53, 0
  %v153 = vsel %vm109, %v54, 0
  %v156 = vsel %vm109, %v55, 0
  %v159 = vsel %vm109, %v56, 0
  %v162 = vsel %vm109, %v57, 0
  %v165 = vsel %vm109, %v58, 0
  %v168 = vsel %vm109, %v59, 0
  %v171 = vsel %vm109, %v60, 0
  %v174 = vsel %vm109, %v61, 0
  %v177 = vsel %vm109, %v62, 0
  %v180 = vsel %vm109, %v63, 0
  %v183 = vsel %vm109, %v64, 0
  %v186 = vsel %vm109, %v65, 0
  %v189 = vsel %vm109, %v66, 0
  %v192 = vsel %vm109, %v67, 0
  %v195 = vsel %vm109, %v68, 0
  %v198 = vsel %vm109, %v69, 0
  %v201 = vsel %vm109, %v70, 0
  %v204 = vsel %vm109, %v71, 0
  %v207 = vsel %vm109, %v72, 0
  %v210 = vsel %vm109, %v73, 0
  %v213 = vsel %vm109, %v74, 0
  %v216 = vsel %vm109, %v75, 0
  %v219 = vsel %vm109, %v76, 0
  %v222 = vsel %vm109, %v77, 0
  %v225 = vsel %vm109, %v78, 0
  %v228 = vsel %vm109, %v79, 0
  %v231 = vsel %vm109, %v80, 0
  %v234 = vsel %vm109, %v81, 0
  %v237 = vsel %vm109, %v82, 0
  %v240 = vsel %vm109, %v83, 0
  %v243 = vsel %vm109, %v84, 0
  %v246 = vsel %vm109, %v85, 0
  %v249 = vsel %vm109, %v86, 0
  %v252 = vsel %vm109, %v87, 0
  %v255 = vsel %vm109, %v88, 0
  %v258 = vsel %vm109, %v89, 0
  %v261 = vsel %vm109, %v90, 0
  %v264 = vsel %vm109, %v91, 0
  %v267 = vsel %vm109, %v92, 0
  %v270 = vsel %vm109, %v93, 0
  %v273 = vsel %vm109, %v94, 0
  %v276 = vsel %vm109, %v95, 0
  %v279 = vsel %vm109, %v96, 0
  %v282 = vsel %vm109, %v97, 0
  %v285 = vsel %vm109, %v98, 0
  %v288 = vsel %vm109, %v99, 0
  %v291 = vsel %vm109, %v100, 0
  %v294 = vsel %vm109, %v101, 0
  %v297 = vsel %vm109, %v102, 0
  %v300 = vsel %vm109, %v103, 0
  %vm302 = vcmask 1043456
  %v304 = vsel %vm302, %v104, 0
  %306 = vmatpush.msra.mxu0 0.0
  %307 = vmatpush.msra.mxu0 0.0
  %308 = vmatpush.msra.mxu0 0.0
  %309 = vmatpush.msra.mxu0 0.0
  %310 = vmatpush.msra.mxu0 0.0
  %311 = vmatpush.msra.mxu0 0.0
  %312 = vmatpush.msra.mxu0 0.0
  %313 = vmatpush.msra.mxu0 0.0
  %314 = vmatpush.msra.mxu0 0.0
  %315 = vmatpush.msra.mxu0 0.0
  %316 = vmatpush.msra.mxu0 0.0
  %317 = vmatpush.msra.mxu0 0.0
  %318 = vmatpush.msra.mxu0 0.0
  %319 = vmatpush.msra.mxu0 0.0
  %320 = vmatpush.msra.mxu0 0.0
  %321 = vmatpush.msra.mxu0 %v304
  %322 = vmatmul.f32.gmra.mxu0 %v111
  %v323 = vpop.f32.mrf.mxu0
  %v324 = vadd.f32 %v107, %v323
  %325 = vmatmul.f32.gmra.mxu0 %v114
  %v326 = vpop.f32.mrf.mxu0
  %v327 = vadd.f32 %v107, %v326
  %328 = vmatmul.f32.gmra.mxu0 %v117
  %v329 = vpop.f32.mrf.mxu0
  %v330 = vadd.f32 %v107, %v329
  %331 = vmatmul.f32.gmra.mxu0 %v120
  %v332 = vpop.f32.mrf.mxu0
  %v333 = vadd.f32 %v107, %v332
  %334 = vmatmul.f32.gmra.mxu0 %v123
  %v335 = vpop.f32.mrf.mxu0
  %v336 = vadd.f32 %v107, %v335
  %337 = vmatmul.f32.gmra.mxu0 %v126
  %v338 = vpop.f32.mrf.mxu0
  %v339 = vadd.f32 %v107, %v338
  %340 = vmatmul.f32.gmra.mxu0 %v129
  %v341 = vpop.f32.mrf.mxu0
  %v342 = vadd.f32 %v107, %v341
  %343 = vmatmul.f32.gmra.mxu0 %v132
  %v344 = vpop.f32.mrf.mxu0
  %v345 = vadd.f32 %v107, %v344
  %346 = vmatmul.f32.gmra.mxu0 %v135
  %v347 = vpop.f32.mrf.mxu0
  %v348 = vadd.f32 %v107, %v347
  %349 = vmatmul.f32.gmra.mxu0 %v138
  %v350 = vpop.f32.mrf.mxu0
  %v351 = vadd.f32 %v107, %v350
  %352 = vmatmul.f32.gmra.mxu0 %v141
  %v353 = vpop.f32.mrf.mxu0
  %v354 = vadd.f32 %v107, %v353
  %355 = vmatmul.f32.gmra.mxu0 %v144
  %v356 = vpop.f32.mrf.mxu0
  %v357 = vadd.f32 %v107, %v356
  %358 = vmatmul.f32.gmra.mxu0 %v147
  %v359 = vpop.f32.mrf.mxu0
  %v360 = vadd.f32 %v107, %v359
  %361 = vmatmul.f32.gmra.mxu0 %v150
  %v362 = vpop.f32.mrf.mxu0
  %v363 = vadd.f32 %v107, %v362
  %364 = vmatmul.f32.gmra.mxu0 %v153
  %v365 = vpop.f32.mrf.mxu0
  %v366 = vadd.f32 %v107, %v365
  %367 = vmatmul.f32.gmra.mxu0 %v156
  %v368 = vpop.f32.mrf.mxu0
  %v369 = vadd.f32 %v107, %v368
  %370 = vmatmul.f32.gmra.mxu0 %v159
  %v371 = vpop.f32.mrf.mxu0
  %v372 = vadd.f32 %v107, %v371
  %373 = vmatmul.f32.gmra.mxu0 %v162
  %v374 = vpop.f32.mrf.mxu0
  %v375 = vadd.f32 %v107, %v374
  %376 = vmatmul.f32.gmra.mxu0 %v165
  %v377 = vpop.f32.mrf.mxu0
  %v378 = vadd.f32 %v107, %v377
  %379 = vmatmul.f32.gmra.mxu0 %v168
  %v380 = vpop.f32.mrf.mxu0
  %v381 = vadd.f32 %v107, %v380
  %382 = vmatmul.f32.gmra.mxu0 %v171
  %v383 = vpop.f32.mrf.mxu0
  %v384 = vadd.f32 %v107, %v383
  %385 = vmatmul.f32.gmra.mxu0 %v174
  %v386 = vpop.f32.mrf.mxu0
  %v387 = vadd.f32 %v107, %v386
  %388 = vmatmul.f32.gmra.mxu0 %v177
  %v389 = vpop.f32.mrf.mxu0
  %v390 = vadd.f32 %v107, %v389
  %391 = vmatmul.f32.gmra.mxu0 %v180
  %v392 = vpop.f32.mrf.mxu0
  %v393 = vadd.f32 %v107, %v392
  %394 = vmatmul.f32.gmra.mxu0 %v183
  %v395 = vpop.f32.mrf.mxu0
  %v396 = vadd.f32 %v107, %v395
  %397 = vmatmul.f32.gmra.mxu0 %v186
  %v398 = vpop.f32.mrf.mxu0
  %v399 = vadd.f32 %v107, %v398
  %400 = vmatmul.f32.gmra.mxu0 %v189
  %v401 = vpop.f32.mrf.mxu0
  %v402 = vadd.f32 %v107, %v401
  %403 = vmatmul.f32.gmra.mxu0 %v192
  %v404 = vpop.f32.mrf.mxu0
  %v405 = vadd.f32 %v107, %v404
  %406 = vmatmul.f32.gmra.mxu0 %v195
  %v407 = vpop.f32.mrf.mxu0
  %v408 = vadd.f32 %v107, %v407
  %409 = vmatmul.f32.gmra.mxu0 %v198
  %v410 = vpop.f32.mrf.mxu0
  %v411 = vadd.f32 %v107, %v410
  %412 = vmatmul.f32.gmra.mxu0 %v201
  %v413 = vpop.f32.mrf.mxu0
  %v414 = vadd.f32 %v107, %v413
  %415 = vmatmul.f32.gmra.mxu0 %v204
  %v416 = vpop.f32.mrf.mxu0
  %v417 = vadd.f32 %v107, %v416
  %418 = vmatmul.f32.gmra.mxu0 %v207
  %v419 = vpop.f32.mrf.mxu0
  %v420 = vadd.f32 %v107, %v419
  %421 = vmatmul.f32.gmra.mxu0 %v210
  %v422 = vpop.f32.mrf.mxu0
  %v423 = vadd.f32 %v107, %v422
  %424 = vmatmul.f32.gmra.mxu0 %v213
  %v425 = vpop.f32.mrf.mxu0
  %v426 = vadd.f32 %v107, %v425
  %427 = vmatmul.f32.gmra.mxu0 %v216
  %v428 = vpop.f32.mrf.mxu0
  %v429 = vadd.f32 %v107, %v428
  %430 = vmatmul.f32.gmra.mxu0 %v219
  %v431 = vpop.f32.mrf.mxu0
  %v432 = vadd.f32 %v107, %v431
  %433 = vmatmul.f32.gmra.mxu0 %v222
  %v434 = vpop.f32.mrf.mxu0
  %v435 = vadd.f32 %v107, %v434
  %436 = vmatmul.f32.gmra.mxu0 %v225
  %v437 = vpop.f32.mrf.mxu0
  %v438 = vadd.f32 %v107, %v437
  %439 = vmatmul.f32.gmra.mxu0 %v228
  %v440 = vpop.f32.mrf.mxu0
  %v441 = vadd.f32 %v107, %v440
  %442 = vmatmul.f32.gmra.mxu0 %v231
  %v443 = vpop.f32.mrf.mxu0
  %v444 = vadd.f32 %v107, %v443
  %445 = vmatmul.f32.gmra.mxu0 %v234
  %v446 = vpop.f32.mrf.mxu0
  %v447 = vadd.f32 %v107, %v446
  %448 = vmatmul.f32.gmra.mxu0 %v237
  %v449 = vpop.f32.mrf.mxu0
  %v450 = vadd.f32 %v107, %v449
  %451 = vmatmul.f32.gmra.mxu0 %v240
  %v452 = vpop.f32.mrf.mxu0
  %v453 = vadd.f32 %v107, %v452
  %454 = vmatmul.f32.gmra.mxu0 %v243
  %v455 = vpop.f32.mrf.mxu0
  %v456 = vadd.f32 %v107, %v455
  %457 = vmatmul.f32.gmra.mxu0 %v246
  %v458 = vpop.f32.mrf.mxu0
  %v459 = vadd.f32 %v107, %v458
  %460 = vmatmul.f32.gmra.mxu0 %v249
  %v461 = vpop.f32.mrf.mxu0
  %v462 = vadd.f32 %v107, %v461
  %463 = vmatmul.f32.gmra.mxu0 %v252
  %v464 = vpop.f32.mrf.mxu0
  %v465 = vadd.f32 %v107, %v464
  %466 = vmatmul.f32.gmra.mxu0 %v255
  %v467 = vpop.f32.mrf.mxu0
  %v468 = vadd.f32 %v107, %v467
  %469 = vmatmul.f32.gmra.mxu0 %v258
  %v470 = vpop.f32.mrf.mxu0
  %v471 = vadd.f32 %v107, %v470
  %472 = vmatmul.f32.gmra.mxu0 %v261
  %v473 = vpop.f32.mrf.mxu0
  %v474 = vadd.f32 %v107, %v473
  %475 = vmatmul.f32.gmra.mxu0 %v264
  %v476 = vpop.f32.mrf.mxu0
  %v477 = vadd.f32 %v107, %v476
  %478 = vmatmul.f32.gmra.mxu0 %v267
  %v479 = vpop.f32.mrf.mxu0
  %v480 = vadd.f32 %v107, %v479
  %481 = vmatmul.f32.gmra.mxu0 %v270
  %v482 = vpop.f32.mrf.mxu0
  %v483 = vadd.f32 %v107, %v482
  %484 = vmatmul.f32.gmra.mxu0 %v273
  %v485 = vpop.f32.mrf.mxu0
  %v486 = vadd.f32 %v107, %v485
  %487 = vmatmul.f32.gmra.mxu0 %v276
  %v488 = vpop.f32.mrf.mxu0
  %v489 = vadd.f32 %v107, %v488
  %490 = vmatmul.f32.gmra.mxu0 %v279
  %v491 = vpop.f32.mrf.mxu0
  %v492 = vadd.f32 %v107, %v491
  %493 = vmatmul.f32.gmra.mxu0 %v282
  %v494 = vpop.f32.mrf.mxu0
  %v495 = vadd.f32 %v107, %v494
  %496 = vmatmul.f32.gmra.mxu0 %v285
  %v497 = vpop.f32.mrf.mxu0
  %v498 = vadd.f32 %v107, %v497
  %499 = vmatmul.f32.gmra.mxu0 %v288
  %v500 = vpop.f32.mrf.mxu0
  %v501 = vadd.f32 %v107, %v500
  %502 = vmatmul.f32.gmra.mxu0 %v291
  %v503 = vpop.f32.mrf.mxu0
  %v504 = vadd.f32 %v107, %v503
  %505 = vmatmul.f32.gmra.mxu0 %v294
  %v506 = vpop.f32.mrf.mxu0
  %v507 = vadd.f32 %v107, %v506
  %508 = vmatmul.f32.gmra.mxu0 %v297
  %v509 = vpop.f32.mrf.mxu0
  %v510 = vadd.f32 %v107, %v509
  %511 = vmatmul.f32.gmra.mxu0 %v300
  %v512 = vpop.f32.mrf.mxu0
  %v513 = vadd.f32 %v107, %v512
  %514 = vdwg.mxu0
  %515 = vst.msk [vmem:[%s11] sm:$0xff] %vm109, %v324
  %516 = vst.msk [vmem:[%s11 + $0x8] sm:$0xff] %vm109, %v327
  %517 = vst.msk [vmem:[%s11 + $0x10] sm:$0xff] %vm109, %v330
  %518 = vst.msk [vmem:[%s11 + $0x18] sm:$0xff] %vm109, %v333
  %519 = vst.msk [vmem:[%s11 + $0x20] sm:$0xff] %vm109, %v336
  %520 = vst.msk [vmem:[%s11 + $0x28] sm:$0xff] %vm109, %v339
  %521 = vst.msk [vmem:[%s11 + $0x30] sm:$0xff] %vm109, %v342
  %522 = vst.msk [vmem:[%s11 + $0x38] sm:$0xff] %vm109, %v345
  %523 = vst.msk [vmem:[%s11 + $0x40] sm:$0xff] %vm109, %v348
  %524 = vst.msk [vmem:[%s11 + $0x48] sm:$0xff] %vm109, %v351
  %525 = vst.msk [vmem:[%s11 + $0x50] sm:$0xff] %vm109, %v354
  %526 = vst.msk [vmem:[%s11 + $0x58] sm:$0xff] %vm109, %v357
  %527 = vst.msk [vmem:[%s11 + $0x60] sm:$0xff] %vm109, %v360
  %528 = vst.msk [vmem:[%s11 + $0x68] sm:$0xff] %vm109, %v363
  %529 = vst.msk [vmem:[%s11 + $0x70] sm:$0xff] %vm109, %v366
  %530 = vst.msk [vmem:[%s11 + $0x78] sm:$0xff] %vm109, %v369
  %531 = vst.msk [vmem:[%s11 + $0x80] sm:$0xff] %vm109, %v372
  %532 = vst.msk [vmem:[%s11 + $0x88] sm:$0xff] %vm109, %v375
  %533 = vst.msk [vmem:[%s11 + $0x90] sm:$0xff] %vm109, %v378
  %534 = vst.msk [vmem:[%s11 + $0x98] sm:$0xff] %vm109, %v381
  %535 = vst.msk [vmem:[%s11 + $0xa0] sm:$0xff] %vm109, %v384
  %536 = vst.msk [vmem:[%s11 + $0xa8] sm:$0xff] %vm109, %v387
  %537 = vst.msk [vmem:[%s11 + $0xb0] sm:$0xff] %vm109, %v390
  %538 = vst.msk [vmem:[%s11 + $0xb8] sm:$0xff] %vm109, %v393
  %539 = vst.msk [vmem:[%s11 + $0xc0] sm:$0xff] %vm109, %v396
  %540 = vst.msk [vmem:[%s11 + $0xc8] sm:$0xff] %vm109, %v399
  %541 = vst.msk [vmem:[%s11 + $0xd0] sm:$0xff] %vm109, %v402
  %542 = vst.msk [vmem:[%s11 + $0xd8] sm:$0xff] %vm109, %v405
  %543 = vst.msk [vmem:[%s11 + $0xe0] sm:$0xff] %vm109, %v408
  %544 = vst.msk [vmem:[%s11 + $0xe8] sm:$0xff] %vm109, %v411
  %545 = vst.msk [vmem:[%s11 + $0xf0] sm:$0xff] %vm109, %v414
  %546 = vst.msk [vmem:[%s11 + $0xf8] sm:$0xff] %vm109, %v417
  %547 = vst.msk [vmem:[%s11 + $0x100] sm:$0xff] %vm109, %v420
  %548 = vst.msk [vmem:[%s11 + $0x108] sm:$0xff] %vm109, %v423
  %549 = vst.msk [vmem:[%s11 + $0x110] sm:$0xff] %vm109, %v426
  %550 = vst.msk [vmem:[%s11 + $0x118] sm:$0xff] %vm109, %v429
  %551 = vst.msk [vmem:[%s11 + $0x120] sm:$0xff] %vm109, %v432
  %552 = vst.msk [vmem:[%s11 + $0x128] sm:$0xff] %vm109, %v435
  %553 = vst.msk [vmem:[%s11 + $0x130] sm:$0xff] %vm109, %v438
  %554 = vst.msk [vmem:[%s11 + $0x138] sm:$0xff] %vm109, %v441
  %555 = vst.msk [vmem:[%s11 + $0x140] sm:$0xff] %vm109, %v444
  %556 = vst.msk [vmem:[%s11 + $0x148] sm:$0xff] %vm109, %v447
  %557 = vst.msk [vmem:[%s11 + $0x150] sm:$0xff] %vm109, %v450
  %558 = vst.msk [vmem:[%s11 + $0x158] sm:$0xff] %vm109, %v453
  %559 = vst.msk [vmem:[%s11 + $0x160] sm:$0xff] %vm109, %v456
  %560 = vst.msk [vmem:[%s11 + $0x168] sm:$0xff] %vm109, %v459
  %561 = vst.msk [vmem:[%s11 + $0x170] sm:$0xff] %vm109, %v462
  %562 = vst.msk [vmem:[%s11 + $0x178] sm:$0xff] %vm109, %v465
  %563 = vst.msk [vmem:[%s11 + $0x180] sm:$0xff] %vm109, %v468
  %564 = vst.msk [vmem:[%s11 + $0x188] sm:$0xff] %vm109, %v471
  %565 = vst.msk [vmem:[%s11 + $0x190] sm:$0xff] %vm109, %v474
  %566 = vst.msk [vmem:[%s11 + $0x198] sm:$0xff] %vm109, %v477
  %567 = vst.msk [vmem:[%s11 + $0x1a0] sm:$0xff] %vm109, %v480
  %568 = vst.msk [vmem:[%s11 + $0x1a8] sm:$0xff] %vm109, %v483
  %569 = vst.msk [vmem:[%s11 + $0x1b0] sm:$0xff] %vm109, %v486
  %570 = vst.msk [vmem:[%s11 + $0x1b8] sm:$0xff] %vm109, %v489
  %571 = vst.msk [vmem:[%s11 + $0x1c0] sm:$0xff] %vm109, %v492
  %572 = vst.msk [vmem:[%s11 + $0x1c8] sm:$0xff] %vm109, %v495
  %573 = vst.msk [vmem:[%s11 + $0x1d0] sm:$0xff] %vm109, %v498
  %574 = vst.msk [vmem:[%s11 + $0x1d8] sm:$0xff] %vm109, %v501
  %575 = vst.msk [vmem:[%s11 + $0x1e0] sm:$0xff] %vm109, %v504
  %576 = vst.msk [vmem:[%s11 + $0x1e8] sm:$0xff] %vm109, %v507
  %577 = vst.msk [vmem:[%s11 + $0x1f0] sm:$0xff] %vm109, %v510
  %578 = vst.msk [vmem:[%s11 + $0x1f8] sm:$0xff] %vm109, %v513
  %v579 = vld [vmem:[%s5] sm:$0xf]
  %v580 = vld [vmem:[%s1] sm:$0xff]
  %v581 = vld [vmem:[%s1 + $0x8] sm:$0xff]
  %v582 = vld [vmem:[%s1 + $0x10] sm:$0xff]
  %v583 = vld [vmem:[%s1 + $0x18] sm:$0xff]
  %v584 = vld [vmem:[%s1 + $0x20] sm:$0xff]
  %v585 = vld [vmem:[%s1 + $0x28] sm:$0xff]
  %v586 = vld [vmem:[%s1 + $0x30] sm:$0xff]
  %v587 = vld [vmem:[%s1 + $0x38] sm:$0xff]
  %v588 = vld [vmem:[%s1 + $0x40] sm:$0xff]
  %v589 = vld [vmem:[%s1 + $0x48] sm:$0xff]
  %v590 = vld [vmem:[%s1 + $0x50] sm:$0xff]
  %v591 = vld [vmem:[%s1 + $0x58] sm:$0xff]
  %v592 = vld [vmem:[%s1 + $0x60] sm:$0xff]
  %v593 = vld [vmem:[%s1 + $0x68] sm:$0xff]
  %v594 = vld [vmem:[%s1 + $0x70] sm:$0xff]
  %v595 = vld [vmem:[%s1 + $0x78] sm:$0xff]
  %v596 = vld [vmem:[%s1 + $0x80] sm:$0xff]
  %v597 = vld [vmem:[%s1 + $0x88] sm:$0xff]
  %v598 = vld [vmem:[%s1 + $0x90] sm:$0xff]
  %v599 = vld [vmem:[%s1 + $0x98] sm:$0xff]
  %v600 = vld [vmem:[%s1 + $0xa0] sm:$0xff]
  %v601 = vld [vmem:[%s1 + $0xa8] sm:$0xff]
  %v602 = vld [vmem:[%s1 + $0xb0] sm:$0xff]
  %v603 = vld [vmem:[%s1 + $0xb8] sm:$0xff]
  %v604 = vld [vmem:[%s1 + $0xc0] sm:$0xff]
  %v605 = vld [vmem:[%s1 + $0xc8] sm:$0xff]
  %v606 = vld [vmem:[%s1 + $0xd0] sm:$0xff]
  %v607 = vld [vmem:[%s1 + $0xd8] sm:$0xff]
  %v608 = vld [vmem:[%s1 + $0xe0] sm:$0xff]
  %v609 = vld [vmem:[%s1 + $0xe8] sm:$0xff]
  %v610 = vld [vmem:[%s1 + $0xf0] sm:$0xff]
  %v611 = vld [vmem:[%s1 + $0xf8] sm:$0xff]
  %v612 = vld [vmem:[%s1 + $0x100] sm:$0xff]
  %v613 = vld [vmem:[%s1 + $0x108] sm:$0xff]
  %v614 = vld [vmem:[%s1 + $0x110] sm:$0xff]
  %v615 = vld [vmem:[%s1 + $0x118] sm:$0xff]
  %v616 = vld [vmem:[%s1 + $0x120] sm:$0xff]
  %v617 = vld [vmem:[%s1 + $0x128] sm:$0xff]
  %v618 = vld [vmem:[%s1 + $0x130] sm:$0xff]
  %v619 = vld [vmem:[%s1 + $0x138] sm:$0xff]
  %v620 = vld [vmem:[%s1 + $0x140] sm:$0xff]
  %v621 = vld [vmem:[%s1 + $0x148] sm:$0xff]
  %v622 = vld [vmem:[%s1 + $0x150] sm:$0xff]
  %v623 = vld [vmem:[%s1 + $0x158] sm:$0xff]
  %v624 = vld [vmem:[%s1 + $0x160] sm:$0xff]
  %v625 = vld [vmem:[%s1 + $0x168] sm:$0xff]
  %v626 = vld [vmem:[%s1 + $0x170] sm:$0xff]
  %v627 = vld [vmem:[%s1 + $0x178] sm:$0xff]
  %v628 = vld [vmem:[%s1 + $0x180] sm:$0xff]
  %v629 = vld [vmem:[%s1 + $0x188] sm:$0xff]
  %v630 = vld [vmem:[%s1 + $0x190] sm:$0xff]
  %v631 = vld [vmem:[%s1 + $0x198] sm:$0xff]
  %v632 = vld [vmem:[%s1 + $0x1a0] sm:$0xff]
  %v633 = vld [vmem:[%s1 + $0x1a8] sm:$0xff]
  %v634 = vld [vmem:[%s1 + $0x1b0] sm:$0xff]
  %v635 = vld [vmem:[%s1 + $0x1b8] sm:$0xff]
  %v636 = vld [vmem:[%s1 + $0x1c0] sm:$0xff]
  %v637 = vld [vmem:[%s1 + $0x1c8] sm:$0xff]
  %v638 = vld [vmem:[%s1 + $0x1d0] sm:$0xff]
  %v639 = vld [vmem:[%s1 + $0x1d8] sm:$0xff]
  %v640 = vld [vmem:[%s1 + $0x1e0] sm:$0xff]
  %v641 = vld [vmem:[%s1 + $0x1e8] sm:$0xff]
  %v642 = vld [vmem:[%s1 + $0x1f0] sm:$0xff]
  %v643 = vld [vmem:[%s1 + $0x1f8] sm:$0xff]
  %v644 = vld [vmem:[%s6] sm:$0x3]
  %vm645 = vcmask 15360
  %v647 = vsel %vm645, %v580, 0
  %v650 = vsel %vm645, %v581, 0
  %v653 = vsel %vm645, %v582, 0
  %v656 = vsel %vm645, %v583, 0
  %v659 = vsel %vm645, %v584, 0
  %v662 = vsel %vm645, %v585, 0
  %v665 = vsel %vm645, %v586, 0
  %v668 = vsel %vm645, %v587, 0
  %v671 = vsel %vm645, %v588, 0
  %v674 = vsel %vm645, %v589, 0
  %v677 = vsel %vm645, %v590, 0
  %v680 = vsel %vm645, %v591, 0
  %v683 = vsel %vm645, %v592, 0
  %v686 = vsel %vm645, %v593, 0
  %v689 = vsel %vm645, %v594, 0
  %v692 = vsel %vm645, %v595, 0
  %v695 = vsel %vm645, %v596, 0
  %v698 = vsel %vm645, %v597, 0
  %v701 = vsel %vm645, %v598, 0
  %v704 = vsel %vm645, %v599, 0
  %v707 = vsel %vm645, %v600, 0
  %v710 = vsel %vm645, %v601, 0
  %v713 = vsel %vm645, %v602, 0
  %v716 = vsel %vm645, %v603, 0
  %v719 = vsel %vm645, %v604, 0
  %v722 = vsel %vm645, %v605, 0
  %v725 = vsel %vm645, %v606, 0
  %v728 = vsel %vm645, %v607, 0
  %v731 = vsel %vm645, %v608, 0
  %v734 = vsel %vm645, %v609, 0
  %v737 = vsel %vm645, %v610, 0
  %v740 = vsel %vm645, %v611, 0
  %v743 = vsel %vm645, %v612, 0
  %v746 = vsel %vm645, %v613, 0
  %v749 = vsel %vm645, %v614, 0
  %v752 = vsel %vm645, %v615, 0
  %v755 = vsel %vm645, %v616, 0
  %v758 = vsel %vm645, %v617, 0
  %v761 = vsel %vm645, %v618, 0
  %v764 = vsel %vm645, %v619, 0
  %v767 = vsel %vm645, %v620, 0
  %v770 = vsel %vm645, %v621, 0
  %v773 = vsel %vm645, %v622, 0
  %v776 = vsel %vm645, %v623, 0
  %v779 = vsel %vm645, %v624, 0
  %v782 = vsel %vm645, %v625, 0
  %v785 = vsel %vm645, %v626, 0
  %v788 = vsel %vm645, %v627, 0
  %v791 = vsel %vm645, %v628, 0
  %v794 = vsel %vm645, %v629, 0
  %v797 = vsel %vm645, %v630, 0
  %v800 = vsel %vm645, %v631, 0
  %v803 = vsel %vm645, %v632, 0
  %v806 = vsel %vm645, %v633, 0
  %v809 = vsel %vm645, %v634, 0
  %v812 = vsel %vm645, %v635, 0
  %v815 = vsel %vm645, %v636, 0
  %v818 = vsel %vm645, %v637, 0
  %v821 = vsel %vm645, %v638, 0
  %v824 = vsel %vm645, %v639, 0
  %v827 = vsel %vm645, %v640, 0
  %v830 = vsel %vm645, %v641, 0
  %v833 = vsel %vm645, %v642, 0
  %v836 = vsel %vm645, %v643, 0
  %vm838 = vcmask 1041408
  %v840 = vsel %vm838, %v644, 0
  %842 = vmatpush.msra.mxu0 0.0
  %843 = vmatpush.msra.mxu0 0.0
  %844 = vmatpush.msra.mxu0 0.0
  %845 = vmatpush.msra.mxu0 0.0
  %846 = vmatpush.msra.mxu0 0.0
  %847 = vmatpush.msra.mxu0 0.0
  %848 = vmatpush.msra.mxu0 0.0
  %849 = vmatpush.msra.mxu0 0.0
  %850 = vmatpush.msra.mxu0 0.0
  %851 = vmatpush.msra.mxu0 0.0
  %852 = vmatpush.msra.mxu0 0.0
  %853 = vmatpush.msra.mxu0 0.0
  %854 = vmatpush.msra.mxu0 0.0
  %855 = vmatpush.msra.mxu0 0.0
  %856 = vmatpush.msra.mxu0 0.0
  %857 = vmatpush.msra.mxu0 %v840
  %858 = vmatmul.f32.gmra.mxu0 %v647
  %v859 = vpop.f32.mrf.mxu0
  %v860 = vadd.f32 0.0, %v859
  %861 = vmatmul.f32.gmra.mxu0 %v650
  %v862 = vpop.f32.mrf.mxu0
  %v863 = vadd.f32 0.0, %v862
  %864 = vmatmul.f32.gmra.mxu0 %v653
  %v865 = vpop.f32.mrf.mxu0
  %v866 = vadd.f32 0.0, %v865
  %867 = vmatmul.f32.gmra.mxu0 %v656
  %v868 = vpop.f32.mrf.mxu0
  %v869 = vadd.f32 0.0, %v868
  %870 = vmatmul.f32.gmra.mxu0 %v659
  %v871 = vpop.f32.mrf.mxu0
  %v872 = vadd.f32 0.0, %v871
  %873 = vmatmul.f32.gmra.mxu0 %v662
  %v874 = vpop.f32.mrf.mxu0
  %v875 = vadd.f32 0.0, %v874
  %876 = vmatmul.f32.gmra.mxu0 %v665
  %v877 = vpop.f32.mrf.mxu0
  %v878 = vadd.f32 0.0, %v877
  %879 = vmatmul.f32.gmra.mxu0 %v668
  %v880 = vpop.f32.mrf.mxu0
  %v881 = vadd.f32 0.0, %v880
  %882 = vmatmul.f32.gmra.mxu0 %v671
  %v883 = vpop.f32.mrf.mxu0
  %v884 = vadd.f32 0.0, %v883
  %885 = vmatmul.f32.gmra.mxu0 %v674
  %v886 = vpop.f32.mrf.mxu0
  %v887 = vadd.f32 0.0, %v886
  %888 = vmatmul.f32.gmra.mxu0 %v677
  %v889 = vpop.f32.mrf.mxu0
  %v890 = vadd.f32 0.0, %v889
  %891 = vmatmul.f32.gmra.mxu0 %v680
  %v892 = vpop.f32.mrf.mxu0
  %v893 = vadd.f32 0.0, %v892
  %894 = vmatmul.f32.gmra.mxu0 %v683
  %v895 = vpop.f32.mrf.mxu0
  %v896 = vadd.f32 0.0, %v895
  %897 = vmatmul.f32.gmra.mxu0 %v686
  %v898 = vpop.f32.mrf.mxu0
  %v899 = vadd.f32 0.0, %v898
  %900 = vmatmul.f32.gmra.mxu0 %v689
  %v901 = vpop.f32.mrf.mxu0
  %v902 = vadd.f32 0.0, %v901
  %903 = vmatmul.f32.gmra.mxu0 %v692
  %v904 = vpop.f32.mrf.mxu0
  %v905 = vadd.f32 0.0, %v904
  %906 = vmatmul.f32.gmra.mxu0 %v695
  %v907 = vpop.f32.mrf.mxu0
  %v908 = vadd.f32 0.0, %v907
  %909 = vmatmul.f32.gmra.mxu0 %v698
  %v910 = vpop.f32.mrf.mxu0
  %v911 = vadd.f32 0.0, %v910
  %912 = vmatmul.f32.gmra.mxu0 %v701
  %v913 = vpop.f32.mrf.mxu0
  %v914 = vadd.f32 0.0, %v913
  %915 = vmatmul.f32.gmra.mxu0 %v704
  %v916 = vpop.f32.mrf.mxu0
  %v917 = vadd.f32 0.0, %v916
  %918 = vmatmul.f32.gmra.mxu0 %v707
  %v919 = vpop.f32.mrf.mxu0
  %v920 = vadd.f32 0.0, %v919
  %921 = vmatmul.f32.gmra.mxu0 %v710
  %v922 = vpop.f32.mrf.mxu0
  %v923 = vadd.f32 0.0, %v922
  %924 = vmatmul.f32.gmra.mxu0 %v713
  %v925 = vpop.f32.mrf.mxu0
  %v926 = vadd.f32 0.0, %v925
  %927 = vmatmul.f32.gmra.mxu0 %v716
  %v928 = vpop.f32.mrf.mxu0
  %v929 = vadd.f32 0.0, %v928
  %930 = vmatmul.f32.gmra.mxu0 %v719
  %v931 = vpop.f32.mrf.mxu0
  %v932 = vadd.f32 0.0, %v931
  %933 = vmatmul.f32.gmra.mxu0 %v722
  %v934 = vpop.f32.mrf.mxu0
  %v935 = vadd.f32 0.0, %v934
  %936 = vmatmul.f32.gmra.mxu0 %v725
  %v937 = vpop.f32.mrf.mxu0
  %v938 = vadd.f32 0.0, %v937
  %939 = vmatmul.f32.gmra.mxu0 %v728
  %v940 = vpop.f32.mrf.mxu0
  %v941 = vadd.f32 0.0, %v940
  %942 = vmatmul.f32.gmra.mxu0 %v731
  %v943 = vpop.f32.mrf.mxu0
  %v944 = vadd.f32 0.0, %v943
  %945 = vmatmul.f32.gmra.mxu0 %v734
  %v946 = vpop.f32.mrf.mxu0
  %v947 = vadd.f32 0.0, %v946
  %948 = vmatmul.f32.gmra.mxu0 %v737
  %v949 = vpop.f32.mrf.mxu0
  %v950 = vadd.f32 0.0, %v949
  %951 = vmatmul.f32.gmra.mxu0 %v740
  %v952 = vpop.f32.mrf.mxu0
  %v953 = vadd.f32 0.0, %v952
  %954 = vmatmul.f32.gmra.mxu0 %v743
  %v955 = vpop.f32.mrf.mxu0
  %v956 = vadd.f32 0.0, %v955
  %957 = vmatmul.f32.gmra.mxu0 %v746
  %v958 = vpop.f32.mrf.mxu0
  %v959 = vadd.f32 0.0, %v958
  %960 = vmatmul.f32.gmra.mxu0 %v749
  %v961 = vpop.f32.mrf.mxu0
  %v962 = vadd.f32 0.0, %v961
  %963 = vmatmul.f32.gmra.mxu0 %v752
  %v964 = vpop.f32.mrf.mxu0
  %v965 = vadd.f32 0.0, %v964
  %966 = vmatmul.f32.gmra.mxu0 %v755
  %v967 = vpop.f32.mrf.mxu0
  %v968 = vadd.f32 0.0, %v967
  %969 = vmatmul.f32.gmra.mxu0 %v758
  %v970 = vpop.f32.mrf.mxu0
  %v971 = vadd.f32 0.0, %v970
  %972 = vmatmul.f32.gmra.mxu0 %v761
  %v973 = vpop.f32.mrf.mxu0
  %v974 = vadd.f32 0.0, %v973
  %975 = vmatmul.f32.gmra.mxu0 %v764
  %v976 = vpop.f32.mrf.mxu0
  %v977 = vadd.f32 0.0, %v976
  %978 = vmatmul.f32.gmra.mxu0 %v767
  %v979 = vpop.f32.mrf.mxu0
  %v980 = vadd.f32 0.0, %v979
  %981 = vmatmul.f32.gmra.mxu0 %v770
  %v982 = vpop.f32.mrf.mxu0
  %v983 = vadd.f32 0.0, %v982
  %984 = vmatmul.f32.gmra.mxu0 %v773
  %v985 = vpop.f32.mrf.mxu0
  %v986 = vadd.f32 0.0, %v985
  %987 = vmatmul.f32.gmra.mxu0 %v776
  %v988 = vpop.f32.mrf.mxu0
  %v989 = vadd.f32 0.0, %v988
  %990 = vmatmul.f32.gmra.mxu0 %v779
  %v991 = vpop.f32.mrf.mxu0
  %v992 = vadd.f32 0.0, %v991
  %993 = vmatmul.f32.gmra.mxu0 %v782
  %v994 = vpop.f32.mrf.mxu0
  %v995 = vadd.f32 0.0, %v994
  %996 = vmatmul.f32.gmra.mxu0 %v785
  %v997 = vpop.f32.mrf.mxu0
  %v998 = vadd.f32 0.0, %v997
  %999 = vmatmul.f32.gmra.mxu0 %v788
  %v1000 = vpop.f32.mrf.mxu0
  %v1001 = vadd.f32 0.0, %v1000
  %1002 = vmatmul.f32.gmra.mxu0 %v791
  %v1003 = vpop.f32.mrf.mxu0
  %v1004 = vadd.f32 0.0, %v1003
  %1005 = vmatmul.f32.gmra.mxu0 %v794
  %v1006 = vpop.f32.mrf.mxu0
  %v1007 = vadd.f32 0.0, %v1006
  %1008 = vmatmul.f32.gmra.mxu0 %v797
  %v1009 = vpop.f32.mrf.mxu0
  %v1010 = vadd.f32 0.0, %v1009
  %1011 = vmatmul.f32.gmra.mxu0 %v800
  %v1012 = vpop.f32.mrf.mxu0
  %v1013 = vadd.f32 0.0, %v1012
  %1014 = vmatmul.f32.gmra.mxu0 %v803
  %v1015 = vpop.f32.mrf.mxu0
  %v1016 = vadd.f32 0.0, %v1015
  %1017 = vmatmul.f32.gmra.mxu0 %v806
  %v1018 = vpop.f32.mrf.mxu0
  %v1019 = vadd.f32 0.0, %v1018
  %1020 = vmatmul.f32.gmra.mxu0 %v809
  %v1021 = vpop.f32.mrf.mxu0
  %v1022 = vadd.f32 0.0, %v1021
  %1023 = vmatmul.f32.gmra.mxu0 %v812
  %v1024 = vpop.f32.mrf.mxu0
  %v1025 = vadd.f32 0.0, %v1024
  %1026 = vmatmul.f32.gmra.mxu0 %v815
  %v1027 = vpop.f32.mrf.mxu0
  %v1028 = vadd.f32 0.0, %v1027
  %1029 = vmatmul.f32.gmra.mxu0 %v818
  %v1030 = vpop.f32.mrf.mxu0
  %v1031 = vadd.f32 0.0, %v1030
  %1032 = vmatmul.f32.gmra.mxu0 %v821
  %v1033 = vpop.f32.mrf.mxu0
  %v1034 = vadd.f32 0.0, %v1033
  %1035 = vmatmul.f32.gmra.mxu0 %v824
  %v1036 = vpop.f32.mrf.mxu0
  %v1037 = vadd.f32 0.0, %v1036
  %1038 = vmatmul.f32.gmra.mxu0 %v827
  %v1039 = vpop.f32.mrf.mxu0
  %v1040 = vadd.f32 0.0, %v1039
  %1041 = vmatmul.f32.gmra.mxu0 %v830
  %v1042 = vpop.f32.mrf.mxu0
  %v1043 = vadd.f32 0.0, %v1042
  %1044 = vmatmul.f32.gmra.mxu0 %v833
  %v1045 = vpop.f32.mrf.mxu0
  %v1046 = vadd.f32 0.0, %v1045
  %1047 = vmatmul.f32.gmra.mxu0 %v836
  %v1048 = vpop.f32.mrf.mxu0
  %v1049 = vadd.f32 0.0, %v1048
  %1050 = vdwg.mxu0
  %v1052 = vsel %vm109, %v324, 0
  %v1055 = vsel %vm109, %v327, 0
  %v1058 = vsel %vm109, %v330, 0
  %v1061 = vsel %vm109, %v333, 0
  %v1064 = vsel %vm109, %v336, 0
  %v1067 = vsel %vm109, %v339, 0
  %v1070 = vsel %vm109, %v342, 0
  %v1073 = vsel %vm109, %v345, 0
  %v1076 = vsel %vm109, %v348, 0
  %v1079 = vsel %vm109, %v351, 0
  %v1082 = vsel %vm109, %v354, 0
  %v1085 = vsel %vm109, %v357, 0
  %v1088 = vsel %vm109, %v360, 0
  %v1091 = vsel %vm109, %v363, 0
  %v1094 = vsel %vm109, %v366, 0
  %v1097 = vsel %vm109, %v369, 0
  %v1100 = vsel %vm109, %v372, 0
  %v1103 = vsel %vm109, %v375, 0
  %v1106 = vsel %vm109, %v378, 0
  %v1109 = vsel %vm109, %v381, 0
  %v1112 = vsel %vm109, %v384, 0
  %v1115 = vsel %vm109, %v387, 0
  %v1118 = vsel %vm109, %v390, 0
  %v1121 = vsel %vm109, %v393, 0
  %v1124 = vsel %vm109, %v396, 0
  %v1127 = vsel %vm109, %v399, 0
  %v1130 = vsel %vm109, %v402, 0
  %v1133 = vsel %vm109, %v405, 0
  %v1136 = vsel %vm109, %v408, 0
  %v1139 = vsel %vm109, %v411, 0
  %v1142 = vsel %vm109, %v414, 0
  %v1145 = vsel %vm109, %v417, 0
  %v1148 = vsel %vm109, %v420, 0
  %v1151 = vsel %vm109, %v423, 0
  %v1154 = vsel %vm109, %v426, 0
  %v1157 = vsel %vm109, %v429, 0
  %v1160 = vsel %vm109, %v432, 0
  %v1163 = vsel %vm109, %v435, 0
  %v1166 = vsel %vm109, %v438, 0
  %v1169 = vsel %vm109, %v441, 0
  %v1172 = vsel %vm109, %v444, 0
  %v1175 = vsel %vm109, %v447, 0
  %v1178 = vsel %vm109, %v450, 0
  %v1181 = vsel %vm109, %v453, 0
  %v1184 = vsel %vm109, %v456, 0
  %v1187 = vsel %vm109, %v459, 0
  %v1190 = vsel %vm109, %v462, 0
  %v1193 = vsel %vm109, %v465, 0
  %v1196 = vsel %vm109, %v468, 0
  %v1199 = vsel %vm109, %v471, 0
  %v1202 = vsel %vm109, %v474, 0
  %v1205 = vsel %vm109, %v477, 0
  %v1208 = vsel %vm109, %v480, 0
  %v1211 = vsel %vm109, %v483, 0
  %v1214 = vsel %vm109, %v486, 0
  %v1217 = vsel %vm109, %v489, 0
  %v1220 = vsel %vm109, %v492, 0
  %v1223 = vsel %vm109, %v495, 0
  %v1226 = vsel %vm109, %v498, 0
  %v1229 = vsel %vm109, %v501, 0
  %v1232 = vsel %vm109, %v504, 0
  %v1235 = vsel %vm109, %v507, 0
  %v1238 = vsel %vm109, %v510, 0
  %v1241 = vsel %vm109, %v513, 0
  %v1244 = vsel %vm302, %v579, 0
  %1246 = vmatpush.msra.mxu0 0.0
  %1247 = vmatpush.msra.mxu0 0.0
  %1248 = vmatpush.msra.mxu0 0.0
  %1249 = vmatpush.msra.mxu0 0.0
  %1250 = vmatpush.msra.mxu0 0.0
  %1251 = vmatpush.msra.mxu0 0.0
  %1252 = vmatpush.msra.mxu0 0.0
  %1253 = vmatpush.msra.mxu0 0.0
  %1254 = vmatpush.msra.mxu0 0.0
  %1255 = vmatpush.msra.mxu0 0.0
  %1256 = vmatpush.msra.mxu0 0.0
  %1257 = vmatpush.msra.mxu0 0.0
  %1258 = vmatpush.msra.mxu0 0.0
  %1259 = vmatpush.msra.mxu0 0.0
  %1260 = vmatpush.msra.mxu0 0.0
  %1261 = vmatpush.msra.mxu0 %v1244
  %1262 = vmatmul.f32.gmra.mxu0 %v1052
  %v1263 = vpop.f32.mrf.mxu0
  %v1264 = vadd.f32 %v860, %v1263
  %1265 = vmatmul.f32.gmra.mxu0 %v1055
  %v1266 = vpop.f32.mrf.mxu0
  %v1267 = vadd.f32 %v863, %v1266
  %1268 = vmatmul.f32.gmra.mxu0 %v1058
  %v1269 = vpop.f32.mrf.mxu0
  %v1270 = vadd.f32 %v866, %v1269
  %1271 = vmatmul.f32.gmra.mxu0 %v1061
  %v1272 = vpop.f32.mrf.mxu0
  %v1273 = vadd.f32 %v869, %v1272
  %1274 = vmatmul.f32.gmra.mxu0 %v1064
  %v1275 = vpop.f32.mrf.mxu0
  %v1276 = vadd.f32 %v872, %v1275
  %1277 = vmatmul.f32.gmra.mxu0 %v1067
  %v1278 = vpop.f32.mrf.mxu0
  %v1279 = vadd.f32 %v875, %v1278
  %1280 = vmatmul.f32.gmra.mxu0 %v1070
  %v1281 = vpop.f32.mrf.mxu0
  %v1282 = vadd.f32 %v878, %v1281
  %1283 = vmatmul.f32.gmra.mxu0 %v1073
  %v1284 = vpop.f32.mrf.mxu0
  %v1285 = vadd.f32 %v881, %v1284
  %1286 = vmatmul.f32.gmra.mxu0 %v1076
  %v1287 = vpop.f32.mrf.mxu0
  %v1288 = vadd.f32 %v884, %v1287
  %1289 = vmatmul.f32.gmra.mxu0 %v1079
  %v1290 = vpop.f32.mrf.mxu0
  %v1291 = vadd.f32 %v887, %v1290
  %1292 = vmatmul.f32.gmra.mxu0 %v1082
  %v1293 = vpop.f32.mrf.mxu0
  %v1294 = vadd.f32 %v890, %v1293
  %1295 = vmatmul.f32.gmra.mxu0 %v1085
  %v1296 = vpop.f32.mrf.mxu0
  %v1297 = vadd.f32 %v893, %v1296
  %1298 = vmatmul.f32.gmra.mxu0 %v1088
  %v1299 = vpop.f32.mrf.mxu0
  %v1300 = vadd.f32 %v896, %v1299
  %1301 = vmatmul.f32.gmra.mxu0 %v1091
  %v1302 = vpop.f32.mrf.mxu0
  %v1303 = vadd.f32 %v899, %v1302
  %1304 = vmatmul.f32.gmra.mxu0 %v1094
  %v1305 = vpop.f32.mrf.mxu0
  %v1306 = vadd.f32 %v902, %v1305
  %1307 = vmatmul.f32.gmra.mxu0 %v1097
  %v1308 = vpop.f32.mrf.mxu0
  %v1309 = vadd.f32 %v905, %v1308
  %1310 = vmatmul.f32.gmra.mxu0 %v1100
  %v1311 = vpop.f32.mrf.mxu0
  %v1312 = vadd.f32 %v908, %v1311
  %1313 = vmatmul.f32.gmra.mxu0 %v1103
  %v1314 = vpop.f32.mrf.mxu0
  %v1315 = vadd.f32 %v911, %v1314
  %1316 = vmatmul.f32.gmra.mxu0 %v1106
  %v1317 = vpop.f32.mrf.mxu0
  %v1318 = vadd.f32 %v914, %v1317
  %1319 = vmatmul.f32.gmra.mxu0 %v1109
  %v1320 = vpop.f32.mrf.mxu0
  %v1321 = vadd.f32 %v917, %v1320
  %1322 = vmatmul.f32.gmra.mxu0 %v1112
  %v1323 = vpop.f32.mrf.mxu0
  %v1324 = vadd.f32 %v920, %v1323
  %1325 = vmatmul.f32.gmra.mxu0 %v1115
  %v1326 = vpop.f32.mrf.mxu0
  %v1327 = vadd.f32 %v923, %v1326
  %1328 = vmatmul.f32.gmra.mxu0 %v1118
  %v1329 = vpop.f32.mrf.mxu0
  %v1330 = vadd.f32 %v926, %v1329
  %1331 = vmatmul.f32.gmra.mxu0 %v1121
  %v1332 = vpop.f32.mrf.mxu0
  %v1333 = vadd.f32 %v929, %v1332
  %1334 = vmatmul.f32.gmra.mxu0 %v1124
  %v1335 = vpop.f32.mrf.mxu0
  %v1336 = vadd.f32 %v932, %v1335
  %1337 = vmatmul.f32.gmra.mxu0 %v1127
  %v1338 = vpop.f32.mrf.mxu0
  %v1339 = vadd.f32 %v935, %v1338
  %1340 = vmatmul.f32.gmra.mxu0 %v1130
  %v1341 = vpop.f32.mrf.mxu0
  %v1342 = vadd.f32 %v938, %v1341
  %1343 = vmatmul.f32.gmra.mxu0 %v1133
  %v1344 = vpop.f32.mrf.mxu0
  %v1345 = vadd.f32 %v941, %v1344
  %1346 = vmatmul.f32.gmra.mxu0 %v1136
  %v1347 = vpop.f32.mrf.mxu0
  %v1348 = vadd.f32 %v944, %v1347
  %1349 = vmatmul.f32.gmra.mxu0 %v1139
  %v1350 = vpop.f32.mrf.mxu0
  %v1351 = vadd.f32 %v947, %v1350
  %1352 = vmatmul.f32.gmra.mxu0 %v1142
  %v1353 = vpop.f32.mrf.mxu0
  %v1354 = vadd.f32 %v950, %v1353
  %1355 = vmatmul.f32.gmra.mxu0 %v1145
  %v1356 = vpop.f32.mrf.mxu0
  %v1357 = vadd.f32 %v953, %v1356
  %1358 = vmatmul.f32.gmra.mxu0 %v1148
  %v1359 = vpop.f32.mrf.mxu0
  %v1360 = vadd.f32 %v956, %v1359
  %1361 = vmatmul.f32.gmra.mxu0 %v1151
  %v1362 = vpop.f32.mrf.mxu0
  %v1363 = vadd.f32 %v959, %v1362
  %1364 = vmatmul.f32.gmra.mxu0 %v1154
  %v1365 = vpop.f32.mrf.mxu0
  %v1366 = vadd.f32 %v962, %v1365
  %1367 = vmatmul.f32.gmra.mxu0 %v1157
  %v1368 = vpop.f32.mrf.mxu0
  %v1369 = vadd.f32 %v965, %v1368
  %1370 = vmatmul.f32.gmra.mxu0 %v1160
  %v1371 = vpop.f32.mrf.mxu0
  %v1372 = vadd.f32 %v968, %v1371
  %1373 = vmatmul.f32.gmra.mxu0 %v1163
  %v1374 = vpop.f32.mrf.mxu0
  %v1375 = vadd.f32 %v971, %v1374
  %1376 = vmatmul.f32.gmra.mxu0 %v1166
  %v1377 = vpop.f32.mrf.mxu0
  %v1378 = vadd.f32 %v974, %v1377
  %1379 = vmatmul.f32.gmra.mxu0 %v1169
  %v1380 = vpop.f32.mrf.mxu0
  %v1381 = vadd.f32 %v977, %v1380
  %1382 = vmatmul.f32.gmra.mxu0 %v1172
  %v1383 = vpop.f32.mrf.mxu0
  %v1384 = vadd.f32 %v980, %v1383
  %1385 = vmatmul.f32.gmra.mxu0 %v1175
  %v1386 = vpop.f32.mrf.mxu0
  %v1387 = vadd.f32 %v983, %v1386
  %1388 = vmatmul.f32.gmra.mxu0 %v1178
  %v1389 = vpop.f32.mrf.mxu0
  %v1390 = vadd.f32 %v986, %v1389
  %1391 = vmatmul.f32.gmra.mxu0 %v1181
  %v1392 = vpop.f32.mrf.mxu0
  %v1393 = vadd.f32 %v989, %v1392
  %1394 = vmatmul.f32.gmra.mxu0 %v1184
  %v1395 = vpop.f32.mrf.mxu0
  %v1396 = vadd.f32 %v992, %v1395
  %1397 = vmatmul.f32.gmra.mxu0 %v1187
  %v1398 = vpop.f32.mrf.mxu0
  %v1399 = vadd.f32 %v995, %v1398
  %1400 = vmatmul.f32.gmra.mxu0 %v1190
  %v1401 = vpop.f32.mrf.mxu0
  %v1402 = vadd.f32 %v998, %v1401
  %1403 = vmatmul.f32.gmra.mxu0 %v1193
  %v1404 = vpop.f32.mrf.mxu0
  %v1405 = vadd.f32 %v1001, %v1404
  %1406 = vmatmul.f32.gmra.mxu0 %v1196
  %v1407 = vpop.f32.mrf.mxu0
  %v1408 = vadd.f32 %v1004, %v1407
  %1409 = vmatmul.f32.gmra.mxu0 %v1199
  %v1410 = vpop.f32.mrf.mxu0
  %v1411 = vadd.f32 %v1007, %v1410
  %1412 = vmatmul.f32.gmra.mxu0 %v1202
  %v1413 = vpop.f32.mrf.mxu0
  %v1414 = vadd.f32 %v1010, %v1413
  %1415 = vmatmul.f32.gmra.mxu0 %v1205
  %v1416 = vpop.f32.mrf.mxu0
  %v1417 = vadd.f32 %v1013, %v1416
  %1418 = vmatmul.f32.gmra.mxu0 %v1208
  %v1419 = vpop.f32.mrf.mxu0
  %v1420 = vadd.f32 %v1016, %v1419
  %1421 = vmatmul.f32.gmra.mxu0 %v1211
  %v1422 = vpop.f32.mrf.mxu0
  %v1423 = vadd.f32 %v1019, %v1422
  %1424 = vmatmul.f32.gmra.mxu0 %v1214
  %v1425 = vpop.f32.mrf.mxu0
  %v1426 = vadd.f32 %v1022, %v1425
  %1427 = vmatmul.f32.gmra.mxu0 %v1217
  %v1428 = vpop.f32.mrf.mxu0
  %v1429 = vadd.f32 %v1025, %v1428
  %1430 = vmatmul.f32.gmra.mxu0 %v1220
  %v1431 = vpop.f32.mrf.mxu0
  %v1432 = vadd.f32 %v1028, %v1431
  %1433 = vmatmul.f32.gmra.mxu0 %v1223
  %v1434 = vpop.f32.mrf.mxu0
  %v1435 = vadd.f32 %v1031, %v1434
  %1436 = vmatmul.f32.gmra.mxu0 %v1226
  %v1437 = vpop.f32.mrf.mxu0
  %v1438 = vadd.f32 %v1034, %v1437
  %1439 = vmatmul.f32.gmra.mxu0 %v1229
  %v1440 = vpop.f32.mrf.mxu0
  %v1441 = vadd.f32 %v1037, %v1440
  %1442 = vmatmul.f32.gmra.mxu0 %v1232
  %v1443 = vpop.f32.mrf.mxu0
  %v1444 = vadd.f32 %v1040, %v1443
  %1445 = vmatmul.f32.gmra.mxu0 %v1235
  %v1446 = vpop.f32.mrf.mxu0
  %v1447 = vadd.f32 %v1043, %v1446
  %1448 = vmatmul.f32.gmra.mxu0 %v1238
  %v1449 = vpop.f32.mrf.mxu0
  %v1450 = vadd.f32 %v1046, %v1449
  %1451 = vmatmul.f32.gmra.mxu0 %v1241
  %v1452 = vpop.f32.mrf.mxu0
  %v1453 = vadd.f32 %v1049, %v1452
  %1454 = vdwg.mxu0
  %v1455 = vld [vmem:[%s2] sm:$0xff]
  %v1456 = vld [vmem:[%s2 + $0x8] sm:$0xff]
  %v1457 = vld [vmem:[%s2 + $0x10] sm:$0xff]
  %v1458 = vld [vmem:[%s2 + $0x18] sm:$0xff]
  %v1459 = vld [vmem:[%s2 + $0x20] sm:$0xff]
  %v1460 = vld [vmem:[%s2 + $0x28] sm:$0xff]
  %v1461 = vld [vmem:[%s2 + $0x30] sm:$0xff]
  %v1462 = vld [vmem:[%s2 + $0x38] sm:$0xff]
  %v1463 = vld [vmem:[%s2 + $0x40] sm:$0xff]
  %v1464 = vld [vmem:[%s2 + $0x48] sm:$0xff]
  %v1465 = vld [vmem:[%s2 + $0x50] sm:$0xff]
  %v1466 = vld [vmem:[%s2 + $0x58] sm:$0xff]
  %v1467 = vld [vmem:[%s2 + $0x60] sm:$0xff]
  %v1468 = vld [vmem:[%s2 + $0x68] sm:$0xff]
  %v1469 = vld [vmem:[%s2 + $0x70] sm:$0xff]
  %v1470 = vld [vmem:[%s2 + $0x78] sm:$0xff]
  %v1471 = vld [vmem:[%s2 + $0x80] sm:$0xff]
  %v1472 = vld [vmem:[%s2 + $0x88] sm:$0xff]
  %v1473 = vld [vmem:[%s2 + $0x90] sm:$0xff]
  %v1474 = vld [vmem:[%s2 + $0x98] sm:$0xff]
  %v1475 = vld [vmem:[%s2 + $0xa0] sm:$0xff]
  %v1476 = vld [vmem:[%s2 + $0xa8] sm:$0xff]
  %v1477 = vld [vmem:[%s2 + $0xb0] sm:$0xff]
  %v1478 = vld [vmem:[%s2 + $0xb8] sm:$0xff]
  %v1479 = vld [vmem:[%s2 + $0xc0] sm:$0xff]
  %v1480 = vld [vmem:[%s2 + $0xc8] sm:$0xff]
  %v1481 = vld [vmem:[%s2 + $0xd0] sm:$0xff]
  %v1482 = vld [vmem:[%s2 + $0xd8] sm:$0xff]
  %v1483 = vld [vmem:[%s2 + $0xe0] sm:$0xff]
  %v1484 = vld [vmem:[%s2 + $0xe8] sm:$0xff]
  %v1485 = vld [vmem:[%s2 + $0xf0] sm:$0xff]
  %v1486 = vld [vmem:[%s2 + $0xf8] sm:$0xff]
  %v1487 = vld [vmem:[%s2 + $0x100] sm:$0xff]
  %v1488 = vld [vmem:[%s2 + $0x108] sm:$0xff]
  %v1489 = vld [vmem:[%s2 + $0x110] sm:$0xff]
  %v1490 = vld [vmem:[%s2 + $0x118] sm:$0xff]
  %v1491 = vld [vmem:[%s2 + $0x120] sm:$0xff]
  %v1492 = vld [vmem:[%s2 + $0x128] sm:$0xff]
  %v1493 = vld [vmem:[%s2 + $0x130] sm:$0xff]
  %v1494 = vld [vmem:[%s2 + $0x138] sm:$0xff]
  %v1495 = vld [vmem:[%s2 + $0x140] sm:$0xff]
  %v1496 = vld [vmem:[%s2 + $0x148] sm:$0xff]
  %v1497 = vld [vmem:[%s2 + $0x150] sm:$0xff]
  %v1498 = vld [vmem:[%s2 + $0x158] sm:$0xff]
  %v1499 = vld [vmem:[%s2 + $0x160] sm:$0xff]
  %v1500 = vld [vmem:[%s2 + $0x168] sm:$0xff]
  %v1501 = vld [vmem:[%s2 + $0x170] sm:$0xff]
  %v1502 = vld [vmem:[%s2 + $0x178] sm:$0xff]
  %v1503 = vld [vmem:[%s2 + $0x180] sm:$0xff]
  %v1504 = vld [vmem:[%s2 + $0x188] sm:$0xff]
  %v1505 = vld [vmem:[%s2 + $0x190] sm:$0xff]
  %v1506 = vld [vmem:[%s2 + $0x198] sm:$0xff]
  %v1507 = vld [vmem:[%s2 + $0x1a0] sm:$0xff]
  %v1508 = vld [vmem:[%s2 + $0x1a8] sm:$0xff]
  %v1509 = vld [vmem:[%s2 + $0x1b0] sm:$0xff]
  %v1510 = vld [vmem:[%s2 + $0x1b8] sm:$0xff]
  %v1511 = vld [vmem:[%s2 + $0x1c0] sm:$0xff]
  %v1512 = vld [vmem:[%s2 + $0x1c8] sm:$0xff]
  %v1513 = vld [vmem:[%s2 + $0x1d0] sm:$0xff]
  %v1514 = vld [vmem:[%s2 + $0x1d8] sm:$0xff]
  %v1515 = vld [vmem:[%s2 + $0x1e0] sm:$0xff]
  %v1516 = vld [vmem:[%s2 + $0x1e8] sm:$0xff]
  %v1517 = vld [vmem:[%s2 + $0x1f0] sm:$0xff]
  %v1518 = vld [vmem:[%s2 + $0x1f8] sm:$0xff]
  %v1519 = vld [vmem:[%s7] sm:$0x3]
  %v1521 = vsel %vm645, %v1455, 0
  %v1524 = vsel %vm645, %v1456, 0
  %v1527 = vsel %vm645, %v1457, 0
  %v1530 = vsel %vm645, %v1458, 0
  %v1533 = vsel %vm645, %v1459, 0
  %v1536 = vsel %vm645, %v1460, 0
  %v1539 = vsel %vm645, %v1461, 0
  %v1542 = vsel %vm645, %v1462, 0
  %v1545 = vsel %vm645, %v1463, 0
  %v1548 = vsel %vm645, %v1464, 0
  %v1551 = vsel %vm645, %v1465, 0
  %v1554 = vsel %vm645, %v1466, 0
  %v1557 = vsel %vm645, %v1467, 0
  %v1560 = vsel %vm645, %v1468, 0
  %v1563 = vsel %vm645, %v1469, 0
  %v1566 = vsel %vm645, %v1470, 0
  %v1569 = vsel %vm645, %v1471, 0
  %v1572 = vsel %vm645, %v1472, 0
  %v1575 = vsel %vm645, %v1473, 0
  %v1578 = vsel %vm645, %v1474, 0
  %v1581 = vsel %vm645, %v1475, 0
  %v1584 = vsel %vm645, %v1476, 0
  %v1587 = vsel %vm645, %v1477, 0
  %v1590 = vsel %vm645, %v1478, 0
  %v1593 = vsel %vm645, %v1479, 0
  %v1596 = vsel %vm645, %v1480, 0
  %v1599 = vsel %vm645, %v1481, 0
  %v1602 = vsel %vm645, %v1482, 0
  %v1605 = vsel %vm645, %v1483, 0
  %v1608 = vsel %vm645, %v1484, 0
  %v1611 = vsel %vm645, %v1485, 0
  %v1614 = vsel %vm645, %v1486, 0
  %v1617 = vsel %vm645, %v1487, 0
  %v1620 = vsel %vm645, %v1488, 0
  %v1623 = vsel %vm645, %v1489, 0
  %v1626 = vsel %vm645, %v1490, 0
  %v1629 = vsel %vm645, %v1491, 0
  %v1632 = vsel %vm645, %v1492, 0
  %v1635 = vsel %vm645, %v1493, 0
  %v1638 = vsel %vm645, %v1494, 0
  %v1641 = vsel %vm645, %v1495, 0
  %v1644 = vsel %vm645, %v1496, 0
  %v1647 = vsel %vm645, %v1497, 0
  %v1650 = vsel %vm645, %v1498, 0
  %v1653 = vsel %vm645, %v1499, 0
  %v1656 = vsel %vm645, %v1500, 0
  %v1659 = vsel %vm645, %v1501, 0
  %v1662 = vsel %vm645, %v1502, 0
  %v1665 = vsel %vm645, %v1503, 0
  %v1668 = vsel %vm645, %v1504, 0
  %v1671 = vsel %vm645, %v1505, 0
  %v1674 = vsel %vm645, %v1506, 0
  %v1677 = vsel %vm645, %v1507, 0
  %v1680 = vsel %vm645, %v1508, 0
  %v1683 = vsel %vm645, %v1509, 0
  %v1686 = vsel %vm645, %v1510, 0
  %v1689 = vsel %vm645, %v1511, 0
  %v1692 = vsel %vm645, %v1512, 0
  %v1695 = vsel %vm645, %v1513, 0
  %v1698 = vsel %vm645, %v1514, 0
  %v1701 = vsel %vm645, %v1515, 0
  %v1704 = vsel %vm645, %v1516, 0
  %v1707 = vsel %vm645, %v1517, 0
  %v1710 = vsel %vm645, %v1518, 0
  %v1713 = vsel %vm838, %v1519, 0
  %1715 = vmatpush.msra.mxu0 0.0
  %1716 = vmatpush.msra.mxu0 0.0
  %1717 = vmatpush.msra.mxu0 0.0
  %1718 = vmatpush.msra.mxu0 0.0
  %1719 = vmatpush.msra.mxu0 0.0
  %1720 = vmatpush.msra.mxu0 0.0
  %1721 = vmatpush.msra.mxu0 0.0
  %1722 = vmatpush.msra.mxu0 0.0
  %1723 = vmatpush.msra.mxu0 0.0
  %1724 = vmatpush.msra.mxu0 0.0
  %1725 = vmatpush.msra.mxu0 0.0
  %1726 = vmatpush.msra.mxu0 0.0
  %1727 = vmatpush.msra.mxu0 0.0
  %1728 = vmatpush.msra.mxu0 0.0
  %1729 = vmatpush.msra.mxu0 0.0
  %1730 = vmatpush.msra.mxu0 %v1713
  %1731 = vmatmul.f32.gmra.mxu0 %v1521
  %v1732 = vpop.f32.mrf.mxu0
  %v1733 = vadd.f32 0.0, %v1732
  %1734 = vmatmul.f32.gmra.mxu0 %v1524
  %v1735 = vpop.f32.mrf.mxu0
  %v1736 = vadd.f32 0.0, %v1735
  %1737 = vmatmul.f32.gmra.mxu0 %v1527
  %v1738 = vpop.f32.mrf.mxu0
  %v1739 = vadd.f32 0.0, %v1738
  %1740 = vmatmul.f32.gmra.mxu0 %v1530
  %v1741 = vpop.f32.mrf.mxu0
  %v1742 = vadd.f32 0.0, %v1741
  %1743 = vmatmul.f32.gmra.mxu0 %v1533
  %v1744 = vpop.f32.mrf.mxu0
  %v1745 = vadd.f32 0.0, %v1744
  %1746 = vmatmul.f32.gmra.mxu0 %v1536
  %v1747 = vpop.f32.mrf.mxu0
  %v1748 = vadd.f32 0.0, %v1747
  %1749 = vmatmul.f32.gmra.mxu0 %v1539
  %v1750 = vpop.f32.mrf.mxu0
  %v1751 = vadd.f32 0.0, %v1750
  %1752 = vmatmul.f32.gmra.mxu0 %v1542
  %v1753 = vpop.f32.mrf.mxu0
  %v1754 = vadd.f32 0.0, %v1753
  %1755 = vmatmul.f32.gmra.mxu0 %v1545
  %v1756 = vpop.f32.mrf.mxu0
  %v1757 = vadd.f32 0.0, %v1756
  %1758 = vmatmul.f32.gmra.mxu0 %v1548
  %v1759 = vpop.f32.mrf.mxu0
  %v1760 = vadd.f32 0.0, %v1759
  %1761 = vmatmul.f32.gmra.mxu0 %v1551
  %v1762 = vpop.f32.mrf.mxu0
  %v1763 = vadd.f32 0.0, %v1762
  %1764 = vmatmul.f32.gmra.mxu0 %v1554
  %v1765 = vpop.f32.mrf.mxu0
  %v1766 = vadd.f32 0.0, %v1765
  %1767 = vmatmul.f32.gmra.mxu0 %v1557
  %v1768 = vpop.f32.mrf.mxu0
  %v1769 = vadd.f32 0.0, %v1768
  %1770 = vmatmul.f32.gmra.mxu0 %v1560
  %v1771 = vpop.f32.mrf.mxu0
  %v1772 = vadd.f32 0.0, %v1771
  %1773 = vmatmul.f32.gmra.mxu0 %v1563
  %v1774 = vpop.f32.mrf.mxu0
  %v1775 = vadd.f32 0.0, %v1774
  %1776 = vmatmul.f32.gmra.mxu0 %v1566
  %v1777 = vpop.f32.mrf.mxu0
  %v1778 = vadd.f32 0.0, %v1777
  %1779 = vmatmul.f32.gmra.mxu0 %v1569
  %v1780 = vpop.f32.mrf.mxu0
  %v1781 = vadd.f32 0.0, %v1780
  %1782 = vmatmul.f32.gmra.mxu0 %v1572
  %v1783 = vpop.f32.mrf.mxu0
  %v1784 = vadd.f32 0.0, %v1783
  %1785 = vmatmul.f32.gmra.mxu0 %v1575
  %v1786 = vpop.f32.mrf.mxu0
  %v1787 = vadd.f32 0.0, %v1786
  %1788 = vmatmul.f32.gmra.mxu0 %v1578
  %v1789 = vpop.f32.mrf.mxu0
  %v1790 = vadd.f32 0.0, %v1789
  %1791 = vmatmul.f32.gmra.mxu0 %v1581
  %v1792 = vpop.f32.mrf.mxu0
  %v1793 = vadd.f32 0.0, %v1792
  %1794 = vmatmul.f32.gmra.mxu0 %v1584
  %v1795 = vpop.f32.mrf.mxu0
  %v1796 = vadd.f32 0.0, %v1795
  %1797 = vmatmul.f32.gmra.mxu0 %v1587
  %v1798 = vpop.f32.mrf.mxu0
  %v1799 = vadd.f32 0.0, %v1798
  %1800 = vmatmul.f32.gmra.mxu0 %v1590
  %v1801 = vpop.f32.mrf.mxu0
  %v1802 = vadd.f32 0.0, %v1801
  %1803 = vmatmul.f32.gmra.mxu0 %v1593
  %v1804 = vpop.f32.mrf.mxu0
  %v1805 = vadd.f32 0.0, %v1804
  %1806 = vmatmul.f32.gmra.mxu0 %v1596
  %v1807 = vpop.f32.mrf.mxu0
  %v1808 = vadd.f32 0.0, %v1807
  %1809 = vmatmul.f32.gmra.mxu0 %v1599
  %v1810 = vpop.f32.mrf.mxu0
  %v1811 = vadd.f32 0.0, %v1810
  %1812 = vmatmul.f32.gmra.mxu0 %v1602
  %v1813 = vpop.f32.mrf.mxu0
  %v1814 = vadd.f32 0.0, %v1813
  %1815 = vmatmul.f32.gmra.mxu0 %v1605
  %v1816 = vpop.f32.mrf.mxu0
  %v1817 = vadd.f32 0.0, %v1816
  %1818 = vmatmul.f32.gmra.mxu0 %v1608
  %v1819 = vpop.f32.mrf.mxu0
  %v1820 = vadd.f32 0.0, %v1819
  %1821 = vmatmul.f32.gmra.mxu0 %v1611
  %v1822 = vpop.f32.mrf.mxu0
  %v1823 = vadd.f32 0.0, %v1822
  %1824 = vmatmul.f32.gmra.mxu0 %v1614
  %v1825 = vpop.f32.mrf.mxu0
  %v1826 = vadd.f32 0.0, %v1825
  %1827 = vmatmul.f32.gmra.mxu0 %v1617
  %v1828 = vpop.f32.mrf.mxu0
  %v1829 = vadd.f32 0.0, %v1828
  %1830 = vmatmul.f32.gmra.mxu0 %v1620
  %v1831 = vpop.f32.mrf.mxu0
  %v1832 = vadd.f32 0.0, %v1831
  %1833 = vmatmul.f32.gmra.mxu0 %v1623
  %v1834 = vpop.f32.mrf.mxu0
  %v1835 = vadd.f32 0.0, %v1834
  %1836 = vmatmul.f32.gmra.mxu0 %v1626
  %v1837 = vpop.f32.mrf.mxu0
  %v1838 = vadd.f32 0.0, %v1837
  %1839 = vmatmul.f32.gmra.mxu0 %v1629
  %v1840 = vpop.f32.mrf.mxu0
  %v1841 = vadd.f32 0.0, %v1840
  %1842 = vmatmul.f32.gmra.mxu0 %v1632
  %v1843 = vpop.f32.mrf.mxu0
  %v1844 = vadd.f32 0.0, %v1843
  %1845 = vmatmul.f32.gmra.mxu0 %v1635
  %v1846 = vpop.f32.mrf.mxu0
  %v1847 = vadd.f32 0.0, %v1846
  %1848 = vmatmul.f32.gmra.mxu0 %v1638
  %v1849 = vpop.f32.mrf.mxu0
  %v1850 = vadd.f32 0.0, %v1849
  %1851 = vmatmul.f32.gmra.mxu0 %v1641
  %v1852 = vpop.f32.mrf.mxu0
  %v1853 = vadd.f32 0.0, %v1852
  %1854 = vmatmul.f32.gmra.mxu0 %v1644
  %v1855 = vpop.f32.mrf.mxu0
  %v1856 = vadd.f32 0.0, %v1855
  %1857 = vmatmul.f32.gmra.mxu0 %v1647
  %v1858 = vpop.f32.mrf.mxu0
  %v1859 = vadd.f32 0.0, %v1858
  %1860 = vmatmul.f32.gmra.mxu0 %v1650
  %v1861 = vpop.f32.mrf.mxu0
  %v1862 = vadd.f32 0.0, %v1861
  %1863 = vmatmul.f32.gmra.mxu0 %v1653
  %v1864 = vpop.f32.mrf.mxu0
  %v1865 = vadd.f32 0.0, %v1864
  %1866 = vmatmul.f32.gmra.mxu0 %v1656
  %v1867 = vpop.f32.mrf.mxu0
  %v1868 = vadd.f32 0.0, %v1867
  %1869 = vmatmul.f32.gmra.mxu0 %v1659
  %v1870 = vpop.f32.mrf.mxu0
  %v1871 = vadd.f32 0.0, %v1870
  %1872 = vmatmul.f32.gmra.mxu0 %v1662
  %v1873 = vpop.f32.mrf.mxu0
  %v1874 = vadd.f32 0.0, %v1873
  %1875 = vmatmul.f32.gmra.mxu0 %v1665
  %v1876 = vpop.f32.mrf.mxu0
  %v1877 = vadd.f32 0.0, %v1876
  %1878 = vmatmul.f32.gmra.mxu0 %v1668
  %v1879 = vpop.f32.mrf.mxu0
  %v1880 = vadd.f32 0.0, %v1879
  %1881 = vmatmul.f32.gmra.mxu0 %v1671
  %v1882 = vpop.f32.mrf.mxu0
  %v1883 = vadd.f32 0.0, %v1882
  %1884 = vmatmul.f32.gmra.mxu0 %v1674
  %v1885 = vpop.f32.mrf.mxu0
  %v1886 = vadd.f32 0.0, %v1885
  %1887 = vmatmul.f32.gmra.mxu0 %v1677
  %v1888 = vpop.f32.mrf.mxu0
  %v1889 = vadd.f32 0.0, %v1888
  %1890 = vmatmul.f32.gmra.mxu0 %v1680
  %v1891 = vpop.f32.mrf.mxu0
  %v1892 = vadd.f32 0.0, %v1891
  %1893 = vmatmul.f32.gmra.mxu0 %v1683
  %v1894 = vpop.f32.mrf.mxu0
  %v1895 = vadd.f32 0.0, %v1894
  %1896 = vmatmul.f32.gmra.mxu0 %v1686
  %v1897 = vpop.f32.mrf.mxu0
  %v1898 = vadd.f32 0.0, %v1897
  %1899 = vmatmul.f32.gmra.mxu0 %v1689
  %v1900 = vpop.f32.mrf.mxu0
  %v1901 = vadd.f32 0.0, %v1900
  %1902 = vmatmul.f32.gmra.mxu0 %v1692
  %v1903 = vpop.f32.mrf.mxu0
  %v1904 = vadd.f32 0.0, %v1903
  %1905 = vmatmul.f32.gmra.mxu0 %v1695
  %v1906 = vpop.f32.mrf.mxu0
  %v1907 = vadd.f32 0.0, %v1906
  %1908 = vmatmul.f32.gmra.mxu0 %v1698
  %v1909 = vpop.f32.mrf.mxu0
  %v1910 = vadd.f32 0.0, %v1909
  %1911 = vmatmul.f32.gmra.mxu0 %v1701
  %v1912 = vpop.f32.mrf.mxu0
  %v1913 = vadd.f32 0.0, %v1912
  %1914 = vmatmul.f32.gmra.mxu0 %v1704
  %v1915 = vpop.f32.mrf.mxu0
  %v1916 = vadd.f32 0.0, %v1915
  %1917 = vmatmul.f32.gmra.mxu0 %v1707
  %v1918 = vpop.f32.mrf.mxu0
  %v1919 = vadd.f32 0.0, %v1918
  %1920 = vmatmul.f32.gmra.mxu0 %v1710
  %v1921 = vpop.f32.mrf.mxu0
  %v1922 = vadd.f32 0.0, %v1921
  %1923 = vdwg.mxu0
  %v1924 = vadd.f32 %v1264, %v1733
  %v1925 = vadd.f32 %v1267, %v1736
  %v1926 = vadd.f32 %v1270, %v1739
  %v1927 = vadd.f32 %v1273, %v1742
  %v1928 = vadd.f32 %v1276, %v1745
  %v1929 = vadd.f32 %v1279, %v1748
  %v1930 = vadd.f32 %v1282, %v1751
  %v1931 = vadd.f32 %v1285, %v1754
  %v1932 = vadd.f32 %v1288, %v1757
  %v1933 = vadd.f32 %v1291, %v1760
  %v1934 = vadd.f32 %v1294, %v1763
  %v1935 = vadd.f32 %v1297, %v1766
  %v1936 = vadd.f32 %v1300, %v1769
  %v1937 = vadd.f32 %v1303, %v1772
  %v1938 = vadd.f32 %v1306, %v1775
  %v1939 = vadd.f32 %v1309, %v1778
  %v1940 = vadd.f32 %v1312, %v1781
  %v1941 = vadd.f32 %v1315, %v1784
  %v1942 = vadd.f32 %v1318, %v1787
  %v1943 = vadd.f32 %v1321, %v1790
  %v1944 = vadd.f32 %v1324, %v1793
  %v1945 = vadd.f32 %v1327, %v1796
  %v1946 = vadd.f32 %v1330, %v1799
  %v1947 = vadd.f32 %v1333, %v1802
  %v1948 = vadd.f32 %v1336, %v1805
  %v1949 = vadd.f32 %v1339, %v1808
  %v1950 = vadd.f32 %v1342, %v1811
  %v1951 = vadd.f32 %v1345, %v1814
  %v1952 = vadd.f32 %v1348, %v1817
  %v1953 = vadd.f32 %v1351, %v1820
  %v1954 = vadd.f32 %v1354, %v1823
  %v1955 = vadd.f32 %v1357, %v1826
  %v1956 = vadd.f32 %v1360, %v1829
  %v1957 = vadd.f32 %v1363, %v1832
  %v1958 = vadd.f32 %v1366, %v1835
  %v1959 = vadd.f32 %v1369, %v1838
  %v1960 = vadd.f32 %v1372, %v1841
  %v1961 = vadd.f32 %v1375, %v1844
  %v1962 = vadd.f32 %v1378, %v1847
  %v1963 = vadd.f32 %v1381, %v1850
  %v1964 = vadd.f32 %v1384, %v1853
  %v1965 = vadd.f32 %v1387, %v1856
  %v1966 = vadd.f32 %v1390, %v1859
  %v1967 = vadd.f32 %v1393, %v1862
  %v1968 = vadd.f32 %v1396, %v1865
  %v1969 = vadd.f32 %v1399, %v1868
  %v1970 = vadd.f32 %v1402, %v1871
  %v1971 = vadd.f32 %v1405, %v1874
  %v1972 = vadd.f32 %v1408, %v1877
  %v1973 = vadd.f32 %v1411, %v1880
  %v1974 = vadd.f32 %v1414, %v1883
  %v1975 = vadd.f32 %v1417, %v1886
  %v1976 = vadd.f32 %v1420, %v1889
  %v1977 = vadd.f32 %v1423, %v1892
  %v1978 = vadd.f32 %v1426, %v1895
  %v1979 = vadd.f32 %v1429, %v1898
  %v1980 = vadd.f32 %v1432, %v1901
  %v1981 = vadd.f32 %v1435, %v1904
  %v1982 = vadd.f32 %v1438, %v1907
  %v1983 = vadd.f32 %v1441, %v1910
  %v1984 = vadd.f32 %v1444, %v1913
  %v1985 = vadd.f32 %v1447, %v1916
  %v1986 = vadd.f32 %v1450, %v1919
  %v1987 = vadd.f32 %v1453, %v1922
  %v1988 = vld [vmem:[%s8] sm:$0x1]
  %v1990 = vperm.slane %v1988, 0
  %v1992 = vadd.f32 %v1924, %v1990
  %v1993 = vadd.f32 %v1925, %v1990
  %v1994 = vadd.f32 %v1926, %v1990
  %v1995 = vadd.f32 %v1927, %v1990
  %v1996 = vadd.f32 %v1928, %v1990
  %v1997 = vadd.f32 %v1929, %v1990
  %v1998 = vadd.f32 %v1930, %v1990
  %v1999 = vadd.f32 %v1931, %v1990
  %v2000 = vadd.f32 %v1932, %v1990
  %v2001 = vadd.f32 %v1933, %v1990
  %v2002 = vadd.f32 %v1934, %v1990
  %v2003 = vadd.f32 %v1935, %v1990
  %v2004 = vadd.f32 %v1936, %v1990
  %v2005 = vadd.f32 %v1937, %v1990
  %v2006 = vadd.f32 %v1938, %v1990
  %v2007 = vadd.f32 %v1939, %v1990
  %v2008 = vadd.f32 %v1940, %v1990
  %v2009 = vadd.f32 %v1941, %v1990
  %v2010 = vadd.f32 %v1942, %v1990
  %v2011 = vadd.f32 %v1943, %v1990
  %v2012 = vadd.f32 %v1944, %v1990
  %v2013 = vadd.f32 %v1945, %v1990
  %v2014 = vadd.f32 %v1946, %v1990
  %v2015 = vadd.f32 %v1947, %v1990
  %v2016 = vadd.f32 %v1948, %v1990
  %v2017 = vadd.f32 %v1949, %v1990
  %v2018 = vadd.f32 %v1950, %v1990
  %v2019 = vadd.f32 %v1951, %v1990
  %v2020 = vadd.f32 %v1952, %v1990
  %v2021 = vadd.f32 %v1953, %v1990
  %v2022 = vadd.f32 %v1954, %v1990
  %v2023 = vadd.f32 %v1955, %v1990
  %v2024 = vadd.f32 %v1956, %v1990
  %v2025 = vadd.f32 %v1957, %v1990
  %v2026 = vadd.f32 %v1958, %v1990
  %v2027 = vadd.f32 %v1959, %v1990
  %v2028 = vadd.f32 %v1960, %v1990
  %v2029 = vadd.f32 %v1961, %v1990
  %v2030 = vadd.f32 %v1962, %v1990
  %v2031 = vadd.f32 %v1963, %v1990
  %v2032 = vadd.f32 %v1964, %v1990
  %v2033 = vadd.f32 %v1965, %v1990
  %v2034 = vadd.f32 %v1966, %v1990
  %v2035 = vadd.f32 %v1967, %v1990
  %v2036 = vadd.f32 %v1968, %v1990
  %v2037 = vadd.f32 %v1969, %v1990
  %v2038 = vadd.f32 %v1970, %v1990
  %v2039 = vadd.f32 %v1971, %v1990
  %v2040 = vadd.f32 %v1972, %v1990
  %v2041 = vadd.f32 %v1973, %v1990
  %v2042 = vadd.f32 %v1974, %v1990
  %v2043 = vadd.f32 %v1975, %v1990
  %v2044 = vadd.f32 %v1976, %v1990
  %v2045 = vadd.f32 %v1977, %v1990
  %v2046 = vadd.f32 %v1978, %v1990
  %v2047 = vadd.f32 %v1979, %v1990
  %v2048 = vadd.f32 %v1980, %v1990
  %v2049 = vadd.f32 %v1981, %v1990
  %v2050 = vadd.f32 %v1982, %v1990
  %v2051 = vadd.f32 %v1983, %v1990
  %v2052 = vadd.f32 %v1984, %v1990
  %v2053 = vadd.f32 %v1985, %v1990
  %v2054 = vadd.f32 %v1986, %v1990
  %v2055 = vadd.f32 %v1987, %v1990
  %v2056 = vsel %vm645, %v1992, 0.0
  %2057 = vadd.xlane.f32.xlu0 %v2056
  %v2058 = vpop.xlane.xlu0 %2057
  %v2059 = vsel %vm645, %v1993, 0.0
  %2060 = vadd.xlane.f32.xlu0 %v2059
  %v2061 = vpop.xlane.xlu0 %2060
  %v2062 = vsel %vm645, %v1994, 0.0
  %2063 = vadd.xlane.f32.xlu0 %v2062
  %v2064 = vpop.xlane.xlu0 %2063
  %v2065 = vsel %vm645, %v1995, 0.0
  %2066 = vadd.xlane.f32.xlu0 %v2065
  %v2067 = vpop.xlane.xlu0 %2066
  %v2068 = vsel %vm645, %v1996, 0.0
  %2069 = vadd.xlane.f32.xlu0 %v2068
  %v2070 = vpop.xlane.xlu0 %2069
  %v2071 = vsel %vm645, %v1997, 0.0
  %2072 = vadd.xlane.f32.xlu0 %v2071
  %v2073 = vpop.xlane.xlu0 %2072
  %v2074 = vsel %vm645, %v1998, 0.0
  %2075 = vadd.xlane.f32.xlu0 %v2074
  %v2076 = vpop.xlane.xlu0 %2075
  %v2077 = vsel %vm645, %v1999, 0.0
  %2078 = vadd.xlane.f32.xlu0 %v2077
  %v2079 = vpop.xlane.xlu0 %2078
  %v2080 = vsel %vm645, %v2000, 0.0
  %2081 = vadd.xlane.f32.xlu0 %v2080
  %v2082 = vpop.xlane.xlu0 %2081
  %v2083 = vsel %vm645, %v2001, 0.0
  %2084 = vadd.xlane.f32.xlu0 %v2083
  %v2085 = vpop.xlane.xlu0 %2084
  %v2086 = vsel %vm645, %v2002, 0.0
  %2087 = vadd.xlane.f32.xlu0 %v2086
  %v2088 = vpop.xlane.xlu0 %2087
  %v2089 = vsel %vm645, %v2003, 0.0
  %2090 = vadd.xlane.f32.xlu0 %v2089
  %v2091 = vpop.xlane.xlu0 %2090
  %v2092 = vsel %vm645, %v2004, 0.0
  %2093 = vadd.xlane.f32.xlu0 %v2092
  %v2094 = vpop.xlane.xlu0 %2093
  %v2095 = vsel %vm645, %v2005, 0.0
  %2096 = vadd.xlane.f32.xlu0 %v2095
  %v2097 = vpop.xlane.xlu0 %2096
  %v2098 = vsel %vm645, %v2006, 0.0
  %2099 = vadd.xlane.f32.xlu0 %v2098
  %v2100 = vpop.xlane.xlu0 %2099
  %v2101 = vsel %vm645, %v2007, 0.0
  %2102 = vadd.xlane.f32.xlu0 %v2101
  %v2103 = vpop.xlane.xlu0 %2102
  %v2104 = vsel %vm645, %v2008, 0.0
  %2105 = vadd.xlane.f32.xlu0 %v2104
  %v2106 = vpop.xlane.xlu0 %2105
  %v2107 = vsel %vm645, %v2009, 0.0
  %2108 = vadd.xlane.f32.xlu0 %v2107
  %v2109 = vpop.xlane.xlu0 %2108
  %v2110 = vsel %vm645, %v2010, 0.0
  %2111 = vadd.xlane.f32.xlu0 %v2110
  %v2112 = vpop.xlane.xlu0 %2111
  %v2113 = vsel %vm645, %v2011, 0.0
  %2114 = vadd.xlane.f32.xlu0 %v2113
  %v2115 = vpop.xlane.xlu0 %2114
  %v2116 = vsel %vm645, %v2012, 0.0
  %2117 = vadd.xlane.f32.xlu0 %v2116
  %v2118 = vpop.xlane.xlu0 %2117
  %v2119 = vsel %vm645, %v2013, 0.0
  %2120 = vadd.xlane.f32.xlu0 %v2119
  %v2121 = vpop.xlane.xlu0 %2120
  %v2122 = vsel %vm645, %v2014, 0.0
  %2123 = vadd.xlane.f32.xlu0 %v2122
  %v2124 = vpop.xlane.xlu0 %2123
  %v2125 = vsel %vm645, %v2015, 0.0
  %2126 = vadd.xlane.f32.xlu0 %v2125
  %v2127 = vpop.xlane.xlu0 %2126
  %v2128 = vsel %vm645, %v2016, 0.0
  %2129 = vadd.xlane.f32.xlu0 %v2128
  %v2130 = vpop.xlane.xlu0 %2129
  %v2131 = vsel %vm645, %v2017, 0.0
  %2132 = vadd.xlane.f32.xlu0 %v2131
  %v2133 = vpop.xlane.xlu0 %2132
  %v2134 = vsel %vm645, %v2018, 0.0
  %2135 = vadd.xlane.f32.xlu0 %v2134
  %v2136 = vpop.xlane.xlu0 %2135
  %v2137 = vsel %vm645, %v2019, 0.0
  %2138 = vadd.xlane.f32.xlu0 %v2137
  %v2139 = vpop.xlane.xlu0 %2138
  %v2140 = vsel %vm645, %v2020, 0.0
  %2141 = vadd.xlane.f32.xlu0 %v2140
  %v2142 = vpop.xlane.xlu0 %2141
  %v2143 = vsel %vm645, %v2021, 0.0
  %2144 = vadd.xlane.f32.xlu0 %v2143
  %v2145 = vpop.xlane.xlu0 %2144
  %v2146 = vsel %vm645, %v2022, 0.0
  %2147 = vadd.xlane.f32.xlu0 %v2146
  %v2148 = vpop.xlane.xlu0 %2147
  %v2149 = vsel %vm645, %v2023, 0.0
  %2150 = vadd.xlane.f32.xlu0 %v2149
  %v2151 = vpop.xlane.xlu0 %2150
  %v2152 = vsel %vm645, %v2024, 0.0
  %2153 = vadd.xlane.f32.xlu0 %v2152
  %v2154 = vpop.xlane.xlu0 %2153
  %v2155 = vsel %vm645, %v2025, 0.0
  %2156 = vadd.xlane.f32.xlu0 %v2155
  %v2157 = vpop.xlane.xlu0 %2156
  %v2158 = vsel %vm645, %v2026, 0.0
  %2159 = vadd.xlane.f32.xlu0 %v2158
  %v2160 = vpop.xlane.xlu0 %2159
  %v2161 = vsel %vm645, %v2027, 0.0
  %2162 = vadd.xlane.f32.xlu0 %v2161
  %v2163 = vpop.xlane.xlu0 %2162
  %v2164 = vsel %vm645, %v2028, 0.0
  %2165 = vadd.xlane.f32.xlu0 %v2164
  %v2166 = vpop.xlane.xlu0 %2165
  %v2167 = vsel %vm645, %v2029, 0.0
  %2168 = vadd.xlane.f32.xlu0 %v2167
  %v2169 = vpop.xlane.xlu0 %2168
  %v2170 = vsel %vm645, %v2030, 0.0
  %2171 = vadd.xlane.f32.xlu0 %v2170
  %v2172 = vpop.xlane.xlu0 %2171
  %v2173 = vsel %vm645, %v2031, 0.0
  %2174 = vadd.xlane.f32.xlu0 %v2173
  %v2175 = vpop.xlane.xlu0 %2174
  %v2176 = vsel %vm645, %v2032, 0.0
  %2177 = vadd.xlane.f32.xlu0 %v2176
  %v2178 = vpop.xlane.xlu0 %2177
  %v2179 = vsel %vm645, %v2033, 0.0
  %2180 = vadd.xlane.f32.xlu0 %v2179
  %v2181 = vpop.xlane.xlu0 %2180
  %v2182 = vsel %vm645, %v2034, 0.0
  %2183 = vadd.xlane.f32.xlu0 %v2182
  %v2184 = vpop.xlane.xlu0 %2183
  %v2185 = vsel %vm645, %v2035, 0.0
  %2186 = vadd.xlane.f32.xlu0 %v2185
  %v2187 = vpop.xlane.xlu0 %2186
  %v2188 = vsel %vm645, %v2036, 0.0
  %2189 = vadd.xlane.f32.xlu0 %v2188
  %v2190 = vpop.xlane.xlu0 %2189
  %v2191 = vsel %vm645, %v2037, 0.0
  %2192 = vadd.xlane.f32.xlu0 %v2191
  %v2193 = vpop.xlane.xlu0 %2192
  %v2194 = vsel %vm645, %v2038, 0.0
  %2195 = vadd.xlane.f32.xlu0 %v2194
  %v2196 = vpop.xlane.xlu0 %2195
  %v2197 = vsel %vm645, %v2039, 0.0
  %2198 = vadd.xlane.f32.xlu0 %v2197
  %v2199 = vpop.xlane.xlu0 %2198
  %v2200 = vsel %vm645, %v2040, 0.0
  %2201 = vadd.xlane.f32.xlu0 %v2200
  %v2202 = vpop.xlane.xlu0 %2201
  %v2203 = vsel %vm645, %v2041, 0.0
  %2204 = vadd.xlane.f32.xlu0 %v2203
  %v2205 = vpop.xlane.xlu0 %2204
  %v2206 = vsel %vm645, %v2042, 0.0
  %2207 = vadd.xlane.f32.xlu0 %v2206
  %v2208 = vpop.xlane.xlu0 %2207
  %v2209 = vsel %vm645, %v2043, 0.0
  %2210 = vadd.xlane.f32.xlu0 %v2209
  %v2211 = vpop.xlane.xlu0 %2210
  %v2212 = vsel %vm645, %v2044, 0.0
  %2213 = vadd.xlane.f32.xlu0 %v2212
  %v2214 = vpop.xlane.xlu0 %2213
  %v2215 = vsel %vm645, %v2045, 0.0
  %2216 = vadd.xlane.f32.xlu0 %v2215
  %v2217 = vpop.xlane.xlu0 %2216
  %v2218 = vsel %vm645, %v2046, 0.0
  %2219 = vadd.xlane.f32.xlu0 %v2218
  %v2220 = vpop.xlane.xlu0 %2219
  %v2221 = vsel %vm645, %v2047, 0.0
  %2222 = vadd.xlane.f32.xlu0 %v2221
  %v2223 = vpop.xlane.xlu0 %2222
  %v2224 = vsel %vm645, %v2048, 0.0
  %2225 = vadd.xlane.f32.xlu0 %v2224
  %v2226 = vpop.xlane.xlu0 %2225
  %v2227 = vsel %vm645, %v2049, 0.0
  %2228 = vadd.xlane.f32.xlu0 %v2227
  %v2229 = vpop.xlane.xlu0 %2228
  %v2230 = vsel %vm645, %v2050, 0.0
  %2231 = vadd.xlane.f32.xlu0 %v2230
  %v2232 = vpop.xlane.xlu0 %2231
  %v2233 = vsel %vm645, %v2051, 0.0
  %2234 = vadd.xlane.f32.xlu0 %v2233
  %v2235 = vpop.xlane.xlu0 %2234
  %v2236 = vsel %vm645, %v2052, 0.0
  %2237 = vadd.xlane.f32.xlu0 %v2236
  %v2238 = vpop.xlane.xlu0 %2237
  %v2239 = vsel %vm645, %v2053, 0.0
  %2240 = vadd.xlane.f32.xlu0 %v2239
  %v2241 = vpop.xlane.xlu0 %2240
  %v2242 = vsel %vm645, %v2054, 0.0
  %2243 = vadd.xlane.f32.xlu0 %v2242
  %v2244 = vpop.xlane.xlu0 %2243
  %v2245 = vsel %vm645, %v2055, 0.0
  %2246 = vadd.xlane.f32.xlu0 %v2245
  %v2247 = vpop.xlane.xlu0 %2246
  %v2248 = vrcp.pop 2.0
  %v2249 = vmul.f32 2.0, %v2248
  %v2250 = vsub.f32 1.0, %v2249
  %v2251 = vmul.f32 %v2248, %v2250
  %v2252 = vadd.f32 %v2248, %v2251
  %vm2253 = vweird.f32 %v2248
  %v2254 = vsel %vm2253, %v2248, %v2252
  %v2255 = vmul.f32 %v2058, %v2254
  %v2256 = vmul.f32 %v2061, %v2254
  %v2257 = vmul.f32 %v2064, %v2254
  %v2258 = vmul.f32 %v2067, %v2254
  %v2259 = vmul.f32 %v2070, %v2254
  %v2260 = vmul.f32 %v2073, %v2254
  %v2261 = vmul.f32 %v2076, %v2254
  %v2262 = vmul.f32 %v2079, %v2254
  %v2263 = vmul.f32 %v2082, %v2254
  %v2264 = vmul.f32 %v2085, %v2254
  %v2265 = vmul.f32 %v2088, %v2254
  %v2266 = vmul.f32 %v2091, %v2254
  %v2267 = vmul.f32 %v2094, %v2254
  %v2268 = vmul.f32 %v2097, %v2254
  %v2269 = vmul.f32 %v2100, %v2254
  %v2270 = vmul.f32 %v2103, %v2254
  %v2271 = vmul.f32 %v2106, %v2254
  %v2272 = vmul.f32 %v2109, %v2254
  %v2273 = vmul.f32 %v2112, %v2254
  %v2274 = vmul.f32 %v2115, %v2254
  %v2275 = vmul.f32 %v2118, %v2254
  %v2276 = vmul.f32 %v2121, %v2254
  %v2277 = vmul.f32 %v2124, %v2254
  %v2278 = vmul.f32 %v2127, %v2254
  %v2279 = vmul.f32 %v2130, %v2254
  %v2280 = vmul.f32 %v2133, %v2254
  %v2281 = vmul.f32 %v2136, %v2254
  %v2282 = vmul.f32 %v2139, %v2254
  %v2283 = vmul.f32 %v2142, %v2254
  %v2284 = vmul.f32 %v2145, %v2254
  %v2285 = vmul.f32 %v2148, %v2254
  %v2286 = vmul.f32 %v2151, %v2254
  %v2287 = vmul.f32 %v2154, %v2254
  %v2288 = vmul.f32 %v2157, %v2254
  %v2289 = vmul.f32 %v2160, %v2254
  %v2290 = vmul.f32 %v2163, %v2254
  %v2291 = vmul.f32 %v2166, %v2254
  %v2292 = vmul.f32 %v2169, %v2254
  %v2293 = vmul.f32 %v2172, %v2254
  %v2294 = vmul.f32 %v2175, %v2254
  %v2295 = vmul.f32 %v2178, %v2254
  %v2296 = vmul.f32 %v2181, %v2254
  %v2297 = vmul.f32 %v2184, %v2254
  %v2298 = vmul.f32 %v2187, %v2254
  %v2299 = vmul.f32 %v2190, %v2254
  %v2300 = vmul.f32 %v2193, %v2254
  %v2301 = vmul.f32 %v2196, %v2254
  %v2302 = vmul.f32 %v2199, %v2254
  %v2303 = vmul.f32 %v2202, %v2254
  %v2304 = vmul.f32 %v2205, %v2254
  %v2305 = vmul.f32 %v2208, %v2254
  %v2306 = vmul.f32 %v2211, %v2254
  %v2307 = vmul.f32 %v2214, %v2254
  %v2308 = vmul.f32 %v2217, %v2254
  %v2309 = vmul.f32 %v2220, %v2254
  %v2310 = vmul.f32 %v2223, %v2254
  %v2311 = vmul.f32 %v2226, %v2254
  %v2312 = vmul.f32 %v2229, %v2254
  %v2313 = vmul.f32 %v2232, %v2254
  %v2314 = vmul.f32 %v2235, %v2254
  %v2315 = vmul.f32 %v2238, %v2254
  %v2316 = vmul.f32 %v2241, %v2254
  %v2317 = vmul.f32 %v2244, %v2254
  %v2318 = vmul.f32 %v2247, %v2254
  %v2319 = vsub.f32 %v1992, %v2255
  %v2320 = vsub.f32 %v1993, %v2256
  %v2321 = vsub.f32 %v1994, %v2257
  %v2322 = vsub.f32 %v1995, %v2258
  %v2323 = vsub.f32 %v1996, %v2259
  %v2324 = vsub.f32 %v1997, %v2260
  %v2325 = vsub.f32 %v1998, %v2261
  %v2326 = vsub.f32 %v1999, %v2262
  %v2327 = vsub.f32 %v2000, %v2263
  %v2328 = vsub.f32 %v2001, %v2264
  %v2329 = vsub.f32 %v2002, %v2265
  %v2330 = vsub.f32 %v2003, %v2266
  %v2331 = vsub.f32 %v2004, %v2267
  %v2332 = vsub.f32 %v2005, %v2268
  %v2333 = vsub.f32 %v2006, %v2269
  %v2334 = vsub.f32 %v2007, %v2270
  %v2335 = vsub.f32 %v2008, %v2271
  %v2336 = vsub.f32 %v2009, %v2272
  %v2337 = vsub.f32 %v2010, %v2273
  %v2338 = vsub.f32 %v2011, %v2274
  %v2339 = vsub.f32 %v2012, %v2275
  %v2340 = vsub.f32 %v2013, %v2276
  %v2341 = vsub.f32 %v2014, %v2277
  %v2342 = vsub.f32 %v2015, %v2278
  %v2343 = vsub.f32 %v2016, %v2279
  %v2344 = vsub.f32 %v2017, %v2280
  %v2345 = vsub.f32 %v2018, %v2281
  %v2346 = vsub.f32 %v2019, %v2282
  %v2347 = vsub.f32 %v2020, %v2283
  %v2348 = vsub.f32 %v2021, %v2284
  %v2349 = vsub.f32 %v2022, %v2285
  %v2350 = vsub.f32 %v2023, %v2286
  %v2351 = vsub.f32 %v2024, %v2287
  %v2352 = vsub.f32 %v2025, %v2288
  %v2353 = vsub.f32 %v2026, %v2289
  %v2354 = vsub.f32 %v2027, %v2290
  %v2355 = vsub.f32 %v2028, %v2291
  %v2356 = vsub.f32 %v2029, %v2292
  %v2357 = vsub.f32 %v2030, %v2293
  %v2358 = vsub.f32 %v2031, %v2294
  %v2359 = vsub.f32 %v2032, %v2295
  %v2360 = vsub.f32 %v2033, %v2296
  %v2361 = vsub.f32 %v2034, %v2297
  %v2362 = vsub.f32 %v2035, %v2298
  %v2363 = vsub.f32 %v2036, %v2299
  %v2364 = vsub.f32 %v2037, %v2300
  %v2365 = vsub.f32 %v2038, %v2301
  %v2366 = vsub.f32 %v2039, %v2302
  %v2367 = vsub.f32 %v2040, %v2303
  %v2368 = vsub.f32 %v2041, %v2304
  %v2369 = vsub.f32 %v2042, %v2305
  %v2370 = vsub.f32 %v2043, %v2306
  %v2371 = vsub.f32 %v2044, %v2307
  %v2372 = vsub.f32 %v2045, %v2308
  %v2373 = vsub.f32 %v2046, %v2309
  %v2374 = vsub.f32 %v2047, %v2310
  %v2375 = vsub.f32 %v2048, %v2311
  %v2376 = vsub.f32 %v2049, %v2312
  %v2377 = vsub.f32 %v2050, %v2313
  %v2378 = vsub.f32 %v2051, %v2314
  %v2379 = vsub.f32 %v2052, %v2315
  %v2380 = vsub.f32 %v2053, %v2316
  %v2381 = vsub.f32 %v2054, %v2317
  %v2382 = vsub.f32 %v2055, %v2318
  %v2383 = vmul.f32 %v2319, %v2319
  %v2384 = vmul.f32 %v2320, %v2320
  %v2385 = vmul.f32 %v2321, %v2321
  %v2386 = vmul.f32 %v2322, %v2322
  %v2387 = vmul.f32 %v2323, %v2323
  %v2388 = vmul.f32 %v2324, %v2324
  %v2389 = vmul.f32 %v2325, %v2325
  %v2390 = vmul.f32 %v2326, %v2326
  %v2391 = vmul.f32 %v2327, %v2327
  %v2392 = vmul.f32 %v2328, %v2328
  %v2393 = vmul.f32 %v2329, %v2329
  %v2394 = vmul.f32 %v2330, %v2330
  %v2395 = vmul.f32 %v2331, %v2331
  %v2396 = vmul.f32 %v2332, %v2332
  %v2397 = vmul.f32 %v2333, %v2333
  %v2398 = vmul.f32 %v2334, %v2334
  %v2399 = vmul.f32 %v2335, %v2335
  %v2400 = vmul.f32 %v2336, %v2336
  %v2401 = vmul.f32 %v2337, %v2337
  %v2402 = vmul.f32 %v2338, %v2338
  %v2403 = vmul.f32 %v2339, %v2339
  %v2404 = vmul.f32 %v2340, %v2340
  %v2405 = vmul.f32 %v2341, %v2341
  %v2406 = vmul.f32 %v2342, %v2342
  %v2407 = vmul.f32 %v2343, %v2343
  %v2408 = vmul.f32 %v2344, %v2344
  %v2409 = vmul.f32 %v2345, %v2345
  %v2410 = vmul.f32 %v2346, %v2346
  %v2411 = vmul.f32 %v2347, %v2347
  %v2412 = vmul.f32 %v2348, %v2348
  %v2413 = vmul.f32 %v2349, %v2349
  %v2414 = vmul.f32 %v2350, %v2350
  %v2415 = vmul.f32 %v2351, %v2351
  %v2416 = vmul.f32 %v2352, %v2352
  %v2417 = vmul.f32 %v2353, %v2353
  %v2418 = vmul.f32 %v2354, %v2354
  %v2419 = vmul.f32 %v2355, %v2355
  %v2420 = vmul.f32 %v2356, %v2356
  %v2421 = vmul.f32 %v2357, %v2357
  %v2422 = vmul.f32 %v2358, %v2358
  %v2423 = vmul.f32 %v2359, %v2359
  %v2424 = vmul.f32 %v2360, %v2360
  %v2425 = vmul.f32 %v2361, %v2361
  %v2426 = vmul.f32 %v2362, %v2362
  %v2427 = vmul.f32 %v2363, %v2363
  %v2428 = vmul.f32 %v2364, %v2364
  %v2429 = vmul.f32 %v2365, %v2365
  %v2430 = vmul.f32 %v2366, %v2366
  %v2431 = vmul.f32 %v2367, %v2367
  %v2432 = vmul.f32 %v2368, %v2368
  %v2433 = vmul.f32 %v2369, %v2369
  %v2434 = vmul.f32 %v2370, %v2370
  %v2435 = vmul.f32 %v2371, %v2371
  %v2436 = vmul.f32 %v2372, %v2372
  %v2437 = vmul.f32 %v2373, %v2373
  %v2438 = vmul.f32 %v2374, %v2374
  %v2439 = vmul.f32 %v2375, %v2375
  %v2440 = vmul.f32 %v2376, %v2376
  %v2441 = vmul.f32 %v2377, %v2377
  %v2442 = vmul.f32 %v2378, %v2378
  %v2443 = vmul.f32 %v2379, %v2379
  %v2444 = vmul.f32 %v2380, %v2380
  %v2445 = vmul.f32 %v2381, %v2381
  %v2446 = vmul.f32 %v2382, %v2382
  %v2447 = vsel %vm645, %v2383, 0.0
  %2448 = vadd.xlane.f32.xlu0 %v2447
  %v2449 = vpop.xlane.xlu0 %2448
  %v2450 = vsel %vm645, %v2384, 0.0
  %2451 = vadd.xlane.f32.xlu0 %v2450
  %v2452 = vpop.xlane.xlu0 %2451
  %v2453 = vsel %vm645, %v2385, 0.0
  %2454 = vadd.xlane.f32.xlu0 %v2453
  %v2455 = vpop.xlane.xlu0 %2454
  %v2456 = vsel %vm645, %v2386, 0.0
  %2457 = vadd.xlane.f32.xlu0 %v2456
  %v2458 = vpop.xlane.xlu0 %2457
  %v2459 = vsel %vm645, %v2387, 0.0
  %2460 = vadd.xlane.f32.xlu0 %v2459
  %v2461 = vpop.xlane.xlu0 %2460
  %v2462 = vsel %vm645, %v2388, 0.0
  %2463 = vadd.xlane.f32.xlu0 %v2462
  %v2464 = vpop.xlane.xlu0 %2463
  %v2465 = vsel %vm645, %v2389, 0.0
  %2466 = vadd.xlane.f32.xlu0 %v2465
  %v2467 = vpop.xlane.xlu0 %2466
  %v2468 = vsel %vm645, %v2390, 0.0
  %2469 = vadd.xlane.f32.xlu0 %v2468
  %v2470 = vpop.xlane.xlu0 %2469
  %v2471 = vsel %vm645, %v2391, 0.0
  %2472 = vadd.xlane.f32.xlu0 %v2471
  %v2473 = vpop.xlane.xlu0 %2472
  %v2474 = vsel %vm645, %v2392, 0.0
  %2475 = vadd.xlane.f32.xlu0 %v2474
  %v2476 = vpop.xlane.xlu0 %2475
  %v2477 = vsel %vm645, %v2393, 0.0
  %2478 = vadd.xlane.f32.xlu0 %v2477
  %v2479 = vpop.xlane.xlu0 %2478
  %v2480 = vsel %vm645, %v2394, 0.0
  %2481 = vadd.xlane.f32.xlu0 %v2480
  %v2482 = vpop.xlane.xlu0 %2481
  %v2483 = vsel %vm645, %v2395, 0.0
  %2484 = vadd.xlane.f32.xlu0 %v2483
  %v2485 = vpop.xlane.xlu0 %2484
  %v2486 = vsel %vm645, %v2396, 0.0
  %2487 = vadd.xlane.f32.xlu0 %v2486
  %v2488 = vpop.xlane.xlu0 %2487
  %v2489 = vsel %vm645, %v2397, 0.0
  %2490 = vadd.xlane.f32.xlu0 %v2489
  %v2491 = vpop.xlane.xlu0 %2490
  %v2492 = vsel %vm645, %v2398, 0.0
  %2493 = vadd.xlane.f32.xlu0 %v2492
  %v2494 = vpop.xlane.xlu0 %2493
  %v2495 = vsel %vm645, %v2399, 0.0
  %2496 = vadd.xlane.f32.xlu0 %v2495
  %v2497 = vpop.xlane.xlu0 %2496
  %v2498 = vsel %vm645, %v2400, 0.0
  %2499 = vadd.xlane.f32.xlu0 %v2498
  %v2500 = vpop.xlane.xlu0 %2499
  %v2501 = vsel %vm645, %v2401, 0.0
  %2502 = vadd.xlane.f32.xlu0 %v2501
  %v2503 = vpop.xlane.xlu0 %2502
  %v2504 = vsel %vm645, %v2402, 0.0
  %2505 = vadd.xlane.f32.xlu0 %v2504
  %v2506 = vpop.xlane.xlu0 %2505
  %v2507 = vsel %vm645, %v2403, 0.0
  %2508 = vadd.xlane.f32.xlu0 %v2507
  %v2509 = vpop.xlane.xlu0 %2508
  %v2510 = vsel %vm645, %v2404, 0.0
  %2511 = vadd.xlane.f32.xlu0 %v2510
  %v2512 = vpop.xlane.xlu0 %2511
  %v2513 = vsel %vm645, %v2405, 0.0
  %2514 = vadd.xlane.f32.xlu0 %v2513
  %v2515 = vpop.xlane.xlu0 %2514
  %v2516 = vsel %vm645, %v2406, 0.0
  %2517 = vadd.xlane.f32.xlu0 %v2516
  %v2518 = vpop.xlane.xlu0 %2517
  %v2519 = vsel %vm645, %v2407, 0.0
  %2520 = vadd.xlane.f32.xlu0 %v2519
  %v2521 = vpop.xlane.xlu0 %2520
  %v2522 = vsel %vm645, %v2408, 0.0
  %2523 = vadd.xlane.f32.xlu0 %v2522
  %v2524 = vpop.xlane.xlu0 %2523
  %v2525 = vsel %vm645, %v2409, 0.0
  %2526 = vadd.xlane.f32.xlu0 %v2525
  %v2527 = vpop.xlane.xlu0 %2526
  %v2528 = vsel %vm645, %v2410, 0.0
  %2529 = vadd.xlane.f32.xlu0 %v2528
  %v2530 = vpop.xlane.xlu0 %2529
  %v2531 = vsel %vm645, %v2411, 0.0
  %2532 = vadd.xlane.f32.xlu0 %v2531
  %v2533 = vpop.xlane.xlu0 %2532
  %v2534 = vsel %vm645, %v2412, 0.0
  %2535 = vadd.xlane.f32.xlu0 %v2534
  %v2536 = vpop.xlane.xlu0 %2535
  %v2537 = vsel %vm645, %v2413, 0.0
  %2538 = vadd.xlane.f32.xlu0 %v2537
  %v2539 = vpop.xlane.xlu0 %2538
  %v2540 = vsel %vm645, %v2414, 0.0
  %2541 = vadd.xlane.f32.xlu0 %v2540
  %v2542 = vpop.xlane.xlu0 %2541
  %v2543 = vsel %vm645, %v2415, 0.0
  %2544 = vadd.xlane.f32.xlu0 %v2543
  %v2545 = vpop.xlane.xlu0 %2544
  %v2546 = vsel %vm645, %v2416, 0.0
  %2547 = vadd.xlane.f32.xlu0 %v2546
  %v2548 = vpop.xlane.xlu0 %2547
  %v2549 = vsel %vm645, %v2417, 0.0
  %2550 = vadd.xlane.f32.xlu0 %v2549
  %v2551 = vpop.xlane.xlu0 %2550
  %v2552 = vsel %vm645, %v2418, 0.0
  %2553 = vadd.xlane.f32.xlu0 %v2552
  %v2554 = vpop.xlane.xlu0 %2553
  %v2555 = vsel %vm645, %v2419, 0.0
  %2556 = vadd.xlane.f32.xlu0 %v2555
  %v2557 = vpop.xlane.xlu0 %2556
  %v2558 = vsel %vm645, %v2420, 0.0
  %2559 = vadd.xlane.f32.xlu0 %v2558
  %v2560 = vpop.xlane.xlu0 %2559
  %v2561 = vsel %vm645, %v2421, 0.0
  %2562 = vadd.xlane.f32.xlu0 %v2561
  %v2563 = vpop.xlane.xlu0 %2562
  %v2564 = vsel %vm645, %v2422, 0.0
  %2565 = vadd.xlane.f32.xlu0 %v2564
  %v2566 = vpop.xlane.xlu0 %2565
  %v2567 = vsel %vm645, %v2423, 0.0
  %2568 = vadd.xlane.f32.xlu0 %v2567
  %v2569 = vpop.xlane.xlu0 %2568
  %v2570 = vsel %vm645, %v2424, 0.0
  %2571 = vadd.xlane.f32.xlu0 %v2570
  %v2572 = vpop.xlane.xlu0 %2571
  %v2573 = vsel %vm645, %v2425, 0.0
  %2574 = vadd.xlane.f32.xlu0 %v2573
  %v2575 = vpop.xlane.xlu0 %2574
  %v2576 = vsel %vm645, %v2426, 0.0
  %2577 = vadd.xlane.f32.xlu0 %v2576
  %v2578 = vpop.xlane.xlu0 %2577
  %v2579 = vsel %vm645, %v2427, 0.0
  %2580 = vadd.xlane.f32.xlu0 %v2579
  %v2581 = vpop.xlane.xlu0 %2580
  %v2582 = vsel %vm645, %v2428, 0.0
  %2583 = vadd.xlane.f32.xlu0 %v2582
  %v2584 = vpop.xlane.xlu0 %2583
  %v2585 = vsel %vm645, %v2429, 0.0
  %2586 = vadd.xlane.f32.xlu0 %v2585
  %v2587 = vpop.xlane.xlu0 %2586
  %v2588 = vsel %vm645, %v2430, 0.0
  %2589 = vadd.xlane.f32.xlu0 %v2588
  %v2590 = vpop.xlane.xlu0 %2589
  %v2591 = vsel %vm645, %v2431, 0.0
  %2592 = vadd.xlane.f32.xlu0 %v2591
  %v2593 = vpop.xlane.xlu0 %2592
  %v2594 = vsel %vm645, %v2432, 0.0
  %2595 = vadd.xlane.f32.xlu0 %v2594
  %v2596 = vpop.xlane.xlu0 %2595
  %v2597 = vsel %vm645, %v2433, 0.0
  %2598 = vadd.xlane.f32.xlu0 %v2597
  %v2599 = vpop.xlane.xlu0 %2598
  %v2600 = vsel %vm645, %v2434, 0.0
  %2601 = vadd.xlane.f32.xlu0 %v2600
  %v2602 = vpop.xlane.xlu0 %2601
  %v2603 = vsel %vm645, %v2435, 0.0
  %2604 = vadd.xlane.f32.xlu0 %v2603
  %v2605 = vpop.xlane.xlu0 %2604
  %v2606 = vsel %vm645, %v2436, 0.0
  %2607 = vadd.xlane.f32.xlu0 %v2606
  %v2608 = vpop.xlane.xlu0 %2607
  %v2609 = vsel %vm645, %v2437, 0.0
  %2610 = vadd.xlane.f32.xlu0 %v2609
  %v2611 = vpop.xlane.xlu0 %2610
  %v2612 = vsel %vm645, %v2438, 0.0
  %2613 = vadd.xlane.f32.xlu0 %v2612
  %v2614 = vpop.xlane.xlu0 %2613
  %v2615 = vsel %vm645, %v2439, 0.0
  %2616 = vadd.xlane.f32.xlu0 %v2615
  %v2617 = vpop.xlane.xlu0 %2616
  %v2618 = vsel %vm645, %v2440, 0.0
  %2619 = vadd.xlane.f32.xlu0 %v2618
  %v2620 = vpop.xlane.xlu0 %2619
  %v2621 = vsel %vm645, %v2441, 0.0
  %2622 = vadd.xlane.f32.xlu0 %v2621
  %v2623 = vpop.xlane.xlu0 %2622
  %v2624 = vsel %vm645, %v2442, 0.0
  %2625 = vadd.xlane.f32.xlu0 %v2624
  %v2626 = vpop.xlane.xlu0 %2625
  %v2627 = vsel %vm645, %v2443, 0.0
  %2628 = vadd.xlane.f32.xlu0 %v2627
  %v2629 = vpop.xlane.xlu0 %2628
  %v2630 = vsel %vm645, %v2444, 0.0
  %2631 = vadd.xlane.f32.xlu0 %v2630
  %v2632 = vpop.xlane.xlu0 %2631
  %v2633 = vsel %vm645, %v2445, 0.0
  %2634 = vadd.xlane.f32.xlu0 %v2633
  %v2635 = vpop.xlane.xlu0 %2634
  %v2636 = vsel %vm645, %v2446, 0.0
  %2637 = vadd.xlane.f32.xlu0 %v2636
  %v2638 = vpop.xlane.xlu0 %2637
  %v2639 = vmul.f32 %v2449, %v2254
  %v2640 = vmul.f32 %v2452, %v2254
  %v2641 = vmul.f32 %v2455, %v2254
  %v2642 = vmul.f32 %v2458, %v2254
  %v2643 = vmul.f32 %v2461, %v2254
  %v2644 = vmul.f32 %v2464, %v2254
  %v2645 = vmul.f32 %v2467, %v2254
  %v2646 = vmul.f32 %v2470, %v2254
  %v2647 = vmul.f32 %v2473, %v2254
  %v2648 = vmul.f32 %v2476, %v2254
  %v2649 = vmul.f32 %v2479, %v2254
  %v2650 = vmul.f32 %v2482, %v2254
  %v2651 = vmul.f32 %v2485, %v2254
  %v2652 = vmul.f32 %v2488, %v2254
  %v2653 = vmul.f32 %v2491, %v2254
  %v2654 = vmul.f32 %v2494, %v2254
  %v2655 = vmul.f32 %v2497, %v2254
  %v2656 = vmul.f32 %v2500, %v2254
  %v2657 = vmul.f32 %v2503, %v2254
  %v2658 = vmul.f32 %v2506, %v2254
  %v2659 = vmul.f32 %v2509, %v2254
  %v2660 = vmul.f32 %v2512, %v2254
  %v2661 = vmul.f32 %v2515, %v2254
  %v2662 = vmul.f32 %v2518, %v2254
  %v2663 = vmul.f32 %v2521, %v2254
  %v2664 = vmul.f32 %v2524, %v2254
  %v2665 = vmul.f32 %v2527, %v2254
  %v2666 = vmul.f32 %v2530, %v2254
  %v2667 = vmul.f32 %v2533, %v2254
  %v2668 = vmul.f32 %v2536, %v2254
  %v2669 = vmul.f32 %v2539, %v2254
  %v2670 = vmul.f32 %v2542, %v2254
  %v2671 = vmul.f32 %v2545, %v2254
  %v2672 = vmul.f32 %v2548, %v2254
  %v2673 = vmul.f32 %v2551, %v2254
  %v2674 = vmul.f32 %v2554, %v2254
  %v2675 = vmul.f32 %v2557, %v2254
  %v2676 = vmul.f32 %v2560, %v2254
  %v2677 = vmul.f32 %v2563, %v2254
  %v2678 = vmul.f32 %v2566, %v2254
  %v2679 = vmul.f32 %v2569, %v2254
  %v2680 = vmul.f32 %v2572, %v2254
  %v2681 = vmul.f32 %v2575, %v2254
  %v2682 = vmul.f32 %v2578, %v2254
  %v2683 = vmul.f32 %v2581, %v2254
  %v2684 = vmul.f32 %v2584, %v2254
  %v2685 = vmul.f32 %v2587, %v2254
  %v2686 = vmul.f32 %v2590, %v2254
  %v2687 = vmul.f32 %v2593, %v2254
  %v2688 = vmul.f32 %v2596, %v2254
  %v2689 = vmul.f32 %v2599, %v2254
  %v2690 = vmul.f32 %v2602, %v2254
  %v2691 = vmul.f32 %v2605, %v2254
  %v2692 = vmul.f32 %v2608, %v2254
  %v2693 = vmul.f32 %v2611, %v2254
  %v2694 = vmul.f32 %v2614, %v2254
  %v2695 = vmul.f32 %v2617, %v2254
  %v2696 = vmul.f32 %v2620, %v2254
  %v2697 = vmul.f32 %v2623, %v2254
  %v2698 = vmul.f32 %v2626, %v2254
  %v2699 = vmul.f32 %v2629, %v2254
  %v2700 = vmul.f32 %v2632, %v2254
  %v2701 = vmul.f32 %v2635, %v2254
  %v2702 = vmul.f32 %v2638, %v2254
  %v2703 = vadd.f32 %v2639, 1e-06
  %v2704 = vadd.f32 %v2640, 1e-06
  %v2705 = vadd.f32 %v2641, 1e-06
  %v2706 = vadd.f32 %v2642, 1e-06
  %v2707 = vadd.f32 %v2643, 1e-06
  %v2708 = vadd.f32 %v2644, 1e-06
  %v2709 = vadd.f32 %v2645, 1e-06
  %v2710 = vadd.f32 %v2646, 1e-06
  %v2711 = vadd.f32 %v2647, 1e-06
  %v2712 = vadd.f32 %v2648, 1e-06
  %v2713 = vadd.f32 %v2649, 1e-06
  %v2714 = vadd.f32 %v2650, 1e-06
  %v2715 = vadd.f32 %v2651, 1e-06
  %v2716 = vadd.f32 %v2652, 1e-06
  %v2717 = vadd.f32 %v2653, 1e-06
  %v2718 = vadd.f32 %v2654, 1e-06
  %v2719 = vadd.f32 %v2655, 1e-06
  %v2720 = vadd.f32 %v2656, 1e-06
  %v2721 = vadd.f32 %v2657, 1e-06
  %v2722 = vadd.f32 %v2658, 1e-06
  %v2723 = vadd.f32 %v2659, 1e-06
  %v2724 = vadd.f32 %v2660, 1e-06
  %v2725 = vadd.f32 %v2661, 1e-06
  %v2726 = vadd.f32 %v2662, 1e-06
  %v2727 = vadd.f32 %v2663, 1e-06
  %v2728 = vadd.f32 %v2664, 1e-06
  %v2729 = vadd.f32 %v2665, 1e-06
  %v2730 = vadd.f32 %v2666, 1e-06
  %v2731 = vadd.f32 %v2667, 1e-06
  %v2732 = vadd.f32 %v2668, 1e-06
  %v2733 = vadd.f32 %v2669, 1e-06
  %v2734 = vadd.f32 %v2670, 1e-06
  %v2735 = vadd.f32 %v2671, 1e-06
  %v2736 = vadd.f32 %v2672, 1e-06
  %v2737 = vadd.f32 %v2673, 1e-06
  %v2738 = vadd.f32 %v2674, 1e-06
  %v2739 = vadd.f32 %v2675, 1e-06
  %v2740 = vadd.f32 %v2676, 1e-06
  %v2741 = vadd.f32 %v2677, 1e-06
  %v2742 = vadd.f32 %v2678, 1e-06
  %v2743 = vadd.f32 %v2679, 1e-06
  %v2744 = vadd.f32 %v2680, 1e-06
  %v2745 = vadd.f32 %v2681, 1e-06
  %v2746 = vadd.f32 %v2682, 1e-06
  %v2747 = vadd.f32 %v2683, 1e-06
  %v2748 = vadd.f32 %v2684, 1e-06
  %v2749 = vadd.f32 %v2685, 1e-06
  %v2750 = vadd.f32 %v2686, 1e-06
  %v2751 = vadd.f32 %v2687, 1e-06
  %v2752 = vadd.f32 %v2688, 1e-06
  %v2753 = vadd.f32 %v2689, 1e-06
  %v2754 = vadd.f32 %v2690, 1e-06
  %v2755 = vadd.f32 %v2691, 1e-06
  %v2756 = vadd.f32 %v2692, 1e-06
  %v2757 = vadd.f32 %v2693, 1e-06
  %v2758 = vadd.f32 %v2694, 1e-06
  %v2759 = vadd.f32 %v2695, 1e-06
  %v2760 = vadd.f32 %v2696, 1e-06
  %v2761 = vadd.f32 %v2697, 1e-06
  %v2762 = vadd.f32 %v2698, 1e-06
  %v2763 = vadd.f32 %v2699, 1e-06
  %v2764 = vadd.f32 %v2700, 1e-06
  %v2765 = vadd.f32 %v2701, 1e-06
  %v2766 = vadd.f32 %v2702, 1e-06
  %v2767 = vrsqrt.pop %v2703
  %v2768 = vmul.f32 %v2767, %v2703
  %v2769 = vmul.f32 %v2768, %v2767
  %v2770 = vmul.f32 0.5, %v2769
  %v2771 = vsub.f32 1.5, %v2770
  %v2772 = vmul.f32 %v2767, %v2771
  %vm2773 = vweird.f32 %v2703
  %vm2774 = vweird.f32 %v2767
  %vm2775 = vmor %vm2773, %vm2774
  %v2776 = vsel %vm2775, %v2767, %v2772
  %v2777 = vrsqrt.pop %v2704
  %v2778 = vmul.f32 %v2777, %v2704
  %v2779 = vmul.f32 %v2778, %v2777
  %v2780 = vmul.f32 0.5, %v2779
  %v2781 = vsub.f32 1.5, %v2780
  %v2782 = vmul.f32 %v2777, %v2781
  %vm2783 = vweird.f32 %v2704
  %vm2784 = vweird.f32 %v2777
  %vm2785 = vmor %vm2783, %vm2784
  %v2786 = vsel %vm2785, %v2777, %v2782
  %v2787 = vrsqrt.pop %v2705
  %v2788 = vmul.f32 %v2787, %v2705
  %v2789 = vmul.f32 %v2788, %v2787
  %v2790 = vmul.f32 0.5, %v2789
  %v2791 = vsub.f32 1.5, %v2790
  %v2792 = vmul.f32 %v2787, %v2791
  %vm2793 = vweird.f32 %v2705
  %vm2794 = vweird.f32 %v2787
  %vm2795 = vmor %vm2793, %vm2794
  %v2796 = vsel %vm2795, %v2787, %v2792
  %v2797 = vrsqrt.pop %v2706
  %v2798 = vmul.f32 %v2797, %v2706
  %v2799 = vmul.f32 %v2798, %v2797
  %v2800 = vmul.f32 0.5, %v2799
  %v2801 = vsub.f32 1.5, %v2800
  %v2802 = vmul.f32 %v2797, %v2801
  %vm2803 = vweird.f32 %v2706
  %vm2804 = vweird.f32 %v2797
  %vm2805 = vmor %vm2803, %vm2804
  %v2806 = vsel %vm2805, %v2797, %v2802
  %v2807 = vrsqrt.pop %v2707
  %v2808 = vmul.f32 %v2807, %v2707
  %v2809 = vmul.f32 %v2808, %v2807
  %v2810 = vmul.f32 0.5, %v2809
  %v2811 = vsub.f32 1.5, %v2810
  %v2812 = vmul.f32 %v2807, %v2811
  %vm2813 = vweird.f32 %v2707
  %vm2814 = vweird.f32 %v2807
  %vm2815 = vmor %vm2813, %vm2814
  %v2816 = vsel %vm2815, %v2807, %v2812
  %v2817 = vrsqrt.pop %v2708
  %v2818 = vmul.f32 %v2817, %v2708
  %v2819 = vmul.f32 %v2818, %v2817
  %v2820 = vmul.f32 0.5, %v2819
  %v2821 = vsub.f32 1.5, %v2820
  %v2822 = vmul.f32 %v2817, %v2821
  %vm2823 = vweird.f32 %v2708
  %vm2824 = vweird.f32 %v2817
  %vm2825 = vmor %vm2823, %vm2824
  %v2826 = vsel %vm2825, %v2817, %v2822
  %v2827 = vrsqrt.pop %v2709
  %v2828 = vmul.f32 %v2827, %v2709
  %v2829 = vmul.f32 %v2828, %v2827
  %v2830 = vmul.f32 0.5, %v2829
  %v2831 = vsub.f32 1.5, %v2830
  %v2832 = vmul.f32 %v2827, %v2831
  %vm2833 = vweird.f32 %v2709
  %vm2834 = vweird.f32 %v2827
  %vm2835 = vmor %vm2833, %vm2834
  %v2836 = vsel %vm2835, %v2827, %v2832
  %v2837 = vrsqrt.pop %v2710
  %v2838 = vmul.f32 %v2837, %v2710
  %v2839 = vmul.f32 %v2838, %v2837
  %v2840 = vmul.f32 0.5, %v2839
  %v2841 = vsub.f32 1.5, %v2840
  %v2842 = vmul.f32 %v2837, %v2841
  %vm2843 = vweird.f32 %v2710
  %vm2844 = vweird.f32 %v2837
  %vm2845 = vmor %vm2843, %vm2844
  %v2846 = vsel %vm2845, %v2837, %v2842
  %v2847 = vrsqrt.pop %v2711
  %v2848 = vmul.f32 %v2847, %v2711
  %v2849 = vmul.f32 %v2848, %v2847
  %v2850 = vmul.f32 0.5, %v2849
  %v2851 = vsub.f32 1.5, %v2850
  %v2852 = vmul.f32 %v2847, %v2851
  %vm2853 = vweird.f32 %v2711
  %vm2854 = vweird.f32 %v2847
  %vm2855 = vmor %vm2853, %vm2854
  %v2856 = vsel %vm2855, %v2847, %v2852
  %v2857 = vrsqrt.pop %v2712
  %v2858 = vmul.f32 %v2857, %v2712
  %v2859 = vmul.f32 %v2858, %v2857
  %v2860 = vmul.f32 0.5, %v2859
  %v2861 = vsub.f32 1.5, %v2860
  %v2862 = vmul.f32 %v2857, %v2861
  %vm2863 = vweird.f32 %v2712
  %vm2864 = vweird.f32 %v2857
  %vm2865 = vmor %vm2863, %vm2864
  %v2866 = vsel %vm2865, %v2857, %v2862
  %v2867 = vrsqrt.pop %v2713
  %v2868 = vmul.f32 %v2867, %v2713
  %v2869 = vmul.f32 %v2868, %v2867
  %v2870 = vmul.f32 0.5, %v2869
  %v2871 = vsub.f32 1.5, %v2870
  %v2872 = vmul.f32 %v2867, %v2871
  %vm2873 = vweird.f32 %v2713
  %vm2874 = vweird.f32 %v2867
  %vm2875 = vmor %vm2873, %vm2874
  %v2876 = vsel %vm2875, %v2867, %v2872
  %v2877 = vrsqrt.pop %v2714
  %v2878 = vmul.f32 %v2877, %v2714
  %v2879 = vmul.f32 %v2878, %v2877
  %v2880 = vmul.f32 0.5, %v2879
  %v2881 = vsub.f32 1.5, %v2880
  %v2882 = vmul.f32 %v2877, %v2881
  %vm2883 = vweird.f32 %v2714
  %vm2884 = vweird.f32 %v2877
  %vm2885 = vmor %vm2883, %vm2884
  %v2886 = vsel %vm2885, %v2877, %v2882
  %v2887 = vrsqrt.pop %v2715
  %v2888 = vmul.f32 %v2887, %v2715
  %v2889 = vmul.f32 %v2888, %v2887
  %v2890 = vmul.f32 0.5, %v2889
  %v2891 = vsub.f32 1.5, %v2890
  %v2892 = vmul.f32 %v2887, %v2891
  %vm2893 = vweird.f32 %v2715
  %vm2894 = vweird.f32 %v2887
  %vm2895 = vmor %vm2893, %vm2894
  %v2896 = vsel %vm2895, %v2887, %v2892
  %v2897 = vrsqrt.pop %v2716
  %v2898 = vmul.f32 %v2897, %v2716
  %v2899 = vmul.f32 %v2898, %v2897
  %v2900 = vmul.f32 0.5, %v2899
  %v2901 = vsub.f32 1.5, %v2900
  %v2902 = vmul.f32 %v2897, %v2901
  %vm2903 = vweird.f32 %v2716
  %vm2904 = vweird.f32 %v2897
  %vm2905 = vmor %vm2903, %vm2904
  %v2906 = vsel %vm2905, %v2897, %v2902
  %v2907 = vrsqrt.pop %v2717
  %v2908 = vmul.f32 %v2907, %v2717
  %v2909 = vmul.f32 %v2908, %v2907
  %v2910 = vmul.f32 0.5, %v2909
  %v2911 = vsub.f32 1.5, %v2910
  %v2912 = vmul.f32 %v2907, %v2911
  %vm2913 = vweird.f32 %v2717
  %vm2914 = vweird.f32 %v2907
  %vm2915 = vmor %vm2913, %vm2914
  %v2916 = vsel %vm2915, %v2907, %v2912
  %v2917 = vrsqrt.pop %v2718
  %v2918 = vmul.f32 %v2917, %v2718
  %v2919 = vmul.f32 %v2918, %v2917
  %v2920 = vmul.f32 0.5, %v2919
  %v2921 = vsub.f32 1.5, %v2920
  %v2922 = vmul.f32 %v2917, %v2921
  %vm2923 = vweird.f32 %v2718
  %vm2924 = vweird.f32 %v2917
  %vm2925 = vmor %vm2923, %vm2924
  %v2926 = vsel %vm2925, %v2917, %v2922
  %v2927 = vrsqrt.pop %v2719
  %v2928 = vmul.f32 %v2927, %v2719
  %v2929 = vmul.f32 %v2928, %v2927
  %v2930 = vmul.f32 0.5, %v2929
  %v2931 = vsub.f32 1.5, %v2930
  %v2932 = vmul.f32 %v2927, %v2931
  %vm2933 = vweird.f32 %v2719
  %vm2934 = vweird.f32 %v2927
  %vm2935 = vmor %vm2933, %vm2934
  %v2936 = vsel %vm2935, %v2927, %v2932
  %v2937 = vrsqrt.pop %v2720
  %v2938 = vmul.f32 %v2937, %v2720
  %v2939 = vmul.f32 %v2938, %v2937
  %v2940 = vmul.f32 0.5, %v2939
  %v2941 = vsub.f32 1.5, %v2940
  %v2942 = vmul.f32 %v2937, %v2941
  %vm2943 = vweird.f32 %v2720
  %vm2944 = vweird.f32 %v2937
  %vm2945 = vmor %vm2943, %vm2944
  %v2946 = vsel %vm2945, %v2937, %v2942
  %v2947 = vrsqrt.pop %v2721
  %v2948 = vmul.f32 %v2947, %v2721
  %v2949 = vmul.f32 %v2948, %v2947
  %v2950 = vmul.f32 0.5, %v2949
  %v2951 = vsub.f32 1.5, %v2950
  %v2952 = vmul.f32 %v2947, %v2951
  %vm2953 = vweird.f32 %v2721
  %vm2954 = vweird.f32 %v2947
  %vm2955 = vmor %vm2953, %vm2954
  %v2956 = vsel %vm2955, %v2947, %v2952
  %v2957 = vrsqrt.pop %v2722
  %v2958 = vmul.f32 %v2957, %v2722
  %v2959 = vmul.f32 %v2958, %v2957
  %v2960 = vmul.f32 0.5, %v2959
  %v2961 = vsub.f32 1.5, %v2960
  %v2962 = vmul.f32 %v2957, %v2961
  %vm2963 = vweird.f32 %v2722
  %vm2964 = vweird.f32 %v2957
  %vm2965 = vmor %vm2963, %vm2964
  %v2966 = vsel %vm2965, %v2957, %v2962
  %v2967 = vrsqrt.pop %v2723
  %v2968 = vmul.f32 %v2967, %v2723
  %v2969 = vmul.f32 %v2968, %v2967
  %v2970 = vmul.f32 0.5, %v2969
  %v2971 = vsub.f32 1.5, %v2970
  %v2972 = vmul.f32 %v2967, %v2971
  %vm2973 = vweird.f32 %v2723
  %vm2974 = vweird.f32 %v2967
  %vm2975 = vmor %vm2973, %vm2974
  %v2976 = vsel %vm2975, %v2967, %v2972
  %v2977 = vrsqrt.pop %v2724
  %v2978 = vmul.f32 %v2977, %v2724
  %v2979 = vmul.f32 %v2978, %v2977
  %v2980 = vmul.f32 0.5, %v2979
  %v2981 = vsub.f32 1.5, %v2980
  %v2982 = vmul.f32 %v2977, %v2981
  %vm2983 = vweird.f32 %v2724
  %vm2984 = vweird.f32 %v2977
  %vm2985 = vmor %vm2983, %vm2984
  %v2986 = vsel %vm2985, %v2977, %v2982
  %v2987 = vrsqrt.pop %v2725
  %v2988 = vmul.f32 %v2987, %v2725
  %v2989 = vmul.f32 %v2988, %v2987
  %v2990 = vmul.f32 0.5, %v2989
  %v2991 = vsub.f32 1.5, %v2990
  %v2992 = vmul.f32 %v2987, %v2991
  %vm2993 = vweird.f32 %v2725
  %vm2994 = vweird.f32 %v2987
  %vm2995 = vmor %vm2993, %vm2994
  %v2996 = vsel %vm2995, %v2987, %v2992
  %v2997 = vrsqrt.pop %v2726
  %v2998 = vmul.f32 %v2997, %v2726
  %v2999 = vmul.f32 %v2998, %v2997
  %v3000 = vmul.f32 0.5, %v2999
  %v3001 = vsub.f32 1.5, %v3000
  %v3002 = vmul.f32 %v2997, %v3001
  %vm3003 = vweird.f32 %v2726
  %vm3004 = vweird.f32 %v2997
  %vm3005 = vmor %vm3003, %vm3004
  %v3006 = vsel %vm3005, %v2997, %v3002
  %v3007 = vrsqrt.pop %v2727
  %v3008 = vmul.f32 %v3007, %v2727
  %v3009 = vmul.f32 %v3008, %v3007
  %v3010 = vmul.f32 0.5, %v3009
  %v3011 = vsub.f32 1.5, %v3010
  %v3012 = vmul.f32 %v3007, %v3011
  %vm3013 = vweird.f32 %v2727
  %vm3014 = vweird.f32 %v3007
  %vm3015 = vmor %vm3013, %vm3014
  %v3016 = vsel %vm3015, %v3007, %v3012
  %v3017 = vrsqrt.pop %v2728
  %v3018 = vmul.f32 %v3017, %v2728
  %v3019 = vmul.f32 %v3018, %v3017
  %v3020 = vmul.f32 0.5, %v3019
  %v3021 = vsub.f32 1.5, %v3020
  %v3022 = vmul.f32 %v3017, %v3021
  %vm3023 = vweird.f32 %v2728
  %vm3024 = vweird.f32 %v3017
  %vm3025 = vmor %vm3023, %vm3024
  %v3026 = vsel %vm3025, %v3017, %v3022
  %v3027 = vrsqrt.pop %v2729
  %v3028 = vmul.f32 %v3027, %v2729
  %v3029 = vmul.f32 %v3028, %v3027
  %v3030 = vmul.f32 0.5, %v3029
  %v3031 = vsub.f32 1.5, %v3030
  %v3032 = vmul.f32 %v3027, %v3031
  %vm3033 = vweird.f32 %v2729
  %vm3034 = vweird.f32 %v3027
  %vm3035 = vmor %vm3033, %vm3034
  %v3036 = vsel %vm3035, %v3027, %v3032
  %v3037 = vrsqrt.pop %v2730
  %v3038 = vmul.f32 %v3037, %v2730
  %v3039 = vmul.f32 %v3038, %v3037
  %v3040 = vmul.f32 0.5, %v3039
  %v3041 = vsub.f32 1.5, %v3040
  %v3042 = vmul.f32 %v3037, %v3041
  %vm3043 = vweird.f32 %v2730
  %vm3044 = vweird.f32 %v3037
  %vm3045 = vmor %vm3043, %vm3044
  %v3046 = vsel %vm3045, %v3037, %v3042
  %v3047 = vrsqrt.pop %v2731
  %v3048 = vmul.f32 %v3047, %v2731
  %v3049 = vmul.f32 %v3048, %v3047
  %v3050 = vmul.f32 0.5, %v3049
  %v3051 = vsub.f32 1.5, %v3050
  %v3052 = vmul.f32 %v3047, %v3051
  %vm3053 = vweird.f32 %v2731
  %vm3054 = vweird.f32 %v3047
  %vm3055 = vmor %vm3053, %vm3054
  %v3056 = vsel %vm3055, %v3047, %v3052
  %v3057 = vrsqrt.pop %v2732
  %v3058 = vmul.f32 %v3057, %v2732
  %v3059 = vmul.f32 %v3058, %v3057
  %v3060 = vmul.f32 0.5, %v3059
  %v3061 = vsub.f32 1.5, %v3060
  %v3062 = vmul.f32 %v3057, %v3061
  %vm3063 = vweird.f32 %v2732
  %vm3064 = vweird.f32 %v3057
  %vm3065 = vmor %vm3063, %vm3064
  %v3066 = vsel %vm3065, %v3057, %v3062
  %v3067 = vrsqrt.pop %v2733
  %v3068 = vmul.f32 %v3067, %v2733
  %v3069 = vmul.f32 %v3068, %v3067
  %v3070 = vmul.f32 0.5, %v3069
  %v3071 = vsub.f32 1.5, %v3070
  %v3072 = vmul.f32 %v3067, %v3071
  %vm3073 = vweird.f32 %v2733
  %vm3074 = vweird.f32 %v3067
  %vm3075 = vmor %vm3073, %vm3074
  %v3076 = vsel %vm3075, %v3067, %v3072
  %v3077 = vrsqrt.pop %v2734
  %v3078 = vmul.f32 %v3077, %v2734
  %v3079 = vmul.f32 %v3078, %v3077
  %v3080 = vmul.f32 0.5, %v3079
  %v3081 = vsub.f32 1.5, %v3080
  %v3082 = vmul.f32 %v3077, %v3081
  %vm3083 = vweird.f32 %v2734
  %vm3084 = vweird.f32 %v3077
  %vm3085 = vmor %vm3083, %vm3084
  %v3086 = vsel %vm3085, %v3077, %v3082
  %v3087 = vrsqrt.pop %v2735
  %v3088 = vmul.f32 %v3087, %v2735
  %v3089 = vmul.f32 %v3088, %v3087
  %v3090 = vmul.f32 0.5, %v3089
  %v3091 = vsub.f32 1.5, %v3090
  %v3092 = vmul.f32 %v3087, %v3091
  %vm3093 = vweird.f32 %v2735
  %vm3094 = vweird.f32 %v3087
  %vm3095 = vmor %vm3093, %vm3094
  %v3096 = vsel %vm3095, %v3087, %v3092
  %v3097 = vrsqrt.pop %v2736
  %v3098 = vmul.f32 %v3097, %v2736
  %v3099 = vmul.f32 %v3098, %v3097
  %v3100 = vmul.f32 0.5, %v3099
  %v3101 = vsub.f32 1.5, %v3100
  %v3102 = vmul.f32 %v3097, %v3101
  %vm3103 = vweird.f32 %v2736
  %vm3104 = vweird.f32 %v3097
  %vm3105 = vmor %vm3103, %vm3104
  %v3106 = vsel %vm3105, %v3097, %v3102
  %v3107 = vrsqrt.pop %v2737
  %v3108 = vmul.f32 %v3107, %v2737
  %v3109 = vmul.f32 %v3108, %v3107
  %v3110 = vmul.f32 0.5, %v3109
  %v3111 = vsub.f32 1.5, %v3110
  %v3112 = vmul.f32 %v3107, %v3111
  %vm3113 = vweird.f32 %v2737
  %vm3114 = vweird.f32 %v3107
  %vm3115 = vmor %vm3113, %vm3114
  %v3116 = vsel %vm3115, %v3107, %v3112
  %v3117 = vrsqrt.pop %v2738
  %v3118 = vmul.f32 %v3117, %v2738
  %v3119 = vmul.f32 %v3118, %v3117
  %v3120 = vmul.f32 0.5, %v3119
  %v3121 = vsub.f32 1.5, %v3120
  %v3122 = vmul.f32 %v3117, %v3121
  %vm3123 = vweird.f32 %v2738
  %vm3124 = vweird.f32 %v3117
  %vm3125 = vmor %vm3123, %vm3124
  %v3126 = vsel %vm3125, %v3117, %v3122
  %v3127 = vrsqrt.pop %v2739
  %v3128 = vmul.f32 %v3127, %v2739
  %v3129 = vmul.f32 %v3128, %v3127
  %v3130 = vmul.f32 0.5, %v3129
  %v3131 = vsub.f32 1.5, %v3130
  %v3132 = vmul.f32 %v3127, %v3131
  %vm3133 = vweird.f32 %v2739
  %vm3134 = vweird.f32 %v3127
  %vm3135 = vmor %vm3133, %vm3134
  %v3136 = vsel %vm3135, %v3127, %v3132
  %v3137 = vrsqrt.pop %v2740
  %v3138 = vmul.f32 %v3137, %v2740
  %v3139 = vmul.f32 %v3138, %v3137
  %v3140 = vmul.f32 0.5, %v3139
  %v3141 = vsub.f32 1.5, %v3140
  %v3142 = vmul.f32 %v3137, %v3141
  %vm3143 = vweird.f32 %v2740
  %vm3144 = vweird.f32 %v3137
  %vm3145 = vmor %vm3143, %vm3144
  %v3146 = vsel %vm3145, %v3137, %v3142
  %v3147 = vrsqrt.pop %v2741
  %v3148 = vmul.f32 %v3147, %v2741
  %v3149 = vmul.f32 %v3148, %v3147
  %v3150 = vmul.f32 0.5, %v3149
  %v3151 = vsub.f32 1.5, %v3150
  %v3152 = vmul.f32 %v3147, %v3151
  %vm3153 = vweird.f32 %v2741
  %vm3154 = vweird.f32 %v3147
  %vm3155 = vmor %vm3153, %vm3154
  %v3156 = vsel %vm3155, %v3147, %v3152
  %v3157 = vrsqrt.pop %v2742
  %v3158 = vmul.f32 %v3157, %v2742
  %v3159 = vmul.f32 %v3158, %v3157
  %v3160 = vmul.f32 0.5, %v3159
  %v3161 = vsub.f32 1.5, %v3160
  %v3162 = vmul.f32 %v3157, %v3161
  %vm3163 = vweird.f32 %v2742
  %vm3164 = vweird.f32 %v3157
  %vm3165 = vmor %vm3163, %vm3164
  %v3166 = vsel %vm3165, %v3157, %v3162
  %v3167 = vrsqrt.pop %v2743
  %v3168 = vmul.f32 %v3167, %v2743
  %v3169 = vmul.f32 %v3168, %v3167
  %v3170 = vmul.f32 0.5, %v3169
  %v3171 = vsub.f32 1.5, %v3170
  %v3172 = vmul.f32 %v3167, %v3171
  %vm3173 = vweird.f32 %v2743
  %vm3174 = vweird.f32 %v3167
  %vm3175 = vmor %vm3173, %vm3174
  %v3176 = vsel %vm3175, %v3167, %v3172
  %v3177 = vrsqrt.pop %v2744
  %v3178 = vmul.f32 %v3177, %v2744
  %v3179 = vmul.f32 %v3178, %v3177
  %v3180 = vmul.f32 0.5, %v3179
  %v3181 = vsub.f32 1.5, %v3180
  %v3182 = vmul.f32 %v3177, %v3181
  %vm3183 = vweird.f32 %v2744
  %vm3184 = vweird.f32 %v3177
  %vm3185 = vmor %vm3183, %vm3184
  %v3186 = vsel %vm3185, %v3177, %v3182
  %v3187 = vrsqrt.pop %v2745
  %v3188 = vmul.f32 %v3187, %v2745
  %v3189 = vmul.f32 %v3188, %v3187
  %v3190 = vmul.f32 0.5, %v3189
  %v3191 = vsub.f32 1.5, %v3190
  %v3192 = vmul.f32 %v3187, %v3191
  %vm3193 = vweird.f32 %v2745
  %vm3194 = vweird.f32 %v3187
  %vm3195 = vmor %vm3193, %vm3194
  %v3196 = vsel %vm3195, %v3187, %v3192
  %v3197 = vrsqrt.pop %v2746
  %v3198 = vmul.f32 %v3197, %v2746
  %v3199 = vmul.f32 %v3198, %v3197
  %v3200 = vmul.f32 0.5, %v3199
  %v3201 = vsub.f32 1.5, %v3200
  %v3202 = vmul.f32 %v3197, %v3201
  %vm3203 = vweird.f32 %v2746
  %vm3204 = vweird.f32 %v3197
  %vm3205 = vmor %vm3203, %vm3204
  %v3206 = vsel %vm3205, %v3197, %v3202
  %v3207 = vrsqrt.pop %v2747
  %v3208 = vmul.f32 %v3207, %v2747
  %v3209 = vmul.f32 %v3208, %v3207
  %v3210 = vmul.f32 0.5, %v3209
  %v3211 = vsub.f32 1.5, %v3210
  %v3212 = vmul.f32 %v3207, %v3211
  %vm3213 = vweird.f32 %v2747
  %vm3214 = vweird.f32 %v3207
  %vm3215 = vmor %vm3213, %vm3214
  %v3216 = vsel %vm3215, %v3207, %v3212
  %v3217 = vrsqrt.pop %v2748
  %v3218 = vmul.f32 %v3217, %v2748
  %v3219 = vmul.f32 %v3218, %v3217
  %v3220 = vmul.f32 0.5, %v3219
  %v3221 = vsub.f32 1.5, %v3220
  %v3222 = vmul.f32 %v3217, %v3221
  %vm3223 = vweird.f32 %v2748
  %vm3224 = vweird.f32 %v3217
  %vm3225 = vmor %vm3223, %vm3224
  %v3226 = vsel %vm3225, %v3217, %v3222
  %v3227 = vrsqrt.pop %v2749
  %v3228 = vmul.f32 %v3227, %v2749
  %v3229 = vmul.f32 %v3228, %v3227
  %v3230 = vmul.f32 0.5, %v3229
  %v3231 = vsub.f32 1.5, %v3230
  %v3232 = vmul.f32 %v3227, %v3231
  %vm3233 = vweird.f32 %v2749
  %vm3234 = vweird.f32 %v3227
  %vm3235 = vmor %vm3233, %vm3234
  %v3236 = vsel %vm3235, %v3227, %v3232
  %v3237 = vrsqrt.pop %v2750
  %v3238 = vmul.f32 %v3237, %v2750
  %v3239 = vmul.f32 %v3238, %v3237
  %v3240 = vmul.f32 0.5, %v3239
  %v3241 = vsub.f32 1.5, %v3240
  %v3242 = vmul.f32 %v3237, %v3241
  %vm3243 = vweird.f32 %v2750
  %vm3244 = vweird.f32 %v3237
  %vm3245 = vmor %vm3243, %vm3244
  %v3246 = vsel %vm3245, %v3237, %v3242
  %v3247 = vrsqrt.pop %v2751
  %v3248 = vmul.f32 %v3247, %v2751
  %v3249 = vmul.f32 %v3248, %v3247
  %v3250 = vmul.f32 0.5, %v3249
  %v3251 = vsub.f32 1.5, %v3250
  %v3252 = vmul.f32 %v3247, %v3251
  %vm3253 = vweird.f32 %v2751
  %vm3254 = vweird.f32 %v3247
  %vm3255 = vmor %vm3253, %vm3254
  %v3256 = vsel %vm3255, %v3247, %v3252
  %v3257 = vrsqrt.pop %v2752
  %v3258 = vmul.f32 %v3257, %v2752
  %v3259 = vmul.f32 %v3258, %v3257
  %v3260 = vmul.f32 0.5, %v3259
  %v3261 = vsub.f32 1.5, %v3260
  %v3262 = vmul.f32 %v3257, %v3261
  %vm3263 = vweird.f32 %v2752
  %vm3264 = vweird.f32 %v3257
  %vm3265 = vmor %vm3263, %vm3264
  %v3266 = vsel %vm3265, %v3257, %v3262
  %v3267 = vrsqrt.pop %v2753
  %v3268 = vmul.f32 %v3267, %v2753
  %v3269 = vmul.f32 %v3268, %v3267
  %v3270 = vmul.f32 0.5, %v3269
  %v3271 = vsub.f32 1.5, %v3270
  %v3272 = vmul.f32 %v3267, %v3271
  %vm3273 = vweird.f32 %v2753
  %vm3274 = vweird.f32 %v3267
  %vm3275 = vmor %vm3273, %vm3274
  %v3276 = vsel %vm3275, %v3267, %v3272
  %v3277 = vrsqrt.pop %v2754
  %v3278 = vmul.f32 %v3277, %v2754
  %v3279 = vmul.f32 %v3278, %v3277
  %v3280 = vmul.f32 0.5, %v3279
  %v3281 = vsub.f32 1.5, %v3280
  %v3282 = vmul.f32 %v3277, %v3281
  %vm3283 = vweird.f32 %v2754
  %vm3284 = vweird.f32 %v3277
  %vm3285 = vmor %vm3283, %vm3284
  %v3286 = vsel %vm3285, %v3277, %v3282
  %v3287 = vrsqrt.pop %v2755
  %v3288 = vmul.f32 %v3287, %v2755
  %v3289 = vmul.f32 %v3288, %v3287
  %v3290 = vmul.f32 0.5, %v3289
  %v3291 = vsub.f32 1.5, %v3290
  %v3292 = vmul.f32 %v3287, %v3291
  %vm3293 = vweird.f32 %v2755
  %vm3294 = vweird.f32 %v3287
  %vm3295 = vmor %vm3293, %vm3294
  %v3296 = vsel %vm3295, %v3287, %v3292
  %v3297 = vrsqrt.pop %v2756
  %v3298 = vmul.f32 %v3297, %v2756
  %v3299 = vmul.f32 %v3298, %v3297
  %v3300 = vmul.f32 0.5, %v3299
  %v3301 = vsub.f32 1.5, %v3300
  %v3302 = vmul.f32 %v3297, %v3301
  %vm3303 = vweird.f32 %v2756
  %vm3304 = vweird.f32 %v3297
  %vm3305 = vmor %vm3303, %vm3304
  %v3306 = vsel %vm3305, %v3297, %v3302
  %v3307 = vrsqrt.pop %v2757
  %v3308 = vmul.f32 %v3307, %v2757
  %v3309 = vmul.f32 %v3308, %v3307
  %v3310 = vmul.f32 0.5, %v3309
  %v3311 = vsub.f32 1.5, %v3310
  %v3312 = vmul.f32 %v3307, %v3311
  %vm3313 = vweird.f32 %v2757
  %vm3314 = vweird.f32 %v3307
  %vm3315 = vmor %vm3313, %vm3314
  %v3316 = vsel %vm3315, %v3307, %v3312
  %v3317 = vrsqrt.pop %v2758
  %v3318 = vmul.f32 %v3317, %v2758
  %v3319 = vmul.f32 %v3318, %v3317
  %v3320 = vmul.f32 0.5, %v3319
  %v3321 = vsub.f32 1.5, %v3320
  %v3322 = vmul.f32 %v3317, %v3321
  %vm3323 = vweird.f32 %v2758
  %vm3324 = vweird.f32 %v3317
  %vm3325 = vmor %vm3323, %vm3324
  %v3326 = vsel %vm3325, %v3317, %v3322
  %v3327 = vrsqrt.pop %v2759
  %v3328 = vmul.f32 %v3327, %v2759
  %v3329 = vmul.f32 %v3328, %v3327
  %v3330 = vmul.f32 0.5, %v3329
  %v3331 = vsub.f32 1.5, %v3330
  %v3332 = vmul.f32 %v3327, %v3331
  %vm3333 = vweird.f32 %v2759
  %vm3334 = vweird.f32 %v3327
  %vm3335 = vmor %vm3333, %vm3334
  %v3336 = vsel %vm3335, %v3327, %v3332
  %v3337 = vrsqrt.pop %v2760
  %v3338 = vmul.f32 %v3337, %v2760
  %v3339 = vmul.f32 %v3338, %v3337
  %v3340 = vmul.f32 0.5, %v3339
  %v3341 = vsub.f32 1.5, %v3340
  %v3342 = vmul.f32 %v3337, %v3341
  %vm3343 = vweird.f32 %v2760
  %vm3344 = vweird.f32 %v3337
  %vm3345 = vmor %vm3343, %vm3344
  %v3346 = vsel %vm3345, %v3337, %v3342
  %v3347 = vrsqrt.pop %v2761
  %v3348 = vmul.f32 %v3347, %v2761
  %v3349 = vmul.f32 %v3348, %v3347
  %v3350 = vmul.f32 0.5, %v3349
  %v3351 = vsub.f32 1.5, %v3350
  %v3352 = vmul.f32 %v3347, %v3351
  %vm3353 = vweird.f32 %v2761
  %vm3354 = vweird.f32 %v3347
  %vm3355 = vmor %vm3353, %vm3354
  %v3356 = vsel %vm3355, %v3347, %v3352
  %v3357 = vrsqrt.pop %v2762
  %v3358 = vmul.f32 %v3357, %v2762
  %v3359 = vmul.f32 %v3358, %v3357
  %v3360 = vmul.f32 0.5, %v3359
  %v3361 = vsub.f32 1.5, %v3360
  %v3362 = vmul.f32 %v3357, %v3361
  %vm3363 = vweird.f32 %v2762
  %vm3364 = vweird.f32 %v3357
  %vm3365 = vmor %vm3363, %vm3364
  %v3366 = vsel %vm3365, %v3357, %v3362
  %v3367 = vrsqrt.pop %v2763
  %v3368 = vmul.f32 %v3367, %v2763
  %v3369 = vmul.f32 %v3368, %v3367
  %v3370 = vmul.f32 0.5, %v3369
  %v3371 = vsub.f32 1.5, %v3370
  %v3372 = vmul.f32 %v3367, %v3371
  %vm3373 = vweird.f32 %v2763
  %vm3374 = vweird.f32 %v3367
  %vm3375 = vmor %vm3373, %vm3374
  %v3376 = vsel %vm3375, %v3367, %v3372
  %v3377 = vrsqrt.pop %v2764
  %v3378 = vmul.f32 %v3377, %v2764
  %v3379 = vmul.f32 %v3378, %v3377
  %v3380 = vmul.f32 0.5, %v3379
  %v3381 = vsub.f32 1.5, %v3380
  %v3382 = vmul.f32 %v3377, %v3381
  %vm3383 = vweird.f32 %v2764
  %vm3384 = vweird.f32 %v3377
  %vm3385 = vmor %vm3383, %vm3384
  %v3386 = vsel %vm3385, %v3377, %v3382
  %v3387 = vrsqrt.pop %v2765
  %v3388 = vmul.f32 %v3387, %v2765
  %v3389 = vmul.f32 %v3388, %v3387
  %v3390 = vmul.f32 0.5, %v3389
  %v3391 = vsub.f32 1.5, %v3390
  %v3392 = vmul.f32 %v3387, %v3391
  %vm3393 = vweird.f32 %v2765
  %vm3394 = vweird.f32 %v3387
  %vm3395 = vmor %vm3393, %vm3394
  %v3396 = vsel %vm3395, %v3387, %v3392
  %v3397 = vrsqrt.pop %v2766
  %v3398 = vmul.f32 %v3397, %v2766
  %v3399 = vmul.f32 %v3398, %v3397
  %v3400 = vmul.f32 0.5, %v3399
  %v3401 = vsub.f32 1.5, %v3400
  %v3402 = vmul.f32 %v3397, %v3401
  %vm3403 = vweird.f32 %v2766
  %vm3404 = vweird.f32 %v3397
  %vm3405 = vmor %vm3403, %vm3404
  %v3406 = vsel %vm3405, %v3397, %v3402
  %v3407 = vmul.f32 %v2319, %v2776
  %v3408 = vmul.f32 %v2320, %v2786
  %v3409 = vmul.f32 %v2321, %v2796
  %v3410 = vmul.f32 %v2322, %v2806
  %v3411 = vmul.f32 %v2323, %v2816
  %v3412 = vmul.f32 %v2324, %v2826
  %v3413 = vmul.f32 %v2325, %v2836
  %v3414 = vmul.f32 %v2326, %v2846
  %v3415 = vmul.f32 %v2327, %v2856
  %v3416 = vmul.f32 %v2328, %v2866
  %v3417 = vmul.f32 %v2329, %v2876
  %v3418 = vmul.f32 %v2330, %v2886
  %v3419 = vmul.f32 %v2331, %v2896
  %v3420 = vmul.f32 %v2332, %v2906
  %v3421 = vmul.f32 %v2333, %v2916
  %v3422 = vmul.f32 %v2334, %v2926
  %v3423 = vmul.f32 %v2335, %v2936
  %v3424 = vmul.f32 %v2336, %v2946
  %v3425 = vmul.f32 %v2337, %v2956
  %v3426 = vmul.f32 %v2338, %v2966
  %v3427 = vmul.f32 %v2339, %v2976
  %v3428 = vmul.f32 %v2340, %v2986
  %v3429 = vmul.f32 %v2341, %v2996
  %v3430 = vmul.f32 %v2342, %v3006
  %v3431 = vmul.f32 %v2343, %v3016
  %v3432 = vmul.f32 %v2344, %v3026
  %v3433 = vmul.f32 %v2345, %v3036
  %v3434 = vmul.f32 %v2346, %v3046
  %v3435 = vmul.f32 %v2347, %v3056
  %v3436 = vmul.f32 %v2348, %v3066
  %v3437 = vmul.f32 %v2349, %v3076
  %v3438 = vmul.f32 %v2350, %v3086
  %v3439 = vmul.f32 %v2351, %v3096
  %v3440 = vmul.f32 %v2352, %v3106
  %v3441 = vmul.f32 %v2353, %v3116
  %v3442 = vmul.f32 %v2354, %v3126
  %v3443 = vmul.f32 %v2355, %v3136
  %v3444 = vmul.f32 %v2356, %v3146
  %v3445 = vmul.f32 %v2357, %v3156
  %v3446 = vmul.f32 %v2358, %v3166
  %v3447 = vmul.f32 %v2359, %v3176
  %v3448 = vmul.f32 %v2360, %v3186
  %v3449 = vmul.f32 %v2361, %v3196
  %v3450 = vmul.f32 %v2362, %v3206
  %v3451 = vmul.f32 %v2363, %v3216
  %v3452 = vmul.f32 %v2364, %v3226
  %v3453 = vmul.f32 %v2365, %v3236
  %v3454 = vmul.f32 %v2366, %v3246
  %v3455 = vmul.f32 %v2367, %v3256
  %v3456 = vmul.f32 %v2368, %v3266
  %v3457 = vmul.f32 %v2369, %v3276
  %v3458 = vmul.f32 %v2370, %v3286
  %v3459 = vmul.f32 %v2371, %v3296
  %v3460 = vmul.f32 %v2372, %v3306
  %v3461 = vmul.f32 %v2373, %v3316
  %v3462 = vmul.f32 %v2374, %v3326
  %v3463 = vmul.f32 %v2375, %v3336
  %v3464 = vmul.f32 %v2376, %v3346
  %v3465 = vmul.f32 %v2377, %v3356
  %v3466 = vmul.f32 %v2378, %v3366
  %v3467 = vmul.f32 %v2379, %v3376
  %v3468 = vmul.f32 %v2380, %v3386
  %v3469 = vmul.f32 %v2381, %v3396
  %v3470 = vmul.f32 %v2382, %v3406
  %v3471 = vld [vmem:[%s9] sm:$0x1]
  %v3473 = vperm.slane %v3471, 0
  %v3475 = vmul.f32 %v3473, %v3407
  %v3476 = vmul.f32 %v3473, %v3408
  %v3477 = vmul.f32 %v3473, %v3409
  %v3478 = vmul.f32 %v3473, %v3410
  %v3479 = vmul.f32 %v3473, %v3411
  %v3480 = vmul.f32 %v3473, %v3412
  %v3481 = vmul.f32 %v3473, %v3413
  %v3482 = vmul.f32 %v3473, %v3414
  %v3483 = vmul.f32 %v3473, %v3415
  %v3484 = vmul.f32 %v3473, %v3416
  %v3485 = vmul.f32 %v3473, %v3417
  %v3486 = vmul.f32 %v3473, %v3418
  %v3487 = vmul.f32 %v3473, %v3419
  %v3488 = vmul.f32 %v3473, %v3420
  %v3489 = vmul.f32 %v3473, %v3421
  %v3490 = vmul.f32 %v3473, %v3422
  %v3491 = vmul.f32 %v3473, %v3423
  %v3492 = vmul.f32 %v3473, %v3424
  %v3493 = vmul.f32 %v3473, %v3425
  %v3494 = vmul.f32 %v3473, %v3426
  %v3495 = vmul.f32 %v3473, %v3427
  %v3496 = vmul.f32 %v3473, %v3428
  %v3497 = vmul.f32 %v3473, %v3429
  %v3498 = vmul.f32 %v3473, %v3430
  %v3499 = vmul.f32 %v3473, %v3431
  %v3500 = vmul.f32 %v3473, %v3432
  %v3501 = vmul.f32 %v3473, %v3433
  %v3502 = vmul.f32 %v3473, %v3434
  %v3503 = vmul.f32 %v3473, %v3435
  %v3504 = vmul.f32 %v3473, %v3436
  %v3505 = vmul.f32 %v3473, %v3437
  %v3506 = vmul.f32 %v3473, %v3438
  %v3507 = vmul.f32 %v3473, %v3439
  %v3508 = vmul.f32 %v3473, %v3440
  %v3509 = vmul.f32 %v3473, %v3441
  %v3510 = vmul.f32 %v3473, %v3442
  %v3511 = vmul.f32 %v3473, %v3443
  %v3512 = vmul.f32 %v3473, %v3444
  %v3513 = vmul.f32 %v3473, %v3445
  %v3514 = vmul.f32 %v3473, %v3446
  %v3515 = vmul.f32 %v3473, %v3447
  %v3516 = vmul.f32 %v3473, %v3448
  %v3517 = vmul.f32 %v3473, %v3449
  %v3518 = vmul.f32 %v3473, %v3450
  %v3519 = vmul.f32 %v3473, %v3451
  %v3520 = vmul.f32 %v3473, %v3452
  %v3521 = vmul.f32 %v3473, %v3453
  %v3522 = vmul.f32 %v3473, %v3454
  %v3523 = vmul.f32 %v3473, %v3455
  %v3524 = vmul.f32 %v3473, %v3456
  %v3525 = vmul.f32 %v3473, %v3457
  %v3526 = vmul.f32 %v3473, %v3458
  %v3527 = vmul.f32 %v3473, %v3459
  %v3528 = vmul.f32 %v3473, %v3460
  %v3529 = vmul.f32 %v3473, %v3461
  %v3530 = vmul.f32 %v3473, %v3462
  %v3531 = vmul.f32 %v3473, %v3463
  %v3532 = vmul.f32 %v3473, %v3464
  %v3533 = vmul.f32 %v3473, %v3465
  %v3534 = vmul.f32 %v3473, %v3466
  %v3535 = vmul.f32 %v3473, %v3467
  %v3536 = vmul.f32 %v3473, %v3468
  %v3537 = vmul.f32 %v3473, %v3469
  %v3538 = vmul.f32 %v3473, %v3470
  %v3539 = vld [vmem:[%s10] sm:$0x1]
  %v3541 = vperm.slane %v3539, 0
  %v3543 = vadd.f32 %v3475, %v3541
  %v3544 = vadd.f32 %v3476, %v3541
  %v3545 = vadd.f32 %v3477, %v3541
  %v3546 = vadd.f32 %v3478, %v3541
  %v3547 = vadd.f32 %v3479, %v3541
  %v3548 = vadd.f32 %v3480, %v3541
  %v3549 = vadd.f32 %v3481, %v3541
  %v3550 = vadd.f32 %v3482, %v3541
  %v3551 = vadd.f32 %v3483, %v3541
  %v3552 = vadd.f32 %v3484, %v3541
  %v3553 = vadd.f32 %v3485, %v3541
  %v3554 = vadd.f32 %v3486, %v3541
  %v3555 = vadd.f32 %v3487, %v3541
  %v3556 = vadd.f32 %v3488, %v3541
  %v3557 = vadd.f32 %v3489, %v3541
  %v3558 = vadd.f32 %v3490, %v3541
  %v3559 = vadd.f32 %v3491, %v3541
  %v3560 = vadd.f32 %v3492, %v3541
  %v3561 = vadd.f32 %v3493, %v3541
  %v3562 = vadd.f32 %v3494, %v3541
  %v3563 = vadd.f32 %v3495, %v3541
  %v3564 = vadd.f32 %v3496, %v3541
  %v3565 = vadd.f32 %v3497, %v3541
  %v3566 = vadd.f32 %v3498, %v3541
  %v3567 = vadd.f32 %v3499, %v3541
  %v3568 = vadd.f32 %v3500, %v3541
  %v3569 = vadd.f32 %v3501, %v3541
  %v3570 = vadd.f32 %v3502, %v3541
  %v3571 = vadd.f32 %v3503, %v3541
  %v3572 = vadd.f32 %v3504, %v3541
  %v3573 = vadd.f32 %v3505, %v3541
  %v3574 = vadd.f32 %v3506, %v3541
  %v3575 = vadd.f32 %v3507, %v3541
  %v3576 = vadd.f32 %v3508, %v3541
  %v3577 = vadd.f32 %v3509, %v3541
  %v3578 = vadd.f32 %v3510, %v3541
  %v3579 = vadd.f32 %v3511, %v3541
  %v3580 = vadd.f32 %v3512, %v3541
  %v3581 = vadd.f32 %v3513, %v3541
  %v3582 = vadd.f32 %v3514, %v3541
  %v3583 = vadd.f32 %v3515, %v3541
  %v3584 = vadd.f32 %v3516, %v3541
  %v3585 = vadd.f32 %v3517, %v3541
  %v3586 = vadd.f32 %v3518, %v3541
  %v3587 = vadd.f32 %v3519, %v3541
  %v3588 = vadd.f32 %v3520, %v3541
  %v3589 = vadd.f32 %v3521, %v3541
  %v3590 = vadd.f32 %v3522, %v3541
  %v3591 = vadd.f32 %v3523, %v3541
  %v3592 = vadd.f32 %v3524, %v3541
  %v3593 = vadd.f32 %v3525, %v3541
  %v3594 = vadd.f32 %v3526, %v3541
  %v3595 = vadd.f32 %v3527, %v3541
  %v3596 = vadd.f32 %v3528, %v3541
  %v3597 = vadd.f32 %v3529, %v3541
  %v3598 = vadd.f32 %v3530, %v3541
  %v3599 = vadd.f32 %v3531, %v3541
  %v3600 = vadd.f32 %v3532, %v3541
  %v3601 = vadd.f32 %v3533, %v3541
  %v3602 = vadd.f32 %v3534, %v3541
  %v3603 = vadd.f32 %v3535, %v3541
  %v3604 = vadd.f32 %v3536, %v3541
  %v3605 = vadd.f32 %v3537, %v3541
  %v3606 = vadd.f32 %v3538, %v3541
  %vm3607 = vcmp.ge.f32.partialorder %v3543, 0.0
  %vm3608 = vcmp.ge.f32.partialorder %v3544, 0.0
  %vm3609 = vcmp.ge.f32.partialorder %v3545, 0.0
  %vm3610 = vcmp.ge.f32.partialorder %v3546, 0.0
  %vm3611 = vcmp.ge.f32.partialorder %v3547, 0.0
  %vm3612 = vcmp.ge.f32.partialorder %v3548, 0.0
  %vm3613 = vcmp.ge.f32.partialorder %v3549, 0.0
  %vm3614 = vcmp.ge.f32.partialorder %v3550, 0.0
  %vm3615 = vcmp.ge.f32.partialorder %v3551, 0.0
  %vm3616 = vcmp.ge.f32.partialorder %v3552, 0.0
  %vm3617 = vcmp.ge.f32.partialorder %v3553, 0.0
  %vm3618 = vcmp.ge.f32.partialorder %v3554, 0.0
  %vm3619 = vcmp.ge.f32.partialorder %v3555, 0.0
  %vm3620 = vcmp.ge.f32.partialorder %v3556, 0.0
  %vm3621 = vcmp.ge.f32.partialorder %v3557, 0.0
  %vm3622 = vcmp.ge.f32.partialorder %v3558, 0.0
  %vm3623 = vcmp.ge.f32.partialorder %v3559, 0.0
  %vm3624 = vcmp.ge.f32.partialorder %v3560, 0.0
  %vm3625 = vcmp.ge.f32.partialorder %v3561, 0.0
  %vm3626 = vcmp.ge.f32.partialorder %v3562, 0.0
  %vm3627 = vcmp.ge.f32.partialorder %v3563, 0.0
  %vm3628 = vcmp.ge.f32.partialorder %v3564, 0.0
  %vm3629 = vcmp.ge.f32.partialorder %v3565, 0.0
  %vm3630 = vcmp.ge.f32.partialorder %v3566, 0.0
  %vm3631 = vcmp.ge.f32.partialorder %v3567, 0.0
  %vm3632 = vcmp.ge.f32.partialorder %v3568, 0.0
  %vm3633 = vcmp.ge.f32.partialorder %v3569, 0.0
  %vm3634 = vcmp.ge.f32.partialorder %v3570, 0.0
  %vm3635 = vcmp.ge.f32.partialorder %v3571, 0.0
  %vm3636 = vcmp.ge.f32.partialorder %v3572, 0.0
  %vm3637 = vcmp.ge.f32.partialorder %v3573, 0.0
  %vm3638 = vcmp.ge.f32.partialorder %v3574, 0.0
  %vm3639 = vcmp.ge.f32.partialorder %v3575, 0.0
  %vm3640 = vcmp.ge.f32.partialorder %v3576, 0.0
  %vm3641 = vcmp.ge.f32.partialorder %v3577, 0.0
  %vm3642 = vcmp.ge.f32.partialorder %v3578, 0.0
  %vm3643 = vcmp.ge.f32.partialorder %v3579, 0.0
  %vm3644 = vcmp.ge.f32.partialorder %v3580, 0.0
  %vm3645 = vcmp.ge.f32.partialorder %v3581, 0.0
  %vm3646 = vcmp.ge.f32.partialorder %v3582, 0.0
  %vm3647 = vcmp.ge.f32.partialorder %v3583, 0.0
  %vm3648 = vcmp.ge.f32.partialorder %v3584, 0.0
  %vm3649 = vcmp.ge.f32.partialorder %v3585, 0.0
  %vm3650 = vcmp.ge.f32.partialorder %v3586, 0.0
  %vm3651 = vcmp.ge.f32.partialorder %v3587, 0.0
  %vm3652 = vcmp.ge.f32.partialorder %v3588, 0.0
  %vm3653 = vcmp.ge.f32.partialorder %v3589, 0.0
  %vm3654 = vcmp.ge.f32.partialorder %v3590, 0.0
  %vm3655 = vcmp.ge.f32.partialorder %v3591, 0.0
  %vm3656 = vcmp.ge.f32.partialorder %v3592, 0.0
  %vm3657 = vcmp.ge.f32.partialorder %v3593, 0.0
  %vm3658 = vcmp.ge.f32.partialorder %v3594, 0.0
  %vm3659 = vcmp.ge.f32.partialorder %v3595, 0.0
  %vm3660 = vcmp.ge.f32.partialorder %v3596, 0.0
  %vm3661 = vcmp.ge.f32.partialorder %v3597, 0.0
  %vm3662 = vcmp.ge.f32.partialorder %v3598, 0.0
  %vm3663 = vcmp.ge.f32.partialorder %v3599, 0.0
  %vm3664 = vcmp.ge.f32.partialorder %v3600, 0.0
  %vm3665 = vcmp.ge.f32.partialorder %v3601, 0.0
  %vm3666 = vcmp.ge.f32.partialorder %v3602, 0.0
  %vm3667 = vcmp.ge.f32.partialorder %v3603, 0.0
  %vm3668 = vcmp.ge.f32.partialorder %v3604, 0.0
  %vm3669 = vcmp.ge.f32.partialorder %v3605, 0.0
  %vm3670 = vcmp.ge.f32.partialorder %v3606, 0.0
  %v3671 = vmul.f32 %v3543, 0.1
  %v3672 = vmul.f32 %v3544, 0.1
  %v3673 = vmul.f32 %v3545, 0.1
  %v3674 = vmul.f32 %v3546, 0.1
  %v3675 = vmul.f32 %v3547, 0.1
  %v3676 = vmul.f32 %v3548, 0.1
  %v3677 = vmul.f32 %v3549, 0.1
  %v3678 = vmul.f32 %v3550, 0.1
  %v3679 = vmul.f32 %v3551, 0.1
  %v3680 = vmul.f32 %v3552, 0.1
  %v3681 = vmul.f32 %v3553, 0.1
  %v3682 = vmul.f32 %v3554, 0.1
  %v3683 = vmul.f32 %v3555, 0.1
  %v3684 = vmul.f32 %v3556, 0.1
  %v3685 = vmul.f32 %v3557, 0.1
  %v3686 = vmul.f32 %v3558, 0.1
  %v3687 = vmul.f32 %v3559, 0.1
  %v3688 = vmul.f32 %v3560, 0.1
  %v3689 = vmul.f32 %v3561, 0.1
  %v3690 = vmul.f32 %v3562, 0.1
  %v3691 = vmul.f32 %v3563, 0.1
  %v3692 = vmul.f32 %v3564, 0.1
  %v3693 = vmul.f32 %v3565, 0.1
  %v3694 = vmul.f32 %v3566, 0.1
  %v3695 = vmul.f32 %v3567, 0.1
  %v3696 = vmul.f32 %v3568, 0.1
  %v3697 = vmul.f32 %v3569, 0.1
  %v3698 = vmul.f32 %v3570, 0.1
  %v3699 = vmul.f32 %v3571, 0.1
  %v3700 = vmul.f32 %v3572, 0.1
  %v3701 = vmul.f32 %v3573, 0.1
  %v3702 = vmul.f32 %v3574, 0.1
  %v3703 = vmul.f32 %v3575, 0.1
  %v3704 = vmul.f32 %v3576, 0.1
  %v3705 = vmul.f32 %v3577, 0.1
  %v3706 = vmul.f32 %v3578, 0.1
  %v3707 = vmul.f32 %v3579, 0.1
  %v3708 = vmul.f32 %v3580, 0.1
  %v3709 = vmul.f32 %v3581, 0.1
  %v3710 = vmul.f32 %v3582, 0.1
  %v3711 = vmul.f32 %v3583, 0.1
  %v3712 = vmul.f32 %v3584, 0.1
  %v3713 = vmul.f32 %v3585, 0.1
  %v3714 = vmul.f32 %v3586, 0.1
  %v3715 = vmul.f32 %v3587, 0.1
  %v3716 = vmul.f32 %v3588, 0.1
  %v3717 = vmul.f32 %v3589, 0.1
  %v3718 = vmul.f32 %v3590, 0.1
  %v3719 = vmul.f32 %v3591, 0.1
  %v3720 = vmul.f32 %v3592, 0.1
  %v3721 = vmul.f32 %v3593, 0.1
  %v3722 = vmul.f32 %v3594, 0.1
  %v3723 = vmul.f32 %v3595, 0.1
  %v3724 = vmul.f32 %v3596, 0.1
  %v3725 = vmul.f32 %v3597, 0.1
  %v3726 = vmul.f32 %v3598, 0.1
  %v3727 = vmul.f32 %v3599, 0.1
  %v3728 = vmul.f32 %v3600, 0.1
  %v3729 = vmul.f32 %v3601, 0.1
  %v3730 = vmul.f32 %v3602, 0.1
  %v3731 = vmul.f32 %v3603, 0.1
  %v3732 = vmul.f32 %v3604, 0.1
  %v3733 = vmul.f32 %v3605, 0.1
  %v3734 = vmul.f32 %v3606, 0.1
  %v3735 = vsel %vm3607, %v3543, %v3671
  %v3736 = vsel %vm3608, %v3544, %v3672
  %v3737 = vsel %vm3609, %v3545, %v3673
  %v3738 = vsel %vm3610, %v3546, %v3674
  %v3739 = vsel %vm3611, %v3547, %v3675
  %v3740 = vsel %vm3612, %v3548, %v3676
  %v3741 = vsel %vm3613, %v3549, %v3677
  %v3742 = vsel %vm3614, %v3550, %v3678
  %v3743 = vsel %vm3615, %v3551, %v3679
  %v3744 = vsel %vm3616, %v3552, %v3680
  %v3745 = vsel %vm3617, %v3553, %v3681
  %v3746 = vsel %vm3618, %v3554, %v3682
  %v3747 = vsel %vm3619, %v3555, %v3683
  %v3748 = vsel %vm3620, %v3556, %v3684
  %v3749 = vsel %vm3621, %v3557, %v3685
  %v3750 = vsel %vm3622, %v3558, %v3686
  %v3751 = vsel %vm3623, %v3559, %v3687
  %v3752 = vsel %vm3624, %v3560, %v3688
  %v3753 = vsel %vm3625, %v3561, %v3689
  %v3754 = vsel %vm3626, %v3562, %v3690
  %v3755 = vsel %vm3627, %v3563, %v3691
  %v3756 = vsel %vm3628, %v3564, %v3692
  %v3757 = vsel %vm3629, %v3565, %v3693
  %v3758 = vsel %vm3630, %v3566, %v3694
  %v3759 = vsel %vm3631, %v3567, %v3695
  %v3760 = vsel %vm3632, %v3568, %v3696
  %v3761 = vsel %vm3633, %v3569, %v3697
  %v3762 = vsel %vm3634, %v3570, %v3698
  %v3763 = vsel %vm3635, %v3571, %v3699
  %v3764 = vsel %vm3636, %v3572, %v3700
  %v3765 = vsel %vm3637, %v3573, %v3701
  %v3766 = vsel %vm3638, %v3574, %v3702
  %v3767 = vsel %vm3639, %v3575, %v3703
  %v3768 = vsel %vm3640, %v3576, %v3704
  %v3769 = vsel %vm3641, %v3577, %v3705
  %v3770 = vsel %vm3642, %v3578, %v3706
  %v3771 = vsel %vm3643, %v3579, %v3707
  %v3772 = vsel %vm3644, %v3580, %v3708
  %v3773 = vsel %vm3645, %v3581, %v3709
  %v3774 = vsel %vm3646, %v3582, %v3710
  %v3775 = vsel %vm3647, %v3583, %v3711
  %v3776 = vsel %vm3648, %v3584, %v3712
  %v3777 = vsel %vm3649, %v3585, %v3713
  %v3778 = vsel %vm3650, %v3586, %v3714
  %v3779 = vsel %vm3651, %v3587, %v3715
  %v3780 = vsel %vm3652, %v3588, %v3716
  %v3781 = vsel %vm3653, %v3589, %v3717
  %v3782 = vsel %vm3654, %v3590, %v3718
  %v3783 = vsel %vm3655, %v3591, %v3719
  %v3784 = vsel %vm3656, %v3592, %v3720
  %v3785 = vsel %vm3657, %v3593, %v3721
  %v3786 = vsel %vm3658, %v3594, %v3722
  %v3787 = vsel %vm3659, %v3595, %v3723
  %v3788 = vsel %vm3660, %v3596, %v3724
  %v3789 = vsel %vm3661, %v3597, %v3725
  %v3790 = vsel %vm3662, %v3598, %v3726
  %v3791 = vsel %vm3663, %v3599, %v3727
  %v3792 = vsel %vm3664, %v3600, %v3728
  %v3793 = vsel %vm3665, %v3601, %v3729
  %v3794 = vsel %vm3666, %v3602, %v3730
  %v3795 = vsel %vm3667, %v3603, %v3731
  %v3796 = vsel %vm3668, %v3604, %v3732
  %v3797 = vsel %vm3669, %v3605, %v3733
  %v3798 = vsel %vm3670, %v3606, %v3734
  %3799 = vst.msk [vmem:[%s12] sm:$0xff] %vm645, %v3735
  %3800 = vst.msk [vmem:[%s12 + $0x8] sm:$0xff] %vm645, %v3736
  %3801 = vst.msk [vmem:[%s12 + $0x10] sm:$0xff] %vm645, %v3737
  %3802 = vst.msk [vmem:[%s12 + $0x18] sm:$0xff] %vm645, %v3738
  %3803 = vst.msk [vmem:[%s12 + $0x20] sm:$0xff] %vm645, %v3739
  %3804 = vst.msk [vmem:[%s12 + $0x28] sm:$0xff] %vm645, %v3740
  %3805 = vst.msk [vmem:[%s12 + $0x30] sm:$0xff] %vm645, %v3741
  %3806 = vst.msk [vmem:[%s12 + $0x38] sm:$0xff] %vm645, %v3742
  %3807 = vst.msk [vmem:[%s12 + $0x40] sm:$0xff] %vm645, %v3743
  %3808 = vst.msk [vmem:[%s12 + $0x48] sm:$0xff] %vm645, %v3744
  %3809 = vst.msk [vmem:[%s12 + $0x50] sm:$0xff] %vm645, %v3745
  %3810 = vst.msk [vmem:[%s12 + $0x58] sm:$0xff] %vm645, %v3746
  %3811 = vst.msk [vmem:[%s12 + $0x60] sm:$0xff] %vm645, %v3747
  %3812 = vst.msk [vmem:[%s12 + $0x68] sm:$0xff] %vm645, %v3748
  %3813 = vst.msk [vmem:[%s12 + $0x70] sm:$0xff] %vm645, %v3749
  %3814 = vst.msk [vmem:[%s12 + $0x78] sm:$0xff] %vm645, %v3750
  %3815 = vst.msk [vmem:[%s12 + $0x80] sm:$0xff] %vm645, %v3751
  %3816 = vst.msk [vmem:[%s12 + $0x88] sm:$0xff] %vm645, %v3752
  %3817 = vst.msk [vmem:[%s12 + $0x90] sm:$0xff] %vm645, %v3753
  %3818 = vst.msk [vmem:[%s12 + $0x98] sm:$0xff] %vm645, %v3754
  %3819 = vst.msk [vmem:[%s12 + $0xa0] sm:$0xff] %vm645, %v3755
  %3820 = vst.msk [vmem:[%s12 + $0xa8] sm:$0xff] %vm645, %v3756
  %3821 = vst.msk [vmem:[%s12 + $0xb0] sm:$0xff] %vm645, %v3757
  %3822 = vst.msk [vmem:[%s12 + $0xb8] sm:$0xff] %vm645, %v3758
  %3823 = vst.msk [vmem:[%s12 + $0xc0] sm:$0xff] %vm645, %v3759
  %3824 = vst.msk [vmem:[%s12 + $0xc8] sm:$0xff] %vm645, %v3760
  %3825 = vst.msk [vmem:[%s12 + $0xd0] sm:$0xff] %vm645, %v3761
  %3826 = vst.msk [vmem:[%s12 + $0xd8] sm:$0xff] %vm645, %v3762
  %3827 = vst.msk [vmem:[%s12 + $0xe0] sm:$0xff] %vm645, %v3763
  %3828 = vst.msk [vmem:[%s12 + $0xe8] sm:$0xff] %vm645, %v3764
  %3829 = vst.msk [vmem:[%s12 + $0xf0] sm:$0xff] %vm645, %v3765
  %3830 = vst.msk [vmem:[%s12 + $0xf8] sm:$0xff] %vm645, %v3766
  %3831 = vst.msk [vmem:[%s12 + $0x100] sm:$0xff] %vm645, %v3767
  %3832 = vst.msk [vmem:[%s12 + $0x108] sm:$0xff] %vm645, %v3768
  %3833 = vst.msk [vmem:[%s12 + $0x110] sm:$0xff] %vm645, %v3769
  %3834 = vst.msk [vmem:[%s12 + $0x118] sm:$0xff] %vm645, %v3770
  %3835 = vst.msk [vmem:[%s12 + $0x120] sm:$0xff] %vm645, %v3771
  %3836 = vst.msk [vmem:[%s12 + $0x128] sm:$0xff] %vm645, %v3772
  %3837 = vst.msk [vmem:[%s12 + $0x130] sm:$0xff] %vm645, %v3773
  %3838 = vst.msk [vmem:[%s12 + $0x138] sm:$0xff] %vm645, %v3774
  %3839 = vst.msk [vmem:[%s12 + $0x140] sm:$0xff] %vm645, %v3775
  %3840 = vst.msk [vmem:[%s12 + $0x148] sm:$0xff] %vm645, %v3776
  %3841 = vst.msk [vmem:[%s12 + $0x150] sm:$0xff] %vm645, %v3777
  %3842 = vst.msk [vmem:[%s12 + $0x158] sm:$0xff] %vm645, %v3778
  %3843 = vst.msk [vmem:[%s12 + $0x160] sm:$0xff] %vm645, %v3779
  %3844 = vst.msk [vmem:[%s12 + $0x168] sm:$0xff] %vm645, %v3780
  %3845 = vst.msk [vmem:[%s12 + $0x170] sm:$0xff] %vm645, %v3781
  %3846 = vst.msk [vmem:[%s12 + $0x178] sm:$0xff] %vm645, %v3782
  %3847 = vst.msk [vmem:[%s12 + $0x180] sm:$0xff] %vm645, %v3783
  %3848 = vst.msk [vmem:[%s12 + $0x188] sm:$0xff] %vm645, %v3784
  %3849 = vst.msk [vmem:[%s12 + $0x190] sm:$0xff] %vm645, %v3785
  %3850 = vst.msk [vmem:[%s12 + $0x198] sm:$0xff] %vm645, %v3786
  %3851 = vst.msk [vmem:[%s12 + $0x1a0] sm:$0xff] %vm645, %v3787
  %3852 = vst.msk [vmem:[%s12 + $0x1a8] sm:$0xff] %vm645, %v3788
  %3853 = vst.msk [vmem:[%s12 + $0x1b0] sm:$0xff] %vm645, %v3789
  %3854 = vst.msk [vmem:[%s12 + $0x1b8] sm:$0xff] %vm645, %v3790
  %3855 = vst.msk [vmem:[%s12 + $0x1c0] sm:$0xff] %vm645, %v3791
  %3856 = vst.msk [vmem:[%s12 + $0x1c8] sm:$0xff] %vm645, %v3792
  %3857 = vst.msk [vmem:[%s12 + $0x1d0] sm:$0xff] %vm645, %v3793
  %3858 = vst.msk [vmem:[%s12 + $0x1d8] sm:$0xff] %vm645, %v3794
  %3859 = vst.msk [vmem:[%s12 + $0x1e0] sm:$0xff] %vm645, %v3795
  %3860 = vst.msk [vmem:[%s12 + $0x1e8] sm:$0xff] %vm645, %v3796
  %3861 = vst.msk [vmem:[%s12 + $0x1f0] sm:$0xff] %vm645, %v3797
  %3862 = vst.msk [vmem:[%s12 + $0x1f8] sm:$0xff] %vm645, %v3798
  // Predicated region
  $region46: #{window_attention_mixer_forward.6} parent=0 // pred_check
    _
  $region47: #{window_attention_mixer_forward.6} parent=0 // pred_check_branch
    %3864 = sbr.rel (0) target = $region49
  $region48: #{window_attention_mixer_forward.6} parent=0 // pred_region
    _
  $region49: #{window_attention_mixer_forward.6} parent=0 // pred_fallthru
    _
  // Predicated region
  $region50: #{window_attention_mixer_forward.6} parent=0 // pred_check
    _
  $region51: #{window_attention_mixer_forward.6} parent=0 // pred_check_branch
    %3866 = sbr.rel (0) target = $region53
  $region52: #{window_attention_mixer_forward.6} parent=0 // pred_region
    _
  $region53: #{window_attention_mixer_forward.6} parent=0 // pred_fallthru
    _
  // Predicated region
  $region54: #{window_attention_mixer_forward.6} parent=0 // pred_check
    _
  $region55: #{window_attention_mixer_forward.6} parent=0 // pred_check_branch
    %3868 = sbr.rel (0) target = $region57
  $region56: #{window_attention_mixer_forward.6} parent=0 // pred_region
    _
  $region57: #{window_attention_mixer_forward.6} parent=0 // pred_fallthru
    _
  // Predicated region
  $region58: #{window_attention_mixer_forward.6} parent=0 // pred_check
    _
  $region59: #{window_attention_mixer_forward.6} parent=0 // pred_check_branch
    %3870 = sbr.rel (0) target = $region61
  $region60: #{window_attention_mixer_forward.6} parent=0 // pred_region
    _
  $region61: #{window_attention_mixer_forward.6} parent=0 // pred_fallthru
    _

// kernel: window_attention_mixer_forward.7
$region0: #{window_attention_mixer_forward.7}
  #allocation0 [shape = 'u32[]', space=smem, size = 0x4, offset = 0x4, fixed_abs, tag = 'smem constant byte address 0x4 - core index']
  #allocation1 [shape = 'u32[72,128]{1,0:T(1,128)}', space=vmem, size = 0x9000, scoped, tag = 'internal scratch']
  #allocation2 [shape = 'f32[1,1]{1,0:T(1,128)S(1)}', space=vmem, size = 0x200, scoped, tag = 'scoped memory for window_attention_mixer_forward.7']
  %s0 = inlined_call_operand.vmem [shape: f32[512,2], index: 0, kind: input, shape index: {}]
  %s1 = inlined_call_operand.vmem [shape: f32[2,1], index: 1, kind: input, shape index: {}]
  %s2 = inlined_call_operand.<no memory space> [shape: f32[1,1], index: 2, kind: input, shape index: {}]
  %s3 = inlined_call_operand.vmem [shape: f32[1,2], index: 3, kind: input, shape index: {}]
  %s4 = inlined_call_operand.vmem [shape: f32[1,2], index: 4, kind: input, shape index: {}]
  %s5 = inlined_call_operand.vmem [shape: f32[512,2], index: 5, kind: output, shape index: {}]
  %s6 = sld [smem:[#allocation0]]
  $region30: #{window_attention_mixer_forward.7} parent=0
    _
  %s8 = ssub.s32 1, %s6
  %s9 = scalar_select 0, %s8, %s6
  %v10 = vstv %s2
  %11 = vst [vmem:[#allocation2] sm:$0x1] %v10
  // Predicated region
  $region2: #{window_attention_mixer_forward.7} parent=0 // pred_check
    _
  $region3: #{window_attention_mixer_forward.7} parent=0 // pred_check_branch
    %13 = sbr.rel (0) target = $region5
  $region4: #{window_attention_mixer_forward.7} parent=0 // pred_region
    _
  $region5: #{window_attention_mixer_forward.7} parent=0 // pred_fallthru
    _
  // Predicated region
  $region6: #{window_attention_mixer_forward.7} parent=0 // pred_check
    _
  $region7: #{window_attention_mixer_forward.7} parent=0 // pred_check_branch
    %15 = sbr.rel (0) target = $region9
  $region8: #{window_attention_mixer_forward.7} parent=0 // pred_region
    _
  $region9: #{window_attention_mixer_forward.7} parent=0 // pred_fallthru
    _
  // Predicated region
  $region10: #{window_attention_mixer_forward.7} parent=0 // pred_check
    _
  $region11: #{window_attention_mixer_forward.7} parent=0 // pred_check_branch
    %17 = sbr.rel (0) target = $region13
  $region12: #{window_attention_mixer_forward.7} parent=0 // pred_region
    _
  $region13: #{window_attention_mixer_forward.7} parent=0 // pred_fallthru
    _
  // Predicated region
  $region14: #{window_attention_mixer_forward.7} parent=0 // pred_check
    _
  $region15: #{window_attention_mixer_forward.7} parent=0 // pred_check_branch
    %19 = sbr.rel (0) target = $region17
  $region16: #{window_attention_mixer_forward.7} parent=0 // pred_region
    _
  $region17: #{window_attention_mixer_forward.7} parent=0 // pred_fallthru
    _
  // Predicated region
  $region18: #{window_attention_mixer_forward.7} parent=0 // pred_check
    _
  $region19: #{window_attention_mixer_forward.7} parent=0 // pred_check_branch
    %21 = sbr.rel (0) target = $region21
  $region20: #{window_attention_mixer_forward.7} parent=0 // pred_region
    _
  $region21: #{window_attention_mixer_forward.7} parent=0 // pred_fallthru
    _
  %v22 = vld [vmem:[%s0] sm:$0xff]
  %v23 = vld [vmem:[%s0 + $0x8] sm:$0xff]
  %v24 = vld [vmem:[%s0 + $0x10] sm:$0xff]
  %v25 = vld [vmem:[%s0 + $0x18] sm:$0xff]
  %v26 = vld [vmem:[%s0 + $0x20] sm:$0xff]
  %v27 = vld [vmem:[%s0 + $0x28] sm:$0xff]
  %v28 = vld [vmem:[%s0 + $0x30] sm:$0xff]
  %v29 = vld [vmem:[%s0 + $0x38] sm:$0xff]
  %v30 = vld [vmem:[%s0 + $0x40] sm:$0xff]
  %v31 = vld [vmem:[%s0 + $0x48] sm:$0xff]
  %v32 = vld [vmem:[%s0 + $0x50] sm:$0xff]
  %v33 = vld [vmem:[%s0 + $0x58] sm:$0xff]
  %v34 = vld [vmem:[%s0 + $0x60] sm:$0xff]
  %v35 = vld [vmem:[%s0 + $0x68] sm:$0xff]
  %v36 = vld [vmem:[%s0 + $0x70] sm:$0xff]
  %v37 = vld [vmem:[%s0 + $0x78] sm:$0xff]
  %v38 = vld [vmem:[%s0 + $0x80] sm:$0xff]
  %v39 = vld [vmem:[%s0 + $0x88] sm:$0xff]
  %v40 = vld [vmem:[%s0 + $0x90] sm:$0xff]
  %v41 = vld [vmem:[%s0 + $0x98] sm:$0xff]
  %v42 = vld [vmem:[%s0 + $0xa0] sm:$0xff]
  %v43 = vld [vmem:[%s0 + $0xa8] sm:$0xff]
  %v44 = vld [vmem:[%s0 + $0xb0] sm:$0xff]
  %v45 = vld [vmem:[%s0 + $0xb8] sm:$0xff]
  %v46 = vld [vmem:[%s0 + $0xc0] sm:$0xff]
  %v47 = vld [vmem:[%s0 + $0xc8] sm:$0xff]
  %v48 = vld [vmem:[%s0 + $0xd0] sm:$0xff]
  %v49 = vld [vmem:[%s0 + $0xd8] sm:$0xff]
  %v50 = vld [vmem:[%s0 + $0xe0] sm:$0xff]
  %v51 = vld [vmem:[%s0 + $0xe8] sm:$0xff]
  %v52 = vld [vmem:[%s0 + $0xf0] sm:$0xff]
  %v53 = vld [vmem:[%s0 + $0xf8] sm:$0xff]
  %v54 = vld [vmem:[%s0 + $0x100] sm:$0xff]
  %v55 = vld [vmem:[%s0 + $0x108] sm:$0xff]
  %v56 = vld [vmem:[%s0 + $0x110] sm:$0xff]
  %v57 = vld [vmem:[%s0 + $0x118] sm:$0xff]
  %v58 = vld [vmem:[%s0 + $0x120] sm:$0xff]
  %v59 = vld [vmem:[%s0 + $0x128] sm:$0xff]
  %v60 = vld [vmem:[%s0 + $0x130] sm:$0xff]
  %v61 = vld [vmem:[%s0 + $0x138] sm:$0xff]
  %v62 = vld [vmem:[%s0 + $0x140] sm:$0xff]
  %v63 = vld [vmem:[%s0 + $0x148] sm:$0xff]
  %v64 = vld [vmem:[%s0 + $0x150] sm:$0xff]
  %v65 = vld [vmem:[%s0 + $0x158] sm:$0xff]
  %v66 = vld [vmem:[%s0 + $0x160] sm:$0xff]
  %v67 = vld [vmem:[%s0 + $0x168] sm:$0xff]
  %v68 = vld [vmem:[%s0 + $0x170] sm:$0xff]
  %v69 = vld [vmem:[%s0 + $0x178] sm:$0xff]
  %v70 = vld [vmem:[%s0 + $0x180] sm:$0xff]
  %v71 = vld [vmem:[%s0 + $0x188] sm:$0xff]
  %v72 = vld [vmem:[%s0 + $0x190] sm:$0xff]
  %v73 = vld [vmem:[%s0 + $0x198] sm:$0xff]
  %v74 = vld [vmem:[%s0 + $0x1a0] sm:$0xff]
  %v75 = vld [vmem:[%s0 + $0x1a8] sm:$0xff]
  %v76 = vld [vmem:[%s0 + $0x1b0] sm:$0xff]
  %v77 = vld [vmem:[%s0 + $0x1b8] sm:$0xff]
  %v78 = vld [vmem:[%s0 + $0x1c0] sm:$0xff]
  %v79 = vld [vmem:[%s0 + $0x1c8] sm:$0xff]
  %v80 = vld [vmem:[%s0 + $0x1d0] sm:$0xff]
  %v81 = vld [vmem:[%s0 + $0x1d8] sm:$0xff]
  %v82 = vld [vmem:[%s0 + $0x1e0] sm:$0xff]
  %v83 = vld [vmem:[%s0 + $0x1e8] sm:$0xff]
  %v84 = vld [vmem:[%s0 + $0x1f0] sm:$0xff]
  %v85 = vld [vmem:[%s0 + $0x1f8] sm:$0xff]
  %v86 = vld [vmem:[%s1] sm:$0x3]
  %v87 = vld [vmem:[#allocation2] sm:$0x1]
  %v89 = vperm.slane %v87, 0
  %vm91 = vcmask 15360
  %v93 = vsel %vm91, %v22, 0
  %v96 = vsel %vm91, %v23, 0
  %v99 = vsel %vm91, %v24, 0
  %v102 = vsel %vm91, %v25, 0
  %v105 = vsel %vm91, %v26, 0
  %v108 = vsel %vm91, %v27, 0
  %v111 = vsel %vm91, %v28, 0
  %v114 = vsel %vm91, %v29, 0
  %v117 = vsel %vm91, %v30, 0
  %v120 = vsel %vm91, %v31, 0
  %v123 = vsel %vm91, %v32, 0
  %v126 = vsel %vm91, %v33, 0
  %v129 = vsel %vm91, %v34, 0
  %v132 = vsel %vm91, %v35, 0
  %v135 = vsel %vm91, %v36, 0
  %v138 = vsel %vm91, %v37, 0
  %v141 = vsel %vm91, %v38, 0
  %v144 = vsel %vm91, %v39, 0
  %v147 = vsel %vm91, %v40, 0
  %v150 = vsel %vm91, %v41, 0
  %v153 = vsel %vm91, %v42, 0
  %v156 = vsel %vm91, %v43, 0
  %v159 = vsel %vm91, %v44, 0
  %v162 = vsel %vm91, %v45, 0
  %v165 = vsel %vm91, %v46, 0
  %v168 = vsel %vm91, %v47, 0
  %v171 = vsel %vm91, %v48, 0
  %v174 = vsel %vm91, %v49, 0
  %v177 = vsel %vm91, %v50, 0
  %v180 = vsel %vm91, %v51, 0
  %v183 = vsel %vm91, %v52, 0
  %v186 = vsel %vm91, %v53, 0
  %v189 = vsel %vm91, %v54, 0
  %v192 = vsel %vm91, %v55, 0
  %v195 = vsel %vm91, %v56, 0
  %v198 = vsel %vm91, %v57, 0
  %v201 = vsel %vm91, %v58, 0
  %v204 = vsel %vm91, %v59, 0
  %v207 = vsel %vm91, %v60, 0
  %v210 = vsel %vm91, %v61, 0
  %v213 = vsel %vm91, %v62, 0
  %v216 = vsel %vm91, %v63, 0
  %v219 = vsel %vm91, %v64, 0
  %v222 = vsel %vm91, %v65, 0
  %v225 = vsel %vm91, %v66, 0
  %v228 = vsel %vm91, %v67, 0
  %v231 = vsel %vm91, %v68, 0
  %v234 = vsel %vm91, %v69, 0
  %v237 = vsel %vm91, %v70, 0
  %v240 = vsel %vm91, %v71, 0
  %v243 = vsel %vm91, %v72, 0
  %v246 = vsel %vm91, %v73, 0
  %v249 = vsel %vm91, %v74, 0
  %v252 = vsel %vm91, %v75, 0
  %v255 = vsel %vm91, %v76, 0
  %v258 = vsel %vm91, %v77, 0
  %v261 = vsel %vm91, %v78, 0
  %v264 = vsel %vm91, %v79, 0
  %v267 = vsel %vm91, %v80, 0
  %v270 = vsel %vm91, %v81, 0
  %v273 = vsel %vm91, %v82, 0
  %v276 = vsel %vm91, %v83, 0
  %v279 = vsel %vm91, %v84, 0
  %v282 = vsel %vm91, %v85, 0
  %vm284 = vcmask 1041408
  %v286 = vsel %vm284, %v86, 0
  %288 = vmatpush.msra.mxu0 0.0
  %289 = vmatpush.msra.mxu0 0.0
  %290 = vmatpush.msra.mxu0 0.0
  %291 = vmatpush.msra.mxu0 0.0
  %292 = vmatpush.msra.mxu0 0.0
  %293 = vmatpush.msra.mxu0 0.0
  %294 = vmatpush.msra.mxu0 0.0
  %295 = vmatpush.msra.mxu0 0.0
  %296 = vmatpush.msra.mxu0 0.0
  %297 = vmatpush.msra.mxu0 0.0
  %298 = vmatpush.msra.mxu0 0.0
  %299 = vmatpush.msra.mxu0 0.0
  %300 = vmatpush.msra.mxu0 0.0
  %301 = vmatpush.msra.mxu0 0.0
  %302 = vmatpush.msra.mxu0 0.0
  %303 = vmatpush.msra.mxu0 %v286
  %304 = vmatmul.f32.gmra.mxu0 %v93
  %v305 = vpop.f32.mrf.mxu0
  %v306 = vadd.f32 %v89, %v305
  %307 = vmatmul.f32.gmra.mxu0 %v96
  %v308 = vpop.f32.mrf.mxu0
  %v309 = vadd.f32 %v89, %v308
  %310 = vmatmul.f32.gmra.mxu0 %v99
  %v311 = vpop.f32.mrf.mxu0
  %v312 = vadd.f32 %v89, %v311
  %313 = vmatmul.f32.gmra.mxu0 %v102
  %v314 = vpop.f32.mrf.mxu0
  %v315 = vadd.f32 %v89, %v314
  %316 = vmatmul.f32.gmra.mxu0 %v105
  %v317 = vpop.f32.mrf.mxu0
  %v318 = vadd.f32 %v89, %v317
  %319 = vmatmul.f32.gmra.mxu0 %v108
  %v320 = vpop.f32.mrf.mxu0
  %v321 = vadd.f32 %v89, %v320
  %322 = vmatmul.f32.gmra.mxu0 %v111
  %v323 = vpop.f32.mrf.mxu0
  %v324 = vadd.f32 %v89, %v323
  %325 = vmatmul.f32.gmra.mxu0 %v114
  %v326 = vpop.f32.mrf.mxu0
  %v327 = vadd.f32 %v89, %v326
  %328 = vmatmul.f32.gmra.mxu0 %v117
  %v329 = vpop.f32.mrf.mxu0
  %v330 = vadd.f32 %v89, %v329
  %331 = vmatmul.f32.gmra.mxu0 %v120
  %v332 = vpop.f32.mrf.mxu0
  %v333 = vadd.f32 %v89, %v332
  %334 = vmatmul.f32.gmra.mxu0 %v123
  %v335 = vpop.f32.mrf.mxu0
  %v336 = vadd.f32 %v89, %v335
  %337 = vmatmul.f32.gmra.mxu0 %v126
  %v338 = vpop.f32.mrf.mxu0
  %v339 = vadd.f32 %v89, %v338
  %340 = vmatmul.f32.gmra.mxu0 %v129
  %v341 = vpop.f32.mrf.mxu0
  %v342 = vadd.f32 %v89, %v341
  %343 = vmatmul.f32.gmra.mxu0 %v132
  %v344 = vpop.f32.mrf.mxu0
  %v345 = vadd.f32 %v89, %v344
  %346 = vmatmul.f32.gmra.mxu0 %v135
  %v347 = vpop.f32.mrf.mxu0
  %v348 = vadd.f32 %v89, %v347
  %349 = vmatmul.f32.gmra.mxu0 %v138
  %v350 = vpop.f32.mrf.mxu0
  %v351 = vadd.f32 %v89, %v350
  %352 = vmatmul.f32.gmra.mxu0 %v141
  %v353 = vpop.f32.mrf.mxu0
  %v354 = vadd.f32 %v89, %v353
  %355 = vmatmul.f32.gmra.mxu0 %v144
  %v356 = vpop.f32.mrf.mxu0
  %v357 = vadd.f32 %v89, %v356
  %358 = vmatmul.f32.gmra.mxu0 %v147
  %v359 = vpop.f32.mrf.mxu0
  %v360 = vadd.f32 %v89, %v359
  %361 = vmatmul.f32.gmra.mxu0 %v150
  %v362 = vpop.f32.mrf.mxu0
  %v363 = vadd.f32 %v89, %v362
  %364 = vmatmul.f32.gmra.mxu0 %v153
  %v365 = vpop.f32.mrf.mxu0
  %v366 = vadd.f32 %v89, %v365
  %367 = vmatmul.f32.gmra.mxu0 %v156
  %v368 = vpop.f32.mrf.mxu0
  %v369 = vadd.f32 %v89, %v368
  %370 = vmatmul.f32.gmra.mxu0 %v159
  %v371 = vpop.f32.mrf.mxu0
  %v372 = vadd.f32 %v89, %v371
  %373 = vmatmul.f32.gmra.mxu0 %v162
  %v374 = vpop.f32.mrf.mxu0
  %v375 = vadd.f32 %v89, %v374
  %376 = vmatmul.f32.gmra.mxu0 %v165
  %v377 = vpop.f32.mrf.mxu0
  %v378 = vadd.f32 %v89, %v377
  %379 = vmatmul.f32.gmra.mxu0 %v168
  %v380 = vpop.f32.mrf.mxu0
  %v381 = vadd.f32 %v89, %v380
  %382 = vmatmul.f32.gmra.mxu0 %v171
  %v383 = vpop.f32.mrf.mxu0
  %v384 = vadd.f32 %v89, %v383
  %385 = vmatmul.f32.gmra.mxu0 %v174
  %v386 = vpop.f32.mrf.mxu0
  %v387 = vadd.f32 %v89, %v386
  %388 = vmatmul.f32.gmra.mxu0 %v177
  %v389 = vpop.f32.mrf.mxu0
  %v390 = vadd.f32 %v89, %v389
  %391 = vmatmul.f32.gmra.mxu0 %v180
  %v392 = vpop.f32.mrf.mxu0
  %v393 = vadd.f32 %v89, %v392
  %394 = vmatmul.f32.gmra.mxu0 %v183
  %v395 = vpop.f32.mrf.mxu0
  %v396 = vadd.f32 %v89, %v395
  %397 = vmatmul.f32.gmra.mxu0 %v186
  %v398 = vpop.f32.mrf.mxu0
  %v399 = vadd.f32 %v89, %v398
  %400 = vmatmul.f32.gmra.mxu0 %v189
  %v401 = vpop.f32.mrf.mxu0
  %v402 = vadd.f32 %v89, %v401
  %403 = vmatmul.f32.gmra.mxu0 %v192
  %v404 = vpop.f32.mrf.mxu0
  %v405 = vadd.f32 %v89, %v404
  %406 = vmatmul.f32.gmra.mxu0 %v195
  %v407 = vpop.f32.mrf.mxu0
  %v408 = vadd.f32 %v89, %v407
  %409 = vmatmul.f32.gmra.mxu0 %v198
  %v410 = vpop.f32.mrf.mxu0
  %v411 = vadd.f32 %v89, %v410
  %412 = vmatmul.f32.gmra.mxu0 %v201
  %v413 = vpop.f32.mrf.mxu0
  %v414 = vadd.f32 %v89, %v413
  %415 = vmatmul.f32.gmra.mxu0 %v204
  %v416 = vpop.f32.mrf.mxu0
  %v417 = vadd.f32 %v89, %v416
  %418 = vmatmul.f32.gmra.mxu0 %v207
  %v419 = vpop.f32.mrf.mxu0
  %v420 = vadd.f32 %v89, %v419
  %421 = vmatmul.f32.gmra.mxu0 %v210
  %v422 = vpop.f32.mrf.mxu0
  %v423 = vadd.f32 %v89, %v422
  %424 = vmatmul.f32.gmra.mxu0 %v213
  %v425 = vpop.f32.mrf.mxu0
  %v426 = vadd.f32 %v89, %v425
  %427 = vmatmul.f32.gmra.mxu0 %v216
  %v428 = vpop.f32.mrf.mxu0
  %v429 = vadd.f32 %v89, %v428
  %430 = vmatmul.f32.gmra.mxu0 %v219
  %v431 = vpop.f32.mrf.mxu0
  %v432 = vadd.f32 %v89, %v431
  %433 = vmatmul.f32.gmra.mxu0 %v222
  %v434 = vpop.f32.mrf.mxu0
  %v435 = vadd.f32 %v89, %v434
  %436 = vmatmul.f32.gmra.mxu0 %v225
  %v437 = vpop.f32.mrf.mxu0
  %v438 = vadd.f32 %v89, %v437
  %439 = vmatmul.f32.gmra.mxu0 %v228
  %v440 = vpop.f32.mrf.mxu0
  %v441 = vadd.f32 %v89, %v440
  %442 = vmatmul.f32.gmra.mxu0 %v231
  %v443 = vpop.f32.mrf.mxu0
  %v444 = vadd.f32 %v89, %v443
  %445 = vmatmul.f32.gmra.mxu0 %v234
  %v446 = vpop.f32.mrf.mxu0
  %v447 = vadd.f32 %v89, %v446
  %448 = vmatmul.f32.gmra.mxu0 %v237
  %v449 = vpop.f32.mrf.mxu0
  %v450 = vadd.f32 %v89, %v449
  %451 = vmatmul.f32.gmra.mxu0 %v240
  %v452 = vpop.f32.mrf.mxu0
  %v453 = vadd.f32 %v89, %v452
  %454 = vmatmul.f32.gmra.mxu0 %v243
  %v455 = vpop.f32.mrf.mxu0
  %v456 = vadd.f32 %v89, %v455
  %457 = vmatmul.f32.gmra.mxu0 %v246
  %v458 = vpop.f32.mrf.mxu0
  %v459 = vadd.f32 %v89, %v458
  %460 = vmatmul.f32.gmra.mxu0 %v249
  %v461 = vpop.f32.mrf.mxu0
  %v462 = vadd.f32 %v89, %v461
  %463 = vmatmul.f32.gmra.mxu0 %v252
  %v464 = vpop.f32.mrf.mxu0
  %v465 = vadd.f32 %v89, %v464
  %466 = vmatmul.f32.gmra.mxu0 %v255
  %v467 = vpop.f32.mrf.mxu0
  %v468 = vadd.f32 %v89, %v467
  %469 = vmatmul.f32.gmra.mxu0 %v258
  %v470 = vpop.f32.mrf.mxu0
  %v471 = vadd.f32 %v89, %v470
  %472 = vmatmul.f32.gmra.mxu0 %v261
  %v473 = vpop.f32.mrf.mxu0
  %v474 = vadd.f32 %v89, %v473
  %475 = vmatmul.f32.gmra.mxu0 %v264
  %v476 = vpop.f32.mrf.mxu0
  %v477 = vadd.f32 %v89, %v476
  %478 = vmatmul.f32.gmra.mxu0 %v267
  %v479 = vpop.f32.mrf.mxu0
  %v480 = vadd.f32 %v89, %v479
  %481 = vmatmul.f32.gmra.mxu0 %v270
  %v482 = vpop.f32.mrf.mxu0
  %v483 = vadd.f32 %v89, %v482
  %484 = vmatmul.f32.gmra.mxu0 %v273
  %v485 = vpop.f32.mrf.mxu0
  %v486 = vadd.f32 %v89, %v485
  %487 = vmatmul.f32.gmra.mxu0 %v276
  %v488 = vpop.f32.mrf.mxu0
  %v489 = vadd.f32 %v89, %v488
  %490 = vmatmul.f32.gmra.mxu0 %v279
  %v491 = vpop.f32.mrf.mxu0
  %v492 = vadd.f32 %v89, %v491
  %493 = vmatmul.f32.gmra.mxu0 %v282
  %v494 = vpop.f32.mrf.mxu0
  %v495 = vadd.f32 %v89, %v494
  %496 = vdwg.mxu0
  %vm497 = vcmp.ge.f32.partialorder %v306, 0.0
  %vm498 = vcmp.ge.f32.partialorder %v309, 0.0
  %vm499 = vcmp.ge.f32.partialorder %v312, 0.0
  %vm500 = vcmp.ge.f32.partialorder %v315, 0.0
  %vm501 = vcmp.ge.f32.partialorder %v318, 0.0
  %vm502 = vcmp.ge.f32.partialorder %v321, 0.0
  %vm503 = vcmp.ge.f32.partialorder %v324, 0.0
  %vm504 = vcmp.ge.f32.partialorder %v327, 0.0
  %vm505 = vcmp.ge.f32.partialorder %v330, 0.0
  %vm506 = vcmp.ge.f32.partialorder %v333, 0.0
  %vm507 = vcmp.ge.f32.partialorder %v336, 0.0
  %vm508 = vcmp.ge.f32.partialorder %v339, 0.0
  %vm509 = vcmp.ge.f32.partialorder %v342, 0.0
  %vm510 = vcmp.ge.f32.partialorder %v345, 0.0
  %vm511 = vcmp.ge.f32.partialorder %v348, 0.0
  %vm512 = vcmp.ge.f32.partialorder %v351, 0.0
  %vm513 = vcmp.ge.f32.partialorder %v354, 0.0
  %vm514 = vcmp.ge.f32.partialorder %v357, 0.0
  %vm515 = vcmp.ge.f32.partialorder %v360, 0.0
  %vm516 = vcmp.ge.f32.partialorder %v363, 0.0
  %vm517 = vcmp.ge.f32.partialorder %v366, 0.0
  %vm518 = vcmp.ge.f32.partialorder %v369, 0.0
  %vm519 = vcmp.ge.f32.partialorder %v372, 0.0
  %vm520 = vcmp.ge.f32.partialorder %v375, 0.0
  %vm521 = vcmp.ge.f32.partialorder %v378, 0.0
  %vm522 = vcmp.ge.f32.partialorder %v381, 0.0
  %vm523 = vcmp.ge.f32.partialorder %v384, 0.0
  %vm524 = vcmp.ge.f32.partialorder %v387, 0.0
  %vm525 = vcmp.ge.f32.partialorder %v390, 0.0
  %vm526 = vcmp.ge.f32.partialorder %v393, 0.0
  %vm527 = vcmp.ge.f32.partialorder %v396, 0.0
  %vm528 = vcmp.ge.f32.partialorder %v399, 0.0
  %vm529 = vcmp.ge.f32.partialorder %v402, 0.0
  %vm530 = vcmp.ge.f32.partialorder %v405, 0.0
  %vm531 = vcmp.ge.f32.partialorder %v408, 0.0
  %vm532 = vcmp.ge.f32.partialorder %v411, 0.0
  %vm533 = vcmp.ge.f32.partialorder %v414, 0.0
  %vm534 = vcmp.ge.f32.partialorder %v417, 0.0
  %vm535 = vcmp.ge.f32.partialorder %v420, 0.0
  %vm536 = vcmp.ge.f32.partialorder %v423, 0.0
  %vm537 = vcmp.ge.f32.partialorder %v426, 0.0
  %vm538 = vcmp.ge.f32.partialorder %v429, 0.0
  %vm539 = vcmp.ge.f32.partialorder %v432, 0.0
  %vm540 = vcmp.ge.f32.partialorder %v435, 0.0
  %vm541 = vcmp.ge.f32.partialorder %v438, 0.0
  %vm542 = vcmp.ge.f32.partialorder %v441, 0.0
  %vm543 = vcmp.ge.f32.partialorder %v444, 0.0
  %vm544 = vcmp.ge.f32.partialorder %v447, 0.0
  %vm545 = vcmp.ge.f32.partialorder %v450, 0.0
  %vm546 = vcmp.ge.f32.partialorder %v453, 0.0
  %vm547 = vcmp.ge.f32.partialorder %v456, 0.0
  %vm548 = vcmp.ge.f32.partialorder %v459, 0.0
  %vm549 = vcmp.ge.f32.partialorder %v462, 0.0
  %vm550 = vcmp.ge.f32.partialorder %v465, 0.0
  %vm551 = vcmp.ge.f32.partialorder %v468, 0.0
  %vm552 = vcmp.ge.f32.partialorder %v471, 0.0
  %vm553 = vcmp.ge.f32.partialorder %v474, 0.0
  %vm554 = vcmp.ge.f32.partialorder %v477, 0.0
  %vm555 = vcmp.ge.f32.partialorder %v480, 0.0
  %vm556 = vcmp.ge.f32.partialorder %v483, 0.0
  %vm557 = vcmp.ge.f32.partialorder %v486, 0.0
  %vm558 = vcmp.ge.f32.partialorder %v489, 0.0
  %vm559 = vcmp.ge.f32.partialorder %v492, 0.0
  %vm560 = vcmp.ge.f32.partialorder %v495, 0.0
  %v561 = vmul.f32 %v306, 0.1
  %v562 = vmul.f32 %v309, 0.1
  %v563 = vmul.f32 %v312, 0.1
  %v564 = vmul.f32 %v315, 0.1
  %v565 = vmul.f32 %v318, 0.1
  %v566 = vmul.f32 %v321, 0.1
  %v567 = vmul.f32 %v324, 0.1
  %v568 = vmul.f32 %v327, 0.1
  %v569 = vmul.f32 %v330, 0.1
  %v570 = vmul.f32 %v333, 0.1
  %v571 = vmul.f32 %v336, 0.1
  %v572 = vmul.f32 %v339, 0.1
  %v573 = vmul.f32 %v342, 0.1
  %v574 = vmul.f32 %v345, 0.1
  %v575 = vmul.f32 %v348, 0.1
  %v576 = vmul.f32 %v351, 0.1
  %v577 = vmul.f32 %v354, 0.1
  %v578 = vmul.f32 %v357, 0.1
  %v579 = vmul.f32 %v360, 0.1
  %v580 = vmul.f32 %v363, 0.1
  %v581 = vmul.f32 %v366, 0.1
  %v582 = vmul.f32 %v369, 0.1
  %v583 = vmul.f32 %v372, 0.1
  %v584 = vmul.f32 %v375, 0.1
  %v585 = vmul.f32 %v378, 0.1
  %v586 = vmul.f32 %v381, 0.1
  %v587 = vmul.f32 %v384, 0.1
  %v588 = vmul.f32 %v387, 0.1
  %v589 = vmul.f32 %v390, 0.1
  %v590 = vmul.f32 %v393, 0.1
  %v591 = vmul.f32 %v396, 0.1
  %v592 = vmul.f32 %v399, 0.1
  %v593 = vmul.f32 %v402, 0.1
  %v594 = vmul.f32 %v405, 0.1
  %v595 = vmul.f32 %v408, 0.1
  %v596 = vmul.f32 %v411, 0.1
  %v597 = vmul.f32 %v414, 0.1
  %v598 = vmul.f32 %v417, 0.1
  %v599 = vmul.f32 %v420, 0.1
  %v600 = vmul.f32 %v423, 0.1
  %v601 = vmul.f32 %v426, 0.1
  %v602 = vmul.f32 %v429, 0.1
  %v603 = vmul.f32 %v432, 0.1
  %v604 = vmul.f32 %v435, 0.1
  %v605 = vmul.f32 %v438, 0.1
  %v606 = vmul.f32 %v441, 0.1
  %v607 = vmul.f32 %v444, 0.1
  %v608 = vmul.f32 %v447, 0.1
  %v609 = vmul.f32 %v450, 0.1
  %v610 = vmul.f32 %v453, 0.1
  %v611 = vmul.f32 %v456, 0.1
  %v612 = vmul.f32 %v459, 0.1
  %v613 = vmul.f32 %v462, 0.1
  %v614 = vmul.f32 %v465, 0.1
  %v615 = vmul.f32 %v468, 0.1
  %v616 = vmul.f32 %v471, 0.1
  %v617 = vmul.f32 %v474, 0.1
  %v618 = vmul.f32 %v477, 0.1
  %v619 = vmul.f32 %v480, 0.1
  %v620 = vmul.f32 %v483, 0.1
  %v621 = vmul.f32 %v486, 0.1
  %v622 = vmul.f32 %v489, 0.1
  %v623 = vmul.f32 %v492, 0.1
  %v624 = vmul.f32 %v495, 0.1
  %v625 = vsel %vm497, %v306, %v561
  %v626 = vsel %vm498, %v309, %v562
  %v627 = vsel %vm499, %v312, %v563
  %v628 = vsel %vm500, %v315, %v564
  %v629 = vsel %vm501, %v318, %v565
  %v630 = vsel %vm502, %v321, %v566
  %v631 = vsel %vm503, %v324, %v567
  %v632 = vsel %vm504, %v327, %v568
  %v633 = vsel %vm505, %v330, %v569
  %v634 = vsel %vm506, %v333, %v570
  %v635 = vsel %vm507, %v336, %v571
  %v636 = vsel %vm508, %v339, %v572
  %v637 = vsel %vm509, %v342, %v573
  %v638 = vsel %vm510, %v345, %v574
  %v639 = vsel %vm511, %v348, %v575
  %v640 = vsel %vm512, %v351, %v576
  %v641 = vsel %vm513, %v354, %v577
  %v642 = vsel %vm514, %v357, %v578
  %v643 = vsel %vm515, %v360, %v579
  %v644 = vsel %vm516, %v363, %v580
  %v645 = vsel %vm517, %v366, %v581
  %v646 = vsel %vm518, %v369, %v582
  %v647 = vsel %vm519, %v372, %v583
  %v648 = vsel %vm520, %v375, %v584
  %v649 = vsel %vm521, %v378, %v585
  %v650 = vsel %vm522, %v381, %v586
  %v651 = vsel %vm523, %v384, %v587
  %v652 = vsel %vm524, %v387, %v588
  %v653 = vsel %vm525, %v390, %v589
  %v654 = vsel %vm526, %v393, %v590
  %v655 = vsel %vm527, %v396, %v591
  %v656 = vsel %vm528, %v399, %v592
  %v657 = vsel %vm529, %v402, %v593
  %v658 = vsel %vm530, %v405, %v594
  %v659 = vsel %vm531, %v408, %v595
  %v660 = vsel %vm532, %v411, %v596
  %v661 = vsel %vm533, %v414, %v597
  %v662 = vsel %vm534, %v417, %v598
  %v663 = vsel %vm535, %v420, %v599
  %v664 = vsel %vm536, %v423, %v600
  %v665 = vsel %vm537, %v426, %v601
  %v666 = vsel %vm538, %v429, %v602
  %v667 = vsel %vm539, %v432, %v603
  %v668 = vsel %vm540, %v435, %v604
  %v669 = vsel %vm541, %v438, %v605
  %v670 = vsel %vm542, %v441, %v606
  %v671 = vsel %vm543, %v444, %v607
  %v672 = vsel %vm544, %v447, %v608
  %v673 = vsel %vm545, %v450, %v609
  %v674 = vsel %vm546, %v453, %v610
  %v675 = vsel %vm547, %v456, %v611
  %v676 = vsel %vm548, %v459, %v612
  %v677 = vsel %vm549, %v462, %v613
  %v678 = vsel %vm550, %v465, %v614
  %v679 = vsel %vm551, %v468, %v615
  %v680 = vsel %vm552, %v471, %v616
  %v681 = vsel %vm553, %v474, %v617
  %v682 = vsel %vm554, %v477, %v618
  %v683 = vsel %vm555, %v480, %v619
  %v684 = vsel %vm556, %v483, %v620
  %v685 = vsel %vm557, %v486, %v621
  %v686 = vsel %vm558, %v489, %v622
  %v687 = vsel %vm559, %v492, %v623
  %v688 = vsel %vm560, %v495, %v624
  %v689 = vld [vmem:[%s3] sm:$0x1]
  %v690 = vld [vmem:[%s4] sm:$0x1]
  %v692 = vperm.slane %v690, 0
  %vm694 = vcmask 7168
  %v696 = vsel %vm694, %v625, 0
  %v699 = vsel %vm694, %v626, 0
  %v702 = vsel %vm694, %v627, 0
  %v705 = vsel %vm694, %v628, 0
  %v708 = vsel %vm694, %v629, 0
  %v711 = vsel %vm694, %v630, 0
  %v714 = vsel %vm694, %v631, 0
  %v717 = vsel %vm694, %v632, 0
  %v720 = vsel %vm694, %v633, 0
  %v723 = vsel %vm694, %v634, 0
  %v726 = vsel %vm694, %v635, 0
  %v729 = vsel %vm694, %v636, 0
  %v732 = vsel %vm694, %v637, 0
  %v735 = vsel %vm694, %v638, 0
  %v738 = vsel %vm694, %v639, 0
  %v741 = vsel %vm694, %v640, 0
  %v744 = vsel %vm694, %v641, 0
  %v747 = vsel %vm694, %v642, 0
  %v750 = vsel %vm694, %v643, 0
  %v753 = vsel %vm694, %v644, 0
  %v756 = vsel %vm694, %v645, 0
  %v759 = vsel %vm694, %v646, 0
  %v762 = vsel %vm694, %v647, 0
  %v765 = vsel %vm694, %v648, 0
  %v768 = vsel %vm694, %v649, 0
  %v771 = vsel %vm694, %v650, 0
  %v774 = vsel %vm694, %v651, 0
  %v777 = vsel %vm694, %v652, 0
  %v780 = vsel %vm694, %v653, 0
  %v783 = vsel %vm694, %v654, 0
  %v786 = vsel %vm694, %v655, 0
  %v789 = vsel %vm694, %v656, 0
  %v792 = vsel %vm694, %v657, 0
  %v795 = vsel %vm694, %v658, 0
  %v798 = vsel %vm694, %v659, 0
  %v801 = vsel %vm694, %v660, 0
  %v804 = vsel %vm694, %v661, 0
  %v807 = vsel %vm694, %v662, 0
  %v810 = vsel %vm694, %v663, 0
  %v813 = vsel %vm694, %v664, 0
  %v816 = vsel %vm694, %v665, 0
  %v819 = vsel %vm694, %v666, 0
  %v822 = vsel %vm694, %v667, 0
  %v825 = vsel %vm694, %v668, 0
  %v828 = vsel %vm694, %v669, 0
  %v831 = vsel %vm694, %v670, 0
  %v834 = vsel %vm694, %v671, 0
  %v837 = vsel %vm694, %v672, 0
  %v840 = vsel %vm694, %v673, 0
  %v843 = vsel %vm694, %v674, 0
  %v846 = vsel %vm694, %v675, 0
  %v849 = vsel %vm694, %v676, 0
  %v852 = vsel %vm694, %v677, 0
  %v855 = vsel %vm694, %v678, 0
  %v858 = vsel %vm694, %v679, 0
  %v861 = vsel %vm694, %v680, 0
  %v864 = vsel %vm694, %v681, 0
  %v867 = vsel %vm694, %v682, 0
  %v870 = vsel %vm694, %v683, 0
  %v873 = vsel %vm694, %v684, 0
  %v876 = vsel %vm694, %v685, 0
  %v879 = vsel %vm694, %v686, 0
  %v882 = vsel %vm694, %v687, 0
  %v885 = vsel %vm694, %v688, 0
  %vm887 = vcmask 1040384
  %v889 = vsel %vm887, %v689, 0
  %891 = vmatpush.msra.mxu0 0.0
  %892 = vmatpush.msra.mxu0 0.0
  %893 = vmatpush.msra.mxu0 0.0
  %894 = vmatpush.msra.mxu0 0.0
  %895 = vmatpush.msra.mxu0 0.0
  %896 = vmatpush.msra.mxu0 0.0
  %897 = vmatpush.msra.mxu0 0.0
  %898 = vmatpush.msra.mxu0 0.0
  %899 = vmatpush.msra.mxu0 0.0
  %900 = vmatpush.msra.mxu0 0.0
  %901 = vmatpush.msra.mxu0 0.0
  %902 = vmatpush.msra.mxu0 0.0
  %903 = vmatpush.msra.mxu0 0.0
  %904 = vmatpush.msra.mxu0 0.0
  %905 = vmatpush.msra.mxu0 0.0
  %906 = vmatpush.msra.mxu0 %v889
  %907 = vmatmul.f32.gmra.mxu0 %v696
  %v908 = vpop.f32.mrf.mxu0
  %v909 = vadd.f32 %v692, %v908
  %910 = vmatmul.f32.gmra.mxu0 %v699
  %v911 = vpop.f32.mrf.mxu0
  %v912 = vadd.f32 %v692, %v911
  %913 = vmatmul.f32.gmra.mxu0 %v702
  %v914 = vpop.f32.mrf.mxu0
  %v915 = vadd.f32 %v692, %v914
  %916 = vmatmul.f32.gmra.mxu0 %v705
  %v917 = vpop.f32.mrf.mxu0
  %v918 = vadd.f32 %v692, %v917
  %919 = vmatmul.f32.gmra.mxu0 %v708
  %v920 = vpop.f32.mrf.mxu0
  %v921 = vadd.f32 %v692, %v920
  %922 = vmatmul.f32.gmra.mxu0 %v711
  %v923 = vpop.f32.mrf.mxu0
  %v924 = vadd.f32 %v692, %v923
  %925 = vmatmul.f32.gmra.mxu0 %v714
  %v926 = vpop.f32.mrf.mxu0
  %v927 = vadd.f32 %v692, %v926
  %928 = vmatmul.f32.gmra.mxu0 %v717
  %v929 = vpop.f32.mrf.mxu0
  %v930 = vadd.f32 %v692, %v929
  %931 = vmatmul.f32.gmra.mxu0 %v720
  %v932 = vpop.f32.mrf.mxu0
  %v933 = vadd.f32 %v692, %v932
  %934 = vmatmul.f32.gmra.mxu0 %v723
  %v935 = vpop.f32.mrf.mxu0
  %v936 = vadd.f32 %v692, %v935
  %937 = vmatmul.f32.gmra.mxu0 %v726
  %v938 = vpop.f32.mrf.mxu0
  %v939 = vadd.f32 %v692, %v938
  %940 = vmatmul.f32.gmra.mxu0 %v729
  %v941 = vpop.f32.mrf.mxu0
  %v942 = vadd.f32 %v692, %v941
  %943 = vmatmul.f32.gmra.mxu0 %v732
  %v944 = vpop.f32.mrf.mxu0
  %v945 = vadd.f32 %v692, %v944
  %946 = vmatmul.f32.gmra.mxu0 %v735
  %v947 = vpop.f32.mrf.mxu0
  %v948 = vadd.f32 %v692, %v947
  %949 = vmatmul.f32.gmra.mxu0 %v738
  %v950 = vpop.f32.mrf.mxu0
  %v951 = vadd.f32 %v692, %v950
  %952 = vmatmul.f32.gmra.mxu0 %v741
  %v953 = vpop.f32.mrf.mxu0
  %v954 = vadd.f32 %v692, %v953
  %955 = vmatmul.f32.gmra.mxu0 %v744
  %v956 = vpop.f32.mrf.mxu0
  %v957 = vadd.f32 %v692, %v956
  %958 = vmatmul.f32.gmra.mxu0 %v747
  %v959 = vpop.f32.mrf.mxu0
  %v960 = vadd.f32 %v692, %v959
  %961 = vmatmul.f32.gmra.mxu0 %v750
  %v962 = vpop.f32.mrf.mxu0
  %v963 = vadd.f32 %v692, %v962
  %964 = vmatmul.f32.gmra.mxu0 %v753
  %v965 = vpop.f32.mrf.mxu0
  %v966 = vadd.f32 %v692, %v965
  %967 = vmatmul.f32.gmra.mxu0 %v756
  %v968 = vpop.f32.mrf.mxu0
  %v969 = vadd.f32 %v692, %v968
  %970 = vmatmul.f32.gmra.mxu0 %v759
  %v971 = vpop.f32.mrf.mxu0
  %v972 = vadd.f32 %v692, %v971
  %973 = vmatmul.f32.gmra.mxu0 %v762
  %v974 = vpop.f32.mrf.mxu0
  %v975 = vadd.f32 %v692, %v974
  %976 = vmatmul.f32.gmra.mxu0 %v765
  %v977 = vpop.f32.mrf.mxu0
  %v978 = vadd.f32 %v692, %v977
  %979 = vmatmul.f32.gmra.mxu0 %v768
  %v980 = vpop.f32.mrf.mxu0
  %v981 = vadd.f32 %v692, %v980
  %982 = vmatmul.f32.gmra.mxu0 %v771
  %v983 = vpop.f32.mrf.mxu0
  %v984 = vadd.f32 %v692, %v983
  %985 = vmatmul.f32.gmra.mxu0 %v774
  %v986 = vpop.f32.mrf.mxu0
  %v987 = vadd.f32 %v692, %v986
  %988 = vmatmul.f32.gmra.mxu0 %v777
  %v989 = vpop.f32.mrf.mxu0
  %v990 = vadd.f32 %v692, %v989
  %991 = vmatmul.f32.gmra.mxu0 %v780
  %v992 = vpop.f32.mrf.mxu0
  %v993 = vadd.f32 %v692, %v992
  %994 = vmatmul.f32.gmra.mxu0 %v783
  %v995 = vpop.f32.mrf.mxu0
  %v996 = vadd.f32 %v692, %v995
  %997 = vmatmul.f32.gmra.mxu0 %v786
  %v998 = vpop.f32.mrf.mxu0
  %v999 = vadd.f32 %v692, %v998
  %1000 = vmatmul.f32.gmra.mxu0 %v789
  %v1001 = vpop.f32.mrf.mxu0
  %v1002 = vadd.f32 %v692, %v1001
  %1003 = vmatmul.f32.gmra.mxu0 %v792
  %v1004 = vpop.f32.mrf.mxu0
  %v1005 = vadd.f32 %v692, %v1004
  %1006 = vmatmul.f32.gmra.mxu0 %v795
  %v1007 = vpop.f32.mrf.mxu0
  %v1008 = vadd.f32 %v692, %v1007
  %1009 = vmatmul.f32.gmra.mxu0 %v798
  %v1010 = vpop.f32.mrf.mxu0
  %v1011 = vadd.f32 %v692, %v1010
  %1012 = vmatmul.f32.gmra.mxu0 %v801
  %v1013 = vpop.f32.mrf.mxu0
  %v1014 = vadd.f32 %v692, %v1013
  %1015 = vmatmul.f32.gmra.mxu0 %v804
  %v1016 = vpop.f32.mrf.mxu0
  %v1017 = vadd.f32 %v692, %v1016
  %1018 = vmatmul.f32.gmra.mxu0 %v807
  %v1019 = vpop.f32.mrf.mxu0
  %v1020 = vadd.f32 %v692, %v1019
  %1021 = vmatmul.f32.gmra.mxu0 %v810
  %v1022 = vpop.f32.mrf.mxu0
  %v1023 = vadd.f32 %v692, %v1022
  %1024 = vmatmul.f32.gmra.mxu0 %v813
  %v1025 = vpop.f32.mrf.mxu0
  %v1026 = vadd.f32 %v692, %v1025
  %1027 = vmatmul.f32.gmra.mxu0 %v816
  %v1028 = vpop.f32.mrf.mxu0
  %v1029 = vadd.f32 %v692, %v1028
  %1030 = vmatmul.f32.gmra.mxu0 %v819
  %v1031 = vpop.f32.mrf.mxu0
  %v1032 = vadd.f32 %v692, %v1031
  %1033 = vmatmul.f32.gmra.mxu0 %v822
  %v1034 = vpop.f32.mrf.mxu0
  %v1035 = vadd.f32 %v692, %v1034
  %1036 = vmatmul.f32.gmra.mxu0 %v825
  %v1037 = vpop.f32.mrf.mxu0
  %v1038 = vadd.f32 %v692, %v1037
  %1039 = vmatmul.f32.gmra.mxu0 %v828
  %v1040 = vpop.f32.mrf.mxu0
  %v1041 = vadd.f32 %v692, %v1040
  %1042 = vmatmul.f32.gmra.mxu0 %v831
  %v1043 = vpop.f32.mrf.mxu0
  %v1044 = vadd.f32 %v692, %v1043
  %1045 = vmatmul.f32.gmra.mxu0 %v834
  %v1046 = vpop.f32.mrf.mxu0
  %v1047 = vadd.f32 %v692, %v1046
  %1048 = vmatmul.f32.gmra.mxu0 %v837
  %v1049 = vpop.f32.mrf.mxu0
  %v1050 = vadd.f32 %v692, %v1049
  %1051 = vmatmul.f32.gmra.mxu0 %v840
  %v1052 = vpop.f32.mrf.mxu0
  %v1053 = vadd.f32 %v692, %v1052
  %1054 = vmatmul.f32.gmra.mxu0 %v843
  %v1055 = vpop.f32.mrf.mxu0
  %v1056 = vadd.f32 %v692, %v1055
  %1057 = vmatmul.f32.gmra.mxu0 %v846
  %v1058 = vpop.f32.mrf.mxu0
  %v1059 = vadd.f32 %v692, %v1058
  %1060 = vmatmul.f32.gmra.mxu0 %v849
  %v1061 = vpop.f32.mrf.mxu0
  %v1062 = vadd.f32 %v692, %v1061
  %1063 = vmatmul.f32.gmra.mxu0 %v852
  %v1064 = vpop.f32.mrf.mxu0
  %v1065 = vadd.f32 %v692, %v1064
  %1066 = vmatmul.f32.gmra.mxu0 %v855
  %v1067 = vpop.f32.mrf.mxu0
  %v1068 = vadd.f32 %v692, %v1067
  %1069 = vmatmul.f32.gmra.mxu0 %v858
  %v1070 = vpop.f32.mrf.mxu0
  %v1071 = vadd.f32 %v692, %v1070
  %1072 = vmatmul.f32.gmra.mxu0 %v861
  %v1073 = vpop.f32.mrf.mxu0
  %v1074 = vadd.f32 %v692, %v1073
  %1075 = vmatmul.f32.gmra.mxu0 %v864
  %v1076 = vpop.f32.mrf.mxu0
  %v1077 = vadd.f32 %v692, %v1076
  %1078 = vmatmul.f32.gmra.mxu0 %v867
  %v1079 = vpop.f32.mrf.mxu0
  %v1080 = vadd.f32 %v692, %v1079
  %1081 = vmatmul.f32.gmra.mxu0 %v870
  %v1082 = vpop.f32.mrf.mxu0
  %v1083 = vadd.f32 %v692, %v1082
  %1084 = vmatmul.f32.gmra.mxu0 %v873
  %v1085 = vpop.f32.mrf.mxu0
  %v1086 = vadd.f32 %v692, %v1085
  %1087 = vmatmul.f32.gmra.mxu0 %v876
  %v1088 = vpop.f32.mrf.mxu0
  %v1089 = vadd.f32 %v692, %v1088
  %1090 = vmatmul.f32.gmra.mxu0 %v879
  %v1091 = vpop.f32.mrf.mxu0
  %v1092 = vadd.f32 %v692, %v1091
  %1093 = vmatmul.f32.gmra.mxu0 %v882
  %v1094 = vpop.f32.mrf.mxu0
  %v1095 = vadd.f32 %v692, %v1094
  %1096 = vmatmul.f32.gmra.mxu0 %v885
  %v1097 = vpop.f32.mrf.mxu0
  %v1098 = vadd.f32 %v692, %v1097
  %1099 = vdwg.mxu0
  %v1100 = vtanh.pop %v909
  %v1101 = vtanh.pop %v912
  %v1102 = vtanh.pop %v915
  %v1103 = vtanh.pop %v918
  %v1104 = vtanh.pop %v921
  %v1105 = vtanh.pop %v924
  %v1106 = vtanh.pop %v927
  %v1107 = vtanh.pop %v930
  %v1108 = vtanh.pop %v933
  %v1109 = vtanh.pop %v936
  %v1110 = vtanh.pop %v939
  %v1111 = vtanh.pop %v942
  %v1112 = vtanh.pop %v945
  %v1113 = vtanh.pop %v948
  %v1114 = vtanh.pop %v951
  %v1115 = vtanh.pop %v954
  %v1116 = vtanh.pop %v957
  %v1117 = vtanh.pop %v960
  %v1118 = vtanh.pop %v963
  %v1119 = vtanh.pop %v966
  %v1120 = vtanh.pop %v969
  %v1121 = vtanh.pop %v972
  %v1122 = vtanh.pop %v975
  %v1123 = vtanh.pop %v978
  %v1124 = vtanh.pop %v981
  %v1125 = vtanh.pop %v984
  %v1126 = vtanh.pop %v987
  %v1127 = vtanh.pop %v990
  %v1128 = vtanh.pop %v993
  %v1129 = vtanh.pop %v996
  %v1130 = vtanh.pop %v999
  %v1131 = vtanh.pop %v1002
  %v1132 = vtanh.pop %v1005
  %v1133 = vtanh.pop %v1008
  %v1134 = vtanh.pop %v1011
  %v1135 = vtanh.pop %v1014
  %v1136 = vtanh.pop %v1017
  %v1137 = vtanh.pop %v1020
  %v1138 = vtanh.pop %v1023
  %v1139 = vtanh.pop %v1026
  %v1140 = vtanh.pop %v1029
  %v1141 = vtanh.pop %v1032
  %v1142 = vtanh.pop %v1035
  %v1143 = vtanh.pop %v1038
  %v1144 = vtanh.pop %v1041
  %v1145 = vtanh.pop %v1044
  %v1146 = vtanh.pop %v1047
  %v1147 = vtanh.pop %v1050
  %v1148 = vtanh.pop %v1053
  %v1149 = vtanh.pop %v1056
  %v1150 = vtanh.pop %v1059
  %v1151 = vtanh.pop %v1062
  %v1152 = vtanh.pop %v1065
  %v1153 = vtanh.pop %v1068
  %v1154 = vtanh.pop %v1071
  %v1155 = vtanh.pop %v1074
  %v1156 = vtanh.pop %v1077
  %v1157 = vtanh.pop %v1080
  %v1158 = vtanh.pop %v1083
  %v1159 = vtanh.pop %v1086
  %v1160 = vtanh.pop %v1089
  %v1161 = vtanh.pop %v1092
  %v1162 = vtanh.pop %v1095
  %v1163 = vtanh.pop %v1098
  %v1164 = vmul.f32 %v1100, 8.0
  %v1165 = vmul.f32 %v1101, 8.0
  %v1166 = vmul.f32 %v1102, 8.0
  %v1167 = vmul.f32 %v1103, 8.0
  %v1168 = vmul.f32 %v1104, 8.0
  %v1169 = vmul.f32 %v1105, 8.0
  %v1170 = vmul.f32 %v1106, 8.0
  %v1171 = vmul.f32 %v1107, 8.0
  %v1172 = vmul.f32 %v1108, 8.0
  %v1173 = vmul.f32 %v1109, 8.0
  %v1174 = vmul.f32 %v1110, 8.0
  %v1175 = vmul.f32 %v1111, 8.0
  %v1176 = vmul.f32 %v1112, 8.0
  %v1177 = vmul.f32 %v1113, 8.0
  %v1178 = vmul.f32 %v1114, 8.0
  %v1179 = vmul.f32 %v1115, 8.0
  %v1180 = vmul.f32 %v1116, 8.0
  %v1181 = vmul.f32 %v1117, 8.0
  %v1182 = vmul.f32 %v1118, 8.0
  %v1183 = vmul.f32 %v1119, 8.0
  %v1184 = vmul.f32 %v1120, 8.0
  %v1185 = vmul.f32 %v1121, 8.0
  %v1186 = vmul.f32 %v1122, 8.0
  %v1187 = vmul.f32 %v1123, 8.0
  %v1188 = vmul.f32 %v1124, 8.0
  %v1189 = vmul.f32 %v1125, 8.0
  %v1190 = vmul.f32 %v1126, 8.0
  %v1191 = vmul.f32 %v1127, 8.0
  %v1192 = vmul.f32 %v1128, 8.0
  %v1193 = vmul.f32 %v1129, 8.0
  %v1194 = vmul.f32 %v1130, 8.0
  %v1195 = vmul.f32 %v1131, 8.0
  %v1196 = vmul.f32 %v1132, 8.0
  %v1197 = vmul.f32 %v1133, 8.0
  %v1198 = vmul.f32 %v1134, 8.0
  %v1199 = vmul.f32 %v1135, 8.0
  %v1200 = vmul.f32 %v1136, 8.0
  %v1201 = vmul.f32 %v1137, 8.0
  %v1202 = vmul.f32 %v1138, 8.0
  %v1203 = vmul.f32 %v1139, 8.0
  %v1204 = vmul.f32 %v1140, 8.0
  %v1205 = vmul.f32 %v1141, 8.0
  %v1206 = vmul.f32 %v1142, 8.0
  %v1207 = vmul.f32 %v1143, 8.0
  %v1208 = vmul.f32 %v1144, 8.0
  %v1209 = vmul.f32 %v1145, 8.0
  %v1210 = vmul.f32 %v1146, 8.0
  %v1211 = vmul.f32 %v1147, 8.0
  %v1212 = vmul.f32 %v1148, 8.0
  %v1213 = vmul.f32 %v1149, 8.0
  %v1214 = vmul.f32 %v1150, 8.0
  %v1215 = vmul.f32 %v1151, 8.0
  %v1216 = vmul.f32 %v1152, 8.0
  %v1217 = vmul.f32 %v1153, 8.0
  %v1218 = vmul.f32 %v1154, 8.0
  %v1219 = vmul.f32 %v1155, 8.0
  %v1220 = vmul.f32 %v1156, 8.0
  %v1221 = vmul.f32 %v1157, 8.0
  %v1222 = vmul.f32 %v1158, 8.0
  %v1223 = vmul.f32 %v1159, 8.0
  %v1224 = vmul.f32 %v1160, 8.0
  %v1225 = vmul.f32 %v1161, 8.0
  %v1226 = vmul.f32 %v1162, 8.0
  %v1227 = vmul.f32 %v1163, 8.0
  %1228 = vst.msk [vmem:[%s5] sm:$0xff] %vm91, %v1164
  %1229 = vst.msk [vmem:[%s5 + $0x8] sm:$0xff] %vm91, %v1165
  %1230 = vst.msk [vmem:[%s5 + $0x10] sm:$0xff] %vm91, %v1166
  %1231 = vst.msk [vmem:[%s5 + $0x18] sm:$0xff] %vm91, %v1167
  %1232 = vst.msk [vmem:[%s5 + $0x20] sm:$0xff] %vm91, %v1168
  %1233 = vst.msk [vmem:[%s5 + $0x28] sm:$0xff] %vm91, %v1169
  %1234 = vst.msk [vmem:[%s5 + $0x30] sm:$0xff] %vm91, %v1170
  %1235 = vst.msk [vmem:[%s5 + $0x38] sm:$0xff] %vm91, %v1171
  %1236 = vst.msk [vmem:[%s5 + $0x40] sm:$0xff] %vm91, %v1172
  %1237 = vst.msk [vmem:[%s5 + $0x48] sm:$0xff] %vm91, %v1173
  %1238 = vst.msk [vmem:[%s5 + $0x50] sm:$0xff] %vm91, %v1174
  %1239 = vst.msk [vmem:[%s5 + $0x58] sm:$0xff] %vm91, %v1175
  %1240 = vst.msk [vmem:[%s5 + $0x60] sm:$0xff] %vm91, %v1176
  %1241 = vst.msk [vmem:[%s5 + $0x68] sm:$0xff] %vm91, %v1177
  %1242 = vst.msk [vmem:[%s5 + $0x70] sm:$0xff] %vm91, %v1178
  %1243 = vst.msk [vmem:[%s5 + $0x78] sm:$0xff] %vm91, %v1179
  %1244 = vst.msk [vmem:[%s5 + $0x80] sm:$0xff] %vm91, %v1180
  %1245 = vst.msk [vmem:[%s5 + $0x88] sm:$0xff] %vm91, %v1181
  %1246 = vst.msk [vmem:[%s5 + $0x90] sm:$0xff] %vm91, %v1182
  %1247 = vst.msk [vmem:[%s5 + $0x98] sm:$0xff] %vm91, %v1183
  %1248 = vst.msk [vmem:[%s5 + $0xa0] sm:$0xff] %vm91, %v1184
  %1249 = vst.msk [vmem:[%s5 + $0xa8] sm:$0xff] %vm91, %v1185
  %1250 = vst.msk [vmem:[%s5 + $0xb0] sm:$0xff] %vm91, %v1186
  %1251 = vst.msk [vmem:[%s5 + $0xb8] sm:$0xff] %vm91, %v1187
  %1252 = vst.msk [vmem:[%s5 + $0xc0] sm:$0xff] %vm91, %v1188
  %1253 = vst.msk [vmem:[%s5 + $0xc8] sm:$0xff] %vm91, %v1189
  %1254 = vst.msk [vmem:[%s5 + $0xd0] sm:$0xff] %vm91, %v1190
  %1255 = vst.msk [vmem:[%s5 + $0xd8] sm:$0xff] %vm91, %v1191
  %1256 = vst.msk [vmem:[%s5 + $0xe0] sm:$0xff] %vm91, %v1192
  %1257 = vst.msk [vmem:[%s5 + $0xe8] sm:$0xff] %vm91, %v1193
  %1258 = vst.msk [vmem:[%s5 + $0xf0] sm:$0xff] %vm91, %v1194
  %1259 = vst.msk [vmem:[%s5 + $0xf8] sm:$0xff] %vm91, %v1195
  %1260 = vst.msk [vmem:[%s5 + $0x100] sm:$0xff] %vm91, %v1196
  %1261 = vst.msk [vmem:[%s5 + $0x108] sm:$0xff] %vm91, %v1197
  %1262 = vst.msk [vmem:[%s5 + $0x110] sm:$0xff] %vm91, %v1198
  %1263 = vst.msk [vmem:[%s5 + $0x118] sm:$0xff] %vm91, %v1199
  %1264 = vst.msk [vmem:[%s5 + $0x120] sm:$0xff] %vm91, %v1200
  %1265 = vst.msk [vmem:[%s5 + $0x128] sm:$0xff] %vm91, %v1201
  %1266 = vst.msk [vmem:[%s5 + $0x130] sm:$0xff] %vm91, %v1202
  %1267 = vst.msk [vmem:[%s5 + $0x138] sm:$0xff] %vm91, %v1203
  %1268 = vst.msk [vmem:[%s5 + $0x140] sm:$0xff] %vm91, %v1204
  %1269 = vst.msk [vmem:[%s5 + $0x148] sm:$0xff] %vm91, %v1205
  %1270 = vst.msk [vmem:[%s5 + $0x150] sm:$0xff] %vm91, %v1206
  %1271 = vst.msk [vmem:[%s5 + $0x158] sm:$0xff] %vm91, %v1207
  %1272 = vst.msk [vmem:[%s5 + $0x160] sm:$0xff] %vm91, %v1208
  %1273 = vst.msk [vmem:[%s5 + $0x168] sm:$0xff] %vm91, %v1209
  %1274 = vst.msk [vmem:[%s5 + $0x170] sm:$0xff] %vm91, %v1210
  %1275 = vst.msk [vmem:[%s5 + $0x178] sm:$0xff] %vm91, %v1211
  %1276 = vst.msk [vmem:[%s5 + $0x180] sm:$0xff] %vm91, %v1212
  %1277 = vst.msk [vmem:[%s5 + $0x188] sm:$0xff] %vm91, %v1213
  %1278 = vst.msk [vmem:[%s5 + $0x190] sm:$0xff] %vm91, %v1214
  %1279 = vst.msk [vmem:[%s5 + $0x198] sm:$0xff] %vm91, %v1215
  %1280 = vst.msk [vmem:[%s5 + $0x1a0] sm:$0xff] %vm91, %v1216
  %1281 = vst.msk [vmem:[%s5 + $0x1a8] sm:$0xff] %vm91, %v1217
  %1282 = vst.msk [vmem:[%s5 + $0x1b0] sm:$0xff] %vm91, %v1218
  %1283 = vst.msk [vmem:[%s5 + $0x1b8] sm:$0xff] %vm91, %v1219
  %1284 = vst.msk [vmem:[%s5 + $0x1c0] sm:$0xff] %vm91, %v1220
  %1285 = vst.msk [vmem:[%s5 + $0x1c8] sm:$0xff] %vm91, %v1221
  %1286 = vst.msk [vmem:[%s5 + $0x1d0] sm:$0xff] %vm91, %v1222
  %1287 = vst.msk [vmem:[%s5 + $0x1d8] sm:$0xff] %vm91, %v1223
  %1288 = vst.msk [vmem:[%s5 + $0x1e0] sm:$0xff] %vm91, %v1224
  %1289 = vst.msk [vmem:[%s5 + $0x1e8] sm:$0xff] %vm91, %v1225
  %1290 = vst.msk [vmem:[%s5 + $0x1f0] sm:$0xff] %vm91, %v1226
  %1291 = vst.msk [vmem:[%s5 + $0x1f8] sm:$0xff] %vm91, %v1227
  // Predicated region
  $region22: #{window_attention_mixer_forward.7} parent=0 // pred_check
    _
  $region23: #{window_attention_mixer_forward.7} parent=0 // pred_check_branch
    %1293 = sbr.rel (0) target = $region25
  $region24: #{window_attention_mixer_forward.7} parent=0 // pred_region
    _
  $region25: #{window_attention_mixer_forward.7} parent=0 // pred_fallthru
    _
  // Predicated region
  $region26: #{window_attention_mixer_forward.7} parent=0 // pred_check
    _
  $region27: #{window_attention_mixer_forward.7} parent=0 // pred_check_branch
    %1295 = sbr.rel (0) target = $region29
  $region28: #{window_attention_mixer_forward.7} parent=0 // pred_region
    _
  $region29: #{window_attention_mixer_forward.7} parent=0 // pred_fallthru
    _

// kernel: window_attention_mixer_forward.9
$region0: #{window_attention_mixer_forward.9}
  #allocation0 [shape = 'u32[]', space=smem, size = 0x4, offset = 0x4, fixed_abs, tag = 'smem constant byte address 0x4 - core index']
  #allocation1 [shape = 'u32[72,128]{1,0:T(1,128)}', space=vmem, size = 0x9000, scoped, tag = 'internal scratch']
  %s0 = inlined_call_operand.vmem [shape: f32[8,4,64], index: 0, kind: input, shape index: {}]
  %s1 = inlined_call_operand.vmem [shape: f32[8,4,64], index: 1, kind: input, shape index: {}]
  %s2 = inlined_call_operand.vmem [shape: f32[8,4,64], index: 2, kind: input, shape index: {}]
  %s3 = inlined_call_operand.vmem [shape: f32[8,1,64], index: 3, kind: input, shape index: {}]
  %s4 = inlined_call_operand.vmem [shape: f32[8,1,1], index: 4, kind: input, shape index: {}]
  %s5 = inlined_call_operand.vmem [shape: f32[4,4], index: 5, kind: input, shape index: {}]
  %s6 = inlined_call_operand.vmem [shape: f32[4,1], index: 6, kind: input, shape index: {}]
  %s7 = inlined_call_operand.vmem [shape: f32[4,4], index: 7, kind: input, shape index: {}]
  %s8 = inlined_call_operand.vmem [shape: f32[4,1], index: 8, kind: input, shape index: {}]
  %s9 = inlined_call_operand.vmem [shape: f32[64,64], index: 9, kind: input, shape index: {}]
  %s10 = inlined_call_operand.vmem [shape: f32[8,4,64], index: 10, kind: output, shape index: {}]
  %s11 = sld [smem:[#allocation0]]
  $region73: #{window_attention_mixer_forward.9} parent=0
    _
  %s13 = ssub.s32 1, %s11
  %s14 = scalar_select 0, %s13, %s11
  loop: start=0, step=1, limit=4
  $region2: #{window_attention_mixer_forward.9} parent=0 // loop_pre_header
    _
  $region3: #{window_attention_mixer_forward.9} parent=0 // loop_header
    %s16 = sphi 0, %s20
    %p17 = scmp.ge.s32.totalorder %s16, 4
    %s26 = sphi 0, %s28
    %s29 = sphi 0, %s26
    %s30 = sphi 0, %s29
    %s46 = sphi 0, %s30
    %s52 = sphi 0, %s54
    %s55 = sphi 0, %s52
    %s56 = sphi 0, %s55
    %s72 = sphi 0, %s56
    %s78 = sphi 0, %s80
    %s81 = sphi 0, %s78
    %s82 = sphi 0, %s81
    %s98 = sphi 0, %s82
    %s104 = sphi 0, %s106
    %s107 = sphi 0, %s104
    %s108 = sphi 0, %s107
    %s124 = sphi 0, %s108
    %s130 = sphi 0, %s132
    %s133 = sphi 0, %s130
    %s134 = sphi 0, %s133
    %s150 = sphi 0, %s134
    %s154 = sphi 0, %s154
    %s156 = sphi 0, %s154
    %s157 = sphi 0, %s156
    %s171 = sphi 0, %s157
    %s175 = sphi 0, %s175
    %s177 = sphi 0, %s175
    %s178 = sphi 0, %s177
    %s192 = sphi 0, %s178
    %s196 = sphi 0, %s196
    %s198 = sphi 0, %s196
    %s199 = sphi 0, %s198
    %s213 = sphi 0, %s199
    %s217 = sphi 0, %s217
    %s219 = sphi 0, %s217
    %s220 = sphi 0, %s219
    %s234 = sphi 0, %s220
    %s238 = sphi 0, %s238
    %s240 = sphi 0, %s238
    %s241 = sphi 0, %s240
    %s255 = sphi 0, %s241
    %s261 = sphi 0, %s263
    %s264 = sphi 0, %s261
    %s265 = sphi 0, %s264
    %s281 = sphi 0, %s265
  $region4: #{window_attention_mixer_forward.9} parent=0 // loop_header_branch
    %19 = sbr.rel (%p17) target = $region8
  $region5: #{window_attention_mixer_forward.9} parent=0 // loop_body
    %s21 = ssub.s32 %s16, 1
    %s22 = ssub.s32 %s16, 2
    %s23 = sadd.s32 %s16, 1
    %s24 = ssub.s32 %s16, %s23
    %p25 = scmp.eq.s32.totalorder %s24, 0
    %s27 = sadd.s32 %s26, 1
    %s28 = scalar_select %p25, %s26, %s27
    %p31 = pneg %p25
    %p32 = scmp.eq.s32.totalorder %s16, 1
    %p33 = por %p31, %p32
    %p34 = scmp.ne.s32.totalorder %s26, %s29
    %p35 = scmp.eq.s32.totalorder %s16, 0
    %p36 = por %p34, %p35
    %p37 = scmp.ne.s32.totalorder %s26, %s29
    %p38 = scmp.eq.s32.totalorder %s21, 1
    %p39 = por %p37, %p38
    %p40 = scmp.ne.s32.totalorder %s29, %s30
    %p41 = scmp.eq.s32.totalorder %s21, 0
    %p42 = por %p40, %p41
    %p43 = scmp.ne.s32.totalorder %s29, %s30
    %p44 = scmp.eq.s32.totalorder %s22, 1
    %p45 = por %p43, %p44
    %p47 = scmp.ne.s32.totalorder %s30, %s46
    %p48 = scmp.eq.s32.totalorder %s22, 0
    %p49 = por %p47, %p48
    %s50 = ssub.s32 %s16, %s23
    %p51 = scmp.eq.s32.totalorder %s50, 0
    %s53 = sadd.s32 %s52, 1
    %s54 = scalar_select %p51, %s52, %s53
    %p57 = pneg %p51
    %p58 = scmp.eq.s32.totalorder %s16, 1
    %p59 = por %p57, %p58
    %p60 = scmp.ne.s32.totalorder %s52, %s55
    %p61 = scmp.eq.s32.totalorder %s16, 0
    %p62 = por %p60, %p61
    %p63 = scmp.ne.s32.totalorder %s52, %s55
    %p64 = scmp.eq.s32.totalorder %s21, 1
    %p65 = por %p63, %p64
    %p66 = scmp.ne.s32.totalorder %s55, %s56
    %p67 = scmp.eq.s32.totalorder %s21, 0
    %p68 = por %p66, %p67
    %p69 = scmp.ne.s32.totalorder %s55, %s56
    %p70 = scmp.eq.s32.totalorder %s22, 1
    %p71 = por %p69, %p70
    %p73 = scmp.ne.s32.totalorder %s56, %s72
    %p74 = scmp.eq.s32.totalorder %s22, 0
    %p75 = por %p73, %p74
    %s76 = ssub.s32 %s16, %s23
    %p77 = scmp.eq.s32.totalorder %s76, 0
    %s79 = sadd.s32 %s78, 1
    %s80 = scalar_select %p77, %s78, %s79
    %p83 = pneg %p77
    %p84 = scmp.eq.s32.totalorder %s16, 1
    %p85 = por %p83, %p84
    %p86 = scmp.ne.s32.totalorder %s78, %s81
    %p87 = scmp.eq.s32.totalorder %s16, 0
    %p88 = por %p86, %p87
    %p89 = scmp.ne.s32.totalorder %s78, %s81
    %p90 = scmp.eq.s32.totalorder %s21, 1
    %p91 = por %p89, %p90
    %p92 = scmp.ne.s32.totalorder %s81, %s82
    %p93 = scmp.eq.s32.totalorder %s21, 0
    %p94 = por %p92, %p93
    %p95 = scmp.ne.s32.totalorder %s81, %s82
    %p96 = scmp.eq.s32.totalorder %s22, 1
    %p97 = por %p95, %p96
    %p99 = scmp.ne.s32.totalorder %s82, %s98
    %p100 = scmp.eq.s32.totalorder %s22, 0
    %p101 = por %p99, %p100
    %s102 = ssub.s32 %s16, %s23
    %p103 = scmp.eq.s32.totalorder %s102, 0
    %s105 = sadd.s32 %s104, 1
    %s106 = scalar_select %p103, %s104, %s105
    %p109 = pneg %p103
    %p110 = scmp.eq.s32.totalorder %s16, 1
    %p111 = por %p109, %p110
    %p112 = scmp.ne.s32.totalorder %s104, %s107
    %p113 = scmp.eq.s32.totalorder %s16, 0
    %p114 = por %p112, %p113
    %p115 = scmp.ne.s32.totalorder %s104, %s107
    %p116 = scmp.eq.s32.totalorder %s21, 1
    %p117 = por %p115, %p116
    %p118 = scmp.ne.s32.totalorder %s107, %s108
    %p119 = scmp.eq.s32.totalorder %s21, 0
    %p120 = por %p118, %p119
    %p121 = scmp.ne.s32.totalorder %s107, %s108
    %p122 = scmp.eq.s32.totalorder %s22, 1
    %p123 = por %p121, %p122
    %p125 = scmp.ne.s32.totalorder %s108, %s124
    %p126 = scmp.eq.s32.totalorder %s22, 0
    %p127 = por %p125, %p126
    %s128 = ssub.s32 %s16, %s23
    %p129 = scmp.eq.s32.totalorder %s128, 0
    %s131 = sadd.s32 %s130, 1
    %s132 = scalar_select %p129, %s130, %s131
    %p135 = pneg %p129
    %p136 = scmp.eq.s32.totalorder %s16, 1
    %p137 = por %p135, %p136
    %p138 = scmp.ne.s32.totalorder %s130, %s133
    %p139 = scmp.eq.s32.totalorder %s16, 0
    %p140 = por %p138, %p139
    %p141 = scmp.ne.s32.totalorder %s130, %s133
    %p142 = scmp.eq.s32.totalorder %s21, 1
    %p143 = por %p141, %p142
    %p144 = scmp.ne.s32.totalorder %s133, %s134
    %p145 = scmp.eq.s32.totalorder %s21, 0
    %p146 = por %p144, %p145
    %p147 = scmp.ne.s32.totalorder %s133, %s134
    %p148 = scmp.eq.s32.totalorder %s22, 1
    %p149 = por %p147, %p148
    %p151 = scmp.ne.s32.totalorder %s134, %s150
    %p152 = scmp.eq.s32.totalorder %s22, 0
    %p153 = por %p151, %p152
    %s155 = sadd.s32 %s154, 1
    %p158 = scmp.eq.s32.totalorder %s16, 1
    %p159 = scmp.ne.s32.totalorder %s154, %s156
    %p160 = scmp.eq.s32.totalorder %s16, 0
    %p161 = por %p159, %p160
    %p162 = scmp.ne.s32.totalorder %s154, %s156
    %p163 = scmp.eq.s32.totalorder %s21, 1
    %p164 = por %p162, %p163
    %p165 = scmp.ne.s32.totalorder %s156, %s157
    %p166 = scmp.eq.s32.totalorder %s21, 0
    %p167 = por %p165, %p166
    %p168 = scmp.ne.s32.totalorder %s156, %s157
    %p169 = scmp.eq.s32.totalorder %s22, 1
    %p170 = por %p168, %p169
    %p172 = scmp.ne.s32.totalorder %s157, %s171
    %p173 = scmp.eq.s32.totalorder %s22, 0
    %p174 = por %p172, %p173
    %s176 = sadd.s32 %s175, 1
    %p179 = scmp.eq.s32.totalorder %s16, 1
    %p180 = scmp.ne.s32.totalorder %s175, %s177
    %p181 = scmp.eq.s32.totalorder %s16, 0
    %p182 = por %p180, %p181
    %p183 = scmp.ne.s32.totalorder %s175, %s177
    %p184 = scmp.eq.s32.totalorder %s21, 1
    %p185 = por %p183, %p184
    %p186 = scmp.ne.s32.totalorder %s177, %s178
    %p187 = scmp.eq.s32.totalorder %s21, 0
    %p188 = por %p186, %p187
    %p189 = scmp.ne.s32.totalorder %s177, %s178
    %p190 = scmp.eq.s32.totalorder %s22, 1
    %p191 = por %p189, %p190
    %p193 = scmp.ne.s32.totalorder %s178, %s192
    %p194 = scmp.eq.s32.totalorder %s22, 0
    %p195 = por %p193, %p194
    %s197 = sadd.s32 %s196, 1
    %p200 = scmp.eq.s32.totalorder %s16, 1
    %p201 = scmp.ne.s32.totalorder %s196, %s198
    %p202 = scmp.eq.s32.totalorder %s16, 0
    %p203 = por %p201, %p202
    %p204 = scmp.ne.s32.totalorder %s196, %s198
    %p205 = scmp.eq.s32.totalorder %s21, 1
    %p206 = por %p204, %p205
    %p207 = scmp.ne.s32.totalorder %s198, %s199
    %p208 = scmp.eq.s32.totalorder %s21, 0
    %p209 = por %p207, %p208
    %p210 = scmp.ne.s32.totalorder %s198, %s199
    %p211 = scmp.eq.s32.totalorder %s22, 1
    %p212 = por %p210, %p211
    %p214 = scmp.ne.s32.totalorder %s199, %s213
    %p215 = scmp.eq.s32.totalorder %s22, 0
    %p216 = por %p214, %p215
    %s218 = sadd.s32 %s217, 1
    %p221 = scmp.eq.s32.totalorder %s16, 1
    %p222 = scmp.ne.s32.totalorder %s217, %s219
    %p223 = scmp.eq.s32.totalorder %s16, 0
    %p224 = por %p222, %p223
    %p225 = scmp.ne.s32.totalorder %s217, %s219
    %p226 = scmp.eq.s32.totalorder %s21, 1
    %p227 = por %p225, %p226
    %p228 = scmp.ne.s32.totalorder %s219, %s220
    %p229 = scmp.eq.s32.totalorder %s21, 0
    %p230 = por %p228, %p229
    %p231 = scmp.ne.s32.totalorder %s219, %s220
    %p232 = scmp.eq.s32.totalorder %s22, 1
    %p233 = por %p231, %p232
    %p235 = scmp.ne.s32.totalorder %s220, %s234
    %p236 = scmp.eq.s32.totalorder %s22, 0
    %p237 = por %p235, %p236
    %s239 = sadd.s32 %s238, 1
    %p242 = scmp.eq.s32.totalorder %s16, 1
    %p243 = scmp.ne.s32.totalorder %s238, %s240
    %p244 = scmp.eq.s32.totalorder %s16, 0
    %p245 = por %p243, %p244
    %p246 = scmp.ne.s32.totalorder %s238, %s240
    %p247 = scmp.eq.s32.totalorder %s21, 1
    %p248 = por %p246, %p247
    %p249 = scmp.ne.s32.totalorder %s240, %s241
    %p250 = scmp.eq.s32.totalorder %s21, 0
    %p251 = por %p249, %p250
    %p252 = scmp.ne.s32.totalorder %s240, %s241
    %p253 = scmp.eq.s32.totalorder %s22, 1
    %p254 = por %p252, %p253
    %p256 = scmp.ne.s32.totalorder %s241, %s255
    %p257 = scmp.eq.s32.totalorder %s22, 0
    %p258 = por %p256, %p257
    %s259 = ssub.s32 %s16, %s23
    %p260 = scmp.eq.s32.totalorder %s259, 0
    %s262 = sadd.s32 %s261, 1
    %s263 = scalar_select %p260, %s261, %s262
    %p266 = pneg %p260
    %p267 = scmp.eq.s32.totalorder %s16, 1
    %p268 = por %p266, %p267
    %p269 = scmp.ne.s32.totalorder %s261, %s264
    %p270 = scmp.eq.s32.totalorder %s16, 0
    %p271 = por %p269, %p270
    %p272 = scmp.ne.s32.totalorder %s261, %s264
    %p273 = scmp.eq.s32.totalorder %s21, 1
    %p274 = por %p272, %p273
    %p275 = scmp.ne.s32.totalorder %s264, %s265
    %p276 = scmp.eq.s32.totalorder %s21, 0
    %p277 = por %p275, %p276
    %p278 = scmp.ne.s32.totalorder %s264, %s265
    %p279 = scmp.eq.s32.totalorder %s22, 1
    %p280 = por %p278, %p279
    %p282 = scmp.ne.s32.totalorder %s265, %s281
    %p283 = scmp.eq.s32.totalorder %s22, 0
    %p284 = por %p282, %p283
    %p285 = scmp.le.s32.totalorder 1, %s16
    %p286 = scmp.lt.s32.totalorder %s16, 3
    %p287 = pnand %p285, %p286
    %p288 = pneg %p287
    // Predicated region
    $region9: #{window_attention_mixer_forward.9} parent=5 // pred_check
      _
    $region10: #{window_attention_mixer_forward.9} parent=5 // pred_check_branch
      %290 = sbr.rel (%p287) target = $region12
    $region11: #{window_attention_mixer_forward.9} parent=5 // pred_region
      %s291 = ssub.s32 %s16, 1
      // Predicated region
      $region13: #{window_attention_mixer_forward.9} parent=11 // pred_check
        %p292 = pneg %p167
      $region14: #{window_attention_mixer_forward.9} parent=11 // pred_check_branch
        %294 = sbr.rel (%p292) target = $region16
      $region15: #{window_attention_mixer_forward.9} parent=11 // pred_region
        _
      $region16: #{window_attention_mixer_forward.9} parent=11 // pred_fallthru
        _
      // Predicated region
      $region17: #{window_attention_mixer_forward.9} parent=11 // pred_check
        %p295 = pneg %p188
      $region18: #{window_attention_mixer_forward.9} parent=11 // pred_check_branch
        %297 = sbr.rel (%p295) target = $region20
      $region19: #{window_attention_mixer_forward.9} parent=11 // pred_region
        _
      $region20: #{window_attention_mixer_forward.9} parent=11 // pred_fallthru
        _
      // Predicated region
      $region21: #{window_attention_mixer_forward.9} parent=11 // pred_check
        %p298 = pneg %p209
      $region22: #{window_attention_mixer_forward.9} parent=11 // pred_check_branch
        %300 = sbr.rel (%p298) target = $region24
      $region23: #{window_attention_mixer_forward.9} parent=11 // pred_region
        _
      $region24: #{window_attention_mixer_forward.9} parent=11 // pred_fallthru
        _
      // Predicated region
      $region25: #{window_attention_mixer_forward.9} parent=11 // pred_check
        %p301 = pneg %p230
      $region26: #{window_attention_mixer_forward.9} parent=11 // pred_check_branch
        %303 = sbr.rel (%p301) target = $region28
      $region27: #{window_attention_mixer_forward.9} parent=11 // pred_region
        _
      $region28: #{window_attention_mixer_forward.9} parent=11 // pred_fallthru
        _
      // Predicated region
      $region29: #{window_attention_mixer_forward.9} parent=11 // pred_check
        %p304 = pneg %p251
      $region30: #{window_attention_mixer_forward.9} parent=11 // pred_check_branch
        %306 = sbr.rel (%p304) target = $region32
      $region31: #{window_attention_mixer_forward.9} parent=11 // pred_region
        _
      $region32: #{window_attention_mixer_forward.9} parent=11 // pred_fallthru
        _
    $region12: #{window_attention_mixer_forward.9} parent=5 // pred_fallthru
      _
    %p307 = scmp.lt.s32.totalorder %s16, 2
    // Predicated region
    $region33: #{window_attention_mixer_forward.9} parent=5 // pred_check
      %p308 = pneg %p307
    $region34: #{window_attention_mixer_forward.9} parent=5 // pred_check_branch
      %310 = sbr.rel (%p308) target = $region36
    $region35: #{window_attention_mixer_forward.9} parent=5 // pred_region
      // Predicated region
      $region37: #{window_attention_mixer_forward.9} parent=35 // pred_check
        %p311 = pneg %p36
      $region38: #{window_attention_mixer_forward.9} parent=35 // pred_check_branch
        %313 = sbr.rel (%p311) target = $region40
      $region39: #{window_attention_mixer_forward.9} parent=35 // pred_region
        %s314 = smul.u32 4, %s16
        %p315 = scmp.lt.s32.totalorder %s314, 7
        %s316 = scalar_select %p315, %s314, 7
        %s317 = smul.addr %s316, 4
        %s318 = scalar_lea.vmem %s0, %s317
        %s319 = smul.u32 4, %s16
      $region40: #{window_attention_mixer_forward.9} parent=35 // pred_fallthru
        _
      // Predicated region
      $region41: #{window_attention_mixer_forward.9} parent=35 // pred_check
        %p320 = pneg %p62
      $region42: #{window_attention_mixer_forward.9} parent=35 // pred_check_branch
        %322 = sbr.rel (%p320) target = $region44
      $region43: #{window_attention_mixer_forward.9} parent=35 // pred_region
        %s323 = smul.u32 4, %s16
        %p324 = scmp.lt.s32.totalorder %s323, 7
        %s325 = scalar_select %p324, %s323, 7
        %s326 = smul.addr %s325, 4
        %s327 = scalar_lea.vmem %s1, %s326
        %s328 = smul.u32 4, %s16
      $region44: #{window_attention_mixer_forward.9} parent=35 // pred_fallthru
        _
      // Predicated region
      $region45: #{window_attention_mixer_forward.9} parent=35 // pred_check
        %p329 = pneg %p88
      $region46: #{window_attention_mixer_forward.9} parent=35 // pred_check_branch
        %331 = sbr.rel (%p329) target = $region48
      $region47: #{window_attention_mixer_forward.9} parent=35 // pred_region
        %s332 = smul.u32 4, %s16
        %p333 = scmp.lt.s32.totalorder %s332, 7
        %s334 = scalar_select %p333, %s332, 7
        %s335 = smul.addr %s334, 4
        %s336 = scalar_lea.vmem %s2, %s335
        %s337 = smul.u32 4, %s16
      $region48: #{window_attention_mixer_forward.9} parent=35 // pred_fallthru
        _
      // Predicated region
      $region49: #{window_attention_mixer_forward.9} parent=35 // pred_check
        %p338 = pneg %p114
      $region50: #{window_attention_mixer_forward.9} parent=35 // pred_check_branch
        %340 = sbr.rel (%p338) target = $region52
      $region51: #{window_attention_mixer_forward.9} parent=35 // pred_region
        %s341 = smul.u32 4, %s16
        %p342 = scmp.lt.s32.totalorder %s341, 7
        %s343 = scalar_select %p342, %s341, 7
        %s344 = scalar_lea.vmem %s3, %s343
        %s345 = smul.u32 4, %s16
      $region52: #{window_attention_mixer_forward.9} parent=35 // pred_fallthru
        _
      // Predicated region
      $region53: #{window_attention_mixer_forward.9} parent=35 // pred_check
        %p346 = pneg %p140
      $region54: #{window_attention_mixer_forward.9} parent=35 // pred_check_branch
        %348 = sbr.rel (%p346) target = $region56
      $region55: #{window_attention_mixer_forward.9} parent=35 // pred_region
        %s349 = smul.u32 4, %s16
        %p350 = scmp.lt.s32.totalorder %s349, 7
        %s351 = scalar_select %p350, %s349, 7
        %s352 = scalar_lea.vmem %s4, %s351
        %s353 = smul.u32 4, %s16
      $region56: #{window_attention_mixer_forward.9} parent=35 // pred_fallthru
        _
    $region36: #{window_attention_mixer_forward.9} parent=5 // pred_fallthru
      _
    %p354 = scmp.le.s32.totalorder 1, %s16
    %p355 = scmp.lt.s32.totalorder %s16, 3
    %p356 = pnand %p354, %p355
    %p357 = pneg %p356
    // Predicated region
    $region57: #{window_attention_mixer_forward.9} parent=5 // pred_check
      _
    $region58: #{window_attention_mixer_forward.9} parent=5 // pred_check_branch
      %359 = sbr.rel (%p356) target = $region60
    $region59: #{window_attention_mixer_forward.9} parent=5 // pred_region
      %s360 = ssub.s32 %s16, 1
      %s361 = smul.u32 4, %s21
      %p362 = scmp.lt.s32.totalorder %s361, 7
      %s363 = scalar_select %p362, %s361, 7
      %s364 = smul.addr %s363, 4
      %s365 = scalar_lea.vmem %s0, %s364
      %p366 = pneg %p42
      %p367 = pneg %p39
      %s368 = smul.u32 4, %s21
      %p369 = scmp.lt.s32.totalorder %s368, 7
      %s370 = scalar_select %p369, %s368, 7
      %s371 = smul.addr %s370, 4
      %s372 = scalar_lea.vmem %s1, %s371
      %p373 = pneg %p68
      %p374 = pneg %p65
      %s375 = smul.u32 4, %s21
      %p376 = scmp.lt.s32.totalorder %s375, 7
      %s377 = scalar_select %p376, %s375, 7
      %s378 = smul.addr %s377, 4
      %s379 = scalar_lea.vmem %s2, %s378
      %p380 = pneg %p94
      %p381 = pneg %p91
      %s382 = smul.u32 4, %s21
      %p383 = scmp.lt.s32.totalorder %s382, 7
      %s384 = scalar_select %p383, %s382, 7
      %s385 = scalar_lea.vmem %s3, %s384
      %p386 = pneg %p120
      %p387 = pneg %p117
      %s388 = smul.u32 4, %s21
      %p389 = scmp.lt.s32.totalorder %s388, 7
      %s390 = scalar_select %p389, %s388, 7
      %s391 = scalar_lea.vmem %s4, %s390
      %p392 = pneg %p146
      %p393 = pneg %p143
      %p394 = pneg %p167
      %p395 = pneg %p164
      %p396 = pneg %p188
      %p397 = pneg %p185
      %p398 = pneg %p209
      %p399 = pneg %p206
      %p400 = pneg %p230
      %p401 = pneg %p227
      %p402 = pneg %p251
      %p403 = pneg %p248
      %p404 = pneg %p277
      %p405 = pneg %p274
      %s406 = smul.u32 4, %s21
      %p407 = scmp.lt.s32.totalorder %s406, 7
      %s408 = scalar_select %p407, %s406, 7
      %s409 = smul.addr %s408, 4
      %s410 = scalar_lea.vmem %s10, %s409
      %s411 = smul.u32 4, %s21
      %p412 = scmp.lt.s32.totalorder %s411, 7
      %s413 = scalar_select %p412, %s411, 7
      %s414 = smul.addr %s413, 4
      %s415 = scalar_lea.vmem %s0, %s414
      %s416 = smul.u32 4, %s21
      %s417 = smul.u32 4, %s21
      %p418 = scmp.lt.s32.totalorder %s417, 7
      %s419 = scalar_select %p418, %s417, 7
      %s420 = smul.addr %s419, 4
      %s421 = scalar_lea.vmem %s1, %s420
      %s422 = smul.u32 4, %s21
      %s423 = smul.u32 4, %s21
      %p424 = scmp.lt.s32.totalorder %s423, 7
      %s425 = scalar_select %p424, %s423, 7
      %s426 = smul.addr %s425, 4
      %s427 = scalar_lea.vmem %s2, %s426
      %s428 = smul.u32 4, %s21
      %s429 = smul.u32 4, %s21
      %p430 = scmp.lt.s32.totalorder %s429, 7
      %s431 = scalar_select %p430, %s429, 7
      %s432 = scalar_lea.vmem %s3, %s431
      %s433 = smul.u32 4, %s21
      %s434 = smul.u32 4, %s21
      %p435 = scmp.lt.s32.totalorder %s434, 7
      %s436 = scalar_select %p435, %s434, 7
      %s437 = scalar_lea.vmem %s4, %s436
      %s438 = smul.u32 4, %s21
      %s439 = smul.u32 4, %s21
      %p440 = scmp.lt.s32.totalorder %s439, 7
      %s441 = scalar_select %p440, %s439, 7
      %s442 = smul.addr %s441, 4
      %s443 = scalar_lea.vmem %s10, %s442
      %s444 = smul.u32 4, %s21
      %v445 = vld [vmem:[%s437] sm:$0x1]
      %v446 = vld [vmem:[%s437 + $0x1] sm:$0x1]
      %v447 = vld [vmem:[%s437 + $0x2] sm:$0x1]
      %v448 = vld [vmem:[%s437 + $0x3] sm:$0x1]
      %v449 = vld [vmem:[%s415] sm:$0xf]
      %v450 = vld [vmem:[%s415 + $0x4] sm:$0xf]
      %v451 = vld [vmem:[%s415 + $0x8] sm:$0xf]
      %v452 = vld [vmem:[%s415 + $0xc] sm:$0xf]
      %v457 = vperm.slane %v445, 0
      %v458 = vperm.slane %v446, 0
      %v459 = vperm.slane %v447, 0
      %v460 = vperm.slane %v448, 0
      %461 = vset.pattern.permute.xlu0 0
      %462 = vperm.xlu0 %461, %v457
      %v463 = vpop.permute.xlu0 %462
      %465 = vset.pattern.permute.xlu0 0
      %466 = vperm.xlu0 %465, %v458
      %v467 = vpop.permute.xlu0 %466
      %469 = vset.pattern.permute.xlu0 0
      %470 = vperm.xlu0 %469, %v459
      %v471 = vpop.permute.xlu0 %470
      %473 = vset.pattern.permute.xlu0 0
      %474 = vperm.xlu0 %473, %v460
      %v475 = vpop.permute.xlu0 %474
      %v477 = vmul.f32 %v449, %v463
      %v478 = vmul.f32 %v450, %v467
      %v479 = vmul.f32 %v451, %v471
      %v480 = vmul.f32 %v452, %v475
      %v481 = vld [vmem:[%s421] sm:$0xf]
      %v482 = vld [vmem:[%s421 + $0x4] sm:$0xf]
      %v483 = vld [vmem:[%s421 + $0x8] sm:$0xf]
      %v484 = vld [vmem:[%s421 + $0xc] sm:$0xf]
      %v485 = vmul.f32 %v481, %v463
      %v486 = vmul.f32 %v482, %v467
      %v487 = vmul.f32 %v483, %v471
      %v488 = vmul.f32 %v484, %v475
      %v489 = vld [vmem:[%s427] sm:$0xf]
      %v490 = vld [vmem:[%s427 + $0x4] sm:$0xf]
      %v491 = vld [vmem:[%s427 + $0x8] sm:$0xf]
      %v492 = vld [vmem:[%s427 + $0xc] sm:$0xf]
      %v493 = vmul.f32 %v489, %v463
      %v494 = vmul.f32 %v490, %v467
      %v495 = vmul.f32 %v491, %v471
      %v496 = vmul.f32 %v492, %v475
      %v497 = vld [vmem:[%s432] sm:$0x1]
      %v498 = vld [vmem:[%s432 + $0x1] sm:$0x1]
      %v499 = vld [vmem:[%s432 + $0x2] sm:$0x1]
      %v500 = vld [vmem:[%s432 + $0x3] sm:$0x1]
      %v505 = vperm.slane %v497, 0
      %v506 = vperm.slane %v498, 0
      %v507 = vperm.slane %v499, 0
      %v508 = vperm.slane %v500, 0
      %v513 = vmul.f32 %v489, %v505
      %v514 = vmul.f32 %v490, %v506
      %v515 = vmul.f32 %v491, %v507
      %v516 = vmul.f32 %v492, %v508
      %v517 = vsub.f32 1.0, %v445
      %v518 = vsub.f32 1.0, %v446
      %v519 = vsub.f32 1.0, %v447
      %v520 = vsub.f32 1.0, %v448
      %v525 = vperm.slane %v517, 0
      %v526 = vperm.slane %v518, 0
      %v527 = vperm.slane %v519, 0
      %v528 = vperm.slane %v520, 0
      %529 = vset.pattern.permute.xlu0 0
      %530 = vperm.xlu0 %529, %v525
      %v531 = vpop.permute.xlu0 %530
      %533 = vset.pattern.permute.xlu0 0
      %534 = vperm.xlu0 %533, %v526
      %v535 = vpop.permute.xlu0 %534
      %537 = vset.pattern.permute.xlu0 0
      %538 = vperm.xlu0 %537, %v527
      %v539 = vpop.permute.xlu0 %538
      %541 = vset.pattern.permute.xlu0 0
      %542 = vperm.xlu0 %541, %v528
      %v543 = vpop.permute.xlu0 %542
      %v545 = vmul.f32 %v513, %v531
      %v546 = vmul.f32 %v514, %v535
      %v547 = vmul.f32 %v515, %v539
      %v548 = vmul.f32 %v516, %v543
      %v549 = vld [vmem:[%s5] sm:$0xf]
      %v550 = vld [vmem:[%s7] sm:$0xf]
      %v551 = vld [vmem:[%s6] sm:$0xf]
      %553 = vset.pattern.permute.xlu0 0
      %554 = vperm.xlu0 %553, %v551
      %v555 = vpop.permute.xlu0 %554
      %vm557 = vcmask 31744
      %v559 = vsel %vm557, %v549, 0
      %vm561 = vcmask 1043456
      %v563 = vsel %vm561, %v477, 0
      %565 = vmatpush.msra.mxu0 0.0
      %566 = vmatpush.msra.mxu0 0.0
      %567 = vmatpush.msra.mxu0 0.0
      %568 = vmatpush.msra.mxu0 0.0
      %569 = vmatpush.msra.mxu0 0.0
      %570 = vmatpush.msra.mxu0 0.0
      %571 = vmatpush.msra.mxu0 0.0
      %572 = vmatpush.msra.mxu0 0.0
      %573 = vmatpush.msra.mxu0 0.0
      %574 = vmatpush.msra.mxu0 0.0
      %575 = vmatpush.msra.mxu0 0.0
      %576 = vmatpush.msra.mxu0 0.0
      %577 = vmatpush.msra.mxu0 0.0
      %578 = vmatpush.msra.mxu0 0.0
      %579 = vmatpush.msra.mxu0 0.0
      %580 = vmatpush.msra.mxu0 %v563
      %581 = vmatmul.f32.gmra.mxu0 %v559
      %v582 = vpop.f32.mrf.mxu0
      %v583 = vadd.f32 %v555, %v582
      %584 = vdwg.mxu0
      %v586 = vsel %vm561, %v478, 0
      %588 = vmatpush.msra.mxu0 0.0
      %589 = vmatpush.msra.mxu0 0.0
      %590 = vmatpush.msra.mxu0 0.0
      %591 = vmatpush.msra.mxu0 0.0
      %592 = vmatpush.msra.mxu0 0.0
      %593 = vmatpush.msra.mxu0 0.0
      %594 = vmatpush.msra.mxu0 0.0
      %595 = vmatpush.msra.mxu0 0.0
      %596 = vmatpush.msra.mxu0 0.0
      %597 = vmatpush.msra.mxu0 0.0
      %598 = vmatpush.msra.mxu0 0.0
      %599 = vmatpush.msra.mxu0 0.0
      %600 = vmatpush.msra.mxu0 0.0
      %601 = vmatpush.msra.mxu0 0.0
      %602 = vmatpush.msra.mxu0 0.0
      %603 = vmatpush.msra.mxu0 %v586
      %604 = vmatmul.f32.gmra.mxu0 %v559
      %v605 = vpop.f32.mrf.mxu0
      %v606 = vadd.f32 %v555, %v605
      %607 = vdwg.mxu0
      %v609 = vsel %vm561, %v479, 0
      %611 = vmatpush.msra.mxu0 0.0
      %612 = vmatpush.msra.mxu0 0.0
      %613 = vmatpush.msra.mxu0 0.0
      %614 = vmatpush.msra.mxu0 0.0
      %615 = vmatpush.msra.mxu0 0.0
      %616 = vmatpush.msra.mxu0 0.0
      %617 = vmatpush.msra.mxu0 0.0
      %618 = vmatpush.msra.mxu0 0.0
      %619 = vmatpush.msra.mxu0 0.0
      %620 = vmatpush.msra.mxu0 0.0
      %621 = vmatpush.msra.mxu0 0.0
      %622 = vmatpush.msra.mxu0 0.0
      %623 = vmatpush.msra.mxu0 0.0
      %624 = vmatpush.msra.mxu0 0.0
      %625 = vmatpush.msra.mxu0 0.0
      %626 = vmatpush.msra.mxu0 %v609
      %627 = vmatmul.f32.gmra.mxu0 %v559
      %v628 = vpop.f32.mrf.mxu0
      %v629 = vadd.f32 %v555, %v628
      %630 = vdwg.mxu0
      %v632 = vsel %vm561, %v480, 0
      %634 = vmatpush.msra.mxu0 0.0
      %635 = vmatpush.msra.mxu0 0.0
      %636 = vmatpush.msra.mxu0 0.0
      %637 = vmatpush.msra.mxu0 0.0
      %638 = vmatpush.msra.mxu0 0.0
      %639 = vmatpush.msra.mxu0 0.0
      %640 = vmatpush.msra.mxu0 0.0
      %641 = vmatpush.msra.mxu0 0.0
      %642 = vmatpush.msra.mxu0 0.0
      %643 = vmatpush.msra.mxu0 0.0
      %644 = vmatpush.msra.mxu0 0.0
      %645 = vmatpush.msra.mxu0 0.0
      %646 = vmatpush.msra.mxu0 0.0
      %647 = vmatpush.msra.mxu0 0.0
      %648 = vmatpush.msra.mxu0 0.0
      %649 = vmatpush.msra.mxu0 %v632
      %650 = vmatmul.f32.gmra.mxu0 %v559
      %v651 = vpop.f32.mrf.mxu0
      %v652 = vadd.f32 %v555, %v651
      %653 = vdwg.mxu0
      %v654 = vld [vmem:[%s8] sm:$0xf]
      %656 = vset.pattern.permute.xlu0 0
      %657 = vperm.xlu0 %656, %v654
      %v658 = vpop.permute.xlu0 %657
      %v661 = vsel %vm557, %v550, 0
      %v664 = vsel %vm561, %v485, 0
      %666 = vmatpush.msra.mxu0 0.0
      %667 = vmatpush.msra.mxu0 0.0
      %668 = vmatpush.msra.mxu0 0.0
      %669 = vmatpush.msra.mxu0 0.0
      %670 = vmatpush.msra.mxu0 0.0
      %671 = vmatpush.msra.mxu0 0.0
      %672 = vmatpush.msra.mxu0 0.0
      %673 = vmatpush.msra.mxu0 0.0
      %674 = vmatpush.msra.mxu0 0.0
      %675 = vmatpush.msra.mxu0 0.0
      %676 = vmatpush.msra.mxu0 0.0
      %677 = vmatpush.msra.mxu0 0.0
      %678 = vmatpush.msra.mxu0 0.0
      %679 = vmatpush.msra.mxu0 0.0
      %680 = vmatpush.msra.mxu0 0.0
      %681 = vmatpush.msra.mxu0 %v664
      %682 = vmatmul.f32.gmra.mxu0 %v661
      %v683 = vpop.f32.mrf.mxu0
      %v684 = vadd.f32 %v658, %v683
      %685 = vdwg.mxu0
      %v687 = vsel %vm561, %v486, 0
      %689 = vmatpush.msra.mxu0 0.0
      %690 = vmatpush.msra.mxu0 0.0
      %691 = vmatpush.msra.mxu0 0.0
      %692 = vmatpush.msra.mxu0 0.0
      %693 = vmatpush.msra.mxu0 0.0
      %694 = vmatpush.msra.mxu0 0.0
      %695 = vmatpush.msra.mxu0 0.0
      %696 = vmatpush.msra.mxu0 0.0
      %697 = vmatpush.msra.mxu0 0.0
      %698 = vmatpush.msra.mxu0 0.0
      %699 = vmatpush.msra.mxu0 0.0
      %700 = vmatpush.msra.mxu0 0.0
      %701 = vmatpush.msra.mxu0 0.0
      %702 = vmatpush.msra.mxu0 0.0
      %703 = vmatpush.msra.mxu0 0.0
      %704 = vmatpush.msra.mxu0 %v687
      %705 = vmatmul.f32.gmra.mxu0 %v661
      %v706 = vpop.f32.mrf.mxu0
      %v707 = vadd.f32 %v658, %v706
      %708 = vdwg.mxu0
      %v710 = vsel %vm561, %v487, 0
      %712 = vmatpush.msra.mxu0 0.0
      %713 = vmatpush.msra.mxu0 0.0
      %714 = vmatpush.msra.mxu0 0.0
      %715 = vmatpush.msra.mxu0 0.0
      %716 = vmatpush.msra.mxu0 0.0
      %717 = vmatpush.msra.mxu0 0.0
      %718 = vmatpush.msra.mxu0 0.0
      %719 = vmatpush.msra.mxu0 0.0
      %720 = vmatpush.msra.mxu0 0.0
      %721 = vmatpush.msra.mxu0 0.0
      %722 = vmatpush.msra.mxu0 0.0
      %723 = vmatpush.msra.mxu0 0.0
      %724 = vmatpush.msra.mxu0 0.0
      %725 = vmatpush.msra.mxu0 0.0
      %726 = vmatpush.msra.mxu0 0.0
      %727 = vmatpush.msra.mxu0 %v710
      %728 = vmatmul.f32.gmra.mxu0 %v661
      %v729 = vpop.f32.mrf.mxu0
      %v730 = vadd.f32 %v658, %v729
      %731 = vdwg.mxu0
      %v733 = vsel %vm561, %v488, 0
      %735 = vmatpush.msra.mxu0 0.0
      %736 = vmatpush.msra.mxu0 0.0
      %737 = vmatpush.msra.mxu0 0.0
      %738 = vmatpush.msra.mxu0 0.0
      %739 = vmatpush.msra.mxu0 0.0
      %740 = vmatpush.msra.mxu0 0.0
      %741 = vmatpush.msra.mxu0 0.0
      %742 = vmatpush.msra.mxu0 0.0
      %743 = vmatpush.msra.mxu0 0.0
      %744 = vmatpush.msra.mxu0 0.0
      %745 = vmatpush.msra.mxu0 0.0
      %746 = vmatpush.msra.mxu0 0.0
      %747 = vmatpush.msra.mxu0 0.0
      %748 = vmatpush.msra.mxu0 0.0
      %749 = vmatpush.msra.mxu0 0.0
      %750 = vmatpush.msra.mxu0 %v733
      %751 = vmatmul.f32.gmra.mxu0 %v661
      %v752 = vpop.f32.mrf.mxu0
      %v753 = vadd.f32 %v658, %v752
      %754 = vdwg.mxu0
      %v755 = vld [vmem:[%s9] sm:$0xff]
      %v756 = vld [vmem:[%s9 + $0x8] sm:$0xff]
      %v757 = vld [vmem:[%s9 + $0x10] sm:$0xff]
      %v758 = vld [vmem:[%s9 + $0x18] sm:$0xff]
      %v759 = vld [vmem:[%s9 + $0x20] sm:$0xff]
      %v760 = vld [vmem:[%s9 + $0x28] sm:$0xff]
      %v761 = vld [vmem:[%s9 + $0x30] sm:$0xff]
      %v762 = vld [vmem:[%s9 + $0x38] sm:$0xff]
      %763 = vxpose.xlu0.b32.start [1/16] %v583, 128
      %764 = vxpose.xlu0.b32.cont [2/16] 0.0, 128
      %765 = vxpose.xlu0.b32.cont [3/16] 0.0, 128
      %766 = vxpose.xlu0.b32.cont [4/16] 0.0, 128
      %767 = vxpose.xlu0.b32.cont [5/16] 0.0, 128
      %768 = vxpose.xlu0.b32.cont [6/16] 0.0, 128
      %769 = vxpose.xlu0.b32.cont [7/16] 0.0, 128
      %770 = vxpose.xlu0.b32.cont [8/16] 0.0, 128
      %771 = vxpose.xlu0.b32.cont [9/16] 0.0, 128
      %772 = vxpose.xlu0.b32.cont [10/16] 0.0, 128
      %773 = vxpose.xlu0.b32.cont [11/16] 0.0, 128
      %774 = vxpose.xlu0.b32.cont [12/16] 0.0, 128
      %775 = vxpose.xlu0.b32.cont [13/16] 0.0, 128
      %776 = vxpose.xlu0.b32.cont [14/16] 0.0, 128
      %777 = vxpose.xlu0.b32.cont [15/16] 0.0, 128
      %778 = vxpose.xlu0.b32.end [16/16] 0.0, 128
      %v779 = vpop.trf.xlu0
      %v780 = vpop.trf.xlu0
      %v781 = vpop.trf.xlu0
      %v782 = vpop.trf.xlu0
      %v783 = vpop.trf.xlu0
      %v784 = vpop.trf.xlu0
      %v785 = vpop.trf.xlu0
      %v786 = vpop.trf.xlu0
      %v787 = vpop.trf.xlu0
      %v788 = vpop.trf.xlu0
      %v789 = vpop.trf.xlu0
      %v790 = vpop.trf.xlu0
      %v791 = vpop.trf.xlu0
      %v792 = vpop.trf.xlu0
      %v793 = vpop.trf.xlu0
      %v794 = vpop.trf.xlu0
      %v796 = vsel %vm557, %v779, 0
      %v799 = vsel %vm557, %v780, 0
      %v802 = vsel %vm557, %v781, 0
      %v805 = vsel %vm557, %v782, 0
      %v808 = vsel %vm557, %v783, 0
      %v811 = vsel %vm557, %v784, 0
      %v814 = vsel %vm557, %v785, 0
      %v817 = vsel %vm557, %v786, 0
      %v820 = vsel %vm561, %v684, 0
      %822 = vmatpush.msra.mxu0 0.0
      %823 = vmatpush.msra.mxu0 0.0
      %824 = vmatpush.msra.mxu0 0.0
      %825 = vmatpush.msra.mxu0 0.0
      %826 = vmatpush.msra.mxu0 0.0
      %827 = vmatpush.msra.mxu0 0.0
      %828 = vmatpush.msra.mxu0 0.0
      %829 = vmatpush.msra.mxu0 0.0
      %830 = vmatpush.msra.mxu0 0.0
      %831 = vmatpush.msra.mxu0 0.0
      %832 = vmatpush.msra.mxu0 0.0
      %833 = vmatpush.msra.mxu0 0.0
      %834 = vmatpush.msra.mxu0 0.0
      %835 = vmatpush.msra.mxu0 0.0
      %836 = vmatpush.msra.mxu0 0.0
      %837 = vmatpush.msra.mxu0 %v820
      %838 = vmatmul.f32.gmra.mxu0 %v796
      %v839 = vpop.f32.mrf.mxu0
      %v840 = vadd.f32 %v755, %v839
      %841 = vmatmul.f32.gmra.mxu0 %v799
      %v842 = vpop.f32.mrf.mxu0
      %v843 = vadd.f32 %v756, %v842
      %844 = vmatmul.f32.gmra.mxu0 %v802
      %v845 = vpop.f32.mrf.mxu0
      %v846 = vadd.f32 %v757, %v845
      %847 = vmatmul.f32.gmra.mxu0 %v805
      %v848 = vpop.f32.mrf.mxu0
      %v849 = vadd.f32 %v758, %v848
      %850 = vmatmul.f32.gmra.mxu0 %v808
      %v851 = vpop.f32.mrf.mxu0
      %v852 = vadd.f32 %v759, %v851
      %853 = vmatmul.f32.gmra.mxu0 %v811
      %v854 = vpop.f32.mrf.mxu0
      %v855 = vadd.f32 %v760, %v854
      %856 = vmatmul.f32.gmra.mxu0 %v814
      %v857 = vpop.f32.mrf.mxu0
      %v858 = vadd.f32 %v761, %v857
      %859 = vmatmul.f32.gmra.mxu0 %v817
      %v860 = vpop.f32.mrf.mxu0
      %v861 = vadd.f32 %v762, %v860
      %862 = vdwg.mxu0
      %863 = vxpose.xlu0.b32.start [1/16] %v606, 128
      %864 = vxpose.xlu0.b32.cont [2/16] 0.0, 128
      %865 = vxpose.xlu0.b32.cont [3/16] 0.0, 128
      %866 = vxpose.xlu0.b32.cont [4/16] 0.0, 128
      %867 = vxpose.xlu0.b32.cont [5/16] 0.0, 128
      %868 = vxpose.xlu0.b32.cont [6/16] 0.0, 128
      %869 = vxpose.xlu0.b32.cont [7/16] 0.0, 128
      %870 = vxpose.xlu0.b32.cont [8/16] 0.0, 128
      %871 = vxpose.xlu0.b32.cont [9/16] 0.0, 128
      %872 = vxpose.xlu0.b32.cont [10/16] 0.0, 128
      %873 = vxpose.xlu0.b32.cont [11/16] 0.0, 128
      %874 = vxpose.xlu0.b32.cont [12/16] 0.0, 128
      %875 = vxpose.xlu0.b32.cont [13/16] 0.0, 128
      %876 = vxpose.xlu0.b32.cont [14/16] 0.0, 128
      %877 = vxpose.xlu0.b32.cont [15/16] 0.0, 128
      %878 = vxpose.xlu0.b32.end [16/16] 0.0, 128
      %v879 = vpop.trf.xlu0
      %v880 = vpop.trf.xlu0
      %v881 = vpop.trf.xlu0
      %v882 = vpop.trf.xlu0
      %v883 = vpop.trf.xlu0
      %v884 = vpop.trf.xlu0
      %v885 = vpop.trf.xlu0
      %v886 = vpop.trf.xlu0
      %v887 = vpop.trf.xlu0
      %v888 = vpop.trf.xlu0
      %v889 = vpop.trf.xlu0
      %v890 = vpop.trf.xlu0
      %v891 = vpop.trf.xlu0
      %v892 = vpop.trf.xlu0
      %v893 = vpop.trf.xlu0
      %v894 = vpop.trf.xlu0
      %v896 = vsel %vm557, %v879, 0
      %v899 = vsel %vm557, %v880, 0
      %v902 = vsel %vm557, %v881, 0
      %v905 = vsel %vm557, %v882, 0
      %v908 = vsel %vm557, %v883, 0
      %v911 = vsel %vm557, %v884, 0
      %v914 = vsel %vm557, %v885, 0
      %v917 = vsel %vm557, %v886, 0
      %v920 = vsel %vm561, %v707, 0
      %922 = vmatpush.msra.mxu0 0.0
      %923 = vmatpush.msra.mxu0 0.0
      %924 = vmatpush.msra.mxu0 0.0
      %925 = vmatpush.msra.mxu0 0.0
      %926 = vmatpush.msra.mxu0 0.0
      %927 = vmatpush.msra.mxu0 0.0
      %928 = vmatpush.msra.mxu0 0.0
      %929 = vmatpush.msra.mxu0 0.0
      %930 = vmatpush.msra.mxu0 0.0
      %931 = vmatpush.msra.mxu0 0.0
      %932 = vmatpush.msra.mxu0 0.0
      %933 = vmatpush.msra.mxu0 0.0
      %934 = vmatpush.msra.mxu0 0.0
      %935 = vmatpush.msra.mxu0 0.0
      %936 = vmatpush.msra.mxu0 0.0
      %937 = vmatpush.msra.mxu0 %v920
      %938 = vmatmul.f32.gmra.mxu0 %v896
      %v939 = vpop.f32.mrf.mxu0
      %v940 = vadd.f32 %v755, %v939
      %941 = vmatmul.f32.gmra.mxu0 %v899
      %v942 = vpop.f32.mrf.mxu0
      %v943 = vadd.f32 %v756, %v942
      %944 = vmatmul.f32.gmra.mxu0 %v902
      %v945 = vpop.f32.mrf.mxu0
      %v946 = vadd.f32 %v757, %v945
      %947 = vmatmul.f32.gmra.mxu0 %v905
      %v948 = vpop.f32.mrf.mxu0
      %v949 = vadd.f32 %v758, %v948
      %950 = vmatmul.f32.gmra.mxu0 %v908
      %v951 = vpop.f32.mrf.mxu0
      %v952 = vadd.f32 %v759, %v951
      %953 = vmatmul.f32.gmra.mxu0 %v911
      %v954 = vpop.f32.mrf.mxu0
      %v955 = vadd.f32 %v760, %v954
      %956 = vmatmul.f32.gmra.mxu0 %v914
      %v957 = vpop.f32.mrf.mxu0
      %v958 = vadd.f32 %v761, %v957
      %959 = vmatmul.f32.gmra.mxu0 %v917
      %v960 = vpop.f32.mrf.mxu0
      %v961 = vadd.f32 %v762, %v960
      %962 = vdwg.mxu0
      %963 = vxpose.xlu0.b32.start [1/16] %v629, 128
      %964 = vxpose.xlu0.b32.cont [2/16] 0.0, 128
      %965 = vxpose.xlu0.b32.cont [3/16] 0.0, 128
      %966 = vxpose.xlu0.b32.cont [4/16] 0.0, 128
      %967 = vxpose.xlu0.b32.cont [5/16] 0.0, 128
      %968 = vxpose.xlu0.b32.cont [6/16] 0.0, 128
      %969 = vxpose.xlu0.b32.cont [7/16] 0.0, 128
      %970 = vxpose.xlu0.b32.cont [8/16] 0.0, 128
      %971 = vxpose.xlu0.b32.cont [9/16] 0.0, 128
      %972 = vxpose.xlu0.b32.cont [10/16] 0.0, 128
      %973 = vxpose.xlu0.b32.cont [11/16] 0.0, 128
      %974 = vxpose.xlu0.b32.cont [12/16] 0.0, 128
      %975 = vxpose.xlu0.b32.cont [13/16] 0.0, 128
      %976 = vxpose.xlu0.b32.cont [14/16] 0.0, 128
      %977 = vxpose.xlu0.b32.cont [15/16] 0.0, 128
      %978 = vxpose.xlu0.b32.end [16/16] 0.0, 128
      %v979 = vpop.trf.xlu0
      %v980 = vpop.trf.xlu0
      %v981 = vpop.trf.xlu0
      %v982 = vpop.trf.xlu0
      %v983 = vpop.trf.xlu0
      %v984 = vpop.trf.xlu0
      %v985 = vpop.trf.xlu0
      %v986 = vpop.trf.xlu0
      %v987 = vpop.trf.xlu0
      %v988 = vpop.trf.xlu0
      %v989 = vpop.trf.xlu0
      %v990 = vpop.trf.xlu0
      %v991 = vpop.trf.xlu0
      %v992 = vpop.trf.xlu0
      %v993 = vpop.trf.xlu0
      %v994 = vpop.trf.xlu0
      %v996 = vsel %vm557, %v979, 0
      %v999 = vsel %vm557, %v980, 0
      %v1002 = vsel %vm557, %v981, 0
      %v1005 = vsel %vm557, %v982, 0
      %v1008 = vsel %vm557, %v983, 0
      %v1011 = vsel %vm557, %v984, 0
      %v1014 = vsel %vm557, %v985, 0
      %v1017 = vsel %vm557, %v986, 0
      %v1020 = vsel %vm561, %v730, 0
      %1022 = vmatpush.msra.mxu0 0.0
      %1023 = vmatpush.msra.mxu0 0.0
      %1024 = vmatpush.msra.mxu0 0.0
      %1025 = vmatpush.msra.mxu0 0.0
      %1026 = vmatpush.msra.mxu0 0.0
      %1027 = vmatpush.msra.mxu0 0.0
      %1028 = vmatpush.msra.mxu0 0.0
      %1029 = vmatpush.msra.mxu0 0.0
      %1030 = vmatpush.msra.mxu0 0.0
      %1031 = vmatpush.msra.mxu0 0.0
      %1032 = vmatpush.msra.mxu0 0.0
      %1033 = vmatpush.msra.mxu0 0.0
      %1034 = vmatpush.msra.mxu0 0.0
      %1035 = vmatpush.msra.mxu0 0.0
      %1036 = vmatpush.msra.mxu0 0.0
      %1037 = vmatpush.msra.mxu0 %v1020
      %1038 = vmatmul.f32.gmra.mxu0 %v996
      %v1039 = vpop.f32.mrf.mxu0
      %v1040 = vadd.f32 %v755, %v1039
      %1041 = vmatmul.f32.gmra.mxu0 %v999
      %v1042 = vpop.f32.mrf.mxu0
      %v1043 = vadd.f32 %v756, %v1042
      %1044 = vmatmul.f32.gmra.mxu0 %v1002
      %v1045 = vpop.f32.mrf.mxu0
      %v1046 = vadd.f32 %v757, %v1045
      %1047 = vmatmul.f32.gmra.mxu0 %v1005
      %v1048 = vpop.f32.mrf.mxu0
      %v1049 = vadd.f32 %v758, %v1048
      %1050 = vmatmul.f32.gmra.mxu0 %v1008
      %v1051 = vpop.f32.mrf.mxu0
      %v1052 = vadd.f32 %v759, %v1051
      %1053 = vmatmul.f32.gmra.mxu0 %v1011
      %v1054 = vpop.f32.mrf.mxu0
      %v1055 = vadd.f32 %v760, %v1054
      %1056 = vmatmul.f32.gmra.mxu0 %v1014
      %v1057 = vpop.f32.mrf.mxu0
      %v1058 = vadd.f32 %v761, %v1057
      %1059 = vmatmul.f32.gmra.mxu0 %v1017
      %v1060 = vpop.f32.mrf.mxu0
      %v1061 = vadd.f32 %v762, %v1060
      %1062 = vdwg.mxu0
      %1063 = vxpose.xlu0.b32.start [1/16] %v652, 128
      %1064 = vxpose.xlu0.b32.cont [2/16] 0.0, 128
      %1065 = vxpose.xlu0.b32.cont [3/16] 0.0, 128
      %1066 = vxpose.xlu0.b32.cont [4/16] 0.0, 128
      %1067 = vxpose.xlu0.b32.cont [5/16] 0.0, 128
      %1068 = vxpose.xlu0.b32.cont [6/16] 0.0, 128
      %1069 = vxpose.xlu0.b32.cont [7/16] 0.0, 128
      %1070 = vxpose.xlu0.b32.cont [8/16] 0.0, 128
      %1071 = vxpose.xlu0.b32.cont [9/16] 0.0, 128
      %1072 = vxpose.xlu0.b32.cont [10/16] 0.0, 128
      %1073 = vxpose.xlu0.b32.cont [11/16] 0.0, 128
      %1074 = vxpose.xlu0.b32.cont [12/16] 0.0, 128
      %1075 = vxpose.xlu0.b32.cont [13/16] 0.0, 128
      %1076 = vxpose.xlu0.b32.cont [14/16] 0.0, 128
      %1077 = vxpose.xlu0.b32.cont [15/16] 0.0, 128
      %1078 = vxpose.xlu0.b32.end [16/16] 0.0, 128
      %v1079 = vpop.trf.xlu0
      %v1080 = vpop.trf.xlu0
      %v1081 = vpop.trf.xlu0
      %v1082 = vpop.trf.xlu0
      %v1083 = vpop.trf.xlu0
      %v1084 = vpop.trf.xlu0
      %v1085 = vpop.trf.xlu0
      %v1086 = vpop.trf.xlu0
      %v1087 = vpop.trf.xlu0
      %v1088 = vpop.trf.xlu0
      %v1089 = vpop.trf.xlu0
      %v1090 = vpop.trf.xlu0
      %v1091 = vpop.trf.xlu0
      %v1092 = vpop.trf.xlu0
      %v1093 = vpop.trf.xlu0
      %v1094 = vpop.trf.xlu0
      %v1096 = vsel %vm557, %v1079, 0
      %v1099 = vsel %vm557, %v1080, 0
      %v1102 = vsel %vm557, %v1081, 0
      %v1105 = vsel %vm557, %v1082, 0
      %v1108 = vsel %vm557, %v1083, 0
      %v1111 = vsel %vm557, %v1084, 0
      %v1114 = vsel %vm557, %v1085, 0
      %v1117 = vsel %vm557, %v1086, 0
      %v1120 = vsel %vm561, %v753, 0
      %1122 = vmatpush.msra.mxu0 0.0
      %1123 = vmatpush.msra.mxu0 0.0
      %1124 = vmatpush.msra.mxu0 0.0
      %1125 = vmatpush.msra.mxu0 0.0
      %1126 = vmatpush.msra.mxu0 0.0
      %1127 = vmatpush.msra.mxu0 0.0
      %1128 = vmatpush.msra.mxu0 0.0
      %1129 = vmatpush.msra.mxu0 0.0
      %1130 = vmatpush.msra.mxu0 0.0
      %1131 = vmatpush.msra.mxu0 0.0
      %1132 = vmatpush.msra.mxu0 0.0
      %1133 = vmatpush.msra.mxu0 0.0
      %1134 = vmatpush.msra.mxu0 0.0
      %1135 = vmatpush.msra.mxu0 0.0
      %1136 = vmatpush.msra.mxu0 0.0
      %1137 = vmatpush.msra.mxu0 %v1120
      %1138 = vmatmul.f32.gmra.mxu0 %v1096
      %v1139 = vpop.f32.mrf.mxu0
      %v1140 = vadd.f32 %v755, %v1139
      %1141 = vmatmul.f32.gmra.mxu0 %v1099
      %v1142 = vpop.f32.mrf.mxu0
      %v1143 = vadd.f32 %v756, %v1142
      %1144 = vmatmul.f32.gmra.mxu0 %v1102
      %v1145 = vpop.f32.mrf.mxu0
      %v1146 = vadd.f32 %v757, %v1145
      %1147 = vmatmul.f32.gmra.mxu0 %v1105
      %v1148 = vpop.f32.mrf.mxu0
      %v1149 = vadd.f32 %v758, %v1148
      %1150 = vmatmul.f32.gmra.mxu0 %v1108
      %v1151 = vpop.f32.mrf.mxu0
      %v1152 = vadd.f32 %v759, %v1151
      %1153 = vmatmul.f32.gmra.mxu0 %v1111
      %v1154 = vpop.f32.mrf.mxu0
      %v1155 = vadd.f32 %v760, %v1154
      %1156 = vmatmul.f32.gmra.mxu0 %v1114
      %v1157 = vpop.f32.mrf.mxu0
      %v1158 = vadd.f32 %v761, %v1157
      %1159 = vmatmul.f32.gmra.mxu0 %v1117
      %v1160 = vpop.f32.mrf.mxu0
      %v1161 = vadd.f32 %v762, %v1160
      %1162 = vdwg.mxu0
      %vm1163 = vcmask 523264
      %v1164 = vsel %vm1163, %v840, -inf
      %1165 = vmax.xlane.f32.xlu0 %v1164
      %v1166 = vpop.xlane.xlu0 %1165
      %v1167 = vsel %vm1163, %v843, -inf
      %1168 = vmax.xlane.f32.xlu0 %v1167
      %v1169 = vpop.xlane.xlu0 %1168
      %v1170 = vsel %vm1163, %v846, -inf
      %1171 = vmax.xlane.f32.xlu0 %v1170
      %v1172 = vpop.xlane.xlu0 %1171
      %v1173 = vsel %vm1163, %v849, -inf
      %1174 = vmax.xlane.f32.xlu0 %v1173
      %v1175 = vpop.xlane.xlu0 %1174
      %v1176 = vsel %vm1163, %v852, -inf
      %1177 = vmax.xlane.f32.xlu0 %v1176
      %v1178 = vpop.xlane.xlu0 %1177
      %v1179 = vsel %vm1163, %v855, -inf
      %1180 = vmax.xlane.f32.xlu0 %v1179
      %v1181 = vpop.xlane.xlu0 %1180
      %v1182 = vsel %vm1163, %v858, -inf
      %1183 = vmax.xlane.f32.xlu0 %v1182
      %v1184 = vpop.xlane.xlu0 %1183
      %v1185 = vsel %vm1163, %v861, -inf
      %1186 = vmax.xlane.f32.xlu0 %v1185
      %v1187 = vpop.xlane.xlu0 %1186
      %v1188 = vsel %vm1163, %v940, -inf
      %1189 = vmax.xlane.f32.xlu0 %v1188
      %v1190 = vpop.xlane.xlu0 %1189
      %v1191 = vsel %vm1163, %v943, -inf
      %1192 = vmax.xlane.f32.xlu0 %v1191
      %v1193 = vpop.xlane.xlu0 %1192
      %v1194 = vsel %vm1163, %v946, -inf
      %1195 = vmax.xlane.f32.xlu0 %v1194
      %v1196 = vpop.xlane.xlu0 %1195
      %v1197 = vsel %vm1163, %v949, -inf
      %1198 = vmax.xlane.f32.xlu0 %v1197
      %v1199 = vpop.xlane.xlu0 %1198
      %v1200 = vsel %vm1163, %v952, -inf
      %1201 = vmax.xlane.f32.xlu0 %v1200
      %v1202 = vpop.xlane.xlu0 %1201
      %v1203 = vsel %vm1163, %v955, -inf
      %1204 = vmax.xlane.f32.xlu0 %v1203
      %v1205 = vpop.xlane.xlu0 %1204
      %v1206 = vsel %vm1163, %v958, -inf
      %1207 = vmax.xlane.f32.xlu0 %v1206
      %v1208 = vpop.xlane.xlu0 %1207
      %v1209 = vsel %vm1163, %v961, -inf
      %1210 = vmax.xlane.f32.xlu0 %v1209
      %v1211 = vpop.xlane.xlu0 %1210
      %v1212 = vsel %vm1163, %v1040, -inf
      %1213 = vmax.xlane.f32.xlu0 %v1212
      %v1214 = vpop.xlane.xlu0 %1213
      %v1215 = vsel %vm1163, %v1043, -inf
      %1216 = vmax.xlane.f32.xlu0 %v1215
      %v1217 = vpop.xlane.xlu0 %1216
      %v1218 = vsel %vm1163, %v1046, -inf
      %1219 = vmax.xlane.f32.xlu0 %v1218
      %v1220 = vpop.xlane.xlu0 %1219
      %v1221 = vsel %vm1163, %v1049, -inf
      %1222 = vmax.xlane.f32.xlu0 %v1221
      %v1223 = vpop.xlane.xlu0 %1222
      %v1224 = vsel %vm1163, %v1052, -inf
      %1225 = vmax.xlane.f32.xlu0 %v1224
      %v1226 = vpop.xlane.xlu0 %1225
      %v1227 = vsel %vm1163, %v1055, -inf
      %1228 = vmax.xlane.f32.xlu0 %v1227
      %v1229 = vpop.xlane.xlu0 %1228
      %v1230 = vsel %vm1163, %v1058, -inf
      %1231 = vmax.xlane.f32.xlu0 %v1230
      %v1232 = vpop.xlane.xlu0 %1231
      %v1233 = vsel %vm1163, %v1061, -inf
      %1234 = vmax.xlane.f32.xlu0 %v1233
      %v1235 = vpop.xlane.xlu0 %1234
      %v1236 = vsel %vm1163, %v1140, -inf
      %1237 = vmax.xlane.f32.xlu0 %v1236
      %v1238 = vpop.xlane.xlu0 %1237
      %v1239 = vsel %vm1163, %v1143, -inf
      %1240 = vmax.xlane.f32.xlu0 %v1239
      %v1241 = vpop.xlane.xlu0 %1240
      %v1242 = vsel %vm1163, %v1146, -inf
      %1243 = vmax.xlane.f32.xlu0 %v1242
      %v1244 = vpop.xlane.xlu0 %1243
      %v1245 = vsel %vm1163, %v1149, -inf
      %1246 = vmax.xlane.f32.xlu0 %v1245
      %v1247 = vpop.xlane.xlu0 %1246
      %v1248 = vsel %vm1163, %v1152, -inf
      %1249 = vmax.xlane.f32.xlu0 %v1248
      %v1250 = vpop.xlane.xlu0 %1249
      %v1251 = vsel %vm1163, %v1155, -inf
      %1252 = vmax.xlane.f32.xlu0 %v1251
      %v1253 = vpop.xlane.xlu0 %1252
      %v1254 = vsel %vm1163, %v1158, -inf
      %1255 = vmax.xlane.f32.xlu0 %v1254
      %v1256 = vpop.xlane.xlu0 %1255
      %v1257 = vsel %vm1163, %v1161, -inf
      %1258 = vmax.xlane.f32.xlu0 %v1257
      %v1259 = vpop.xlane.xlu0 %1258
      %v1260 = vsub.f32 %v840, %v1166
      %v1261 = vsub.f32 %v843, %v1169
      %v1262 = vsub.f32 %v846, %v1172
      %v1263 = vsub.f32 %v849, %v1175
      %v1264 = vsub.f32 %v852, %v1178
      %v1265 = vsub.f32 %v855, %v1181
      %v1266 = vsub.f32 %v858, %v1184
      %v1267 = vsub.f32 %v861, %v1187
      %v1268 = vsub.f32 %v940, %v1190
      %v1269 = vsub.f32 %v943, %v1193
      %v1270 = vsub.f32 %v946, %v1196
      %v1271 = vsub.f32 %v949, %v1199
      %v1272 = vsub.f32 %v952, %v1202
      %v1273 = vsub.f32 %v955, %v1205
      %v1274 = vsub.f32 %v958, %v1208
      %v1275 = vsub.f32 %v961, %v1211
      %v1276 = vsub.f32 %v1040, %v1214
      %v1277 = vsub.f32 %v1043, %v1217
      %v1278 = vsub.f32 %v1046, %v1220
      %v1279 = vsub.f32 %v1049, %v1223
      %v1280 = vsub.f32 %v1052, %v1226
      %v1281 = vsub.f32 %v1055, %v1229
      %v1282 = vsub.f32 %v1058, %v1232
      %v1283 = vsub.f32 %v1061, %v1235
      %v1284 = vsub.f32 %v1140, %v1238
      %v1285 = vsub.f32 %v1143, %v1241
      %v1286 = vsub.f32 %v1146, %v1244
      %v1287 = vsub.f32 %v1149, %v1247
      %v1288 = vsub.f32 %v1152, %v1250
      %v1289 = vsub.f32 %v1155, %v1253
      %v1290 = vsub.f32 %v1158, %v1256
      %v1291 = vsub.f32 %v1161, %v1259
      %v1292 = vmul.f32 %v1260, 1.442695
      %v1293 = vpow.pop %v1292
      %v1294 = vmul.f32 %v1261, 1.442695
      %v1295 = vpow.pop %v1294
      %v1296 = vmul.f32 %v1262, 1.442695
      %v1297 = vpow.pop %v1296
      %v1298 = vmul.f32 %v1263, 1.442695
      %v1299 = vpow.pop %v1298
      %v1300 = vmul.f32 %v1264, 1.442695
      %v1301 = vpow.pop %v1300
      %v1302 = vmul.f32 %v1265, 1.442695
      %v1303 = vpow.pop %v1302
      %v1304 = vmul.f32 %v1266, 1.442695
      %v1305 = vpow.pop %v1304
      %v1306 = vmul.f32 %v1267, 1.442695
      %v1307 = vpow.pop %v1306
      %v1308 = vmul.f32 %v1268, 1.442695
      %v1309 = vpow.pop %v1308
      %v1310 = vmul.f32 %v1269, 1.442695
      %v1311 = vpow.pop %v1310
      %v1312 = vmul.f32 %v1270, 1.442695
      %v1313 = vpow.pop %v1312
      %v1314 = vmul.f32 %v1271, 1.442695
      %v1315 = vpow.pop %v1314
      %v1316 = vmul.f32 %v1272, 1.442695
      %v1317 = vpow.pop %v1316
      %v1318 = vmul.f32 %v1273, 1.442695
      %v1319 = vpow.pop %v1318
      %v1320 = vmul.f32 %v1274, 1.442695
      %v1321 = vpow.pop %v1320
      %v1322 = vmul.f32 %v1275, 1.442695
      %v1323 = vpow.pop %v1322
      %v1324 = vmul.f32 %v1276, 1.442695
      %v1325 = vpow.pop %v1324
      %v1326 = vmul.f32 %v1277, 1.442695
      %v1327 = vpow.pop %v1326
      %v1328 = vmul.f32 %v1278, 1.442695
      %v1329 = vpow.pop %v1328
      %v1330 = vmul.f32 %v1279, 1.442695
      %v1331 = vpow.pop %v1330
      %v1332 = vmul.f32 %v1280, 1.442695
      %v1333 = vpow.pop %v1332
      %v1334 = vmul.f32 %v1281, 1.442695
      %v1335 = vpow.pop %v1334
      %v1336 = vmul.f32 %v1282, 1.442695
      %v1337 = vpow.pop %v1336
      %v1338 = vmul.f32 %v1283, 1.442695
      %v1339 = vpow.pop %v1338
      %v1340 = vmul.f32 %v1284, 1.442695
      %v1341 = vpow.pop %v1340
      %v1342 = vmul.f32 %v1285, 1.442695
      %v1343 = vpow.pop %v1342
      %v1344 = vmul.f32 %v1286, 1.442695
      %v1345 = vpow.pop %v1344
      %v1346 = vmul.f32 %v1287, 1.442695
      %v1347 = vpow.pop %v1346
      %v1348 = vmul.f32 %v1288, 1.442695
      %v1349 = vpow.pop %v1348
      %v1350 = vmul.f32 %v1289, 1.442695
      %v1351 = vpow.pop %v1350
      %v1352 = vmul.f32 %v1290, 1.442695
      %v1353 = vpow.pop %v1352
      %v1354 = vmul.f32 %v1291, 1.442695
      %v1355 = vpow.pop %v1354
      %v1356 = vsel %vm1163, %v1293, 0.0
      %1357 = vadd.xlane.f32.xlu0 %v1356
      %v1358 = vpop.xlane.xlu0 %1357
      %v1359 = vsel %vm1163, %v1295, 0.0
      %1360 = vadd.xlane.f32.xlu0 %v1359
      %v1361 = vpop.xlane.xlu0 %1360
      %v1362 = vsel %vm1163, %v1297, 0.0
      %1363 = vadd.xlane.f32.xlu0 %v1362
      %v1364 = vpop.xlane.xlu0 %1363
      %v1365 = vsel %vm1163, %v1299, 0.0
      %1366 = vadd.xlane.f32.xlu0 %v1365
      %v1367 = vpop.xlane.xlu0 %1366
      %v1368 = vsel %vm1163, %v1301, 0.0
      %1369 = vadd.xlane.f32.xlu0 %v1368
      %v1370 = vpop.xlane.xlu0 %1369
      %v1371 = vsel %vm1163, %v1303, 0.0
      %1372 = vadd.xlane.f32.xlu0 %v1371
      %v1373 = vpop.xlane.xlu0 %1372
      %v1374 = vsel %vm1163, %v1305, 0.0
      %1375 = vadd.xlane.f32.xlu0 %v1374
      %v1376 = vpop.xlane.xlu0 %1375
      %v1377 = vsel %vm1163, %v1307, 0.0
      %1378 = vadd.xlane.f32.xlu0 %v1377
      %v1379 = vpop.xlane.xlu0 %1378
      %v1380 = vsel %vm1163, %v1309, 0.0
      %1381 = vadd.xlane.f32.xlu0 %v1380
      %v1382 = vpop.xlane.xlu0 %1381
      %v1383 = vsel %vm1163, %v1311, 0.0
      %1384 = vadd.xlane.f32.xlu0 %v1383
      %v1385 = vpop.xlane.xlu0 %1384
      %v1386 = vsel %vm1163, %v1313, 0.0
      %1387 = vadd.xlane.f32.xlu0 %v1386
      %v1388 = vpop.xlane.xlu0 %1387
      %v1389 = vsel %vm1163, %v1315, 0.0
      %1390 = vadd.xlane.f32.xlu0 %v1389
      %v1391 = vpop.xlane.xlu0 %1390
      %v1392 = vsel %vm1163, %v1317, 0.0
      %1393 = vadd.xlane.f32.xlu0 %v1392
      %v1394 = vpop.xlane.xlu0 %1393
      %v1395 = vsel %vm1163, %v1319, 0.0
      %1396 = vadd.xlane.f32.xlu0 %v1395
      %v1397 = vpop.xlane.xlu0 %1396
      %v1398 = vsel %vm1163, %v1321, 0.0
      %1399 = vadd.xlane.f32.xlu0 %v1398
      %v1400 = vpop.xlane.xlu0 %1399
      %v1401 = vsel %vm1163, %v1323, 0.0
      %1402 = vadd.xlane.f32.xlu0 %v1401
      %v1403 = vpop.xlane.xlu0 %1402
      %v1404 = vsel %vm1163, %v1325, 0.0
      %1405 = vadd.xlane.f32.xlu0 %v1404
      %v1406 = vpop.xlane.xlu0 %1405
      %v1407 = vsel %vm1163, %v1327, 0.0
      %1408 = vadd.xlane.f32.xlu0 %v1407
      %v1409 = vpop.xlane.xlu0 %1408
      %v1410 = vsel %vm1163, %v1329, 0.0
      %1411 = vadd.xlane.f32.xlu0 %v1410
      %v1412 = vpop.xlane.xlu0 %1411
      %v1413 = vsel %vm1163, %v1331, 0.0
      %1414 = vadd.xlane.f32.xlu0 %v1413
      %v1415 = vpop.xlane.xlu0 %1414
      %v1416 = vsel %vm1163, %v1333, 0.0
      %1417 = vadd.xlane.f32.xlu0 %v1416
      %v1418 = vpop.xlane.xlu0 %1417
      %v1419 = vsel %vm1163, %v1335, 0.0
      %1420 = vadd.xlane.f32.xlu0 %v1419
      %v1421 = vpop.xlane.xlu0 %1420
      %v1422 = vsel %vm1163, %v1337, 0.0
      %1423 = vadd.xlane.f32.xlu0 %v1422
      %v1424 = vpop.xlane.xlu0 %1423
      %v1425 = vsel %vm1163, %v1339, 0.0
      %1426 = vadd.xlane.f32.xlu0 %v1425
      %v1427 = vpop.xlane.xlu0 %1426
      %v1428 = vsel %vm1163, %v1341, 0.0
      %1429 = vadd.xlane.f32.xlu0 %v1428
      %v1430 = vpop.xlane.xlu0 %1429
      %v1431 = vsel %vm1163, %v1343, 0.0
      %1432 = vadd.xlane.f32.xlu0 %v1431
      %v1433 = vpop.xlane.xlu0 %1432
      %v1434 = vsel %vm1163, %v1345, 0.0
      %1435 = vadd.xlane.f32.xlu0 %v1434
      %v1436 = vpop.xlane.xlu0 %1435
      %v1437 = vsel %vm1163, %v1347, 0.0
      %1438 = vadd.xlane.f32.xlu0 %v1437
      %v1439 = vpop.xlane.xlu0 %1438
      %v1440 = vsel %vm1163, %v1349, 0.0
      %1441 = vadd.xlane.f32.xlu0 %v1440
      %v1442 = vpop.xlane.xlu0 %1441
      %v1443 = vsel %vm1163, %v1351, 0.0
      %1444 = vadd.xlane.f32.xlu0 %v1443
      %v1445 = vpop.xlane.xlu0 %1444
      %v1446 = vsel %vm1163, %v1353, 0.0
      %1447 = vadd.xlane.f32.xlu0 %v1446
      %v1448 = vpop.xlane.xlu0 %1447
      %v1449 = vsel %vm1163, %v1355, 0.0
      %1450 = vadd.xlane.f32.xlu0 %v1449
      %v1451 = vpop.xlane.xlu0 %1450
      %v1452 = vrcp.pop %v1358
      %v1453 = vrcp.pop %v1361
      %v1454 = vrcp.pop %v1364
      %v1455 = vrcp.pop %v1367
      %v1456 = vrcp.pop %v1370
      %v1457 = vrcp.pop %v1373
      %v1458 = vrcp.pop %v1376
      %v1459 = vrcp.pop %v1379
      %v1460 = vrcp.pop %v1382
      %v1461 = vrcp.pop %v1385
      %v1462 = vrcp.pop %v1388
      %v1463 = vrcp.pop %v1391
      %v1464 = vrcp.pop %v1394
      %v1465 = vrcp.pop %v1397
      %v1466 = vrcp.pop %v1400
      %v1467 = vrcp.pop %v1403
      %v1468 = vrcp.pop %v1406
      %v1469 = vrcp.pop %v1409
      %v1470 = vrcp.pop %v1412
      %v1471 = vrcp.pop %v1415
      %v1472 = vrcp.pop %v1418
      %v1473 = vrcp.pop %v1421
      %v1474 = vrcp.pop %v1424
      %v1475 = vrcp.pop %v1427
      %v1476 = vrcp.pop %v1430
      %v1477 = vrcp.pop %v1433
      %v1478 = vrcp.pop %v1436
      %v1479 = vrcp.pop %v1439
      %v1480 = vrcp.pop %v1442
      %v1481 = vrcp.pop %v1445
      %v1482 = vrcp.pop %v1448
      %v1483 = vrcp.pop %v1451
      %v1484 = vmul.f32 %v1293, %v1452
      %v1485 = vmul.f32 %v1295, %v1453
      %v1486 = vmul.f32 %v1297, %v1454
      %v1487 = vmul.f32 %v1299, %v1455
      %v1488 = vmul.f32 %v1301, %v1456
      %v1489 = vmul.f32 %v1303, %v1457
      %v1490 = vmul.f32 %v1305, %v1458
      %v1491 = vmul.f32 %v1307, %v1459
      %v1492 = vmul.f32 %v1309, %v1460
      %v1493 = vmul.f32 %v1311, %v1461
      %v1494 = vmul.f32 %v1313, %v1462
      %v1495 = vmul.f32 %v1315, %v1463
      %v1496 = vmul.f32 %v1317, %v1464
      %v1497 = vmul.f32 %v1319, %v1465
      %v1498 = vmul.f32 %v1321, %v1466
      %v1499 = vmul.f32 %v1323, %v1467
      %v1500 = vmul.f32 %v1325, %v1468
      %v1501 = vmul.f32 %v1327, %v1469
      %v1502 = vmul.f32 %v1329, %v1470
      %v1503 = vmul.f32 %v1331, %v1471
      %v1504 = vmul.f32 %v1333, %v1472
      %v1505 = vmul.f32 %v1335, %v1473
      %v1506 = vmul.f32 %v1337, %v1474
      %v1507 = vmul.f32 %v1339, %v1475
      %v1508 = vmul.f32 %v1341, %v1476
      %v1509 = vmul.f32 %v1343, %v1477
      %v1510 = vmul.f32 %v1345, %v1478
      %v1511 = vmul.f32 %v1347, %v1479
      %v1512 = vmul.f32 %v1349, %v1480
      %v1513 = vmul.f32 %v1351, %v1481
      %v1514 = vmul.f32 %v1353, %v1482
      %v1515 = vmul.f32 %v1355, %v1483
      %v1517 = vsel %vm1163, %v493, 0
      %v1520 = vsel %vm1163, %v1484, 0
      %v1523 = vsel %vm1163, %v1485, 0
      %v1526 = vsel %vm1163, %v1486, 0
      %v1529 = vsel %vm1163, %v1487, 0
      %v1532 = vsel %vm1163, %v1488, 0
      %v1535 = vsel %vm1163, %v1489, 0
      %v1538 = vsel %vm1163, %v1490, 0
      %v1541 = vsel %vm1163, %v1491, 0
      %1543 = vmatpush.xpose.msra.mxu0 0.0
      %1544 = vmatpush.xpose.msra.mxu0 0.0
      %1545 = vmatpush.xpose.msra.mxu0 0.0
      %1546 = vmatpush.xpose.msra.mxu0 0.0
      %1547 = vmatpush.xpose.msra.mxu0 0.0
      %1548 = vmatpush.xpose.msra.mxu0 0.0
      %1549 = vmatpush.xpose.msra.mxu0 0.0
      %1550 = vmatpush.xpose.msra.mxu0 0.0
      %1551 = vmatpush.xpose.msra.mxu0 %v1541
      %1552 = vmatpush.xpose.msra.mxu0 %v1538
      %1553 = vmatpush.xpose.msra.mxu0 %v1535
      %1554 = vmatpush.xpose.msra.mxu0 %v1532
      %1555 = vmatpush.xpose.msra.mxu0 %v1529
      %1556 = vmatpush.xpose.msra.mxu0 %v1526
      %1557 = vmatpush.xpose.msra.mxu0 %v1523
      %1558 = vmatpush.xpose.msra.mxu0 %v1520
      %1559 = vmatmul.f32.gmra.mxu0 %v1517
      %v1560 = vpop.f32.mrf.mxu0
      %v1561 = vadd.f32 %v545, %v1560
      %1562 = vdwg.mxu0
      %v1564 = vsel %vm1163, %v494, 0
      %v1567 = vsel %vm1163, %v1492, 0
      %v1570 = vsel %vm1163, %v1493, 0
      %v1573 = vsel %vm1163, %v1494, 0
      %v1576 = vsel %vm1163, %v1495, 0
      %v1579 = vsel %vm1163, %v1496, 0
      %v1582 = vsel %vm1163, %v1497, 0
      %v1585 = vsel %vm1163, %v1498, 0
      %v1588 = vsel %vm1163, %v1499, 0
      %1590 = vmatpush.xpose.msra.mxu0 0.0
      %1591 = vmatpush.xpose.msra.mxu0 0.0
      %1592 = vmatpush.xpose.msra.mxu0 0.0
      %1593 = vmatpush.xpose.msra.mxu0 0.0
      %1594 = vmatpush.xpose.msra.mxu0 0.0
      %1595 = vmatpush.xpose.msra.mxu0 0.0
      %1596 = vmatpush.xpose.msra.mxu0 0.0
      %1597 = vmatpush.xpose.msra.mxu0 0.0
      %1598 = vmatpush.xpose.msra.mxu0 %v1588
      %1599 = vmatpush.xpose.msra.mxu0 %v1585
      %1600 = vmatpush.xpose.msra.mxu0 %v1582
      %1601 = vmatpush.xpose.msra.mxu0 %v1579
      %1602 = vmatpush.xpose.msra.mxu0 %v1576
      %1603 = vmatpush.xpose.msra.mxu0 %v1573
      %1604 = vmatpush.xpose.msra.mxu0 %v1570
      %1605 = vmatpush.xpose.msra.mxu0 %v1567
      %1606 = vmatmul.f32.gmra.mxu0 %v1564
      %v1607 = vpop.f32.mrf.mxu0
      %v1608 = vadd.f32 %v546, %v1607
      %1609 = vdwg.mxu0
      %v1611 = vsel %vm1163, %v495, 0
      %v1614 = vsel %vm1163, %v1500, 0
      %v1617 = vsel %vm1163, %v1501, 0
      %v1620 = vsel %vm1163, %v1502, 0
      %v1623 = vsel %vm1163, %v1503, 0
      %v1626 = vsel %vm1163, %v1504, 0
      %v1629 = vsel %vm1163, %v1505, 0
      %v1632 = vsel %vm1163, %v1506, 0
      %v1635 = vsel %vm1163, %v1507, 0
      %1637 = vmatpush.xpose.msra.mxu0 0.0
      %1638 = vmatpush.xpose.msra.mxu0 0.0
      %1639 = vmatpush.xpose.msra.mxu0 0.0
      %1640 = vmatpush.xpose.msra.mxu0 0.0
      %1641 = vmatpush.xpose.msra.mxu0 0.0
      %1642 = vmatpush.xpose.msra.mxu0 0.0
      %1643 = vmatpush.xpose.msra.mxu0 0.0
      %1644 = vmatpush.xpose.msra.mxu0 0.0
      %1645 = vmatpush.xpose.msra.mxu0 %v1635
      %1646 = vmatpush.xpose.msra.mxu0 %v1632
      %1647 = vmatpush.xpose.msra.mxu0 %v1629
      %1648 = vmatpush.xpose.msra.mxu0 %v1626
      %1649 = vmatpush.xpose.msra.mxu0 %v1623
      %1650 = vmatpush.xpose.msra.mxu0 %v1620
      %1651 = vmatpush.xpose.msra.mxu0 %v1617
      %1652 = vmatpush.xpose.msra.mxu0 %v1614
      %1653 = vmatmul.f32.gmra.mxu0 %v1611
      %v1654 = vpop.f32.mrf.mxu0
      %v1655 = vadd.f32 %v547, %v1654
      %1656 = vdwg.mxu0
      %v1658 = vsel %vm1163, %v496, 0
      %v1661 = vsel %vm1163, %v1508, 0
      %v1664 = vsel %vm1163, %v1509, 0
      %v1667 = vsel %vm1163, %v1510, 0
      %v1670 = vsel %vm1163, %v1511, 0
      %v1673 = vsel %vm1163, %v1512, 0
      %v1676 = vsel %vm1163, %v1513, 0
      %v1679 = vsel %vm1163, %v1514, 0
      %v1682 = vsel %vm1163, %v1515, 0
      %1684 = vmatpush.xpose.msra.mxu0 0.0
      %1685 = vmatpush.xpose.msra.mxu0 0.0
      %1686 = vmatpush.xpose.msra.mxu0 0.0
      %1687 = vmatpush.xpose.msra.mxu0 0.0
      %1688 = vmatpush.xpose.msra.mxu0 0.0
      %1689 = vmatpush.xpose.msra.mxu0 0.0
      %1690 = vmatpush.xpose.msra.mxu0 0.0
      %1691 = vmatpush.xpose.msra.mxu0 0.0
      %1692 = vmatpush.xpose.msra.mxu0 %v1682
      %1693 = vmatpush.xpose.msra.mxu0 %v1679
      %1694 = vmatpush.xpose.msra.mxu0 %v1676
      %1695 = vmatpush.xpose.msra.mxu0 %v1673
      %1696 = vmatpush.xpose.msra.mxu0 %v1670
      %1697 = vmatpush.xpose.msra.mxu0 %v1667
      %1698 = vmatpush.xpose.msra.mxu0 %v1664
      %1699 = vmatpush.xpose.msra.mxu0 %v1661
      %1700 = vmatmul.f32.gmra.mxu0 %v1658
      %v1701 = vpop.f32.mrf.mxu0
      %v1702 = vadd.f32 %v548, %v1701
      %1703 = vdwg.mxu0
      %vm1704 = vcmask 519168
      %1705 = vst.msk [vmem:[%s443] sm:$0xf] %vm1704, %v1561
      %1706 = vst.msk [vmem:[%s443 + $0x4] sm:$0xf] %vm1704, %v1608
      %1707 = vst.msk [vmem:[%s443 + $0x8] sm:$0xf] %vm1704, %v1655
      %1708 = vst.msk [vmem:[%s443 + $0xc] sm:$0xf] %vm1704, %v1702
      %s1709 = smul.u32 4, %s21
      %p1710 = scmp.lt.s32.totalorder %s1709, 7
      %s1711 = scalar_select %p1710, %s1709, 7
      %s1712 = smul.addr %s1711, 4
      %s1713 = scalar_lea.vmem %s10, %s1712
      // Predicated region
      $region61: #{window_attention_mixer_forward.9} parent=59 // pred_check
        %p1714 = pneg %p274
      $region62: #{window_attention_mixer_forward.9} parent=59 // pred_check_branch
        %1716 = sbr.rel (%p1714) target = $region64
      $region63: #{window_attention_mixer_forward.9} parent=59 // pred_region
        %s1717 = smul.u32 4, %s21
      $region64: #{window_attention_mixer_forward.9} parent=59 // pred_fallthru
        _
    $region60: #{window_attention_mixer_forward.9} parent=5 // pred_fallthru
      _
    %p1718 = scmp.le.s32.totalorder 2, %s16
    // Predicated region
    $region65: #{window_attention_mixer_forward.9} parent=5 // pred_check
      %p1719 = pneg %p1718
    $region66: #{window_attention_mixer_forward.9} parent=5 // pred_check_branch
      %1721 = sbr.rel (%p1719) target = $region68
    $region67: #{window_attention_mixer_forward.9} parent=5 // pred_region
      %s1722 = ssub.s32 %s16, 2
      // Predicated region
      $region69: #{window_attention_mixer_forward.9} parent=67 // pred_check
        %p1723 = pneg %p280
      $region70: #{window_attention_mixer_forward.9} parent=67 // pred_check_branch
        %1725 = sbr.rel (%p1723) target = $region72
      $region71: #{window_attention_mixer_forward.9} parent=67 // pred_region
        %s1726 = smul.u32 4, %s22
        %p1727 = scmp.lt.s32.totalorder %s1726, 7
        %s1728 = scalar_select %p1727, %s1726, 7
        %s1729 = smul.addr %s1728, 4
        %s1730 = scalar_lea.vmem %s10, %s1729
      $region72: #{window_attention_mixer_forward.9} parent=67 // pred_fallthru
        _
    $region68: #{window_attention_mixer_forward.9} parent=5 // pred_fallthru
      _
  $region6: #{window_attention_mixer_forward.9} parent=0 // loop_footer
    %s20 = sadd.s32 1, %s16
  $region7: #{window_attention_mixer_forward.9} parent=0 // loop_footer_branch
    %15 = sbr.rel target = $region3
  $region8: #{window_attention_mixer_forward.9} parent=0 // loop_exit
    _

// kernel: window_attention_mixer_forward.10
$region0: #{window_attention_mixer_forward.10}
  #allocation0 [shape = 'u32[]', space=smem, size = 0x4, offset = 0x4, fixed_abs, tag = 'smem constant byte address 0x4 - core index']
  #allocation1 [shape = 'u32[72,128]{1,0:T(1,128)}', space=vmem, size = 0x9000, scoped, tag = 'internal scratch']
  %s0 = inlined_call_operand.vmem [shape: f32[512,4], index: 0, kind: input, shape index: {}]
  %s1 = inlined_call_operand.vmem [shape: f32[4,4], index: 1, kind: input, shape index: {}]
  %s2 = inlined_call_operand.vmem [shape: f32[1,4], index: 2, kind: input, shape index: {}]
  %s3 = inlined_call_operand.vmem [shape: f32[512,4], index: 3, kind: output, shape index: {}]
  %s4 = sld [smem:[#allocation0]]
  $region22: #{window_attention_mixer_forward.10} parent=0
    _
  %s6 = ssub.s32 1, %s4
  %s7 = scalar_select 0, %s6, %s4
  // Predicated region
  $region2: #{window_attention_mixer_forward.10} parent=0 // pred_check
    _
  $region3: #{window_attention_mixer_forward.10} parent=0 // pred_check_branch
    %9 = sbr.rel (0) target = $region5
  $region4: #{window_attention_mixer_forward.10} parent=0 // pred_region
    _
  $region5: #{window_attention_mixer_forward.10} parent=0 // pred_fallthru
    _
  // Predicated region
  $region6: #{window_attention_mixer_forward.10} parent=0 // pred_check
    _
  $region7: #{window_attention_mixer_forward.10} parent=0 // pred_check_branch
    %11 = sbr.rel (0) target = $region9
  $region8: #{window_attention_mixer_forward.10} parent=0 // pred_region
    _
  $region9: #{window_attention_mixer_forward.10} parent=0 // pred_fallthru
    _
  // Predicated region
  $region10: #{window_attention_mixer_forward.10} parent=0 // pred_check
    _
  $region11: #{window_attention_mixer_forward.10} parent=0 // pred_check_branch
    %13 = sbr.rel (0) target = $region13
  $region12: #{window_attention_mixer_forward.10} parent=0 // pred_region
    _
  $region13: #{window_attention_mixer_forward.10} parent=0 // pred_fallthru
    _
  %v14 = vld [vmem:[%s0] sm:$0xff]
  %v15 = vld [vmem:[%s0 + $0x8] sm:$0xff]
  %v16 = vld [vmem:[%s0 + $0x10] sm:$0xff]
  %v17 = vld [vmem:[%s0 + $0x18] sm:$0xff]
  %v18 = vld [vmem:[%s0 + $0x20] sm:$0xff]
  %v19 = vld [vmem:[%s0 + $0x28] sm:$0xff]
  %v20 = vld [vmem:[%s0 + $0x30] sm:$0xff]
  %v21 = vld [vmem:[%s0 + $0x38] sm:$0xff]
  %v22 = vld [vmem:[%s0 + $0x40] sm:$0xff]
  %v23 = vld [vmem:[%s0 + $0x48] sm:$0xff]
  %v24 = vld [vmem:[%s0 + $0x50] sm:$0xff]
  %v25 = vld [vmem:[%s0 + $0x58] sm:$0xff]
  %v26 = vld [vmem:[%s0 + $0x60] sm:$0xff]
  %v27 = vld [vmem:[%s0 + $0x68] sm:$0xff]
  %v28 = vld [vmem:[%s0 + $0x70] sm:$0xff]
  %v29 = vld [vmem:[%s0 + $0x78] sm:$0xff]
  %v30 = vld [vmem:[%s0 + $0x80] sm:$0xff]
  %v31 = vld [vmem:[%s0 + $0x88] sm:$0xff]
  %v32 = vld [vmem:[%s0 + $0x90] sm:$0xff]
  %v33 = vld [vmem:[%s0 + $0x98] sm:$0xff]
  %v34 = vld [vmem:[%s0 + $0xa0] sm:$0xff]
  %v35 = vld [vmem:[%s0 + $0xa8] sm:$0xff]
  %v36 = vld [vmem:[%s0 + $0xb0] sm:$0xff]
  %v37 = vld [vmem:[%s0 + $0xb8] sm:$0xff]
  %v38 = vld [vmem:[%s0 + $0xc0] sm:$0xff]
  %v39 = vld [vmem:[%s0 + $0xc8] sm:$0xff]
  %v40 = vld [vmem:[%s0 + $0xd0] sm:$0xff]
  %v41 = vld [vmem:[%s0 + $0xd8] sm:$0xff]
  %v42 = vld [vmem:[%s0 + $0xe0] sm:$0xff]
  %v43 = vld [vmem:[%s0 + $0xe8] sm:$0xff]
  %v44 = vld [vmem:[%s0 + $0xf0] sm:$0xff]
  %v45 = vld [vmem:[%s0 + $0xf8] sm:$0xff]
  %v46 = vld [vmem:[%s0 + $0x100] sm:$0xff]
  %v47 = vld [vmem:[%s0 + $0x108] sm:$0xff]
  %v48 = vld [vmem:[%s0 + $0x110] sm:$0xff]
  %v49 = vld [vmem:[%s0 + $0x118] sm:$0xff]
  %v50 = vld [vmem:[%s0 + $0x120] sm:$0xff]
  %v51 = vld [vmem:[%s0 + $0x128] sm:$0xff]
  %v52 = vld [vmem:[%s0 + $0x130] sm:$0xff]
  %v53 = vld [vmem:[%s0 + $0x138] sm:$0xff]
  %v54 = vld [vmem:[%s0 + $0x140] sm:$0xff]
  %v55 = vld [vmem:[%s0 + $0x148] sm:$0xff]
  %v56 = vld [vmem:[%s0 + $0x150] sm:$0xff]
  %v57 = vld [vmem:[%s0 + $0x158] sm:$0xff]
  %v58 = vld [vmem:[%s0 + $0x160] sm:$0xff]
  %v59 = vld [vmem:[%s0 + $0x168] sm:$0xff]
  %v60 = vld [vmem:[%s0 + $0x170] sm:$0xff]
  %v61 = vld [vmem:[%s0 + $0x178] sm:$0xff]
  %v62 = vld [vmem:[%s0 + $0x180] sm:$0xff]
  %v63 = vld [vmem:[%s0 + $0x188] sm:$0xff]
  %v64 = vld [vmem:[%s0 + $0x190] sm:$0xff]
  %v65 = vld [vmem:[%s0 + $0x198] sm:$0xff]
  %v66 = vld [vmem:[%s0 + $0x1a0] sm:$0xff]
  %v67 = vld [vmem:[%s0 + $0x1a8] sm:$0xff]
  %v68 = vld [vmem:[%s0 + $0x1b0] sm:$0xff]
  %v69 = vld [vmem:[%s0 + $0x1b8] sm:$0xff]
  %v70 = vld [vmem:[%s0 + $0x1c0] sm:$0xff]
  %v71 = vld [vmem:[%s0 + $0x1c8] sm:$0xff]
  %v72 = vld [vmem:[%s0 + $0x1d0] sm:$0xff]
  %v73 = vld [vmem:[%s0 + $0x1d8] sm:$0xff]
  %v74 = vld [vmem:[%s0 + $0x1e0] sm:$0xff]
  %v75 = vld [vmem:[%s0 + $0x1e8] sm:$0xff]
  %v76 = vld [vmem:[%s0 + $0x1f0] sm:$0xff]
  %v77 = vld [vmem:[%s0 + $0x1f8] sm:$0xff]
  %v78 = vld [vmem:[%s1] sm:$0xf]
  %v79 = vld [vmem:[%s2] sm:$0x1]
  %v81 = vperm.slane %v79, 0
  %vm83 = vcmask 31744
  %v85 = vsel %vm83, %v14, 0
  %v88 = vsel %vm83, %v15, 0
  %v91 = vsel %vm83, %v16, 0
  %v94 = vsel %vm83, %v17, 0
  %v97 = vsel %vm83, %v18, 0
  %v100 = vsel %vm83, %v19, 0
  %v103 = vsel %vm83, %v20, 0
  %v106 = vsel %vm83, %v21, 0
  %v109 = vsel %vm83, %v22, 0
  %v112 = vsel %vm83, %v23, 0
  %v115 = vsel %vm83, %v24, 0
  %v118 = vsel %vm83, %v25, 0
  %v121 = vsel %vm83, %v26, 0
  %v124 = vsel %vm83, %v27, 0
  %v127 = vsel %vm83, %v28, 0
  %v130 = vsel %vm83, %v29, 0
  %v133 = vsel %vm83, %v30, 0
  %v136 = vsel %vm83, %v31, 0
  %v139 = vsel %vm83, %v32, 0
  %v142 = vsel %vm83, %v33, 0
  %v145 = vsel %vm83, %v34, 0
  %v148 = vsel %vm83, %v35, 0
  %v151 = vsel %vm83, %v36, 0
  %v154 = vsel %vm83, %v37, 0
  %v157 = vsel %vm83, %v38, 0
  %v160 = vsel %vm83, %v39, 0
  %v163 = vsel %vm83, %v40, 0
  %v166 = vsel %vm83, %v41, 0
  %v169 = vsel %vm83, %v42, 0
  %v172 = vsel %vm83, %v43, 0
  %v175 = vsel %vm83, %v44, 0
  %v178 = vsel %vm83, %v45, 0
  %v181 = vsel %vm83, %v46, 0
  %v184 = vsel %vm83, %v47, 0
  %v187 = vsel %vm83, %v48, 0
  %v190 = vsel %vm83, %v49, 0
  %v193 = vsel %vm83, %v50, 0
  %v196 = vsel %vm83, %v51, 0
  %v199 = vsel %vm83, %v52, 0
  %v202 = vsel %vm83, %v53, 0
  %v205 = vsel %vm83, %v54, 0
  %v208 = vsel %vm83, %v55, 0
  %v211 = vsel %vm83, %v56, 0
  %v214 = vsel %vm83, %v57, 0
  %v217 = vsel %vm83, %v58, 0
  %v220 = vsel %vm83, %v59, 0
  %v223 = vsel %vm83, %v60, 0
  %v226 = vsel %vm83, %v61, 0
  %v229 = vsel %vm83, %v62, 0
  %v232 = vsel %vm83, %v63, 0
  %v235 = vsel %vm83, %v64, 0
  %v238 = vsel %vm83, %v65, 0
  %v241 = vsel %vm83, %v66, 0
  %v244 = vsel %vm83, %v67, 0
  %v247 = vsel %vm83, %v68, 0
  %v250 = vsel %vm83, %v69, 0
  %v253 = vsel %vm83, %v70, 0
  %v256 = vsel %vm83, %v71, 0
  %v259 = vsel %vm83, %v72, 0
  %v262 = vsel %vm83, %v73, 0
  %v265 = vsel %vm83, %v74, 0
  %v268 = vsel %vm83, %v75, 0
  %v271 = vsel %vm83, %v76, 0
  %v274 = vsel %vm83, %v77, 0
  %vm276 = vcmask 1043456
  %v278 = vsel %vm276, %v78, 0
  %280 = vmatpush.msra.mxu0 0.0
  %281 = vmatpush.msra.mxu0 0.0
  %282 = vmatpush.msra.mxu0 0.0
  %283 = vmatpush.msra.mxu0 0.0
  %284 = vmatpush.msra.mxu0 0.0
  %285 = vmatpush.msra.mxu0 0.0
  %286 = vmatpush.msra.mxu0 0.0
  %287 = vmatpush.msra.mxu0 0.0
  %288 = vmatpush.msra.mxu0 0.0
  %289 = vmatpush.msra.mxu0 0.0
  %290 = vmatpush.msra.mxu0 0.0
  %291 = vmatpush.msra.mxu0 0.0
  %292 = vmatpush.msra.mxu0 0.0
  %293 = vmatpush.msra.mxu0 0.0
  %294 = vmatpush.msra.mxu0 0.0
  %295 = vmatpush.msra.mxu0 %v278
  %296 = vmatmul.f32.gmra.mxu0 %v85
  %v297 = vpop.f32.mrf.mxu0
  %v298 = vadd.f32 %v81, %v297
  %299 = vmatmul.f32.gmra.mxu0 %v88
  %v300 = vpop.f32.mrf.mxu0
  %v301 = vadd.f32 %v81, %v300
  %302 = vmatmul.f32.gmra.mxu0 %v91
  %v303 = vpop.f32.mrf.mxu0
  %v304 = vadd.f32 %v81, %v303
  %305 = vmatmul.f32.gmra.mxu0 %v94
  %v306 = vpop.f32.mrf.mxu0
  %v307 = vadd.f32 %v81, %v306
  %308 = vmatmul.f32.gmra.mxu0 %v97
  %v309 = vpop.f32.mrf.mxu0
  %v310 = vadd.f32 %v81, %v309
  %311 = vmatmul.f32.gmra.mxu0 %v100
  %v312 = vpop.f32.mrf.mxu0
  %v313 = vadd.f32 %v81, %v312
  %314 = vmatmul.f32.gmra.mxu0 %v103
  %v315 = vpop.f32.mrf.mxu0
  %v316 = vadd.f32 %v81, %v315
  %317 = vmatmul.f32.gmra.mxu0 %v106
  %v318 = vpop.f32.mrf.mxu0
  %v319 = vadd.f32 %v81, %v318
  %320 = vmatmul.f32.gmra.mxu0 %v109
  %v321 = vpop.f32.mrf.mxu0
  %v322 = vadd.f32 %v81, %v321
  %323 = vmatmul.f32.gmra.mxu0 %v112
  %v324 = vpop.f32.mrf.mxu0
  %v325 = vadd.f32 %v81, %v324
  %326 = vmatmul.f32.gmra.mxu0 %v115
  %v327 = vpop.f32.mrf.mxu0
  %v328 = vadd.f32 %v81, %v327
  %329 = vmatmul.f32.gmra.mxu0 %v118
  %v330 = vpop.f32.mrf.mxu0
  %v331 = vadd.f32 %v81, %v330
  %332 = vmatmul.f32.gmra.mxu0 %v121
  %v333 = vpop.f32.mrf.mxu0
  %v334 = vadd.f32 %v81, %v333
  %335 = vmatmul.f32.gmra.mxu0 %v124
  %v336 = vpop.f32.mrf.mxu0
  %v337 = vadd.f32 %v81, %v336
  %338 = vmatmul.f32.gmra.mxu0 %v127
  %v339 = vpop.f32.mrf.mxu0
  %v340 = vadd.f32 %v81, %v339
  %341 = vmatmul.f32.gmra.mxu0 %v130
  %v342 = vpop.f32.mrf.mxu0
  %v343 = vadd.f32 %v81, %v342
  %344 = vmatmul.f32.gmra.mxu0 %v133
  %v345 = vpop.f32.mrf.mxu0
  %v346 = vadd.f32 %v81, %v345
  %347 = vmatmul.f32.gmra.mxu0 %v136
  %v348 = vpop.f32.mrf.mxu0
  %v349 = vadd.f32 %v81, %v348
  %350 = vmatmul.f32.gmra.mxu0 %v139
  %v351 = vpop.f32.mrf.mxu0
  %v352 = vadd.f32 %v81, %v351
  %353 = vmatmul.f32.gmra.mxu0 %v142
  %v354 = vpop.f32.mrf.mxu0
  %v355 = vadd.f32 %v81, %v354
  %356 = vmatmul.f32.gmra.mxu0 %v145
  %v357 = vpop.f32.mrf.mxu0
  %v358 = vadd.f32 %v81, %v357
  %359 = vmatmul.f32.gmra.mxu0 %v148
  %v360 = vpop.f32.mrf.mxu0
  %v361 = vadd.f32 %v81, %v360
  %362 = vmatmul.f32.gmra.mxu0 %v151
  %v363 = vpop.f32.mrf.mxu0
  %v364 = vadd.f32 %v81, %v363
  %365 = vmatmul.f32.gmra.mxu0 %v154
  %v366 = vpop.f32.mrf.mxu0
  %v367 = vadd.f32 %v81, %v366
  %368 = vmatmul.f32.gmra.mxu0 %v157
  %v369 = vpop.f32.mrf.mxu0
  %v370 = vadd.f32 %v81, %v369
  %371 = vmatmul.f32.gmra.mxu0 %v160
  %v372 = vpop.f32.mrf.mxu0
  %v373 = vadd.f32 %v81, %v372
  %374 = vmatmul.f32.gmra.mxu0 %v163
  %v375 = vpop.f32.mrf.mxu0
  %v376 = vadd.f32 %v81, %v375
  %377 = vmatmul.f32.gmra.mxu0 %v166
  %v378 = vpop.f32.mrf.mxu0
  %v379 = vadd.f32 %v81, %v378
  %380 = vmatmul.f32.gmra.mxu0 %v169
  %v381 = vpop.f32.mrf.mxu0
  %v382 = vadd.f32 %v81, %v381
  %383 = vmatmul.f32.gmra.mxu0 %v172
  %v384 = vpop.f32.mrf.mxu0
  %v385 = vadd.f32 %v81, %v384
  %386 = vmatmul.f32.gmra.mxu0 %v175
  %v387 = vpop.f32.mrf.mxu0
  %v388 = vadd.f32 %v81, %v387
  %389 = vmatmul.f32.gmra.mxu0 %v178
  %v390 = vpop.f32.mrf.mxu0
  %v391 = vadd.f32 %v81, %v390
  %392 = vmatmul.f32.gmra.mxu0 %v181
  %v393 = vpop.f32.mrf.mxu0
  %v394 = vadd.f32 %v81, %v393
  %395 = vmatmul.f32.gmra.mxu0 %v184
  %v396 = vpop.f32.mrf.mxu0
  %v397 = vadd.f32 %v81, %v396
  %398 = vmatmul.f32.gmra.mxu0 %v187
  %v399 = vpop.f32.mrf.mxu0
  %v400 = vadd.f32 %v81, %v399
  %401 = vmatmul.f32.gmra.mxu0 %v190
  %v402 = vpop.f32.mrf.mxu0
  %v403 = vadd.f32 %v81, %v402
  %404 = vmatmul.f32.gmra.mxu0 %v193
  %v405 = vpop.f32.mrf.mxu0
  %v406 = vadd.f32 %v81, %v405
  %407 = vmatmul.f32.gmra.mxu0 %v196
  %v408 = vpop.f32.mrf.mxu0
  %v409 = vadd.f32 %v81, %v408
  %410 = vmatmul.f32.gmra.mxu0 %v199
  %v411 = vpop.f32.mrf.mxu0
  %v412 = vadd.f32 %v81, %v411
  %413 = vmatmul.f32.gmra.mxu0 %v202
  %v414 = vpop.f32.mrf.mxu0
  %v415 = vadd.f32 %v81, %v414
  %416 = vmatmul.f32.gmra.mxu0 %v205
  %v417 = vpop.f32.mrf.mxu0
  %v418 = vadd.f32 %v81, %v417
  %419 = vmatmul.f32.gmra.mxu0 %v208
  %v420 = vpop.f32.mrf.mxu0
  %v421 = vadd.f32 %v81, %v420
  %422 = vmatmul.f32.gmra.mxu0 %v211
  %v423 = vpop.f32.mrf.mxu0
  %v424 = vadd.f32 %v81, %v423
  %425 = vmatmul.f32.gmra.mxu0 %v214
  %v426 = vpop.f32.mrf.mxu0
  %v427 = vadd.f32 %v81, %v426
  %428 = vmatmul.f32.gmra.mxu0 %v217
  %v429 = vpop.f32.mrf.mxu0
  %v430 = vadd.f32 %v81, %v429
  %431 = vmatmul.f32.gmra.mxu0 %v220
  %v432 = vpop.f32.mrf.mxu0
  %v433 = vadd.f32 %v81, %v432
  %434 = vmatmul.f32.gmra.mxu0 %v223
  %v435 = vpop.f32.mrf.mxu0
  %v436 = vadd.f32 %v81, %v435
  %437 = vmatmul.f32.gmra.mxu0 %v226
  %v438 = vpop.f32.mrf.mxu0
  %v439 = vadd.f32 %v81, %v438
  %440 = vmatmul.f32.gmra.mxu0 %v229
  %v441 = vpop.f32.mrf.mxu0
  %v442 = vadd.f32 %v81, %v441
  %443 = vmatmul.f32.gmra.mxu0 %v232
  %v444 = vpop.f32.mrf.mxu0
  %v445 = vadd.f32 %v81, %v444
  %446 = vmatmul.f32.gmra.mxu0 %v235
  %v447 = vpop.f32.mrf.mxu0
  %v448 = vadd.f32 %v81, %v447
  %449 = vmatmul.f32.gmra.mxu0 %v238
  %v450 = vpop.f32.mrf.mxu0
  %v451 = vadd.f32 %v81, %v450
  %452 = vmatmul.f32.gmra.mxu0 %v241
  %v453 = vpop.f32.mrf.mxu0
  %v454 = vadd.f32 %v81, %v453
  %455 = vmatmul.f32.gmra.mxu0 %v244
  %v456 = vpop.f32.mrf.mxu0
  %v457 = vadd.f32 %v81, %v456
  %458 = vmatmul.f32.gmra.mxu0 %v247
  %v459 = vpop.f32.mrf.mxu0
  %v460 = vadd.f32 %v81, %v459
  %461 = vmatmul.f32.gmra.mxu0 %v250
  %v462 = vpop.f32.mrf.mxu0
  %v463 = vadd.f32 %v81, %v462
  %464 = vmatmul.f32.gmra.mxu0 %v253
  %v465 = vpop.f32.mrf.mxu0
  %v466 = vadd.f32 %v81, %v465
  %467 = vmatmul.f32.gmra.mxu0 %v256
  %v468 = vpop.f32.mrf.mxu0
  %v469 = vadd.f32 %v81, %v468
  %470 = vmatmul.f32.gmra.mxu0 %v259
  %v471 = vpop.f32.mrf.mxu0
  %v472 = vadd.f32 %v81, %v471
  %473 = vmatmul.f32.gmra.mxu0 %v262
  %v474 = vpop.f32.mrf.mxu0
  %v475 = vadd.f32 %v81, %v474
  %476 = vmatmul.f32.gmra.mxu0 %v265
  %v477 = vpop.f32.mrf.mxu0
  %v478 = vadd.f32 %v81, %v477
  %479 = vmatmul.f32.gmra.mxu0 %v268
  %v480 = vpop.f32.mrf.mxu0
  %v481 = vadd.f32 %v81, %v480
  %482 = vmatmul.f32.gmra.mxu0 %v271
  %v483 = vpop.f32.mrf.mxu0
  %v484 = vadd.f32 %v81, %v483
  %485 = vmatmul.f32.gmra.mxu0 %v274
  %v486 = vpop.f32.mrf.mxu0
  %v487 = vadd.f32 %v81, %v486
  %488 = vdwg.mxu0
  %489 = vst.msk [vmem:[%s3] sm:$0xff] %vm83, %v298
  %490 = vst.msk [vmem:[%s3 + $0x8] sm:$0xff] %vm83, %v301
  %491 = vst.msk [vmem:[%s3 + $0x10] sm:$0xff] %vm83, %v304
  %492 = vst.msk [vmem:[%s3 + $0x18] sm:$0xff] %vm83, %v307
  %493 = vst.msk [vmem:[%s3 + $0x20] sm:$0xff] %vm83, %v310
  %494 = vst.msk [vmem:[%s3 + $0x28] sm:$0xff] %vm83, %v313
  %495 = vst.msk [vmem:[%s3 + $0x30] sm:$0xff] %vm83, %v316
  %496 = vst.msk [vmem:[%s3 + $0x38] sm:$0xff] %vm83, %v319
  %497 = vst.msk [vmem:[%s3 + $0x40] sm:$0xff] %vm83, %v322
  %498 = vst.msk [vmem:[%s3 + $0x48] sm:$0xff] %vm83, %v325
  %499 = vst.msk [vmem:[%s3 + $0x50] sm:$0xff] %vm83, %v328
  %500 = vst.msk [vmem:[%s3 + $0x58] sm:$0xff] %vm83, %v331
  %501 = vst.msk [vmem:[%s3 + $0x60] sm:$0xff] %vm83, %v334
  %502 = vst.msk [vmem:[%s3 + $0x68] sm:$0xff] %vm83, %v337
  %503 = vst.msk [vmem:[%s3 + $0x70] sm:$0xff] %vm83, %v340
  %504 = vst.msk [vmem:[%s3 + $0x78] sm:$0xff] %vm83, %v343
  %505 = vst.msk [vmem:[%s3 + $0x80] sm:$0xff] %vm83, %v346
  %506 = vst.msk [vmem:[%s3 + $0x88] sm:$0xff] %vm83, %v349
  %507 = vst.msk [vmem:[%s3 + $0x90] sm:$0xff] %vm83, %v352
  %508 = vst.msk [vmem:[%s3 + $0x98] sm:$0xff] %vm83, %v355
  %509 = vst.msk [vmem:[%s3 + $0xa0] sm:$0xff] %vm83, %v358
  %510 = vst.msk [vmem:[%s3 + $0xa8] sm:$0xff] %vm83, %v361
  %511 = vst.msk [vmem:[%s3 + $0xb0] sm:$0xff] %vm83, %v364
  %512 = vst.msk [vmem:[%s3 + $0xb8] sm:$0xff] %vm83, %v367
  %513 = vst.msk [vmem:[%s3 + $0xc0] sm:$0xff] %vm83, %v370
  %514 = vst.msk [vmem:[%s3 + $0xc8] sm:$0xff] %vm83, %v373
  %515 = vst.msk [vmem:[%s3 + $0xd0] sm:$0xff] %vm83, %v376
  %516 = vst.msk [vmem:[%s3 + $0xd8] sm:$0xff] %vm83, %v379
  %517 = vst.msk [vmem:[%s3 + $0xe0] sm:$0xff] %vm83, %v382
  %518 = vst.msk [vmem:[%s3 + $0xe8] sm:$0xff] %vm83, %v385
  %519 = vst.msk [vmem:[%s3 + $0xf0] sm:$0xff] %vm83, %v388
  %520 = vst.msk [vmem:[%s3 + $0xf8] sm:$0xff] %vm83, %v391
  %521 = vst.msk [vmem:[%s3 + $0x100] sm:$0xff] %vm83, %v394
  %522 = vst.msk [vmem:[%s3 + $0x108] sm:$0xff] %vm83, %v397
  %523 = vst.msk [vmem:[%s3 + $0x110] sm:$0xff] %vm83, %v400
  %524 = vst.msk [vmem:[%s3 + $0x118] sm:$0xff] %vm83, %v403
  %525 = vst.msk [vmem:[%s3 + $0x120] sm:$0xff] %vm83, %v406
  %526 = vst.msk [vmem:[%s3 + $0x128] sm:$0xff] %vm83, %v409
  %527 = vst.msk [vmem:[%s3 + $0x130] sm:$0xff] %vm83, %v412
  %528 = vst.msk [vmem:[%s3 + $0x138] sm:$0xff] %vm83, %v415
  %529 = vst.msk [vmem:[%s3 + $0x140] sm:$0xff] %vm83, %v418
  %530 = vst.msk [vmem:[%s3 + $0x148] sm:$0xff] %vm83, %v421
  %531 = vst.msk [vmem:[%s3 + $0x150] sm:$0xff] %vm83, %v424
  %532 = vst.msk [vmem:[%s3 + $0x158] sm:$0xff] %vm83, %v427
  %533 = vst.msk [vmem:[%s3 + $0x160] sm:$0xff] %vm83, %v430
  %534 = vst.msk [vmem:[%s3 + $0x168] sm:$0xff] %vm83, %v433
  %535 = vst.msk [vmem:[%s3 + $0x170] sm:$0xff] %vm83, %v436
  %536 = vst.msk [vmem:[%s3 + $0x178] sm:$0xff] %vm83, %v439
  %537 = vst.msk [vmem:[%s3 + $0x180] sm:$0xff] %vm83, %v442
  %538 = vst.msk [vmem:[%s3 + $0x188] sm:$0xff] %vm83, %v445
  %539 = vst.msk [vmem:[%s3 + $0x190] sm:$0xff] %vm83, %v448
  %540 = vst.msk [vmem:[%s3 + $0x198] sm:$0xff] %vm83, %v451
  %541 = vst.msk [vmem:[%s3 + $0x1a0] sm:$0xff] %vm83, %v454
  %542 = vst.msk [vmem:[%s3 + $0x1a8] sm:$0xff] %vm83, %v457
  %543 = vst.msk [vmem:[%s3 + $0x1b0] sm:$0xff] %vm83, %v460
  %544 = vst.msk [vmem:[%s3 + $0x1b8] sm:$0xff] %vm83, %v463
  %545 = vst.msk [vmem:[%s3 + $0x1c0] sm:$0xff] %vm83, %v466
  %546 = vst.msk [vmem:[%s3 + $0x1c8] sm:$0xff] %vm83, %v469
  %547 = vst.msk [vmem:[%s3 + $0x1d0] sm:$0xff] %vm83, %v472
  %548 = vst.msk [vmem:[%s3 + $0x1d8] sm:$0xff] %vm83, %v475
  %549 = vst.msk [vmem:[%s3 + $0x1e0] sm:$0xff] %vm83, %v478
  %550 = vst.msk [vmem:[%s3 + $0x1e8] sm:$0xff] %vm83, %v481
  %551 = vst.msk [vmem:[%s3 + $0x1f0] sm:$0xff] %vm83, %v484
  %552 = vst.msk [vmem:[%s3 + $0x1f8] sm:$0xff] %vm83, %v487
  // Predicated region
  $region14: #{window_attention_mixer_forward.10} parent=0 // pred_check
    _
  $region15: #{window_attention_mixer_forward.10} parent=0 // pred_check_branch
    %554 = sbr.rel (0) target = $region17
  $region16: #{window_attention_mixer_forward.10} parent=0 // pred_region
    _
  $region17: #{window_attention_mixer_forward.10} parent=0 // pred_fallthru
    _
  // Predicated region
  $region18: #{window_attention_mixer_forward.10} parent=0 // pred_check
    _
  $region19: #{window_attention_mixer_forward.10} parent=0 // pred_check_branch
    %556 = sbr.rel (0) target = $region21
  $region20: #{window_attention_mixer_forward.10} parent=0 // pred_region
    _
  $region21: #{window_attention_mixer_forward.10} parent=0 // pred_fallthru
    _

</llo_original>
